<compile_context>
chip_gen: v5e
topology: v5e:2x2
jax: 0.10.0
libtpu: 0.0.40
codegen_flags: <defaults>
</compile_context>

<pallas_src>
import jax
import jax.numpy as jnp
from jax.experimental import pallas as pl
from jax.experimental.pallas import tpu as pltpu


# ----------------------------------------------------------------------------
# Pallas kernels
# ----------------------------------------------------------------------------
def conv_matmul_kernel(x_ref, w_ref, b_ref, o_ref):
    """(Cout, K) @ (K, hw_tile) with fused bias + ReLU (single K step)."""
    acc = jnp.dot(w_ref[...], x_ref[...], preferred_element_type=jnp.float32)
    acc = acc + b_ref[...]                      # (Cout, 1) broadcasts over lanes
    o_ref[...] = jnp.maximum(acc, 0.0).astype(o_ref.dtype)


def maxpool2x2_kernel(x_ref, o_ref):
    """2x2 / stride-2 max pool.

    x_ref: (rt, 2*W)  -- each row holds two consecutive image rows [h | h+1]
                         (free row-major view of the NCHW activation).
    o_ref: (rt, W//2)

    The window max is the elementwise max of four lane-selection matmuls
    against constant 0/1 matrices: no strided loads, no in-kernel reshapes,
    no HBM slice copies.
    """
    v = x_ref[...].astype(jnp.float32)
    two_w = x_ref.shape[1]
    w = two_w // 2
    w2 = o_ref.shape[1]
    lane = jax.lax.broadcasted_iota(jnp.int32, (two_w, w2), 0)
    col = jax.lax.broadcasted_iota(jnp.int32, (two_w, w2), 1)

    def pick(offset):                           # selects lane (2*j + offset)
        sel = (lane == 2 * col + offset).astype(jnp.float32)
        return jnp.dot(v, sel, preferred_element_type=jnp.float32)

    out = jnp.maximum(jnp.maximum(pick(0), pick(1)),
                      jnp.maximum(pick(w), pick(w + 1)))
    o_ref[...] = out.astype(o_ref.dtype)


def fc_fused_kernel(x_ref, w1_ref, b1_ref, w2_ref, b2_ref, o_ref):
    """Fused Linear(+ReLU) -> Linear; the (B, 128) hidden stays in VMEM."""
    h = jnp.dot(x_ref[...], w1_ref[...], preferred_element_type=jnp.float32)
    h = jnp.maximum(h + b1_ref[...], 0.0)
    y = jnp.dot(h, w2_ref[...], preferred_element_type=jnp.float32)
    o_ref[...] = (y + b2_ref[...]).astype(o_ref.dtype)


# ----------------------------------------------------------------------------
# pallas_call wrappers
# ----------------------------------------------------------------------------
def conv_matmul(patches, w, b):
    """patches: (B, K, HW) bf16; w: (Cout, K) bf16; b: (Cout, 1) f32
    -> (B, Cout, HW) bf16 with fused bias + ReLU."""
    B, K, HW = patches.shape
    Cout, Kw = w.shape
    assert K == Kw
    hw_tile = 2048 if HW % 2048 == 0 else HW
    return pl.pallas_call(
        conv_matmul_kernel,
        out_shape=jax.ShapeDtypeStruct((B, Cout, HW), jnp.bfloat16),
        grid_spec=pltpu.PrefetchScalarGridSpec(
            num_scalar_prefetch=0,
            grid=(B, HW // hw_tile),
            in_specs=[
                pl.BlockSpec((None, K, hw_tile), lambda bi, t: (bi, 0, t)),
                pl.BlockSpec((Cout, K), lambda bi, t: (0, 0)),
                pl.BlockSpec((Cout, 1), lambda bi, t: (0, 0)),
            ],
            out_specs=pl.BlockSpec((None, Cout, hw_tile), lambda bi, t: (bi, 0, t)),
        ),
        compiler_params=pltpu.CompilerParams(
            dimension_semantics=("parallel", "parallel")),
    )(patches, w, b)


def maxpool2x2(x_nchw):
    """nn.MaxPool2d(2) on an NCHW activation (even H, W)."""
    B, C, H, W = x_nchw.shape
    H2, W2 = H // 2, W // 2
    rows = C * H2
    if rows % 256 == 0:
        rt = 256
    elif rows % 128 == 0:
        rt = 128
    else:
        rt = rows
    # Free row-major view: row (c*H2 + i) holds image rows 2i and 2i+1 side by side.
    xv = x_nchw.reshape(B, rows, 2 * W)
    out = pl.pallas_call(
        maxpool2x2_kernel,
        out_shape=jax.ShapeDtypeStruct((B, rows, W2), x_nchw.dtype),
        grid_spec=pltpu.PrefetchScalarGridSpec(
            num_scalar_prefetch=0,
            grid=(B, rows // rt),
            in_specs=[pl.BlockSpec((None, rt, 2 * W), lambda bi, r: (bi, r, 0))],
            out_specs=pl.BlockSpec((None, rt, W2), lambda bi, r: (bi, r, 0)),
        ),
        compiler_params=pltpu.CompilerParams(
            dimension_semantics=("parallel", "parallel")),
    )(xv)
    return out.reshape(B, C, H2, W2)


def fc_fused(x, w1, b1, w2, b2):
    """x: (B, K) bf16; w1: (K, N1) bf16; w2: (N1, N2) f32 -> logits (B, N2) f32."""
    B, K = x.shape
    N1 = w1.shape[1]
    N2 = w2.shape[1]
    return pl.pallas_call(
        fc_fused_kernel,
        out_shape=jax.ShapeDtypeStruct((B, N2), jnp.float32),
        grid_spec=pltpu.PrefetchScalarGridSpec(
            num_scalar_prefetch=0,
            grid=(1,),
            in_specs=[
                pl.BlockSpec((B, K), lambda i: (0, 0)),
                pl.BlockSpec((K, N1), lambda i: (0, 0)),
                pl.BlockSpec((1, N1), lambda i: (0, 0)),
                pl.BlockSpec((N1, N2), lambda i: (0, 0)),
                pl.BlockSpec((1, N2), lambda i: (0, 0)),
            ],
            out_specs=pl.BlockSpec((B, N2), lambda i: (0, 0)),
        ),
        compiler_params=pltpu.CompilerParams(dimension_semantics=("arbitrary",)),
    )(x, w1, b1, w2, b2)


# ----------------------------------------------------------------------------
# XLA-side glue + one-time parameter repacking
# ----------------------------------------------------------------------------
# TODO(synk): the 3x3 im2col patch extraction (spatial pad + concat, no
# transpose) is left to XLA; it is the only remaining activation copy.
def im2col_3x3(x_nchw, k_pad):
    """3x3 / padding=1 im2col: (B, Cin, H, W) -> (B, k_pad, H*W).
    Column order is (kh, kw, cin) to match the pre-reshaped conv weights."""
    B, Cin, H, W = x_nchw.shape
    xp = jnp.pad(x_nchw, ((0, 0), (0, 0), (1, 1), (1, 1)))
    cols = [xp[:, :, dh:dh + H, dw:dw + W] for dh in range(3) for dw in range(3)]
    if k_pad > 9 * Cin:
        cols.append(jnp.zeros((B, k_pad - 9 * Cin, H, W), x_nchw.dtype))
    patches = jnp.concatenate(cols, axis=1)          # (B, k_pad, H, W)
    return patches.reshape(B, k_pad, H * W)


def _round_up(n, m):
    return ((n + m - 1) // m) * m


def prepare_params(p):
    """One-time (outside the jitted forward) repack of PyTorch-layout weights."""
    def conv_w(w_oihw):
        cout, cin = w_oihw.shape[0], w_oihw.shape[1]
        k = 9 * cin
        k_pad = _round_up(k, 16)                       # clean bf16 sublane tiles
        wm = jnp.transpose(w_oihw, (0, 2, 3, 1)).reshape(cout, k)  # cols: (kh,kw,cin)
        wm = jnp.pad(wm, ((0, 0), (0, k_pad - k)))
        return wm.astype(jnp.bfloat16)

    return {
        "c1w": conv_w(p["c1w"]),
        "c1b": p["c1b"].reshape(-1, 1).astype(jnp.float32),
        "c2w": conv_w(p["c2w"]),
        "c2b": p["c2b"].reshape(-1, 1).astype(jnp.float32),
        "f1w": jnp.transpose(p["f1w"]).astype(jnp.bfloat16),   # (8192, 128)
        "f1b": p["f1b"].reshape(1, -1).astype(jnp.float32),
        "f2w": jnp.transpose(p["f2w"]).astype(jnp.float32),    # (128, num_classes)
        "f2b": p["f2b"].reshape(1, -1).astype(jnp.float32),
    }


# ----------------------------------------------------------------------------
# Full forward pass (equivalent to SimpleCNN(num_classes).forward)
# ----------------------------------------------------------------------------
def simple_cnn_forward(x_nchw, kp):
    B, _, H, W = x_nchw.shape
    x = x_nchw.astype(jnp.bfloat16)

    # conv1 + ReLU -> (B, 16, H, W)
    p1 = im2col_3x3(x, kp["c1w"].shape[1])
    y1 = conv_matmul(p1, kp["c1w"], kp["c1b"]).reshape(B, kp["c1w"].shape[0], H, W)
    z1 = maxpool2x2(y1)                                      # (B, 16, H/2, W/2)

    # conv2 + ReLU -> (B, 32, H/2, W/2)
    p2 = im2col_3x3(z1, kp["c2w"].shape[1])
    y2 = conv_matmul(p2, kp["c2w"], kp["c2b"]).reshape(
        B, kp["c2w"].shape[0], H // 2, W // 2)
    z2 = maxpool2x2(y2)                                      # (B, 32, H/4, W/4)

    # nn.Flatten flattens (C, H, W): free reshape since we stayed NCHW.
    feats = z2.reshape(B, -1)
    return fc_fused(feats, kp["f1w"], kp["f1b"], kp["f2w"], kp["f2b"])


# ----------------------------------------------------------------------------
# Pure-JAX f32 reference (for correctness check)
# ----------------------------------------------------------------------------
def ref_forward(x_nchw, p):
    def conv(x, w, b):
        y = jax.lax.conv_general_dilated(
            x, w, (1, 1), "SAME", dimension_numbers=("NCHW", "OIHW", "NCHW"))
        return jnp.maximum(y + b[None, :, None, None], 0.0)

    def pool(x):
        B, C, H, W = x.shape
        return x.reshape(B, C, H // 2, 2, W // 2, 2).max(axis=(3, 5))

    x = pool(conv(x_nchw, p["c1w"], p["c1b"]))
    x = pool(conv(x, p["c2w"], p["c2b"]))
    x = x.reshape(x.shape[0], -1)
    x = jnp.maximum(x @ p["f1w"].T + p["f1b"], 0.0)
    return x @ p["f2w"].T + p["f2b"]


# ----------------------------------------------------------------------------
if __name__ == "__main__":
    num_classes = 10
    B = 2
    # Linear(32*16*16, 128) in the module implies a 64x64 spatial input.
    key = jax.random.PRNGKey(0)
    ks = jax.random.split(key, 9)
    params = {
        "c1w": 0.10 * jax.random.normal(ks[0], (16, 3, 3, 3), jnp.float32),
        "c1b": 0.10 * jax.random.normal(ks[1], (16,), jnp.float32),
        "c2w": 0.05 * jax.random.normal(ks[2], (32, 16, 3, 3), jnp.float32),
        "c2b": 0.10 * jax.random.normal(ks[3], (32,), jnp.float32),
        "f1w": 0.01 * jax.random.normal(ks[4], (128, 32 * 16 * 16), jnp.float32),
        "f1b": 0.10 * jax.random.normal(ks[5], (128,), jnp.float32),
        "f2w": 0.10 * jax.random.normal(ks[6], (num_classes, 128), jnp.float32),
        "f2b": 0.10 * jax.random.normal(ks[7], (num_classes,), jnp.float32),
    }
    x = jax.random.normal(ks[8], (B, 3, 64, 64), jnp.float32)

    kparams = jax.block_until_ready(prepare_params(params))   # one-time repack
    fwd = jax.jit(simple_cnn_forward)
    out = jax.block_until_ready(fwd(x, kparams))
    assert out.shape == (B, num_classes), out.shape

    ref = jax.block_until_ready(ref_forward(x, params))
    # bf16 MXU operands with f32 accumulation vs. the pure-f32 reference.
    assert jnp.allclose(out, ref, atol=5e-2, rtol=5e-2), (
        float(jnp.max(jnp.abs(out - ref))))

    print("KERNEL_OK")
</pallas_src>

<mosaic_0001>
module attributes {stable_mosaic.version = 11 : i64} {
  func.func @conv_matmul_kernel(%arg0: i32, %arg1: i32, %arg2: memref<1x32x2048xbf16, #tpu.memory_space<vmem>>, %arg3: memref<16x32xbf16, #tpu.memory_space<vmem>>, %arg4: memref<16x1xf32, #tpu.memory_space<vmem>>, %arg5: memref<1x16x2048xbf16, #tpu.memory_space<vmem>>) attributes {dimension_semantics = [#tpu.dimension_semantics<parallel>, #tpu.dimension_semantics<parallel>], iteration_bounds = array<i64: 2, 2>, scalar_prefetch = 0 : i64, scratch_operands = 0 : i64, tpu.core_type = #tpu.core_type<tc>, window_params = [{transform_indices = @transform_0, window_bounds = array<i64: 1, 32, 2048>}, {pipeline_mode = #tpu.pipeline_mode<synchronous>, transform_indices = @transform_1, window_bounds = array<i64: 16, 32>}, {pipeline_mode = #tpu.pipeline_mode<synchronous>, transform_indices = @transform_2, window_bounds = array<i64: 16, 1>}, {transform_indices = @transform_3, window_bounds = array<i64: 1, 16, 2048>}]} {
    %c0 = arith.constant 0 : index
    %c0_0 = arith.constant 0 : index
    %0 = vector.load %arg3[%c0, %c0_0] : memref<16x32xbf16, #tpu.memory_space<vmem>>, vector<16x32xbf16>
    %c0_1 = arith.constant 0 : index
    %c0_2 = arith.constant 0 : index
    %c0_3 = arith.constant 0 : index
    %1 = vector.load %arg2[%c0_1, %c0_2, %c0_3] : memref<1x32x2048xbf16, #tpu.memory_space<vmem>>, vector<1x32x2048xbf16>
    %2 = vector.shape_cast %1 : vector<1x32x2048xbf16> to vector<32x2048xbf16>
    %cst = arith.constant dense<0.000000e+00> : vector<16x2048xf32>
    %3 = tpu.matmul %0, %2, %cst {dimension_numbers = #tpu.dot_dimension_numbers<[1], [0], [0], [1], [0, 0, 1, 1], [], []>} : vector<16x32xbf16>, vector<32x2048xbf16>, vector<16x2048xf32> -> vector<16x2048xf32>
    %c0_4 = arith.constant 0 : index
    %c0_5 = arith.constant 0 : index
    %4 = vector.load %arg4[%c0_4, %c0_5] : memref<16x1xf32, #tpu.memory_space<vmem>>, vector<16x1xf32>
    %5 = vector.broadcast %4 : vector<16x1xf32> to vector<16x2048xf32>
    %6 = arith.addf %3, %5 : vector<16x2048xf32>
    %cst_6 = arith.constant 0.000000e+00 : f32
    %7 = vector.broadcast %cst_6 : f32 to vector<16x2048xf32>
    %8 = arith.maximumf %6, %7 : vector<16x2048xf32>
    %9 = arith.truncf %8 : vector<16x2048xf32> to vector<16x2048xbf16>
    %c0_7 = arith.constant 0 : index
    %c0_8 = arith.constant 0 : index
    %c0_9 = arith.constant 0 : index
    %10 = vector.load %arg5[%c0_7, %c0_8, %c0_9] : memref<1x16x2048xbf16, #tpu.memory_space<vmem>>, vector<1x16x2048xbf16>
    %11 = vector.shape_cast %10 : vector<1x16x2048xbf16> to vector<16x2048xbf16>
    %12 = vector.shape_cast %9 : vector<16x2048xbf16> to vector<1x16x2048xbf16>
    tpu.vector_store %arg5[%c0_7, %c0_8, %c0_9], %12 {strides = array<i32>} : memref<1x16x2048xbf16, #tpu.memory_space<vmem>>, vector<1x16x2048xbf16>,
    return
  }
  func.func @transform_0(%arg0: i32, %arg1: i32) -> (i32, i32, i32) {
    %c0_i32 = arith.constant 0 : i32
    %c0_i32_0 = arith.constant 0 : i32
    return %arg0, %c0_i32, %arg1 : i32, i32, i32
  }
  func.func @transform_1(%arg0: i32, %arg1: i32) -> (i32, i32) {
    %c0_i32 = arith.constant 0 : i32
    %c0_i32_0 = arith.constant 0 : i32
    %c0_i32_1 = arith.constant 0 : i32
    return %c0_i32, %c0_i32_0 : i32, i32
  }
  func.func @transform_2(%arg0: i32, %arg1: i32) -> (i32, i32) {
    %c0_i32 = arith.constant 0 : i32
    %c0_i32_0 = arith.constant 0 : i32
    %c0_i32_1 = arith.constant 0 : i32
    return %c0_i32, %c0_i32_0 : i32, i32
  }
  func.func @transform_3(%arg0: i32, %arg1: i32) -> (i32, i32, i32) {
    %c0_i32 = arith.constant 0 : i32
    %c0_i32_0 = arith.constant 0 : i32
    return %arg0, %c0_i32, %arg1 : i32, i32, i32
  }
}

module attributes {stable_mosaic.version = 11 : i64} {
  func.func @maxpool2x2_kernel(%arg0: i32, %arg1: i32, %arg2: memref<1x256x128xbf16, #tpu.memory_space<vmem>>, %arg3: memref<1x256x32xbf16, #tpu.memory_space<vmem>>) attributes {dimension_semantics = [#tpu.dimension_semantics<parallel>, #tpu.dimension_semantics<parallel>], iteration_bounds = array<i64: 2, 2>, scalar_prefetch = 0 : i64, scratch_operands = 0 : i64, tpu.core_type = #tpu.core_type<tc>, window_params = [{transform_indices = @transform_0, window_bounds = array<i64: 1, 256, 128>}, {transform_indices = @transform_1, window_bounds = array<i64: 1, 256, 32>}]} {
    %c0 = arith.constant 0 : index
    %c0_0 = arith.constant 0 : index
    %c0_1 = arith.constant 0 : index
    %0 = vector.load %arg2[%c0, %c0_0, %c0_1] : memref<1x256x128xbf16, #tpu.memory_space<vmem>>, vector<1x256x128xbf16>
    %1 = vector.shape_cast %0 : vector<1x256x128xbf16> to vector<256x128xbf16>
    %2 = arith.extf %1 : vector<256x128xbf16> to vector<256x128xf32>
    %3 = tpu.iota {dimensions = array<i32: 0>} : vector<128x32xi32>
    %4 = tpu.iota {dimensions = array<i32: 1>} : vector<128x32xi32>
    %c2_i32 = arith.constant 2 : i32
    %5 = vector.broadcast %c2_i32 : i32 to vector<128x32xi32>
    %6 = arith.muli %5, %4 : vector<128x32xi32>
    %c0_i32 = arith.constant 0 : i32
    %7 = vector.broadcast %c0_i32 : i32 to vector<128x32xi32>
    %8 = arith.addi %6, %7 : vector<128x32xi32>
    %9 = arith.cmpi eq, %3, %8 : vector<128x32xi32>
    %10 = arith.extui %9 : vector<128x32xi1> to vector<128x32xi32>
    %11 = arith.sitofp %10 : vector<128x32xi32> to vector<128x32xf32>
    %cst = arith.constant dense<0.000000e+00> : vector<256x32xf32>
    %12 = tpu.matmul %2, %11, %cst {dimension_numbers = #tpu.dot_dimension_numbers<[1], [0], [0], [1], [0, 0, 1, 1], [], []>} : vector<256x128xf32>, vector<128x32xf32>, vector<256x32xf32> -> vector<256x32xf32>
    %c2_i32_2 = arith.constant 2 : i32
    %13 = vector.broadcast %c2_i32_2 : i32 to vector<128x32xi32>
    %14 = arith.muli %13, %4 : vector<128x32xi32>
    %c1_i32 = arith.constant 1 : i32
    %15 = vector.broadcast %c1_i32 : i32 to vector<128x32xi32>
    %16 = arith.addi %14, %15 : vector<128x32xi32>
    %17 = arith.cmpi eq, %3, %16 : vector<128x32xi32>
    %18 = arith.extui %17 : vector<128x32xi1> to vector<128x32xi32>
    %19 = arith.sitofp %18 : vector<128x32xi32> to vector<128x32xf32>
    %cst_3 = arith.constant dense<0.000000e+00> : vector<256x32xf32>
    %20 = tpu.matmul %2, %19, %cst_3 {dimension_numbers = #tpu.dot_dimension_numbers<[1], [0], [0], [1], [0, 0, 1, 1], [], []>} : vector<256x128xf32>, vector<128x32xf32>, vector<256x32xf32> -> vector<256x32xf32>
    %21 = arith.maximumf %12, %20 : vector<256x32xf32>
    %c2_i32_4 = arith.constant 2 : i32
    %22 = vector.broadcast %c2_i32_4 : i32 to vector<128x32xi32>
    %23 = arith.muli %22, %4 : vector<128x32xi32>
    %c64_i32 = arith.constant 64 : i32
    %24 = vector.broadcast %c64_i32 : i32 to vector<128x32xi32>
    %25 = arith.addi %23, %24 : vector<128x32xi32>
    %26 = arith.cmpi eq, %3, %25 : vector<128x32xi32>
    %27 = arith.extui %26 : vector<128x32xi1> to vector<128x32xi32>
    %28 = arith.sitofp %27 : vector<128x32xi32> to vector<128x32xf32>
    %cst_5 = arith.constant dense<0.000000e+00> : vector<256x32xf32>
    %29 = tpu.matmul %2, %28, %cst_5 {dimension_numbers = #tpu.dot_dimension_numbers<[1], [0], [0], [1], [0, 0, 1, 1], [], []>} : vector<256x128xf32>, vector<128x32xf32>, vector<256x32xf32> -> vector<256x32xf32>
    %c2_i32_6 = arith.constant 2 : i32
    %30 = vector.broadcast %c2_i32_6 : i32 to vector<128x32xi32>
    %31 = arith.muli %30, %4 : vector<128x32xi32>
    %c65_i32 = arith.constant 65 : i32
    %32 = vector.broadcast %c65_i32 : i32 to vector<128x32xi32>
    %33 = arith.addi %31, %32 : vector<128x32xi32>
    %34 = arith.cmpi eq, %3, %33 : vector<128x32xi32>
    %35 = arith.extui %34 : vector<128x32xi1> to vector<128x32xi32>
    %36 = arith.sitofp %35 : vector<128x32xi32> to vector<128x32xf32>
    %cst_7 = arith.constant dense<0.000000e+00> : vector<256x32xf32>
    %37 = tpu.matmul %2, %36, %cst_7 {dimension_numbers = #tpu.dot_dimension_numbers<[1], [0], [0], [1], [0, 0, 1, 1], [], []>} : vector<256x128xf32>, vector<128x32xf32>, vector<256x32xf32> -> vector<256x32xf32>
    %38 = arith.maximumf %29, %37 : vector<256x32xf32>
    %39 = arith.maximumf %21, %38 : vector<256x32xf32>
    %40 = arith.truncf %39 : vector<256x32xf32> to vector<256x32xbf16>
    %c0_8 = arith.constant 0 : index
    %c0_9 = arith.constant 0 : index
    %c0_10 = arith.constant 0 : index
    %41 = vector.load %arg3[%c0_8, %c0_9, %c0_10] : memref<1x256x32xbf16, #tpu.memory_space<vmem>>, vector<1x256x32xbf16>
    %42 = vector.shape_cast %41 : vector<1x256x32xbf16> to vector<256x32xbf16>
    %43 = vector.shape_cast %40 : vector<256x32xbf16> to vector<1x256x32xbf16>
    tpu.vector_store %arg3[%c0_8, %c0_9, %c0_10], %43 {strides = array<i32>} : memref<1x256x32xbf16, #tpu.memory_space<vmem>>, vector<1x256x32xbf16>,
    return
  }
  func.func @transform_0(%arg0: i32, %arg1: i32) -> (i32, i32, i32) {
    %c0_i32 = arith.constant 0 : i32
    %c0_i32_0 = arith.constant 0 : i32
    return %arg0, %arg1, %c0_i32 : i32, i32, i32
  }
  func.func @transform_1(%arg0: i32, %arg1: i32) -> (i32, i32, i32) {
    %c0_i32 = arith.constant 0 : i32
    %c0_i32_0 = arith.constant 0 : i32
    return %arg0, %arg1, %c0_i32 : i32, i32, i32
  }
}

module attributes {stable_mosaic.version = 11 : i64} {
  func.func @conv_matmul_kernel(%arg0: i32, %arg1: i32, %arg2: memref<1x144x1024xbf16, #tpu.memory_space<vmem>>, %arg3: memref<32x144xbf16, #tpu.memory_space<vmem>>, %arg4: memref<32x1xf32, #tpu.memory_space<vmem>>, %arg5: memref<1x32x1024xbf16, #tpu.memory_space<vmem>>) attributes {dimension_semantics = [#tpu.dimension_semantics<parallel>, #tpu.dimension_semantics<parallel>], iteration_bounds = array<i64: 2, 1>, scalar_prefetch = 0 : i64, scratch_operands = 0 : i64, tpu.core_type = #tpu.core_type<tc>, window_params = [{transform_indices = @transform_0, window_bounds = array<i64: 1, 144, 1024>}, {pipeline_mode = #tpu.pipeline_mode<synchronous>, transform_indices = @transform_1, window_bounds = array<i64: 32, 144>}, {pipeline_mode = #tpu.pipeline_mode<synchronous>, transform_indices = @transform_2, window_bounds = array<i64: 32, 1>}, {transform_indices = @transform_3, window_bounds = array<i64: 1, 32, 1024>}]} {
    %c0 = arith.constant 0 : index
    %c0_0 = arith.constant 0 : index
    %0 = vector.load %arg3[%c0, %c0_0] : memref<32x144xbf16, #tpu.memory_space<vmem>>, vector<32x144xbf16>
    %c0_1 = arith.constant 0 : index
    %c0_2 = arith.constant 0 : index
    %c0_3 = arith.constant 0 : index
    %1 = vector.load %arg2[%c0_1, %c0_2, %c0_3] : memref<1x144x1024xbf16, #tpu.memory_space<vmem>>, vector<1x144x1024xbf16>
    %2 = vector.shape_cast %1 : vector<1x144x1024xbf16> to vector<144x1024xbf16>
    %cst = arith.constant dense<0.000000e+00> : vector<32x1024xf32>
    %3 = tpu.matmul %0, %2, %cst {dimension_numbers = #tpu.dot_dimension_numbers<[1], [0], [0], [1], [0, 0, 1, 1], [], []>} : vector<32x144xbf16>, vector<144x1024xbf16>, vector<32x1024xf32> -> vector<32x1024xf32>
    %c0_4 = arith.constant 0 : index
    %c0_5 = arith.constant 0 : index
    %4 = vector.load %arg4[%c0_4, %c0_5] : memref<32x1xf32, #tpu.memory_space<vmem>>, vector<32x1xf32>
    %5 = vector.broadcast %4 : vector<32x1xf32> to vector<32x1024xf32>
    %6 = arith.addf %3, %5 : vector<32x1024xf32>
    %cst_6 = arith.constant 0.000000e+00 : f32
    %7 = vector.broadcast %cst_6 : f32 to vector<32x1024xf32>
    %8 = arith.maximumf %6, %7 : vector<32x1024xf32>
    %9 = arith.truncf %8 : vector<32x1024xf32> to vector<32x1024xbf16>
    %c0_7 = arith.constant 0 : index
    %c0_8 = arith.constant 0 : index
    %c0_9 = arith.constant 0 : index
    %10 = vector.load %arg5[%c0_7, %c0_8, %c0_9] : memref<1x32x1024xbf16, #tpu.memory_space<vmem>>, vector<1x32x1024xbf16>
    %11 = vector.shape_cast %10 : vector<1x32x1024xbf16> to vector<32x1024xbf16>
    %12 = vector.shape_cast %9 : vector<32x1024xbf16> to vector<1x32x1024xbf16>
    tpu.vector_store %arg5[%c0_7, %c0_8, %c0_9], %12 {strides = array<i32>} : memref<1x32x1024xbf16, #tpu.memory_space<vmem>>, vector<1x32x1024xbf16>,
    return
  }
  func.func @transform_0(%arg0: i32, %arg1: i32) -> (i32, i32, i32) {
    %c0_i32 = arith.constant 0 : i32
    %c0_i32_0 = arith.constant 0 : i32
    return %arg0, %c0_i32, %arg1 : i32, i32, i32
  }
  func.func @transform_1(%arg0: i32, %arg1: i32) -> (i32, i32) {
    %c0_i32 = arith.constant 0 : i32
    %c0_i32_0 = arith.constant 0 : i32
    %c0_i32_1 = arith.constant 0 : i32
    return %c0_i32, %c0_i32_0 : i32, i32
  }
  func.func @transform_2(%arg0: i32, %arg1: i32) -> (i32, i32) {
    %c0_i32 = arith.constant 0 : i32
    %c0_i32_0 = arith.constant 0 : i32
    %c0_i32_1 = arith.constant 0 : i32
    return %c0_i32, %c0_i32_0 : i32, i32
  }
  func.func @transform_3(%arg0: i32, %arg1: i32) -> (i32, i32, i32) {
    %c0_i32 = arith.constant 0 : i32
    %c0_i32_0 = arith.constant 0 : i32
    return %arg0, %c0_i32, %arg1 : i32, i32, i32
  }
}

module attributes {stable_mosaic.version = 11 : i64} {
  func.func @maxpool2x2_kernel(%arg0: i32, %arg1: i32, %arg2: memref<1x256x64xbf16, #tpu.memory_space<vmem>>, %arg3: memref<1x256x16xbf16, #tpu.memory_space<vmem>>) attributes {dimension_semantics = [#tpu.dimension_semantics<parallel>, #tpu.dimension_semantics<parallel>], iteration_bounds = array<i64: 2, 2>, scalar_prefetch = 0 : i64, scratch_operands = 0 : i64, tpu.core_type = #tpu.core_type<tc>, window_params = [{transform_indices = @transform_0, window_bounds = array<i64: 1, 256, 64>}, {transform_indices = @transform_1, window_bounds = array<i64: 1, 256, 16>}]} {
    %c0 = arith.constant 0 : index
    %c0_0 = arith.constant 0 : index
    %c0_1 = arith.constant 0 : index
    %0 = vector.load %arg2[%c0, %c0_0, %c0_1] : memref<1x256x64xbf16, #tpu.memory_space<vmem>>, vector<1x256x64xbf16>
    %1 = vector.shape_cast %0 : vector<1x256x64xbf16> to vector<256x64xbf16>
    %2 = arith.extf %1 : vector<256x64xbf16> to vector<256x64xf32>
    %3 = tpu.iota {dimensions = array<i32: 0>} : vector<64x16xi32>
    %4 = tpu.iota {dimensions = array<i32: 1>} : vector<64x16xi32>
    %c2_i32 = arith.constant 2 : i32
    %5 = vector.broadcast %c2_i32 : i32 to vector<64x16xi32>
    %6 = arith.muli %5, %4 : vector<64x16xi32>
    %c0_i32 = arith.constant 0 : i32
    %7 = vector.broadcast %c0_i32 : i32 to vector<64x16xi32>
    %8 = arith.addi %6, %7 : vector<64x16xi32>
    %9 = arith.cmpi eq, %3, %8 : vector<64x16xi32>
    %10 = arith.extui %9 : vector<64x16xi1> to vector<64x16xi32>
    %11 = arith.sitofp %10 : vector<64x16xi32> to vector<64x16xf32>
    %cst = arith.constant dense<0.000000e+00> : vector<256x16xf32>
    %12 = tpu.matmul %2, %11, %cst {dimension_numbers = #tpu.dot_dimension_numbers<[1], [0], [0], [1], [0, 0, 1, 1], [], []>} : vector<256x64xf32>, vector<64x16xf32>, vector<256x16xf32> -> vector<256x16xf32>
    %c2_i32_2 = arith.constant 2 : i32
    %13 = vector.broadcast %c2_i32_2 : i32 to vector<64x16xi32>
    %14 = arith.muli %13, %4 : vector<64x16xi32>
    %c1_i32 = arith.constant 1 : i32
    %15 = vector.broadcast %c1_i32 : i32 to vector<64x16xi32>
    %16 = arith.addi %14, %15 : vector<64x16xi32>
    %17 = arith.cmpi eq, %3, %16 : vector<64x16xi32>
    %18 = arith.extui %17 : vector<64x16xi1> to vector<64x16xi32>
    %19 = arith.sitofp %18 : vector<64x16xi32> to vector<64x16xf32>
    %cst_3 = arith.constant dense<0.000000e+00> : vector<256x16xf32>
    %20 = tpu.matmul %2, %19, %cst_3 {dimension_numbers = #tpu.dot_dimension_numbers<[1], [0], [0], [1], [0, 0, 1, 1], [], []>} : vector<256x64xf32>, vector<64x16xf32>, vector<256x16xf32> -> vector<256x16xf32>
    %21 = arith.maximumf %12, %20 : vector<256x16xf32>
    %c2_i32_4 = arith.constant 2 : i32
    %22 = vector.broadcast %c2_i32_4 : i32 to vector<64x16xi32>
    %23 = arith.muli %22, %4 : vector<64x16xi32>
    %c32_i32 = arith.constant 32 : i32
    %24 = vector.broadcast %c32_i32 : i32 to vector<64x16xi32>
    %25 = arith.addi %23, %24 : vector<64x16xi32>
    %26 = arith.cmpi eq, %3, %25 : vector<64x16xi32>
    %27 = arith.extui %26 : vector<64x16xi1> to vector<64x16xi32>
    %28 = arith.sitofp %27 : vector<64x16xi32> to vector<64x16xf32>
    %cst_5 = arith.constant dense<0.000000e+00> : vector<256x16xf32>
    %29 = tpu.matmul %2, %28, %cst_5 {dimension_numbers = #tpu.dot_dimension_numbers<[1], [0], [0], [1], [0, 0, 1, 1], [], []>} : vector<256x64xf32>, vector<64x16xf32>, vector<256x16xf32> -> vector<256x16xf32>
    %c2_i32_6 = arith.constant 2 : i32
    %30 = vector.broadcast %c2_i32_6 : i32 to vector<64x16xi32>
    %31 = arith.muli %30, %4 : vector<64x16xi32>
    %c33_i32 = arith.constant 33 : i32
    %32 = vector.broadcast %c33_i32 : i32 to vector<64x16xi32>
    %33 = arith.addi %31, %32 : vector<64x16xi32>
    %34 = arith.cmpi eq, %3, %33 : vector<64x16xi32>
    %35 = arith.extui %34 : vector<64x16xi1> to vector<64x16xi32>
    %36 = arith.sitofp %35 : vector<64x16xi32> to vector<64x16xf32>
    %cst_7 = arith.constant dense<0.000000e+00> : vector<256x16xf32>
    %37 = tpu.matmul %2, %36, %cst_7 {dimension_numbers = #tpu.dot_dimension_numbers<[1], [0], [0], [1], [0, 0, 1, 1], [], []>} : vector<256x64xf32>, vector<64x16xf32>, vector<256x16xf32> -> vector<256x16xf32>
    %38 = arith.maximumf %29, %37 : vector<256x16xf32>
    %39 = arith.maximumf %21, %38 : vector<256x16xf32>
    %40 = arith.truncf %39 : vector<256x16xf32> to vector<256x16xbf16>
    %c0_8 = arith.constant 0 : index
    %c0_9 = arith.constant 0 : index
    %c0_10 = arith.constant 0 : index
    %41 = vector.load %arg3[%c0_8, %c0_9, %c0_10] : memref<1x256x16xbf16, #tpu.memory_space<vmem>>, vector<1x256x16xbf16>
    %42 = vector.shape_cast %41 : vector<1x256x16xbf16> to vector<256x16xbf16>
    %43 = vector.shape_cast %40 : vector<256x16xbf16> to vector<1x256x16xbf16>
    tpu.vector_store %arg3[%c0_8, %c0_9, %c0_10], %43 {strides = array<i32>} : memref<1x256x16xbf16, #tpu.memory_space<vmem>>, vector<1x256x16xbf16>,
    return
  }
  func.func @transform_0(%arg0: i32, %arg1: i32) -> (i32, i32, i32) {
    %c0_i32 = arith.constant 0 : i32
    %c0_i32_0 = arith.constant 0 : i32
    return %arg0, %arg1, %c0_i32 : i32, i32, i32
  }
  func.func @transform_1(%arg0: i32, %arg1: i32) -> (i32, i32, i32) {
    %c0_i32 = arith.constant 0 : i32
    %c0_i32_0 = arith.constant 0 : i32
    return %arg0, %arg1, %c0_i32 : i32, i32, i32
  }
}

module attributes {stable_mosaic.version = 11 : i64} {
  func.func @fc_fused_kernel(%arg0: i32, %arg1: memref<2x8192xbf16, #tpu.memory_space<vmem>>, %arg2: memref<8192x128xbf16, #tpu.memory_space<vmem>>, %arg3: memref<1x128xf32, #tpu.memory_space<vmem>>, %arg4: memref<128x10xf32, #tpu.memory_space<vmem>>, %arg5: memref<1x10xf32, #tpu.memory_space<vmem>>, %arg6: memref<2x10xf32, #tpu.memory_space<vmem>>) attributes {dimension_semantics = [#tpu.dimension_semantics<arbitrary>], iteration_bounds = array<i64: 1>, scalar_prefetch = 0 : i64, scratch_operands = 0 : i64, tpu.core_type = #tpu.core_type<tc>, window_params = [{pipeline_mode = #tpu.pipeline_mode<synchronous>, transform_indices = @transform_0, window_bounds = array<i64: 2, 8192>}, {pipeline_mode = #tpu.pipeline_mode<synchronous>, transform_indices = @transform_1, window_bounds = array<i64: 8192, 128>}, {pipeline_mode = #tpu.pipeline_mode<synchronous>, transform_indices = @transform_2, window_bounds = array<i64: 1, 128>}, {pipeline_mode = #tpu.pipeline_mode<synchronous>, transform_indices = @transform_3, window_bounds = array<i64: 128, 10>}, {pipeline_mode = #tpu.pipeline_mode<synchronous>, transform_indices = @transform_4, window_bounds = array<i64: 1, 10>}, {pipeline_mode = #tpu.pipeline_mode<synchronous>, transform_indices = @transform_5, window_bounds = array<i64: 2, 10>}]} {
    %c0 = arith.constant 0 : index
    %c0_0 = arith.constant 0 : index
    %0 = vector.load %arg1[%c0, %c0_0] : memref<2x8192xbf16, #tpu.memory_space<vmem>>, vector<2x8192xbf16>
    %c0_1 = arith.constant 0 : index
    %c0_2 = arith.constant 0 : index
    %1 = vector.load %arg2[%c0_1, %c0_2] : memref<8192x128xbf16, #tpu.memory_space<vmem>>, vector<8192x128xbf16>
    %cst = arith.constant dense<0.000000e+00> : vector<2x128xf32>
    %2 = tpu.matmul %0, %1, %cst {dimension_numbers = #tpu.dot_dimension_numbers<[1], [0], [0], [1], [0, 0, 1, 1], [], []>} : vector<2x8192xbf16>, vector<8192x128xbf16>, vector<2x128xf32> -> vector<2x128xf32>
    %c0_3 = arith.constant 0 : index
    %c0_4 = arith.constant 0 : index
    %3 = vector.load %arg3[%c0_3, %c0_4] : memref<1x128xf32, #tpu.memory_space<vmem>>, vector<1x128xf32>
    %4 = vector.broadcast %3 : vector<1x128xf32> to vector<2x128xf32>
    %5 = arith.addf %2, %4 : vector<2x128xf32>
    %cst_5 = arith.constant 0.000000e+00 : f32
    %6 = vector.broadcast %cst_5 : f32 to vector<2x128xf32>
    %7 = arith.maximumf %5, %6 : vector<2x128xf32>
    %c0_6 = arith.constant 0 : index
    %c0_7 = arith.constant 0 : index
    %8 = vector.load %arg4[%c0_6, %c0_7] : memref<128x10xf32, #tpu.memory_space<vmem>>, vector<128x10xf32>
    %cst_8 = arith.constant dense<0.000000e+00> : vector<2x10xf32>
    %9 = tpu.matmul %7, %8, %cst_8 {dimension_numbers = #tpu.dot_dimension_numbers<[1], [0], [0], [1], [0, 0, 1, 1], [], []>} : vector<2x128xf32>, vector<128x10xf32>, vector<2x10xf32> -> vector<2x10xf32>
    %c0_9 = arith.constant 0 : index
    %c0_10 = arith.constant 0 : index
    %10 = vector.load %arg5[%c0_9, %c0_10] : memref<1x10xf32, #tpu.memory_space<vmem>>, vector<1x10xf32>
    %11 = vector.broadcast %10 : vector<1x10xf32> to vector<2x10xf32>
    %12 = arith.addf %9, %11 : vector<2x10xf32>
    %c0_11 = arith.constant 0 : index
    %c0_12 = arith.constant 0 : index
    %13 = vector.load %arg6[%c0_11, %c0_12] : memref<2x10xf32, #tpu.memory_space<vmem>>, vector<2x10xf32>
    tpu.vector_store %arg6[%c0_11, %c0_12], %12 {strides = array<i32>} : memref<2x10xf32, #tpu.memory_space<vmem>>, vector<2x10xf32>,
    return
  }
  func.func @transform_0(%arg0: i32) -> (i32, i32) {
    %c0_i32 = arith.constant 0 : i32
    %c0_i32_0 = arith.constant 0 : i32
    %c0_i32_1 = arith.constant 0 : i32
    return %c0_i32, %c0_i32_0 : i32, i32
  }
  func.func @transform_1(%arg0: i32) -> (i32, i32) {
    %c0_i32 = arith.constant 0 : i32
    %c0_i32_0 = arith.constant 0 : i32
    %c0_i32_1 = arith.constant 0 : i32
    return %c0_i32, %c0_i32_0 : i32, i32
  }
  func.func @transform_2(%arg0: i32) -> (i32, i32) {
    %c0_i32 = arith.constant 0 : i32
    %c0_i32_0 = arith.constant 0 : i32
    %c0_i32_1 = arith.constant 0 : i32
    return %c0_i32, %c0_i32_0 : i32, i32
  }
  func.func @transform_3(%arg0: i32) -> (i32, i32) {
    %c0_i32 = arith.constant 0 : i32
    %c0_i32_0 = arith.constant 0 : i32
    %c0_i32_1 = arith.constant 0 : i32
    return %c0_i32, %c0_i32_0 : i32, i32
  }
  func.func @transform_4(%arg0: i32) -> (i32, i32) {
    %c0_i32 = arith.constant 0 : i32
    %c0_i32_0 = arith.constant 0 : i32
    %c0_i32_1 = arith.constant 0 : i32
    return %c0_i32, %c0_i32_0 : i32, i32
  }
  func.func @transform_5(%arg0: i32) -> (i32, i32) {
    %c0_i32 = arith.constant 0 : i32
    %c0_i32_0 = arith.constant 0 : i32
    %c0_i32_1 = arith.constant 0 : i32
    return %c0_i32, %c0_i32_0 : i32, i32
  }
}

</mosaic_0001>

<llo_original>
// kernel: simple_cnn_forward.5
$region0: #{simple_cnn_forward.5}
  #allocation0 [shape = 'u32[]', space=smem, size = 0x4, offset = 0x4, fixed_abs, tag = 'smem constant byte address 0x4 - core index']
  #allocation1 [shape = 'u32[72,128]{1,0:T(1,128)}', space=vmem, size = 0x9000, scoped, tag = 'internal scratch']
  %s0 = inlined_call_operand.vmem [shape: bf16[2,32,4096], index: 0, kind: input, shape index: {}]
  %s1 = inlined_call_operand.vmem [shape: bf16[16,32], index: 1, kind: input, shape index: {}]
  %s2 = inlined_call_operand.vmem [shape: f32[16,1], index: 2, kind: input, shape index: {}]
  %s3 = inlined_call_operand.vmem [shape: bf16[2,16,4096], index: 3, kind: output, shape index: {}]
  %s4 = sld [smem:[#allocation0]]
  $region87: #{simple_cnn_forward.5} parent=0
    _
  %s6 = ssub.s32 1, %s4
  %s7 = scalar_select 0, %s6, %s4
  $region1: #{simple_cnn_forward.5} parent=0
    #allocation2 [shape = 'u8[262144]{0}', space=vmem, size = 0x40000, scoped, tag = 'input window, operand 0']
    #allocation3 [shape = 'u8[131072]{0}', space=vmem, size = 0x20000, scoped, tag = 'output window, operand 0']
    loop: start=0, step=1, limit=6
    $region2: #{simple_cnn_forward.5} parent=1 // loop_pre_header
      _
    $region3: #{simple_cnn_forward.5} parent=1 // loop_header
      %s9 = sphi 0, %s13
      %p10 = scmp.ge.s32.totalorder %s9, 6
      %s16 = sphi 0, %s28
      %s17 = sphi 0, %s24
      %s18 = sphi 0, %s16
      %s19 = sphi 0, %s17
      %s20 = sphi 0, %s18
      %s21 = sphi 0, %s19
      %s33 = sphi 0, %s35
      %s36 = sphi 0, %s33
      %s37 = sphi 0, %s36
      %s53 = sphi 0, %s37
      %s57 = sphi 0, %s57
      %s59 = sphi 0, %s57
      %s60 = sphi 0, %s59
      %s74 = sphi 0, %s60
      %s78 = sphi 0, %s78
      %s80 = sphi 0, %s78
      %s81 = sphi 0, %s80
      %s95 = sphi 0, %s81
      %s103 = sphi 0, %s105
      %s106 = sphi 0, %s103
      %s107 = sphi 0, %s106
      %s123 = sphi 0, %s107
    $region4: #{simple_cnn_forward.5} parent=1 // loop_header_branch
      %12 = sbr.rel (%p10) target = $region8
    $region5: #{simple_cnn_forward.5} parent=1 // loop_body
      %s14 = ssub.s32 %s9, 1
      %s15 = ssub.s32 %s9, 2
      %s22 = sadd.s32 1, %s17
      %p23 = scmp.ge.s32.totalorder %s22, 2
      %s24 = scalar_select %p23, 0, %s22
      %s25 = sadd.s32 1, %s16
      %s26 = scalar_select %p23, %s25, %s16
      %p27 = scmp.ge.s32.totalorder %s26, 2
      %s28 = scalar_select %p27, 0, %s26
      %s29 = ssub.s32 %s16, %s28
      %s30 = ssub.s32 %s17, %s24
      %s31 = sor.u32 %s29, %s30
      %p32 = scmp.eq.s32.totalorder %s31, 0
      %s34 = sadd.s32 %s33, 1
      %s35 = scalar_select %p32, %s33, %s34
      %p38 = pneg %p32
      %p39 = scmp.eq.s32.totalorder %s9, 3
      %p40 = por %p38, %p39
      %p41 = scmp.ne.s32.totalorder %s33, %s36
      %p42 = scmp.eq.s32.totalorder %s9, 0
      %p43 = por %p41, %p42
      %p44 = scmp.ne.s32.totalorder %s33, %s36
      %p45 = scmp.eq.s32.totalorder %s14, 3
      %p46 = por %p44, %p45
      %p47 = scmp.ne.s32.totalorder %s36, %s37
      %p48 = scmp.eq.s32.totalorder %s14, 0
      %p49 = por %p47, %p48
      %p50 = scmp.ne.s32.totalorder %s36, %s37
      %p51 = scmp.eq.s32.totalorder %s15, 3
      %p52 = por %p50, %p51
      %p54 = scmp.ne.s32.totalorder %s37, %s53
      %p55 = scmp.eq.s32.totalorder %s15, 0
      %p56 = por %p54, %p55
      %s58 = sadd.s32 %s57, 1
      %p61 = scmp.eq.s32.totalorder %s9, 3
      %p62 = scmp.ne.s32.totalorder %s57, %s59
      %p63 = scmp.eq.s32.totalorder %s9, 0
      %p64 = por %p62, %p63
      %p65 = scmp.ne.s32.totalorder %s57, %s59
      %p66 = scmp.eq.s32.totalorder %s14, 3
      %p67 = por %p65, %p66
      %p68 = scmp.ne.s32.totalorder %s59, %s60
      %p69 = scmp.eq.s32.totalorder %s14, 0
      %p70 = por %p68, %p69
      %p71 = scmp.ne.s32.totalorder %s59, %s60
      %p72 = scmp.eq.s32.totalorder %s15, 3
      %p73 = por %p71, %p72
      %p75 = scmp.ne.s32.totalorder %s60, %s74
      %p76 = scmp.eq.s32.totalorder %s15, 0
      %p77 = por %p75, %p76
      %s79 = sadd.s32 %s78, 1
      %p82 = scmp.eq.s32.totalorder %s9, 3
      %p83 = scmp.ne.s32.totalorder %s78, %s80
      %p84 = scmp.eq.s32.totalorder %s9, 0
      %p85 = por %p83, %p84
      %p86 = scmp.ne.s32.totalorder %s78, %s80
      %p87 = scmp.eq.s32.totalorder %s14, 3
      %p88 = por %p86, %p87
      %p89 = scmp.ne.s32.totalorder %s80, %s81
      %p90 = scmp.eq.s32.totalorder %s14, 0
      %p91 = por %p89, %p90
      %p92 = scmp.ne.s32.totalorder %s80, %s81
      %p93 = scmp.eq.s32.totalorder %s15, 3
      %p94 = por %p92, %p93
      %p96 = scmp.ne.s32.totalorder %s81, %s95
      %p97 = scmp.eq.s32.totalorder %s15, 0
      %p98 = por %p96, %p97
      %s99 = ssub.s32 %s16, %s28
      %s100 = ssub.s32 %s17, %s24
      %s101 = sor.u32 %s99, %s100
      %p102 = scmp.eq.s32.totalorder %s101, 0
      %s104 = sadd.s32 %s103, 1
      %s105 = scalar_select %p102, %s103, %s104
      %p108 = pneg %p102
      %p109 = scmp.eq.s32.totalorder %s9, 3
      %p110 = por %p108, %p109
      %p111 = scmp.ne.s32.totalorder %s103, %s106
      %p112 = scmp.eq.s32.totalorder %s9, 0
      %p113 = por %p111, %p112
      %p114 = scmp.ne.s32.totalorder %s103, %s106
      %p115 = scmp.eq.s32.totalorder %s14, 3
      %p116 = por %p114, %p115
      %p117 = scmp.ne.s32.totalorder %s106, %s107
      %p118 = scmp.eq.s32.totalorder %s14, 0
      %p119 = por %p117, %p118
      %p120 = scmp.ne.s32.totalorder %s106, %s107
      %p121 = scmp.eq.s32.totalorder %s15, 3
      %p122 = por %p120, %p121
      %p124 = scmp.ne.s32.totalorder %s107, %s123
      %p125 = scmp.eq.s32.totalorder %s15, 0
      %p126 = por %p124, %p125
      %p127 = scmp.le.s32.totalorder 1, %s9
      %p128 = scmp.lt.s32.totalorder %s9, 5
      %p129 = pnand %p127, %p128
      %p130 = pneg %p129
      // Predicated region
      $region9: #{simple_cnn_forward.5} parent=5 // pred_check
        _
      $region10: #{simple_cnn_forward.5} parent=5 // pred_check_branch
        %132 = sbr.rel (%p129) target = $region12
      $region11: #{simple_cnn_forward.5} parent=5 // pred_region
        %s133 = ssub.s32 %s9, 1
        // Predicated region
        $region13: #{simple_cnn_forward.5} parent=11 // pred_check
          %p134 = pneg %p70
        $region14: #{simple_cnn_forward.5} parent=11 // pred_check_branch
          %136 = sbr.rel (%p134) target = $region16
        $region15: #{simple_cnn_forward.5} parent=11 // pred_region
          _
        $region16: #{simple_cnn_forward.5} parent=11 // pred_fallthru
          _
        // Predicated region
        $region17: #{simple_cnn_forward.5} parent=11 // pred_check
          %p137 = pneg %p91
        $region18: #{simple_cnn_forward.5} parent=11 // pred_check_branch
          %139 = sbr.rel (%p137) target = $region20
        $region19: #{simple_cnn_forward.5} parent=11 // pred_region
          _
        $region20: #{simple_cnn_forward.5} parent=11 // pred_fallthru
          _
      $region12: #{simple_cnn_forward.5} parent=5 // pred_fallthru
        _
      %p140 = scmp.lt.s32.totalorder %s9, 4
      // Predicated region
      $region21: #{simple_cnn_forward.5} parent=5 // pred_check
        %p141 = pneg %p140
      $region22: #{simple_cnn_forward.5} parent=5 // pred_check_branch
        %143 = sbr.rel (%p141) target = $region24
      $region23: #{simple_cnn_forward.5} parent=5 // pred_region
        // Predicated region
        $region25: #{simple_cnn_forward.5} parent=23 // pred_check
          %p144 = pneg %p43
        $region26: #{simple_cnn_forward.5} parent=23 // pred_check_branch
          %146 = sbr.rel (%p144) target = $region28
        $region27: #{simple_cnn_forward.5} parent=23 // pred_region
          %s147 = sand.u32 %s33, 1
          %s148 = sand.u32 %s33, 1
          %s149 = smul.addr %s148, 256
          %s150 = scalar_lea.vmem [#allocation2], %s149
          %s151 = smul.u32 16, %s17
          %s152 = smul.addr %s16, 128
          %s153 = sadd.s32 %s151, %s152
          %s154 = smul.addr %s153, 4
          %s155 = scalar_lea.vmem %s0, %s154
          // Predicated region
          $region29: #{simple_cnn_forward.5} parent=27 // pred_check
            _
          $region30: #{simple_cnn_forward.5} parent=27 // pred_check_branch
            %157 = sbr.rel (0) target = $region32
          $region31: #{simple_cnn_forward.5} parent=27 // pred_region
            // Predicated region
            $region33: #{simple_cnn_forward.5} parent=31 // pred_check
              _
            $region34: #{simple_cnn_forward.5} parent=31 // pred_check_branch
              %159 = sbr.rel (0) target = $region36
            $region35: #{simple_cnn_forward.5} parent=31 // pred_region
              loop: start=0, step=1, limit=1
              $region37: #{simple_cnn_forward.5} parent=35 // loop_pre_header
                _
              $region38: #{simple_cnn_forward.5} parent=35 // loop_header
                %s161 = sphi 0, %s165
                %p162 = scmp.ge.s32.totalorder %s161, 1
                %s166 = sphi %s155, %s155
                %s167 = sphi %s150, %s150
              $region39: #{simple_cnn_forward.5} parent=35 // loop_header_branch
                %164 = sbr.rel (%p162) target = $region43
              $region40: #{simple_cnn_forward.5} parent=35 // loop_body
                %v168 = vld [vmem:[%s166] sm:$0xff]
                %169 = vst [vmem:[%s167] sm:$0xff] %v168
                %v170 = vld [vmem:[%s166 + $0x8] sm:$0xff]
                %171 = vst [vmem:[%s167 + $0x8] sm:$0xff] %v170
                %v172 = vld [vmem:[%s166 + $0x10] sm:$0xff]
                %173 = vst [vmem:[%s167 + $0x10] sm:$0xff] %v172
                %v174 = vld [vmem:[%s166 + $0x18] sm:$0xff]
                %175 = vst [vmem:[%s167 + $0x18] sm:$0xff] %v174
                %v176 = vld [vmem:[%s166 + $0x20] sm:$0xff]
                %177 = vst [vmem:[%s167 + $0x20] sm:$0xff] %v176
                %v178 = vld [vmem:[%s166 + $0x28] sm:$0xff]
                %179 = vst [vmem:[%s167 + $0x28] sm:$0xff] %v178
                %v180 = vld [vmem:[%s166 + $0x30] sm:$0xff]
                %181 = vst [vmem:[%s167 + $0x30] sm:$0xff] %v180
                %v182 = vld [vmem:[%s166 + $0x38] sm:$0xff]
                %183 = vst [vmem:[%s167 + $0x38] sm:$0xff] %v182
                %v184 = vld [vmem:[%s166 + $0x80] sm:$0xff]
                %185 = vst [vmem:[%s167 + $0x40] sm:$0xff] %v184
                %v186 = vld [vmem:[%s166 + $0x88] sm:$0xff]
                %187 = vst [vmem:[%s167 + $0x48] sm:$0xff] %v186
                %v188 = vld [vmem:[%s166 + $0x90] sm:$0xff]
                %189 = vst [vmem:[%s167 + $0x50] sm:$0xff] %v188
                %v190 = vld [vmem:[%s166 + $0x98] sm:$0xff]
                %191 = vst [vmem:[%s167 + $0x58] sm:$0xff] %v190
                %v192 = vld [vmem:[%s166 + $0xa0] sm:$0xff]
                %193 = vst [vmem:[%s167 + $0x60] sm:$0xff] %v192
                %v194 = vld [vmem:[%s166 + $0xa8] sm:$0xff]
                %195 = vst [vmem:[%s167 + $0x68] sm:$0xff] %v194
                %v196 = vld [vmem:[%s166 + $0xb0] sm:$0xff]
                %197 = vst [vmem:[%s167 + $0x70] sm:$0xff] %v196
                %v198 = vld [vmem:[%s166 + $0xb8] sm:$0xff]
                %199 = vst [vmem:[%s167 + $0x78] sm:$0xff] %v198
                %v200 = vld [vmem:[%s166 + $0x100] sm:$0xff]
                %201 = vst [vmem:[%s167 + $0x80] sm:$0xff] %v200
                %v202 = vld [vmem:[%s166 + $0x108] sm:$0xff]
                %203 = vst [vmem:[%s167 + $0x88] sm:$0xff] %v202
                %v204 = vld [vmem:[%s166 + $0x110] sm:$0xff]
                %205 = vst [vmem:[%s167 + $0x90] sm:$0xff] %v204
                %v206 = vld [vmem:[%s166 + $0x118] sm:$0xff]
                %207 = vst [vmem:[%s167 + $0x98] sm:$0xff] %v206
                %v208 = vld [vmem:[%s166 + $0x120] sm:$0xff]
                %209 = vst [vmem:[%s167 + $0xa0] sm:$0xff] %v208
                %v210 = vld [vmem:[%s166 + $0x128] sm:$0xff]
                %211 = vst [vmem:[%s167 + $0xa8] sm:$0xff] %v210
                %v212 = vld [vmem:[%s166 + $0x130] sm:$0xff]
                %213 = vst [vmem:[%s167 + $0xb0] sm:$0xff] %v212
                %v214 = vld [vmem:[%s166 + $0x138] sm:$0xff]
                %215 = vst [vmem:[%s167 + $0xb8] sm:$0xff] %v214
                %v216 = vld [vmem:[%s166 + $0x180] sm:$0xff]
                %217 = vst [vmem:[%s167 + $0xc0] sm:$0xff] %v216
                %v218 = vld [vmem:[%s166 + $0x188] sm:$0xff]
                %219 = vst [vmem:[%s167 + $0xc8] sm:$0xff] %v218
                %v220 = vld [vmem:[%s166 + $0x190] sm:$0xff]
                %221 = vst [vmem:[%s167 + $0xd0] sm:$0xff] %v220
                %v222 = vld [vmem:[%s166 + $0x198] sm:$0xff]
                %223 = vst [vmem:[%s167 + $0xd8] sm:$0xff] %v222
                %v224 = vld [vmem:[%s166 + $0x1a0] sm:$0xff]
                %225 = vst [vmem:[%s167 + $0xe0] sm:$0xff] %v224
                %v226 = vld [vmem:[%s166 + $0x1a8] sm:$0xff]
                %227 = vst [vmem:[%s167 + $0xe8] sm:$0xff] %v226
                %v228 = vld [vmem:[%s166 + $0x1b0] sm:$0xff]
                %229 = vst [vmem:[%s167 + $0xf0] sm:$0xff] %v228
                %v230 = vld [vmem:[%s166 + $0x1b8] sm:$0xff]
                %231 = vst [vmem:[%s167 + $0xf8] sm:$0xff] %v230
              $region41: #{simple_cnn_forward.5} parent=35 // loop_footer
                %s165 = sadd.s32 1, %s161
              $region42: #{simple_cnn_forward.5} parent=35 // loop_footer_branch
                %160 = sbr.rel target = $region38
              $region43: #{simple_cnn_forward.5} parent=35 // loop_exit
                _
            $region36: #{simple_cnn_forward.5} parent=31 // pred_fallthru
              _
            // Predicated region
            $region44: #{simple_cnn_forward.5} parent=31 // pred_check
              _
            $region45: #{simple_cnn_forward.5} parent=31 // pred_check_branch
              %233 = sbr.rel target = $region47
            $region46: #{simple_cnn_forward.5} parent=31 // pred_region
              _
            $region47: #{simple_cnn_forward.5} parent=31 // pred_fallthru
              _
          $region32: #{simple_cnn_forward.5} parent=27 // pred_fallthru
            _
          %234 = vnop
        $region28: #{simple_cnn_forward.5} parent=23 // pred_fallthru
          _
      $region24: #{simple_cnn_forward.5} parent=5 // pred_fallthru
        _
      %p235 = scmp.le.s32.totalorder 1, %s9
      %p236 = scmp.lt.s32.totalorder %s9, 5
      %p237 = pnand %p235, %p236
      %p238 = pneg %p237
      // Predicated region
      $region48: #{simple_cnn_forward.5} parent=5 // pred_check
        _
      $region49: #{simple_cnn_forward.5} parent=5 // pred_check_branch
        %240 = sbr.rel (%p237) target = $region51
      $region50: #{simple_cnn_forward.5} parent=5 // pred_region
        %s241 = ssub.s32 %s9, 1
        %s242 = sand.u32 %s36, 1
        %s243 = sand.u32 %s36, 1
        %s244 = smul.addr %s243, 256
        %s245 = scalar_lea.vmem [#allocation2], %s244
        // Predicated region
        $region52: #{simple_cnn_forward.5} parent=50 // pred_check
          %p246 = pneg %p49
        $region53: #{simple_cnn_forward.5} parent=50 // pred_check_branch
          %248 = sbr.rel (%p246) target = $region55
        $region54: #{simple_cnn_forward.5} parent=50 // pred_region
          _
        $region55: #{simple_cnn_forward.5} parent=50 // pred_fallthru
          _
        %s249 = sand.u32 %s36, 1
        %s250 = sand.u32 %s36, 1
        %s251 = smul.addr %s250, 256
        %s252 = scalar_lea.vmem [#allocation2], %s251
        %p253 = pneg %p49
        %p254 = pneg %p46
        %p255 = pneg %p70
        %p256 = pneg %p67
        %p257 = pneg %p91
        %p258 = pneg %p88
        %p259 = pneg %p119
        %p260 = pneg %p116
        %s261 = sand.u32 %s106, 1
        %s262 = sand.u32 %s106, 1
        %s263 = smul.addr %s262, 128
        %s264 = scalar_lea.vmem [#allocation3], %s263
        %s265 = smul.u32 16, %s19
        %s266 = smul.u32 16, %s19
        %v268 = vld [vmem:[%s1] sm:$0xf]
        %v269 = vld [vmem:[%s1 + $0x4] sm:$0xf]
        %v270 = vld [vmem:[%s245] sm:$0xff]
        %v271 = vld [vmem:[%s245 + $0x8] sm:$0xff]
        %v272 = vld [vmem:[%s245 + $0x10] sm:$0xff]
        %v273 = vld [vmem:[%s245 + $0x18] sm:$0xff]
        %v274 = vld [vmem:[%s245 + $0x20] sm:$0xff]
        %v275 = vld [vmem:[%s245 + $0x28] sm:$0xff]
        %v276 = vld [vmem:[%s245 + $0x30] sm:$0xff]
        %v277 = vld [vmem:[%s245 + $0x38] sm:$0xff]
        %v278 = vld [vmem:[%s245 + $0x40] sm:$0xff]
        %v279 = vld [vmem:[%s245 + $0x48] sm:$0xff]
        %v280 = vld [vmem:[%s245 + $0x50] sm:$0xff]
        %v281 = vld [vmem:[%s245 + $0x58] sm:$0xff]
        %v282 = vld [vmem:[%s245 + $0x60] sm:$0xff]
        %v283 = vld [vmem:[%s245 + $0x68] sm:$0xff]
        %v284 = vld [vmem:[%s245 + $0x70] sm:$0xff]
        %v285 = vld [vmem:[%s245 + $0x78] sm:$0xff]
        %v286 = vld [vmem:[%s245 + $0x80] sm:$0xff]
        %v287 = vld [vmem:[%s245 + $0x88] sm:$0xff]
        %v288 = vld [vmem:[%s245 + $0x90] sm:$0xff]
        %v289 = vld [vmem:[%s245 + $0x98] sm:$0xff]
        %v290 = vld [vmem:[%s245 + $0xa0] sm:$0xff]
        %v291 = vld [vmem:[%s245 + $0xa8] sm:$0xff]
        %v292 = vld [vmem:[%s245 + $0xb0] sm:$0xff]
        %v293 = vld [vmem:[%s245 + $0xb8] sm:$0xff]
        %v294 = vld [vmem:[%s245 + $0xc0] sm:$0xff]
        %v295 = vld [vmem:[%s245 + $0xc8] sm:$0xff]
        %v296 = vld [vmem:[%s245 + $0xd0] sm:$0xff]
        %v297 = vld [vmem:[%s245 + $0xd8] sm:$0xff]
        %v298 = vld [vmem:[%s245 + $0xe0] sm:$0xff]
        %v299 = vld [vmem:[%s245 + $0xe8] sm:$0xff]
        %v300 = vld [vmem:[%s245 + $0xf0] sm:$0xff]
        %v301 = vld [vmem:[%s245 + $0xf8] sm:$0xff]
        %v302 = vld [vmem:[%s2] sm:$0xff]
        %v303 = vld [vmem:[%s2 + $0x8] sm:$0xff]
        %305 = vset.pattern.permute.xlu0 0
        %306 = vperm.xlu0 %305, %v302
        %v307 = vpop.permute.xlu0 %306
        %310 = vset.pattern.permute.xlu0 0
        %311 = vperm.xlu0 %310, %v303
        %v312 = vpop.permute.xlu0 %311
        %v316 = vunpack.c.l.b16 %v268
        %v317 = vunpack.c.l.b16 %v269
        %v318 = vpack.c.b16 %v317, %v316
        %v351 = vunpack.c.l.b16 %v270
        %v352 = vunpack.c.h.b16 %v270
        %v353 = vunpack.c.l.b16 %v271
        %v354 = vunpack.c.h.b16 %v271
        %v355 = vunpack.c.l.b16 %v272
        %v356 = vunpack.c.h.b16 %v272
        %v357 = vunpack.c.l.b16 %v273
        %v358 = vunpack.c.h.b16 %v273
        %v359 = vunpack.c.l.b16 %v274
        %v360 = vunpack.c.h.b16 %v274
        %v361 = vunpack.c.l.b16 %v275
        %v362 = vunpack.c.h.b16 %v275
        %v363 = vunpack.c.l.b16 %v276
        %v364 = vunpack.c.h.b16 %v276
        %v365 = vunpack.c.l.b16 %v277
        %v366 = vunpack.c.h.b16 %v277
        %v367 = vunpack.c.l.b16 %v278
        %v368 = vunpack.c.h.b16 %v278
        %v369 = vunpack.c.l.b16 %v279
        %v370 = vunpack.c.h.b16 %v279
        %v371 = vunpack.c.l.b16 %v280
        %v372 = vunpack.c.h.b16 %v280
        %v373 = vunpack.c.l.b16 %v281
        %v374 = vunpack.c.h.b16 %v281
        %v375 = vunpack.c.l.b16 %v282
        %v376 = vunpack.c.h.b16 %v282
        %v377 = vunpack.c.l.b16 %v283
        %v378 = vunpack.c.h.b16 %v283
        %v379 = vunpack.c.l.b16 %v284
        %v380 = vunpack.c.h.b16 %v284
        %v381 = vunpack.c.l.b16 %v285
        %v382 = vunpack.c.h.b16 %v285
        %v383 = vunpack.c.l.b16 %v286
        %v384 = vunpack.c.h.b16 %v286
        %v385 = vunpack.c.l.b16 %v287
        %v386 = vunpack.c.h.b16 %v287
        %v387 = vunpack.c.l.b16 %v288
        %v388 = vunpack.c.h.b16 %v288
        %v389 = vunpack.c.l.b16 %v289
        %v390 = vunpack.c.h.b16 %v289
        %v391 = vunpack.c.l.b16 %v290
        %v392 = vunpack.c.h.b16 %v290
        %v393 = vunpack.c.l.b16 %v291
        %v394 = vunpack.c.h.b16 %v291
        %v395 = vunpack.c.l.b16 %v292
        %v396 = vunpack.c.h.b16 %v292
        %v397 = vunpack.c.l.b16 %v293
        %v398 = vunpack.c.h.b16 %v293
        %v399 = vunpack.c.l.b16 %v294
        %v400 = vunpack.c.h.b16 %v294
        %v401 = vunpack.c.l.b16 %v295
        %v402 = vunpack.c.h.b16 %v295
        %v403 = vunpack.c.l.b16 %v296
        %v404 = vunpack.c.h.b16 %v296
        %v405 = vunpack.c.l.b16 %v297
        %v406 = vunpack.c.h.b16 %v297
        %v407 = vunpack.c.l.b16 %v298
        %v408 = vunpack.c.h.b16 %v298
        %v409 = vunpack.c.l.b16 %v299
        %v410 = vunpack.c.h.b16 %v299
        %v411 = vunpack.c.l.b16 %v300
        %v412 = vunpack.c.h.b16 %v300
        %v413 = vunpack.c.l.b16 %v301
        %v414 = vunpack.c.h.b16 %v301
        %v415 = vpack.c.b16 %v367, %v351
        %v416 = vpack.c.b16 %v368, %v352
        %v417 = vpack.c.b16 %v369, %v353
        %v418 = vpack.c.b16 %v370, %v354
        %v419 = vpack.c.b16 %v371, %v355
        %v420 = vpack.c.b16 %v372, %v356
        %v421 = vpack.c.b16 %v373, %v357
        %v422 = vpack.c.b16 %v374, %v358
        %v423 = vpack.c.b16 %v375, %v359
        %v424 = vpack.c.b16 %v376, %v360
        %v425 = vpack.c.b16 %v377, %v361
        %v426 = vpack.c.b16 %v378, %v362
        %v427 = vpack.c.b16 %v379, %v363
        %v428 = vpack.c.b16 %v380, %v364
        %v429 = vpack.c.b16 %v381, %v365
        %v430 = vpack.c.b16 %v382, %v366
        %v431 = vpack.c.b16 %v399, %v383
        %v432 = vpack.c.b16 %v400, %v384
        %v433 = vpack.c.b16 %v401, %v385
        %v434 = vpack.c.b16 %v402, %v386
        %v435 = vpack.c.b16 %v403, %v387
        %v436 = vpack.c.b16 %v404, %v388
        %v437 = vpack.c.b16 %v405, %v389
        %v438 = vpack.c.b16 %v406, %v390
        %v439 = vpack.c.b16 %v407, %v391
        %v440 = vpack.c.b16 %v408, %v392
        %v441 = vpack.c.b16 %v409, %v393
        %v442 = vpack.c.b16 %v410, %v394
        %v443 = vpack.c.b16 %v411, %v395
        %v444 = vpack.c.b16 %v412, %v396
        %v445 = vpack.c.b16 %v413, %v397
        %v446 = vpack.c.b16 %v414, %v398
        %vm479 = vcmask 261120
        %v481 = vsel %vm479, %v318, 0
        %483 = vmatpush.bf16.msra.mxu0 0
        %484 = vmatpush.bf16.msra.mxu0 0
        %485 = vmatpush.bf16.msra.mxu0 0
        %486 = vmatpush.bf16.msra.mxu0 0
        %487 = vmatpush.bf16.msra.mxu0 0
        %488 = vmatpush.bf16.msra.mxu0 0
        %489 = vmatpush.bf16.msra.mxu0 %v431
        %490 = vmatpush.bf16.msra.mxu0 %v415
        %491 = vmatmul.bf16.gmra.mxu0 %v481
        %v492 = vpop.f32.mrf.mxu0
        %v493 = vadd.f32 %v307, %v492
        %v494 = vpop.f32.mrf.mxu0
        %v495 = vadd.f32 %v312, %v494
        %496 = vdwg.mxu0
        %497 = vmatpush.bf16.msra.mxu0 0
        %498 = vmatpush.bf16.msra.mxu0 0
        %499 = vmatpush.bf16.msra.mxu0 0
        %500 = vmatpush.bf16.msra.mxu0 0
        %501 = vmatpush.bf16.msra.mxu0 0
        %502 = vmatpush.bf16.msra.mxu0 0
        %503 = vmatpush.bf16.msra.mxu0 %v432
        %504 = vmatpush.bf16.msra.mxu0 %v416
        %505 = vmatmul.bf16.gmra.mxu0 %v481
        %v506 = vpop.f32.mrf.mxu0
        %v507 = vadd.f32 %v307, %v506
        %v508 = vpop.f32.mrf.mxu0
        %v509 = vadd.f32 %v312, %v508
        %510 = vdwg.mxu0
        %511 = vmatpush.bf16.msra.mxu0 0
        %512 = vmatpush.bf16.msra.mxu0 0
        %513 = vmatpush.bf16.msra.mxu0 0
        %514 = vmatpush.bf16.msra.mxu0 0
        %515 = vmatpush.bf16.msra.mxu0 0
        %516 = vmatpush.bf16.msra.mxu0 0
        %517 = vmatpush.bf16.msra.mxu0 %v433
        %518 = vmatpush.bf16.msra.mxu0 %v417
        %519 = vmatmul.bf16.gmra.mxu0 %v481
        %v520 = vpop.f32.mrf.mxu0
        %v521 = vadd.f32 %v307, %v520
        %v522 = vpop.f32.mrf.mxu0
        %v523 = vadd.f32 %v312, %v522
        %524 = vdwg.mxu0
        %525 = vmatpush.bf16.msra.mxu0 0
        %526 = vmatpush.bf16.msra.mxu0 0
        %527 = vmatpush.bf16.msra.mxu0 0
        %528 = vmatpush.bf16.msra.mxu0 0
        %529 = vmatpush.bf16.msra.mxu0 0
        %530 = vmatpush.bf16.msra.mxu0 0
        %531 = vmatpush.bf16.msra.mxu0 %v434
        %532 = vmatpush.bf16.msra.mxu0 %v418
        %533 = vmatmul.bf16.gmra.mxu0 %v481
        %v534 = vpop.f32.mrf.mxu0
        %v535 = vadd.f32 %v307, %v534
        %v536 = vpop.f32.mrf.mxu0
        %v537 = vadd.f32 %v312, %v536
        %538 = vdwg.mxu0
        %539 = vmatpush.bf16.msra.mxu0 0
        %540 = vmatpush.bf16.msra.mxu0 0
        %541 = vmatpush.bf16.msra.mxu0 0
        %542 = vmatpush.bf16.msra.mxu0 0
        %543 = vmatpush.bf16.msra.mxu0 0
        %544 = vmatpush.bf16.msra.mxu0 0
        %545 = vmatpush.bf16.msra.mxu0 %v435
        %546 = vmatpush.bf16.msra.mxu0 %v419
        %547 = vmatmul.bf16.gmra.mxu0 %v481
        %v548 = vpop.f32.mrf.mxu0
        %v549 = vadd.f32 %v307, %v548
        %v550 = vpop.f32.mrf.mxu0
        %v551 = vadd.f32 %v312, %v550
        %552 = vdwg.mxu0
        %553 = vmatpush.bf16.msra.mxu0 0
        %554 = vmatpush.bf16.msra.mxu0 0
        %555 = vmatpush.bf16.msra.mxu0 0
        %556 = vmatpush.bf16.msra.mxu0 0
        %557 = vmatpush.bf16.msra.mxu0 0
        %558 = vmatpush.bf16.msra.mxu0 0
        %559 = vmatpush.bf16.msra.mxu0 %v436
        %560 = vmatpush.bf16.msra.mxu0 %v420
        %561 = vmatmul.bf16.gmra.mxu0 %v481
        %v562 = vpop.f32.mrf.mxu0
        %v563 = vadd.f32 %v307, %v562
        %v564 = vpop.f32.mrf.mxu0
        %v565 = vadd.f32 %v312, %v564
        %566 = vdwg.mxu0
        %567 = vmatpush.bf16.msra.mxu0 0
        %568 = vmatpush.bf16.msra.mxu0 0
        %569 = vmatpush.bf16.msra.mxu0 0
        %570 = vmatpush.bf16.msra.mxu0 0
        %571 = vmatpush.bf16.msra.mxu0 0
        %572 = vmatpush.bf16.msra.mxu0 0
        %573 = vmatpush.bf16.msra.mxu0 %v437
        %574 = vmatpush.bf16.msra.mxu0 %v421
        %575 = vmatmul.bf16.gmra.mxu0 %v481
        %v576 = vpop.f32.mrf.mxu0
        %v577 = vadd.f32 %v307, %v576
        %v578 = vpop.f32.mrf.mxu0
        %v579 = vadd.f32 %v312, %v578
        %580 = vdwg.mxu0
        %581 = vmatpush.bf16.msra.mxu0 0
        %582 = vmatpush.bf16.msra.mxu0 0
        %583 = vmatpush.bf16.msra.mxu0 0
        %584 = vmatpush.bf16.msra.mxu0 0
        %585 = vmatpush.bf16.msra.mxu0 0
        %586 = vmatpush.bf16.msra.mxu0 0
        %587 = vmatpush.bf16.msra.mxu0 %v438
        %588 = vmatpush.bf16.msra.mxu0 %v422
        %589 = vmatmul.bf16.gmra.mxu0 %v481
        %v590 = vpop.f32.mrf.mxu0
        %v591 = vadd.f32 %v307, %v590
        %v592 = vpop.f32.mrf.mxu0
        %v593 = vadd.f32 %v312, %v592
        %594 = vdwg.mxu0
        %595 = vmatpush.bf16.msra.mxu0 0
        %596 = vmatpush.bf16.msra.mxu0 0
        %597 = vmatpush.bf16.msra.mxu0 0
        %598 = vmatpush.bf16.msra.mxu0 0
        %599 = vmatpush.bf16.msra.mxu0 0
        %600 = vmatpush.bf16.msra.mxu0 0
        %601 = vmatpush.bf16.msra.mxu0 %v439
        %602 = vmatpush.bf16.msra.mxu0 %v423
        %603 = vmatmul.bf16.gmra.mxu0 %v481
        %v604 = vpop.f32.mrf.mxu0
        %v605 = vadd.f32 %v307, %v604
        %v606 = vpop.f32.mrf.mxu0
        %v607 = vadd.f32 %v312, %v606
        %608 = vdwg.mxu0
        %609 = vmatpush.bf16.msra.mxu0 0
        %610 = vmatpush.bf16.msra.mxu0 0
        %611 = vmatpush.bf16.msra.mxu0 0
        %612 = vmatpush.bf16.msra.mxu0 0
        %613 = vmatpush.bf16.msra.mxu0 0
        %614 = vmatpush.bf16.msra.mxu0 0
        %615 = vmatpush.bf16.msra.mxu0 %v440
        %616 = vmatpush.bf16.msra.mxu0 %v424
        %617 = vmatmul.bf16.gmra.mxu0 %v481
        %v618 = vpop.f32.mrf.mxu0
        %v619 = vadd.f32 %v307, %v618
        %v620 = vpop.f32.mrf.mxu0
        %v621 = vadd.f32 %v312, %v620
        %622 = vdwg.mxu0
        %623 = vmatpush.bf16.msra.mxu0 0
        %624 = vmatpush.bf16.msra.mxu0 0
        %625 = vmatpush.bf16.msra.mxu0 0
        %626 = vmatpush.bf16.msra.mxu0 0
        %627 = vmatpush.bf16.msra.mxu0 0
        %628 = vmatpush.bf16.msra.mxu0 0
        %629 = vmatpush.bf16.msra.mxu0 %v441
        %630 = vmatpush.bf16.msra.mxu0 %v425
        %631 = vmatmul.bf16.gmra.mxu0 %v481
        %v632 = vpop.f32.mrf.mxu0
        %v633 = vadd.f32 %v307, %v632
        %v634 = vpop.f32.mrf.mxu0
        %v635 = vadd.f32 %v312, %v634
        %636 = vdwg.mxu0
        %637 = vmatpush.bf16.msra.mxu0 0
        %638 = vmatpush.bf16.msra.mxu0 0
        %639 = vmatpush.bf16.msra.mxu0 0
        %640 = vmatpush.bf16.msra.mxu0 0
        %641 = vmatpush.bf16.msra.mxu0 0
        %642 = vmatpush.bf16.msra.mxu0 0
        %643 = vmatpush.bf16.msra.mxu0 %v442
        %644 = vmatpush.bf16.msra.mxu0 %v426
        %645 = vmatmul.bf16.gmra.mxu0 %v481
        %v646 = vpop.f32.mrf.mxu0
        %v647 = vadd.f32 %v307, %v646
        %v648 = vpop.f32.mrf.mxu0
        %v649 = vadd.f32 %v312, %v648
        %650 = vdwg.mxu0
        %651 = vmatpush.bf16.msra.mxu0 0
        %652 = vmatpush.bf16.msra.mxu0 0
        %653 = vmatpush.bf16.msra.mxu0 0
        %654 = vmatpush.bf16.msra.mxu0 0
        %655 = vmatpush.bf16.msra.mxu0 0
        %656 = vmatpush.bf16.msra.mxu0 0
        %657 = vmatpush.bf16.msra.mxu0 %v443
        %658 = vmatpush.bf16.msra.mxu0 %v427
        %659 = vmatmul.bf16.gmra.mxu0 %v481
        %v660 = vpop.f32.mrf.mxu0
        %v661 = vadd.f32 %v307, %v660
        %v662 = vpop.f32.mrf.mxu0
        %v663 = vadd.f32 %v312, %v662
        %664 = vdwg.mxu0
        %665 = vmatpush.bf16.msra.mxu0 0
        %666 = vmatpush.bf16.msra.mxu0 0
        %667 = vmatpush.bf16.msra.mxu0 0
        %668 = vmatpush.bf16.msra.mxu0 0
        %669 = vmatpush.bf16.msra.mxu0 0
        %670 = vmatpush.bf16.msra.mxu0 0
        %671 = vmatpush.bf16.msra.mxu0 %v444
        %672 = vmatpush.bf16.msra.mxu0 %v428
        %673 = vmatmul.bf16.gmra.mxu0 %v481
        %v674 = vpop.f32.mrf.mxu0
        %v675 = vadd.f32 %v307, %v674
        %v676 = vpop.f32.mrf.mxu0
        %v677 = vadd.f32 %v312, %v676
        %678 = vdwg.mxu0
        %679 = vmatpush.bf16.msra.mxu0 0
        %680 = vmatpush.bf16.msra.mxu0 0
        %681 = vmatpush.bf16.msra.mxu0 0
        %682 = vmatpush.bf16.msra.mxu0 0
        %683 = vmatpush.bf16.msra.mxu0 0
        %684 = vmatpush.bf16.msra.mxu0 0
        %685 = vmatpush.bf16.msra.mxu0 %v445
        %686 = vmatpush.bf16.msra.mxu0 %v429
        %687 = vmatmul.bf16.gmra.mxu0 %v481
        %v688 = vpop.f32.mrf.mxu0
        %v689 = vadd.f32 %v307, %v688
        %v690 = vpop.f32.mrf.mxu0
        %v691 = vadd.f32 %v312, %v690
        %692 = vdwg.mxu0
        %693 = vmatpush.bf16.msra.mxu0 0
        %694 = vmatpush.bf16.msra.mxu0 0
        %695 = vmatpush.bf16.msra.mxu0 0
        %696 = vmatpush.bf16.msra.mxu0 0
        %697 = vmatpush.bf16.msra.mxu0 0
        %698 = vmatpush.bf16.msra.mxu0 0
        %699 = vmatpush.bf16.msra.mxu0 %v446
        %700 = vmatpush.bf16.msra.mxu0 %v430
        %701 = vmatmul.bf16.gmra.mxu0 %v481
        %v702 = vpop.f32.mrf.mxu0
        %v703 = vadd.f32 %v307, %v702
        %v704 = vpop.f32.mrf.mxu0
        %v705 = vadd.f32 %v312, %v704
        %706 = vdwg.mxu0
        %v707 = vmax.f32 %v493, 0.0
        %v708 = vmax.f32 %v507, 0.0
        %v709 = vmax.f32 %v521, 0.0
        %v710 = vmax.f32 %v535, 0.0
        %v711 = vmax.f32 %v549, 0.0
        %v712 = vmax.f32 %v563, 0.0
        %v713 = vmax.f32 %v577, 0.0
        %v714 = vmax.f32 %v591, 0.0
        %v715 = vmax.f32 %v605, 0.0
        %v716 = vmax.f32 %v619, 0.0
        %v717 = vmax.f32 %v633, 0.0
        %v718 = vmax.f32 %v647, 0.0
        %v719 = vmax.f32 %v661, 0.0
        %v720 = vmax.f32 %v675, 0.0
        %v721 = vmax.f32 %v689, 0.0
        %v722 = vmax.f32 %v703, 0.0
        %v723 = vmax.f32 %v495, 0.0
        %v724 = vmax.f32 %v509, 0.0
        %v725 = vmax.f32 %v523, 0.0
        %v726 = vmax.f32 %v537, 0.0
        %v727 = vmax.f32 %v551, 0.0
        %v728 = vmax.f32 %v565, 0.0
        %v729 = vmax.f32 %v579, 0.0
        %v730 = vmax.f32 %v593, 0.0
        %v731 = vmax.f32 %v607, 0.0
        %v732 = vmax.f32 %v621, 0.0
        %v733 = vmax.f32 %v635, 0.0
        %v734 = vmax.f32 %v649, 0.0
        %v735 = vmax.f32 %v663, 0.0
        %v736 = vmax.f32 %v677, 0.0
        %v737 = vmax.f32 %v691, 0.0
        %v738 = vmax.f32 %v705, 0.0
        %v739 = vpack.c.bf16 %v708, %v707
        %v740 = vpack.c.bf16 %v710, %v709
        %v741 = vpack.c.bf16 %v712, %v711
        %v742 = vpack.c.bf16 %v714, %v713
        %v743 = vpack.c.bf16 %v716, %v715
        %v744 = vpack.c.bf16 %v718, %v717
        %v745 = vpack.c.bf16 %v720, %v719
        %v746 = vpack.c.bf16 %v722, %v721
        %v747 = vpack.c.bf16 %v724, %v723
        %v748 = vpack.c.bf16 %v726, %v725
        %v749 = vpack.c.bf16 %v728, %v727
        %v750 = vpack.c.bf16 %v730, %v729
        %v751 = vpack.c.bf16 %v732, %v731
        %v752 = vpack.c.bf16 %v734, %v733
        %v753 = vpack.c.bf16 %v736, %v735
        %v754 = vpack.c.bf16 %v738, %v737
        %755 = vst [vmem:[%s264] sm:$0xff] %v739
        %756 = vst [vmem:[%s264 + $0x8] sm:$0xff] %v740
        %757 = vst [vmem:[%s264 + $0x10] sm:$0xff] %v741
        %758 = vst [vmem:[%s264 + $0x18] sm:$0xff] %v742
        %759 = vst [vmem:[%s264 + $0x20] sm:$0xff] %v743
        %760 = vst [vmem:[%s264 + $0x28] sm:$0xff] %v744
        %761 = vst [vmem:[%s264 + $0x30] sm:$0xff] %v745
        %762 = vst [vmem:[%s264 + $0x38] sm:$0xff] %v746
        %763 = vst [vmem:[%s264 + $0x40] sm:$0xff] %v747
        %764 = vst [vmem:[%s264 + $0x48] sm:$0xff] %v748
        %765 = vst [vmem:[%s264 + $0x50] sm:$0xff] %v749
        %766 = vst [vmem:[%s264 + $0x58] sm:$0xff] %v750
        %767 = vst [vmem:[%s264 + $0x60] sm:$0xff] %v751
        %768 = vst [vmem:[%s264 + $0x68] sm:$0xff] %v752
        %769 = vst [vmem:[%s264 + $0x70] sm:$0xff] %v753
        %770 = vst [vmem:[%s264 + $0x78] sm:$0xff] %v754
        %s771 = sand.u32 %s106, 1
        %s772 = sand.u32 %s106, 1
        %s773 = smul.addr %s772, 128
        %s774 = scalar_lea.vmem [#allocation3], %s773
        // Predicated region
        $region56: #{simple_cnn_forward.5} parent=50 // pred_check
          %p775 = pneg %p116
        $region57: #{simple_cnn_forward.5} parent=50 // pred_check_branch
          %777 = sbr.rel (%p775) target = $region59
        $region58: #{simple_cnn_forward.5} parent=50 // pred_region
          %s778 = smul.u32 16, %s19
          %s779 = smul.addr %s18, 64
          %s780 = sadd.s32 %s778, %s779
          %s781 = smul.addr %s780, 4
          %s782 = scalar_lea.vmem %s3, %s781
          // Predicated region
          $region60: #{simple_cnn_forward.5} parent=58 // pred_check
            _
          $region61: #{simple_cnn_forward.5} parent=58 // pred_check_branch
            %784 = sbr.rel (0) target = $region63
          $region62: #{simple_cnn_forward.5} parent=58 // pred_region
            // Predicated region
            $region64: #{simple_cnn_forward.5} parent=62 // pred_check
              _
            $region65: #{simple_cnn_forward.5} parent=62 // pred_check_branch
              %786 = sbr.rel (0) target = $region67
            $region66: #{simple_cnn_forward.5} parent=62 // pred_region
              loop: start=0, step=1, limit=1
              $region68: #{simple_cnn_forward.5} parent=66 // loop_pre_header
                _
              $region69: #{simple_cnn_forward.5} parent=66 // loop_header
                %s788 = sphi 0, %s792
                %p789 = scmp.ge.s32.totalorder %s788, 1
                %s793 = sphi %s774, %s774
                %s794 = sphi %s782, %s782
              $region70: #{simple_cnn_forward.5} parent=66 // loop_header_branch
                %791 = sbr.rel (%p789) target = $region74
              $region71: #{simple_cnn_forward.5} parent=66 // loop_body
                %v795 = vld [vmem:[%s793] sm:$0xff]
                %796 = vst [vmem:[%s794] sm:$0xff] %v795
                %v797 = vld [vmem:[%s793 + $0x8] sm:$0xff]
                %798 = vst [vmem:[%s794 + $0x8] sm:$0xff] %v797
                %v799 = vld [vmem:[%s793 + $0x10] sm:$0xff]
                %800 = vst [vmem:[%s794 + $0x10] sm:$0xff] %v799
                %v801 = vld [vmem:[%s793 + $0x18] sm:$0xff]
                %802 = vst [vmem:[%s794 + $0x18] sm:$0xff] %v801
                %v803 = vld [vmem:[%s793 + $0x20] sm:$0xff]
                %804 = vst [vmem:[%s794 + $0x20] sm:$0xff] %v803
                %v805 = vld [vmem:[%s793 + $0x28] sm:$0xff]
                %806 = vst [vmem:[%s794 + $0x28] sm:$0xff] %v805
                %v807 = vld [vmem:[%s793 + $0x30] sm:$0xff]
                %808 = vst [vmem:[%s794 + $0x30] sm:$0xff] %v807
                %v809 = vld [vmem:[%s793 + $0x38] sm:$0xff]
                %810 = vst [vmem:[%s794 + $0x38] sm:$0xff] %v809
                %v811 = vld [vmem:[%s793 + $0x40] sm:$0xff]
                %812 = vst [vmem:[%s794 + $0x80] sm:$0xff] %v811
                %v813 = vld [vmem:[%s793 + $0x48] sm:$0xff]
                %814 = vst [vmem:[%s794 + $0x88] sm:$0xff] %v813
                %v815 = vld [vmem:[%s793 + $0x50] sm:$0xff]
                %816 = vst [vmem:[%s794 + $0x90] sm:$0xff] %v815
                %v817 = vld [vmem:[%s793 + $0x58] sm:$0xff]
                %818 = vst [vmem:[%s794 + $0x98] sm:$0xff] %v817
                %v819 = vld [vmem:[%s793 + $0x60] sm:$0xff]
                %820 = vst [vmem:[%s794 + $0xa0] sm:$0xff] %v819
                %v821 = vld [vmem:[%s793 + $0x68] sm:$0xff]
                %822 = vst [vmem:[%s794 + $0xa8] sm:$0xff] %v821
                %v823 = vld [vmem:[%s793 + $0x70] sm:$0xff]
                %824 = vst [vmem:[%s794 + $0xb0] sm:$0xff] %v823
                %v825 = vld [vmem:[%s793 + $0x78] sm:$0xff]
                %826 = vst [vmem:[%s794 + $0xb8] sm:$0xff] %v825
              $region72: #{simple_cnn_forward.5} parent=66 // loop_footer
                %s792 = sadd.s32 1, %s788
              $region73: #{simple_cnn_forward.5} parent=66 // loop_footer_branch
                %787 = sbr.rel target = $region69
              $region74: #{simple_cnn_forward.5} parent=66 // loop_exit
                _
            $region67: #{simple_cnn_forward.5} parent=62 // pred_fallthru
              _
            // Predicated region
            $region75: #{simple_cnn_forward.5} parent=62 // pred_check
              _
            $region76: #{simple_cnn_forward.5} parent=62 // pred_check_branch
              %828 = sbr.rel target = $region78
            $region77: #{simple_cnn_forward.5} parent=62 // pred_region
              _
            $region78: #{simple_cnn_forward.5} parent=62 // pred_fallthru
              _
          $region63: #{simple_cnn_forward.5} parent=58 // pred_fallthru
            _
          %829 = vnop
        $region59: #{simple_cnn_forward.5} parent=50 // pred_fallthru
          _
      $region51: #{simple_cnn_forward.5} parent=5 // pred_fallthru
        _
      %p830 = scmp.le.s32.totalorder 2, %s9
      // Predicated region
      $region79: #{simple_cnn_forward.5} parent=5 // pred_check
        %p831 = pneg %p830
      $region80: #{simple_cnn_forward.5} parent=5 // pred_check_branch
        %833 = sbr.rel (%p831) target = $region82
      $region81: #{simple_cnn_forward.5} parent=5 // pred_region
        %s834 = ssub.s32 %s9, 2
        // Predicated region
        $region83: #{simple_cnn_forward.5} parent=81 // pred_check
          %p835 = pneg %p122
        $region84: #{simple_cnn_forward.5} parent=81 // pred_check_branch
          %837 = sbr.rel (%p835) target = $region86
        $region85: #{simple_cnn_forward.5} parent=81 // pred_region
          %s838 = sand.u32 %s107, 1
          %s839 = sand.u32 %s107, 1
          %s840 = smul.addr %s839, 128
          %s841 = scalar_lea.vmem [#allocation3], %s840
        $region86: #{simple_cnn_forward.5} parent=81 // pred_fallthru
          _
      $region82: #{simple_cnn_forward.5} parent=5 // pred_fallthru
        _
    $region6: #{simple_cnn_forward.5} parent=1 // loop_footer
      %s13 = sadd.s32 1, %s9
    $region7: #{simple_cnn_forward.5} parent=1 // loop_footer_branch
      %8 = sbr.rel target = $region3
    $region8: #{simple_cnn_forward.5} parent=1 // loop_exit
      _

// kernel: simple_cnn_forward.6
$region0: #{simple_cnn_forward.6}
  #allocation0 [shape = 'u32[]', space=smem, size = 0x4, offset = 0x4, fixed_abs, tag = 'smem constant byte address 0x4 - core index']
  #allocation1 [shape = 'u32[72,128]{1,0:T(1,128)}', space=vmem, size = 0x9000, scoped, tag = 'internal scratch']
  %s0 = inlined_call_operand.vmem [shape: bf16[2,512,128], index: 0, kind: input, shape index: {}]
  %s1 = inlined_call_operand.vmem [shape: bf16[2,512,32], index: 1, kind: output, shape index: {}]
  %s2 = sld [smem:[#allocation0]]
  $region37: #{simple_cnn_forward.6} parent=0
    _
  %s4 = ssub.s32 1, %s2
  %s5 = scalar_select 0, %s4, %s2
  loop: start=0, step=1, limit=6
  $region2: #{simple_cnn_forward.6} parent=0 // loop_pre_header
    _
  $region3: #{simple_cnn_forward.6} parent=0 // loop_header
    %s7 = sphi 0, %s11
    %p8 = scmp.ge.s32.totalorder %s7, 6
    %s14 = sphi 0, %s26
    %s15 = sphi 0, %s22
    %s16 = sphi 0, %s14
    %s17 = sphi 0, %s15
    %s18 = sphi 0, %s16
    %s19 = sphi 0, %s17
    %s31 = sphi 0, %s33
    %s34 = sphi 0, %s31
    %s35 = sphi 0, %s34
    %s51 = sphi 0, %s35
    %s59 = sphi 0, %s61
    %s62 = sphi 0, %s59
    %s63 = sphi 0, %s62
    %s79 = sphi 0, %s63
  $region4: #{simple_cnn_forward.6} parent=0 // loop_header_branch
    %10 = sbr.rel (%p8) target = $region8
  $region5: #{simple_cnn_forward.6} parent=0 // loop_body
    %s12 = ssub.s32 %s7, 1
    %s13 = ssub.s32 %s7, 2
    %s20 = sadd.s32 1, %s15
    %p21 = scmp.ge.s32.totalorder %s20, 2
    %s22 = scalar_select %p21, 0, %s20
    %s23 = sadd.s32 1, %s14
    %s24 = scalar_select %p21, %s23, %s14
    %p25 = scmp.ge.s32.totalorder %s24, 2
    %s26 = scalar_select %p25, 0, %s24
    %s27 = ssub.s32 %s14, %s26
    %s28 = ssub.s32 %s15, %s22
    %s29 = sor.u32 %s27, %s28
    %p30 = scmp.eq.s32.totalorder %s29, 0
    %s32 = sadd.s32 %s31, 1
    %s33 = scalar_select %p30, %s31, %s32
    %p36 = pneg %p30
    %p37 = scmp.eq.s32.totalorder %s7, 3
    %p38 = por %p36, %p37
    %p39 = scmp.ne.s32.totalorder %s31, %s34
    %p40 = scmp.eq.s32.totalorder %s7, 0
    %p41 = por %p39, %p40
    %p42 = scmp.ne.s32.totalorder %s31, %s34
    %p43 = scmp.eq.s32.totalorder %s12, 3
    %p44 = por %p42, %p43
    %p45 = scmp.ne.s32.totalorder %s34, %s35
    %p46 = scmp.eq.s32.totalorder %s12, 0
    %p47 = por %p45, %p46
    %p48 = scmp.ne.s32.totalorder %s34, %s35
    %p49 = scmp.eq.s32.totalorder %s13, 3
    %p50 = por %p48, %p49
    %p52 = scmp.ne.s32.totalorder %s35, %s51
    %p53 = scmp.eq.s32.totalorder %s13, 0
    %p54 = por %p52, %p53
    %s55 = ssub.s32 %s14, %s26
    %s56 = ssub.s32 %s15, %s22
    %s57 = sor.u32 %s55, %s56
    %p58 = scmp.eq.s32.totalorder %s57, 0
    %s60 = sadd.s32 %s59, 1
    %s61 = scalar_select %p58, %s59, %s60
    %p64 = pneg %p58
    %p65 = scmp.eq.s32.totalorder %s7, 3
    %p66 = por %p64, %p65
    %p67 = scmp.ne.s32.totalorder %s59, %s62
    %p68 = scmp.eq.s32.totalorder %s7, 0
    %p69 = por %p67, %p68
    %p70 = scmp.ne.s32.totalorder %s59, %s62
    %p71 = scmp.eq.s32.totalorder %s12, 3
    %p72 = por %p70, %p71
    %p73 = scmp.ne.s32.totalorder %s62, %s63
    %p74 = scmp.eq.s32.totalorder %s12, 0
    %p75 = por %p73, %p74
    %p76 = scmp.ne.s32.totalorder %s62, %s63
    %p77 = scmp.eq.s32.totalorder %s13, 3
    %p78 = por %p76, %p77
    %p80 = scmp.ne.s32.totalorder %s63, %s79
    %p81 = scmp.eq.s32.totalorder %s13, 0
    %p82 = por %p80, %p81
    %p83 = scmp.le.s32.totalorder 1, %s7
    %p84 = scmp.lt.s32.totalorder %s7, 5
    %p85 = pnand %p83, %p84
    %p86 = pneg %p85
    // Predicated region
    $region9: #{simple_cnn_forward.6} parent=5 // pred_check
      _
    $region10: #{simple_cnn_forward.6} parent=5 // pred_check_branch
      %88 = sbr.rel (%p85) target = $region12
    $region11: #{simple_cnn_forward.6} parent=5 // pred_region
      %s89 = ssub.s32 %s7, 1
    $region12: #{simple_cnn_forward.6} parent=5 // pred_fallthru
      _
    %p90 = scmp.lt.s32.totalorder %s7, 4
    // Predicated region
    $region13: #{simple_cnn_forward.6} parent=5 // pred_check
      %p91 = pneg %p90
    $region14: #{simple_cnn_forward.6} parent=5 // pred_check_branch
      %93 = sbr.rel (%p91) target = $region16
    $region15: #{simple_cnn_forward.6} parent=5 // pred_region
      // Predicated region
      $region17: #{simple_cnn_forward.6} parent=15 // pred_check
        %p94 = pneg %p41
      $region18: #{simple_cnn_forward.6} parent=15 // pred_check_branch
        %96 = sbr.rel (%p94) target = $region20
      $region19: #{simple_cnn_forward.6} parent=15 // pred_region
        %s97 = smul.u32 32, %s15
        %p98 = scmp.lt.s32.totalorder %s14, 1
        %s99 = scalar_select %p98, %s14, 1
        %p100 = scmp.lt.s32.totalorder %s97, 63
        %s101 = scalar_select %p100, %s97, 63
        %s102 = smul.addr %s99, 64
        %s103 = sadd.s32 %s101, %s102
        %s104 = smul.addr %s103, 4
        %s105 = scalar_lea.vmem %s0, %s104
        %s106 = smul.u32 32, %s15
      $region20: #{simple_cnn_forward.6} parent=15 // pred_fallthru
        _
    $region16: #{simple_cnn_forward.6} parent=5 // pred_fallthru
      _
    %p107 = scmp.le.s32.totalorder 1, %s7
    %p108 = scmp.lt.s32.totalorder %s7, 5
    %p109 = pnand %p107, %p108
    %p110 = pneg %p109
    // Predicated region
    $region21: #{simple_cnn_forward.6} parent=5 // pred_check
      _
    $region22: #{simple_cnn_forward.6} parent=5 // pred_check_branch
      %112 = sbr.rel (%p109) target = $region24
    $region23: #{simple_cnn_forward.6} parent=5 // pred_region
      %s113 = ssub.s32 %s7, 1
      %s114 = smul.u32 32, %s17
      %p115 = scmp.lt.s32.totalorder %s16, 1
      %s116 = scalar_select %p115, %s16, 1
      %p117 = scmp.lt.s32.totalorder %s114, 63
      %s118 = scalar_select %p117, %s114, 63
      %s119 = smul.addr %s116, 64
      %s120 = sadd.s32 %s118, %s119
      %s121 = smul.addr %s120, 4
      %s122 = scalar_lea.vmem %s0, %s121
      %p123 = pneg %p47
      %p124 = pneg %p44
      %p125 = pneg %p75
      %p126 = pneg %p72
      %s127 = smul.u32 32, %s17
      %p128 = scmp.lt.s32.totalorder %s16, 1
      %s129 = scalar_select %p128, %s16, 1
      %p130 = scmp.lt.s32.totalorder %s127, 63
      %s131 = scalar_select %p130, %s127, 63
      %s132 = smul.addr %s129, 64
      %s133 = sadd.s32 %s131, %s132
      %s134 = smul.addr %s133, 4
      %s135 = scalar_lea.vmem %s1, %s134
      %s136 = smul.u32 32, %s17
      %p137 = scmp.lt.s32.totalorder %s16, 1
      %s138 = scalar_select %p137, %s16, 1
      %p139 = scmp.lt.s32.totalorder %s136, 63
      %s140 = scalar_select %p139, %s136, 63
      %s141 = smul.addr %s138, 64
      %s142 = sadd.s32 %s140, %s141
      %s143 = smul.addr %s142, 4
      %s144 = scalar_lea.vmem %s0, %s143
      %s145 = smul.u32 32, %s17
      %s146 = smul.u32 32, %s17
      %p147 = scmp.lt.s32.totalorder %s16, 1
      %s148 = scalar_select %p147, %s16, 1
      %p149 = scmp.lt.s32.totalorder %s146, 63
      %s150 = scalar_select %p149, %s146, 63
      %s151 = smul.addr %s148, 64
      %s152 = sadd.s32 %s150, %s151
      %s153 = smul.addr %s152, 4
      %s154 = scalar_lea.vmem %s1, %s153
      %s155 = smul.u32 32, %s17
      %v156 = vld [vmem:[%s144] sm:$0xf]
      %v157 = vld [vmem:[%s144 + $0x4] sm:$0xf]
      %v158 = vld [vmem:[%s144 + $0x8] sm:$0xf]
      %v159 = vld [vmem:[%s144 + $0xc] sm:$0xf]
      %v160 = vld [vmem:[%s144 + $0x10] sm:$0xf]
      %v161 = vld [vmem:[%s144 + $0x14] sm:$0xf]
      %v162 = vld [vmem:[%s144 + $0x18] sm:$0xf]
      %v163 = vld [vmem:[%s144 + $0x1c] sm:$0xf]
      %v164 = vld [vmem:[%s144 + $0x20] sm:$0xf]
      %v165 = vld [vmem:[%s144 + $0x24] sm:$0xf]
      %v166 = vld [vmem:[%s144 + $0x28] sm:$0xf]
      %v167 = vld [vmem:[%s144 + $0x2c] sm:$0xf]
      %v168 = vld [vmem:[%s144 + $0x30] sm:$0xf]
      %v169 = vld [vmem:[%s144 + $0x34] sm:$0xf]
      %v170 = vld [vmem:[%s144 + $0x38] sm:$0xf]
      %v171 = vld [vmem:[%s144 + $0x3c] sm:$0xf]
      %v172 = vld [vmem:[%s144 + $0x40] sm:$0xf]
      %v173 = vld [vmem:[%s144 + $0x44] sm:$0xf]
      %v174 = vld [vmem:[%s144 + $0x48] sm:$0xf]
      %v175 = vld [vmem:[%s144 + $0x4c] sm:$0xf]
      %v176 = vld [vmem:[%s144 + $0x50] sm:$0xf]
      %v177 = vld [vmem:[%s144 + $0x54] sm:$0xf]
      %v178 = vld [vmem:[%s144 + $0x58] sm:$0xf]
      %v179 = vld [vmem:[%s144 + $0x5c] sm:$0xf]
      %v180 = vld [vmem:[%s144 + $0x60] sm:$0xf]
      %v181 = vld [vmem:[%s144 + $0x64] sm:$0xf]
      %v182 = vld [vmem:[%s144 + $0x68] sm:$0xf]
      %v183 = vld [vmem:[%s144 + $0x6c] sm:$0xf]
      %v184 = vld [vmem:[%s144 + $0x70] sm:$0xf]
      %v185 = vld [vmem:[%s144 + $0x74] sm:$0xf]
      %v186 = vld [vmem:[%s144 + $0x78] sm:$0xf]
      %v187 = vld [vmem:[%s144 + $0x7c] sm:$0xf]
      %v188 = vunpack.c.l.bf16 %v156
      %v189 = vunpack.c.l.bf16 %v157
      %v190 = vunpack.c.l.bf16 %v158
      %v191 = vunpack.c.l.bf16 %v159
      %v192 = vunpack.c.l.bf16 %v160
      %v193 = vunpack.c.l.bf16 %v161
      %v194 = vunpack.c.l.bf16 %v162
      %v195 = vunpack.c.l.bf16 %v163
      %v196 = vunpack.c.l.bf16 %v164
      %v197 = vunpack.c.l.bf16 %v165
      %v198 = vunpack.c.l.bf16 %v166
      %v199 = vunpack.c.l.bf16 %v167
      %v200 = vunpack.c.l.bf16 %v168
      %v201 = vunpack.c.l.bf16 %v169
      %v202 = vunpack.c.l.bf16 %v170
      %v203 = vunpack.c.l.bf16 %v171
      %v204 = vunpack.c.l.bf16 %v172
      %v205 = vunpack.c.l.bf16 %v173
      %v206 = vunpack.c.l.bf16 %v174
      %v207 = vunpack.c.l.bf16 %v175
      %v208 = vunpack.c.l.bf16 %v176
      %v209 = vunpack.c.l.bf16 %v177
      %v210 = vunpack.c.l.bf16 %v178
      %v211 = vunpack.c.l.bf16 %v179
      %v212 = vunpack.c.l.bf16 %v180
      %v213 = vunpack.c.l.bf16 %v181
      %v214 = vunpack.c.l.bf16 %v182
      %v215 = vunpack.c.l.bf16 %v183
      %v216 = vunpack.c.l.bf16 %v184
      %v217 = vunpack.c.l.bf16 %v185
      %v218 = vunpack.c.l.bf16 %v186
      %v219 = vunpack.c.l.bf16 %v187
      %v220 = vlaneseq
      %v221 = vshrl.u32 %v220, 7
      %v222 = vadd.s32 %v221, 8
      %v223 = vadd.s32 %v221, 16
      %v224 = vadd.s32 %v221, 24
      %v225 = vadd.s32 %v221, 32
      %v226 = vadd.s32 %v221, 40
      %v227 = vadd.s32 %v221, 48
      %v228 = vadd.s32 %v221, 56
      %v229 = vadd.s32 %v221, 64
      %v230 = vadd.s32 %v221, 72
      %v231 = vadd.s32 %v221, 80
      %v232 = vadd.s32 %v221, 88
      %v233 = vadd.s32 %v221, 96
      %v234 = vadd.s32 %v221, 104
      %v235 = vadd.s32 %v221, 112
      %v236 = vadd.s32 %v221, 120
      %v237 = vlaneseq
      %v238 = vand.u32 %v237, 127
      %v239 = vmul.u32 %v238, 2
      %vm240 = vcmp.eq.s32.totalorder %v221, %v239
      %vm241 = vcmp.eq.s32.totalorder %v222, %v239
      %vm242 = vcmp.eq.s32.totalorder %v223, %v239
      %vm243 = vcmp.eq.s32.totalorder %v224, %v239
      %vm244 = vcmp.eq.s32.totalorder %v225, %v239
      %vm245 = vcmp.eq.s32.totalorder %v226, %v239
      %vm246 = vcmp.eq.s32.totalorder %v227, %v239
      %vm247 = vcmp.eq.s32.totalorder %v228, %v239
      %vm248 = vcmp.eq.s32.totalorder %v229, %v239
      %vm249 = vcmp.eq.s32.totalorder %v230, %v239
      %vm250 = vcmp.eq.s32.totalorder %v231, %v239
      %vm251 = vcmp.eq.s32.totalorder %v232, %v239
      %vm252 = vcmp.eq.s32.totalorder %v233, %v239
      %vm253 = vcmp.eq.s32.totalorder %v234, %v239
      %vm254 = vcmp.eq.s32.totalorder %v235, %v239
      %vm255 = vcmp.eq.s32.totalorder %v236, %v239
      %v256 = vsel %vm240, 1, 0
      %v257 = vsel %vm241, 1, 0
      %v258 = vsel %vm242, 1, 0
      %v259 = vsel %vm243, 1, 0
      %v260 = vsel %vm244, 1, 0
      %v261 = vsel %vm245, 1, 0
      %v262 = vsel %vm246, 1, 0
      %v263 = vsel %vm247, 1, 0
      %v264 = vsel %vm248, 1, 0
      %v265 = vsel %vm249, 1, 0
      %v266 = vsel %vm250, 1, 0
      %v267 = vsel %vm251, 1, 0
      %v268 = vsel %vm252, 1, 0
      %v269 = vsel %vm253, 1, 0
      %v270 = vsel %vm254, 1, 0
      %v271 = vsel %vm255, 1, 0
      %v272 = vcvt.s32.f32 %v256
      %v273 = vcvt.s32.f32 %v257
      %v274 = vcvt.s32.f32 %v258
      %v275 = vcvt.s32.f32 %v259
      %v276 = vcvt.s32.f32 %v260
      %v277 = vcvt.s32.f32 %v261
      %v278 = vcvt.s32.f32 %v262
      %v279 = vcvt.s32.f32 %v263
      %v280 = vcvt.s32.f32 %v264
      %v281 = vcvt.s32.f32 %v265
      %v282 = vcvt.s32.f32 %v266
      %v283 = vcvt.s32.f32 %v267
      %v284 = vcvt.s32.f32 %v268
      %v285 = vcvt.s32.f32 %v269
      %v286 = vcvt.s32.f32 %v270
      %v287 = vcvt.s32.f32 %v271
      %288 = vmatpush.msra.mxu0 %v287
      %289 = vmatpush.msra.mxu0 %v286
      %290 = vmatpush.msra.mxu0 %v285
      %291 = vmatpush.msra.mxu0 %v284
      %292 = vmatpush.msra.mxu0 %v283
      %293 = vmatpush.msra.mxu0 %v282
      %294 = vmatpush.msra.mxu0 %v281
      %295 = vmatpush.msra.mxu0 %v280
      %296 = vmatpush.msra.mxu0 %v279
      %297 = vmatpush.msra.mxu0 %v278
      %298 = vmatpush.msra.mxu0 %v277
      %299 = vmatpush.msra.mxu0 %v276
      %300 = vmatpush.msra.mxu0 %v275
      %301 = vmatpush.msra.mxu0 %v274
      %302 = vmatpush.msra.mxu0 %v273
      %303 = vmatpush.msra.mxu0 %v272
      %304 = vmatmul.f32.gmra.mxu0 %v188
      %v305 = vpop.f32.mrf.mxu0
      %v306 = vadd.f32 0.0, %v305
      %307 = vmatmul.f32.gmra.mxu0 %v189
      %v308 = vpop.f32.mrf.mxu0
      %v309 = vadd.f32 0.0, %v308
      %310 = vmatmul.f32.gmra.mxu0 %v190
      %v311 = vpop.f32.mrf.mxu0
      %v312 = vadd.f32 0.0, %v311
      %313 = vmatmul.f32.gmra.mxu0 %v191
      %v314 = vpop.f32.mrf.mxu0
      %v315 = vadd.f32 0.0, %v314
      %316 = vmatmul.f32.gmra.mxu0 %v192
      %v317 = vpop.f32.mrf.mxu0
      %v318 = vadd.f32 0.0, %v317
      %319 = vmatmul.f32.gmra.mxu0 %v193
      %v320 = vpop.f32.mrf.mxu0
      %v321 = vadd.f32 0.0, %v320
      %322 = vmatmul.f32.gmra.mxu0 %v194
      %v323 = vpop.f32.mrf.mxu0
      %v324 = vadd.f32 0.0, %v323
      %325 = vmatmul.f32.gmra.mxu0 %v195
      %v326 = vpop.f32.mrf.mxu0
      %v327 = vadd.f32 0.0, %v326
      %328 = vmatmul.f32.gmra.mxu0 %v196
      %v329 = vpop.f32.mrf.mxu0
      %v330 = vadd.f32 0.0, %v329
      %331 = vmatmul.f32.gmra.mxu0 %v197
      %v332 = vpop.f32.mrf.mxu0
      %v333 = vadd.f32 0.0, %v332
      %334 = vmatmul.f32.gmra.mxu0 %v198
      %v335 = vpop.f32.mrf.mxu0
      %v336 = vadd.f32 0.0, %v335
      %337 = vmatmul.f32.gmra.mxu0 %v199
      %v338 = vpop.f32.mrf.mxu0
      %v339 = vadd.f32 0.0, %v338
      %340 = vmatmul.f32.gmra.mxu0 %v200
      %v341 = vpop.f32.mrf.mxu0
      %v342 = vadd.f32 0.0, %v341
      %343 = vmatmul.f32.gmra.mxu0 %v201
      %v344 = vpop.f32.mrf.mxu0
      %v345 = vadd.f32 0.0, %v344
      %346 = vmatmul.f32.gmra.mxu0 %v202
      %v347 = vpop.f32.mrf.mxu0
      %v348 = vadd.f32 0.0, %v347
      %349 = vmatmul.f32.gmra.mxu0 %v203
      %v350 = vpop.f32.mrf.mxu0
      %v351 = vadd.f32 0.0, %v350
      %352 = vmatmul.f32.gmra.mxu0 %v204
      %v353 = vpop.f32.mrf.mxu0
      %v354 = vadd.f32 0.0, %v353
      %355 = vmatmul.f32.gmra.mxu0 %v205
      %v356 = vpop.f32.mrf.mxu0
      %v357 = vadd.f32 0.0, %v356
      %358 = vmatmul.f32.gmra.mxu0 %v206
      %v359 = vpop.f32.mrf.mxu0
      %v360 = vadd.f32 0.0, %v359
      %361 = vmatmul.f32.gmra.mxu0 %v207
      %v362 = vpop.f32.mrf.mxu0
      %v363 = vadd.f32 0.0, %v362
      %364 = vmatmul.f32.gmra.mxu0 %v208
      %v365 = vpop.f32.mrf.mxu0
      %v366 = vadd.f32 0.0, %v365
      %367 = vmatmul.f32.gmra.mxu0 %v209
      %v368 = vpop.f32.mrf.mxu0
      %v369 = vadd.f32 0.0, %v368
      %370 = vmatmul.f32.gmra.mxu0 %v210
      %v371 = vpop.f32.mrf.mxu0
      %v372 = vadd.f32 0.0, %v371
      %373 = vmatmul.f32.gmra.mxu0 %v211
      %v374 = vpop.f32.mrf.mxu0
      %v375 = vadd.f32 0.0, %v374
      %376 = vmatmul.f32.gmra.mxu0 %v212
      %v377 = vpop.f32.mrf.mxu0
      %v378 = vadd.f32 0.0, %v377
      %379 = vmatmul.f32.gmra.mxu0 %v213
      %v380 = vpop.f32.mrf.mxu0
      %v381 = vadd.f32 0.0, %v380
      %382 = vmatmul.f32.gmra.mxu0 %v214
      %v383 = vpop.f32.mrf.mxu0
      %v384 = vadd.f32 0.0, %v383
      %385 = vmatmul.f32.gmra.mxu0 %v215
      %v386 = vpop.f32.mrf.mxu0
      %v387 = vadd.f32 0.0, %v386
      %388 = vmatmul.f32.gmra.mxu0 %v216
      %v389 = vpop.f32.mrf.mxu0
      %v390 = vadd.f32 0.0, %v389
      %391 = vmatmul.f32.gmra.mxu0 %v217
      %v392 = vpop.f32.mrf.mxu0
      %v393 = vadd.f32 0.0, %v392
      %394 = vmatmul.f32.gmra.mxu0 %v218
      %v395 = vpop.f32.mrf.mxu0
      %v396 = vadd.f32 0.0, %v395
      %397 = vmatmul.f32.gmra.mxu0 %v219
      %v398 = vpop.f32.mrf.mxu0
      %v399 = vadd.f32 0.0, %v398
      %400 = vdwg.mxu0
      %v401 = vadd.s32 %v239, 1
      %vm402 = vcmp.eq.s32.totalorder %v221, %v401
      %vm403 = vcmp.eq.s32.totalorder %v222, %v401
      %vm404 = vcmp.eq.s32.totalorder %v223, %v401
      %vm405 = vcmp.eq.s32.totalorder %v224, %v401
      %vm406 = vcmp.eq.s32.totalorder %v225, %v401
      %vm407 = vcmp.eq.s32.totalorder %v226, %v401
      %vm408 = vcmp.eq.s32.totalorder %v227, %v401
      %vm409 = vcmp.eq.s32.totalorder %v228, %v401
      %vm410 = vcmp.eq.s32.totalorder %v229, %v401
      %vm411 = vcmp.eq.s32.totalorder %v230, %v401
      %vm412 = vcmp.eq.s32.totalorder %v231, %v401
      %vm413 = vcmp.eq.s32.totalorder %v232, %v401
      %vm414 = vcmp.eq.s32.totalorder %v233, %v401
      %vm415 = vcmp.eq.s32.totalorder %v234, %v401
      %vm416 = vcmp.eq.s32.totalorder %v235, %v401
      %vm417 = vcmp.eq.s32.totalorder %v236, %v401
      %v418 = vsel %vm402, 1, 0
      %v419 = vsel %vm403, 1, 0
      %v420 = vsel %vm404, 1, 0
      %v421 = vsel %vm405, 1, 0
      %v422 = vsel %vm406, 1, 0
      %v423 = vsel %vm407, 1, 0
      %v424 = vsel %vm408, 1, 0
      %v425 = vsel %vm409, 1, 0
      %v426 = vsel %vm410, 1, 0
      %v427 = vsel %vm411, 1, 0
      %v428 = vsel %vm412, 1, 0
      %v429 = vsel %vm413, 1, 0
      %v430 = vsel %vm414, 1, 0
      %v431 = vsel %vm415, 1, 0
      %v432 = vsel %vm416, 1, 0
      %v433 = vsel %vm417, 1, 0
      %v434 = vcvt.s32.f32 %v418
      %v435 = vcvt.s32.f32 %v419
      %v436 = vcvt.s32.f32 %v420
      %v437 = vcvt.s32.f32 %v421
      %v438 = vcvt.s32.f32 %v422
      %v439 = vcvt.s32.f32 %v423
      %v440 = vcvt.s32.f32 %v424
      %v441 = vcvt.s32.f32 %v425
      %v442 = vcvt.s32.f32 %v426
      %v443 = vcvt.s32.f32 %v427
      %v444 = vcvt.s32.f32 %v428
      %v445 = vcvt.s32.f32 %v429
      %v446 = vcvt.s32.f32 %v430
      %v447 = vcvt.s32.f32 %v431
      %v448 = vcvt.s32.f32 %v432
      %v449 = vcvt.s32.f32 %v433
      %450 = vmatpush.msra.mxu0 %v449
      %451 = vmatpush.msra.mxu0 %v448
      %452 = vmatpush.msra.mxu0 %v447
      %453 = vmatpush.msra.mxu0 %v446
      %454 = vmatpush.msra.mxu0 %v445
      %455 = vmatpush.msra.mxu0 %v444
      %456 = vmatpush.msra.mxu0 %v443
      %457 = vmatpush.msra.mxu0 %v442
      %458 = vmatpush.msra.mxu0 %v441
      %459 = vmatpush.msra.mxu0 %v440
      %460 = vmatpush.msra.mxu0 %v439
      %461 = vmatpush.msra.mxu0 %v438
      %462 = vmatpush.msra.mxu0 %v437
      %463 = vmatpush.msra.mxu0 %v436
      %464 = vmatpush.msra.mxu0 %v435
      %465 = vmatpush.msra.mxu0 %v434
      %466 = vmatmul.f32.gmra.mxu0 %v188
      %v467 = vpop.f32.mrf.mxu0
      %v468 = vadd.f32 0.0, %v467
      %469 = vmatmul.f32.gmra.mxu0 %v189
      %v470 = vpop.f32.mrf.mxu0
      %v471 = vadd.f32 0.0, %v470
      %472 = vmatmul.f32.gmra.mxu0 %v190
      %v473 = vpop.f32.mrf.mxu0
      %v474 = vadd.f32 0.0, %v473
      %475 = vmatmul.f32.gmra.mxu0 %v191
      %v476 = vpop.f32.mrf.mxu0
      %v477 = vadd.f32 0.0, %v476
      %478 = vmatmul.f32.gmra.mxu0 %v192
      %v479 = vpop.f32.mrf.mxu0
      %v480 = vadd.f32 0.0, %v479
      %481 = vmatmul.f32.gmra.mxu0 %v193
      %v482 = vpop.f32.mrf.mxu0
      %v483 = vadd.f32 0.0, %v482
      %484 = vmatmul.f32.gmra.mxu0 %v194
      %v485 = vpop.f32.mrf.mxu0
      %v486 = vadd.f32 0.0, %v485
      %487 = vmatmul.f32.gmra.mxu0 %v195
      %v488 = vpop.f32.mrf.mxu0
      %v489 = vadd.f32 0.0, %v488
      %490 = vmatmul.f32.gmra.mxu0 %v196
      %v491 = vpop.f32.mrf.mxu0
      %v492 = vadd.f32 0.0, %v491
      %493 = vmatmul.f32.gmra.mxu0 %v197
      %v494 = vpop.f32.mrf.mxu0
      %v495 = vadd.f32 0.0, %v494
      %496 = vmatmul.f32.gmra.mxu0 %v198
      %v497 = vpop.f32.mrf.mxu0
      %v498 = vadd.f32 0.0, %v497
      %499 = vmatmul.f32.gmra.mxu0 %v199
      %v500 = vpop.f32.mrf.mxu0
      %v501 = vadd.f32 0.0, %v500
      %502 = vmatmul.f32.gmra.mxu0 %v200
      %v503 = vpop.f32.mrf.mxu0
      %v504 = vadd.f32 0.0, %v503
      %505 = vmatmul.f32.gmra.mxu0 %v201
      %v506 = vpop.f32.mrf.mxu0
      %v507 = vadd.f32 0.0, %v506
      %508 = vmatmul.f32.gmra.mxu0 %v202
      %v509 = vpop.f32.mrf.mxu0
      %v510 = vadd.f32 0.0, %v509
      %511 = vmatmul.f32.gmra.mxu0 %v203
      %v512 = vpop.f32.mrf.mxu0
      %v513 = vadd.f32 0.0, %v512
      %514 = vmatmul.f32.gmra.mxu0 %v204
      %v515 = vpop.f32.mrf.mxu0
      %v516 = vadd.f32 0.0, %v515
      %517 = vmatmul.f32.gmra.mxu0 %v205
      %v518 = vpop.f32.mrf.mxu0
      %v519 = vadd.f32 0.0, %v518
      %520 = vmatmul.f32.gmra.mxu0 %v206
      %v521 = vpop.f32.mrf.mxu0
      %v522 = vadd.f32 0.0, %v521
      %523 = vmatmul.f32.gmra.mxu0 %v207
      %v524 = vpop.f32.mrf.mxu0
      %v525 = vadd.f32 0.0, %v524
      %526 = vmatmul.f32.gmra.mxu0 %v208
      %v527 = vpop.f32.mrf.mxu0
      %v528 = vadd.f32 0.0, %v527
      %529 = vmatmul.f32.gmra.mxu0 %v209
      %v530 = vpop.f32.mrf.mxu0
      %v531 = vadd.f32 0.0, %v530
      %532 = vmatmul.f32.gmra.mxu0 %v210
      %v533 = vpop.f32.mrf.mxu0
      %v534 = vadd.f32 0.0, %v533
      %535 = vmatmul.f32.gmra.mxu0 %v211
      %v536 = vpop.f32.mrf.mxu0
      %v537 = vadd.f32 0.0, %v536
      %538 = vmatmul.f32.gmra.mxu0 %v212
      %v539 = vpop.f32.mrf.mxu0
      %v540 = vadd.f32 0.0, %v539
      %541 = vmatmul.f32.gmra.mxu0 %v213
      %v542 = vpop.f32.mrf.mxu0
      %v543 = vadd.f32 0.0, %v542
      %544 = vmatmul.f32.gmra.mxu0 %v214
      %v545 = vpop.f32.mrf.mxu0
      %v546 = vadd.f32 0.0, %v545
      %547 = vmatmul.f32.gmra.mxu0 %v215
      %v548 = vpop.f32.mrf.mxu0
      %v549 = vadd.f32 0.0, %v548
      %550 = vmatmul.f32.gmra.mxu0 %v216
      %v551 = vpop.f32.mrf.mxu0
      %v552 = vadd.f32 0.0, %v551
      %553 = vmatmul.f32.gmra.mxu0 %v217
      %v554 = vpop.f32.mrf.mxu0
      %v555 = vadd.f32 0.0, %v554
      %556 = vmatmul.f32.gmra.mxu0 %v218
      %v557 = vpop.f32.mrf.mxu0
      %v558 = vadd.f32 0.0, %v557
      %559 = vmatmul.f32.gmra.mxu0 %v219
      %v560 = vpop.f32.mrf.mxu0
      %v561 = vadd.f32 0.0, %v560
      %562 = vdwg.mxu0
      %v563 = vmax.f32 %v306, %v468
      %v564 = vmax.f32 %v309, %v471
      %v565 = vmax.f32 %v312, %v474
      %v566 = vmax.f32 %v315, %v477
      %v567 = vmax.f32 %v318, %v480
      %v568 = vmax.f32 %v321, %v483
      %v569 = vmax.f32 %v324, %v486
      %v570 = vmax.f32 %v327, %v489
      %v571 = vmax.f32 %v330, %v492
      %v572 = vmax.f32 %v333, %v495
      %v573 = vmax.f32 %v336, %v498
      %v574 = vmax.f32 %v339, %v501
      %v575 = vmax.f32 %v342, %v504
      %v576 = vmax.f32 %v345, %v507
      %v577 = vmax.f32 %v348, %v510
      %v578 = vmax.f32 %v351, %v513
      %v579 = vmax.f32 %v354, %v516
      %v580 = vmax.f32 %v357, %v519
      %v581 = vmax.f32 %v360, %v522
      %v582 = vmax.f32 %v363, %v525
      %v583 = vmax.f32 %v366, %v528
      %v584 = vmax.f32 %v369, %v531
      %v585 = vmax.f32 %v372, %v534
      %v586 = vmax.f32 %v375, %v537
      %v587 = vmax.f32 %v378, %v540
      %v588 = vmax.f32 %v381, %v543
      %v589 = vmax.f32 %v384, %v546
      %v590 = vmax.f32 %v387, %v549
      %v591 = vmax.f32 %v390, %v552
      %v592 = vmax.f32 %v393, %v555
      %v593 = vmax.f32 %v396, %v558
      %v594 = vmax.f32 %v399, %v561
      %v595 = vadd.s32 %v239, 64
      %vm596 = vcmp.eq.s32.totalorder %v221, %v595
      %vm597 = vcmp.eq.s32.totalorder %v222, %v595
      %vm598 = vcmp.eq.s32.totalorder %v223, %v595
      %vm599 = vcmp.eq.s32.totalorder %v224, %v595
      %vm600 = vcmp.eq.s32.totalorder %v225, %v595
      %vm601 = vcmp.eq.s32.totalorder %v226, %v595
      %vm602 = vcmp.eq.s32.totalorder %v227, %v595
      %vm603 = vcmp.eq.s32.totalorder %v228, %v595
      %vm604 = vcmp.eq.s32.totalorder %v229, %v595
      %vm605 = vcmp.eq.s32.totalorder %v230, %v595
      %vm606 = vcmp.eq.s32.totalorder %v231, %v595
      %vm607 = vcmp.eq.s32.totalorder %v232, %v595
      %vm608 = vcmp.eq.s32.totalorder %v233, %v595
      %vm609 = vcmp.eq.s32.totalorder %v234, %v595
      %vm610 = vcmp.eq.s32.totalorder %v235, %v595
      %vm611 = vcmp.eq.s32.totalorder %v236, %v595
      %v612 = vsel %vm596, 1, 0
      %v613 = vsel %vm597, 1, 0
      %v614 = vsel %vm598, 1, 0
      %v615 = vsel %vm599, 1, 0
      %v616 = vsel %vm600, 1, 0
      %v617 = vsel %vm601, 1, 0
      %v618 = vsel %vm602, 1, 0
      %v619 = vsel %vm603, 1, 0
      %v620 = vsel %vm604, 1, 0
      %v621 = vsel %vm605, 1, 0
      %v622 = vsel %vm606, 1, 0
      %v623 = vsel %vm607, 1, 0
      %v624 = vsel %vm608, 1, 0
      %v625 = vsel %vm609, 1, 0
      %v626 = vsel %vm610, 1, 0
      %v627 = vsel %vm611, 1, 0
      %v628 = vcvt.s32.f32 %v612
      %v629 = vcvt.s32.f32 %v613
      %v630 = vcvt.s32.f32 %v614
      %v631 = vcvt.s32.f32 %v615
      %v632 = vcvt.s32.f32 %v616
      %v633 = vcvt.s32.f32 %v617
      %v634 = vcvt.s32.f32 %v618
      %v635 = vcvt.s32.f32 %v619
      %v636 = vcvt.s32.f32 %v620
      %v637 = vcvt.s32.f32 %v621
      %v638 = vcvt.s32.f32 %v622
      %v639 = vcvt.s32.f32 %v623
      %v640 = vcvt.s32.f32 %v624
      %v641 = vcvt.s32.f32 %v625
      %v642 = vcvt.s32.f32 %v626
      %v643 = vcvt.s32.f32 %v627
      %644 = vmatpush.msra.mxu0 %v643
      %645 = vmatpush.msra.mxu0 %v642
      %646 = vmatpush.msra.mxu0 %v641
      %647 = vmatpush.msra.mxu0 %v640
      %648 = vmatpush.msra.mxu0 %v639
      %649 = vmatpush.msra.mxu0 %v638
      %650 = vmatpush.msra.mxu0 %v637
      %651 = vmatpush.msra.mxu0 %v636
      %652 = vmatpush.msra.mxu0 %v635
      %653 = vmatpush.msra.mxu0 %v634
      %654 = vmatpush.msra.mxu0 %v633
      %655 = vmatpush.msra.mxu0 %v632
      %656 = vmatpush.msra.mxu0 %v631
      %657 = vmatpush.msra.mxu0 %v630
      %658 = vmatpush.msra.mxu0 %v629
      %659 = vmatpush.msra.mxu0 %v628
      %660 = vmatmul.f32.gmra.mxu0 %v188
      %v661 = vpop.f32.mrf.mxu0
      %v662 = vadd.f32 0.0, %v661
      %663 = vmatmul.f32.gmra.mxu0 %v189
      %v664 = vpop.f32.mrf.mxu0
      %v665 = vadd.f32 0.0, %v664
      %666 = vmatmul.f32.gmra.mxu0 %v190
      %v667 = vpop.f32.mrf.mxu0
      %v668 = vadd.f32 0.0, %v667
      %669 = vmatmul.f32.gmra.mxu0 %v191
      %v670 = vpop.f32.mrf.mxu0
      %v671 = vadd.f32 0.0, %v670
      %672 = vmatmul.f32.gmra.mxu0 %v192
      %v673 = vpop.f32.mrf.mxu0
      %v674 = vadd.f32 0.0, %v673
      %675 = vmatmul.f32.gmra.mxu0 %v193
      %v676 = vpop.f32.mrf.mxu0
      %v677 = vadd.f32 0.0, %v676
      %678 = vmatmul.f32.gmra.mxu0 %v194
      %v679 = vpop.f32.mrf.mxu0
      %v680 = vadd.f32 0.0, %v679
      %681 = vmatmul.f32.gmra.mxu0 %v195
      %v682 = vpop.f32.mrf.mxu0
      %v683 = vadd.f32 0.0, %v682
      %684 = vmatmul.f32.gmra.mxu0 %v196
      %v685 = vpop.f32.mrf.mxu0
      %v686 = vadd.f32 0.0, %v685
      %687 = vmatmul.f32.gmra.mxu0 %v197
      %v688 = vpop.f32.mrf.mxu0
      %v689 = vadd.f32 0.0, %v688
      %690 = vmatmul.f32.gmra.mxu0 %v198
      %v691 = vpop.f32.mrf.mxu0
      %v692 = vadd.f32 0.0, %v691
      %693 = vmatmul.f32.gmra.mxu0 %v199
      %v694 = vpop.f32.mrf.mxu0
      %v695 = vadd.f32 0.0, %v694
      %696 = vmatmul.f32.gmra.mxu0 %v200
      %v697 = vpop.f32.mrf.mxu0
      %v698 = vadd.f32 0.0, %v697
      %699 = vmatmul.f32.gmra.mxu0 %v201
      %v700 = vpop.f32.mrf.mxu0
      %v701 = vadd.f32 0.0, %v700
      %702 = vmatmul.f32.gmra.mxu0 %v202
      %v703 = vpop.f32.mrf.mxu0
      %v704 = vadd.f32 0.0, %v703
      %705 = vmatmul.f32.gmra.mxu0 %v203
      %v706 = vpop.f32.mrf.mxu0
      %v707 = vadd.f32 0.0, %v706
      %708 = vmatmul.f32.gmra.mxu0 %v204
      %v709 = vpop.f32.mrf.mxu0
      %v710 = vadd.f32 0.0, %v709
      %711 = vmatmul.f32.gmra.mxu0 %v205
      %v712 = vpop.f32.mrf.mxu0
      %v713 = vadd.f32 0.0, %v712
      %714 = vmatmul.f32.gmra.mxu0 %v206
      %v715 = vpop.f32.mrf.mxu0
      %v716 = vadd.f32 0.0, %v715
      %717 = vmatmul.f32.gmra.mxu0 %v207
      %v718 = vpop.f32.mrf.mxu0
      %v719 = vadd.f32 0.0, %v718
      %720 = vmatmul.f32.gmra.mxu0 %v208
      %v721 = vpop.f32.mrf.mxu0
      %v722 = vadd.f32 0.0, %v721
      %723 = vmatmul.f32.gmra.mxu0 %v209
      %v724 = vpop.f32.mrf.mxu0
      %v725 = vadd.f32 0.0, %v724
      %726 = vmatmul.f32.gmra.mxu0 %v210
      %v727 = vpop.f32.mrf.mxu0
      %v728 = vadd.f32 0.0, %v727
      %729 = vmatmul.f32.gmra.mxu0 %v211
      %v730 = vpop.f32.mrf.mxu0
      %v731 = vadd.f32 0.0, %v730
      %732 = vmatmul.f32.gmra.mxu0 %v212
      %v733 = vpop.f32.mrf.mxu0
      %v734 = vadd.f32 0.0, %v733
      %735 = vmatmul.f32.gmra.mxu0 %v213
      %v736 = vpop.f32.mrf.mxu0
      %v737 = vadd.f32 0.0, %v736
      %738 = vmatmul.f32.gmra.mxu0 %v214
      %v739 = vpop.f32.mrf.mxu0
      %v740 = vadd.f32 0.0, %v739
      %741 = vmatmul.f32.gmra.mxu0 %v215
      %v742 = vpop.f32.mrf.mxu0
      %v743 = vadd.f32 0.0, %v742
      %744 = vmatmul.f32.gmra.mxu0 %v216
      %v745 = vpop.f32.mrf.mxu0
      %v746 = vadd.f32 0.0, %v745
      %747 = vmatmul.f32.gmra.mxu0 %v217
      %v748 = vpop.f32.mrf.mxu0
      %v749 = vadd.f32 0.0, %v748
      %750 = vmatmul.f32.gmra.mxu0 %v218
      %v751 = vpop.f32.mrf.mxu0
      %v752 = vadd.f32 0.0, %v751
      %753 = vmatmul.f32.gmra.mxu0 %v219
      %v754 = vpop.f32.mrf.mxu0
      %v755 = vadd.f32 0.0, %v754
      %756 = vdwg.mxu0
      %v757 = vadd.s32 %v239, 65
      %vm758 = vcmp.eq.s32.totalorder %v221, %v757
      %vm759 = vcmp.eq.s32.totalorder %v222, %v757
      %vm760 = vcmp.eq.s32.totalorder %v223, %v757
      %vm761 = vcmp.eq.s32.totalorder %v224, %v757
      %vm762 = vcmp.eq.s32.totalorder %v225, %v757
      %vm763 = vcmp.eq.s32.totalorder %v226, %v757
      %vm764 = vcmp.eq.s32.totalorder %v227, %v757
      %vm765 = vcmp.eq.s32.totalorder %v228, %v757
      %vm766 = vcmp.eq.s32.totalorder %v229, %v757
      %vm767 = vcmp.eq.s32.totalorder %v230, %v757
      %vm768 = vcmp.eq.s32.totalorder %v231, %v757
      %vm769 = vcmp.eq.s32.totalorder %v232, %v757
      %vm770 = vcmp.eq.s32.totalorder %v233, %v757
      %vm771 = vcmp.eq.s32.totalorder %v234, %v757
      %vm772 = vcmp.eq.s32.totalorder %v235, %v757
      %vm773 = vcmp.eq.s32.totalorder %v236, %v757
      %v774 = vsel %vm758, 1, 0
      %v775 = vsel %vm759, 1, 0
      %v776 = vsel %vm760, 1, 0
      %v777 = vsel %vm761, 1, 0
      %v778 = vsel %vm762, 1, 0
      %v779 = vsel %vm763, 1, 0
      %v780 = vsel %vm764, 1, 0
      %v781 = vsel %vm765, 1, 0
      %v782 = vsel %vm766, 1, 0
      %v783 = vsel %vm767, 1, 0
      %v784 = vsel %vm768, 1, 0
      %v785 = vsel %vm769, 1, 0
      %v786 = vsel %vm770, 1, 0
      %v787 = vsel %vm771, 1, 0
      %v788 = vsel %vm772, 1, 0
      %v789 = vsel %vm773, 1, 0
      %v790 = vcvt.s32.f32 %v774
      %v791 = vcvt.s32.f32 %v775
      %v792 = vcvt.s32.f32 %v776
      %v793 = vcvt.s32.f32 %v777
      %v794 = vcvt.s32.f32 %v778
      %v795 = vcvt.s32.f32 %v779
      %v796 = vcvt.s32.f32 %v780
      %v797 = vcvt.s32.f32 %v781
      %v798 = vcvt.s32.f32 %v782
      %v799 = vcvt.s32.f32 %v783
      %v800 = vcvt.s32.f32 %v784
      %v801 = vcvt.s32.f32 %v785
      %v802 = vcvt.s32.f32 %v786
      %v803 = vcvt.s32.f32 %v787
      %v804 = vcvt.s32.f32 %v788
      %v805 = vcvt.s32.f32 %v789
      %806 = vmatpush.msra.mxu0 %v805
      %807 = vmatpush.msra.mxu0 %v804
      %808 = vmatpush.msra.mxu0 %v803
      %809 = vmatpush.msra.mxu0 %v802
      %810 = vmatpush.msra.mxu0 %v801
      %811 = vmatpush.msra.mxu0 %v800
      %812 = vmatpush.msra.mxu0 %v799
      %813 = vmatpush.msra.mxu0 %v798
      %814 = vmatpush.msra.mxu0 %v797
      %815 = vmatpush.msra.mxu0 %v796
      %816 = vmatpush.msra.mxu0 %v795
      %817 = vmatpush.msra.mxu0 %v794
      %818 = vmatpush.msra.mxu0 %v793
      %819 = vmatpush.msra.mxu0 %v792
      %820 = vmatpush.msra.mxu0 %v791
      %821 = vmatpush.msra.mxu0 %v790
      %822 = vmatmul.f32.gmra.mxu0 %v188
      %v823 = vpop.f32.mrf.mxu0
      %v824 = vadd.f32 0.0, %v823
      %825 = vmatmul.f32.gmra.mxu0 %v189
      %v826 = vpop.f32.mrf.mxu0
      %v827 = vadd.f32 0.0, %v826
      %828 = vmatmul.f32.gmra.mxu0 %v190
      %v829 = vpop.f32.mrf.mxu0
      %v830 = vadd.f32 0.0, %v829
      %831 = vmatmul.f32.gmra.mxu0 %v191
      %v832 = vpop.f32.mrf.mxu0
      %v833 = vadd.f32 0.0, %v832
      %834 = vmatmul.f32.gmra.mxu0 %v192
      %v835 = vpop.f32.mrf.mxu0
      %v836 = vadd.f32 0.0, %v835
      %837 = vmatmul.f32.gmra.mxu0 %v193
      %v838 = vpop.f32.mrf.mxu0
      %v839 = vadd.f32 0.0, %v838
      %840 = vmatmul.f32.gmra.mxu0 %v194
      %v841 = vpop.f32.mrf.mxu0
      %v842 = vadd.f32 0.0, %v841
      %843 = vmatmul.f32.gmra.mxu0 %v195
      %v844 = vpop.f32.mrf.mxu0
      %v845 = vadd.f32 0.0, %v844
      %846 = vmatmul.f32.gmra.mxu0 %v196
      %v847 = vpop.f32.mrf.mxu0
      %v848 = vadd.f32 0.0, %v847
      %849 = vmatmul.f32.gmra.mxu0 %v197
      %v850 = vpop.f32.mrf.mxu0
      %v851 = vadd.f32 0.0, %v850
      %852 = vmatmul.f32.gmra.mxu0 %v198
      %v853 = vpop.f32.mrf.mxu0
      %v854 = vadd.f32 0.0, %v853
      %855 = vmatmul.f32.gmra.mxu0 %v199
      %v856 = vpop.f32.mrf.mxu0
      %v857 = vadd.f32 0.0, %v856
      %858 = vmatmul.f32.gmra.mxu0 %v200
      %v859 = vpop.f32.mrf.mxu0
      %v860 = vadd.f32 0.0, %v859
      %861 = vmatmul.f32.gmra.mxu0 %v201
      %v862 = vpop.f32.mrf.mxu0
      %v863 = vadd.f32 0.0, %v862
      %864 = vmatmul.f32.gmra.mxu0 %v202
      %v865 = vpop.f32.mrf.mxu0
      %v866 = vadd.f32 0.0, %v865
      %867 = vmatmul.f32.gmra.mxu0 %v203
      %v868 = vpop.f32.mrf.mxu0
      %v869 = vadd.f32 0.0, %v868
      %870 = vmatmul.f32.gmra.mxu0 %v204
      %v871 = vpop.f32.mrf.mxu0
      %v872 = vadd.f32 0.0, %v871
      %873 = vmatmul.f32.gmra.mxu0 %v205
      %v874 = vpop.f32.mrf.mxu0
      %v875 = vadd.f32 0.0, %v874
      %876 = vmatmul.f32.gmra.mxu0 %v206
      %v877 = vpop.f32.mrf.mxu0
      %v878 = vadd.f32 0.0, %v877
      %879 = vmatmul.f32.gmra.mxu0 %v207
      %v880 = vpop.f32.mrf.mxu0
      %v881 = vadd.f32 0.0, %v880
      %882 = vmatmul.f32.gmra.mxu0 %v208
      %v883 = vpop.f32.mrf.mxu0
      %v884 = vadd.f32 0.0, %v883
      %885 = vmatmul.f32.gmra.mxu0 %v209
      %v886 = vpop.f32.mrf.mxu0
      %v887 = vadd.f32 0.0, %v886
      %888 = vmatmul.f32.gmra.mxu0 %v210
      %v889 = vpop.f32.mrf.mxu0
      %v890 = vadd.f32 0.0, %v889
      %891 = vmatmul.f32.gmra.mxu0 %v211
      %v892 = vpop.f32.mrf.mxu0
      %v893 = vadd.f32 0.0, %v892
      %894 = vmatmul.f32.gmra.mxu0 %v212
      %v895 = vpop.f32.mrf.mxu0
      %v896 = vadd.f32 0.0, %v895
      %897 = vmatmul.f32.gmra.mxu0 %v213
      %v898 = vpop.f32.mrf.mxu0
      %v899 = vadd.f32 0.0, %v898
      %900 = vmatmul.f32.gmra.mxu0 %v214
      %v901 = vpop.f32.mrf.mxu0
      %v902 = vadd.f32 0.0, %v901
      %903 = vmatmul.f32.gmra.mxu0 %v215
      %v904 = vpop.f32.mrf.mxu0
      %v905 = vadd.f32 0.0, %v904
      %906 = vmatmul.f32.gmra.mxu0 %v216
      %v907 = vpop.f32.mrf.mxu0
      %v908 = vadd.f32 0.0, %v907
      %909 = vmatmul.f32.gmra.mxu0 %v217
      %v910 = vpop.f32.mrf.mxu0
      %v911 = vadd.f32 0.0, %v910
      %912 = vmatmul.f32.gmra.mxu0 %v218
      %v913 = vpop.f32.mrf.mxu0
      %v914 = vadd.f32 0.0, %v913
      %915 = vmatmul.f32.gmra.mxu0 %v219
      %v916 = vpop.f32.mrf.mxu0
      %v917 = vadd.f32 0.0, %v916
      %918 = vdwg.mxu0
      %v919 = vmax.f32 %v662, %v824
      %v920 = vmax.f32 %v665, %v827
      %v921 = vmax.f32 %v668, %v830
      %v922 = vmax.f32 %v671, %v833
      %v923 = vmax.f32 %v674, %v836
      %v924 = vmax.f32 %v677, %v839
      %v925 = vmax.f32 %v680, %v842
      %v926 = vmax.f32 %v683, %v845
      %v927 = vmax.f32 %v686, %v848
      %v928 = vmax.f32 %v689, %v851
      %v929 = vmax.f32 %v692, %v854
      %v930 = vmax.f32 %v695, %v857
      %v931 = vmax.f32 %v698, %v860
      %v932 = vmax.f32 %v701, %v863
      %v933 = vmax.f32 %v704, %v866
      %v934 = vmax.f32 %v707, %v869
      %v935 = vmax.f32 %v710, %v872
      %v936 = vmax.f32 %v713, %v875
      %v937 = vmax.f32 %v716, %v878
      %v938 = vmax.f32 %v719, %v881
      %v939 = vmax.f32 %v722, %v884
      %v940 = vmax.f32 %v725, %v887
      %v941 = vmax.f32 %v728, %v890
      %v942 = vmax.f32 %v731, %v893
      %v943 = vmax.f32 %v734, %v896
      %v944 = vmax.f32 %v737, %v899
      %v945 = vmax.f32 %v740, %v902
      %v946 = vmax.f32 %v743, %v905
      %v947 = vmax.f32 %v746, %v908
      %v948 = vmax.f32 %v749, %v911
      %v949 = vmax.f32 %v752, %v914
      %v950 = vmax.f32 %v755, %v917
      %v951 = vmax.f32 %v563, %v919
      %v952 = vmax.f32 %v564, %v920
      %v953 = vmax.f32 %v565, %v921
      %v954 = vmax.f32 %v566, %v922
      %v955 = vmax.f32 %v567, %v923
      %v956 = vmax.f32 %v568, %v924
      %v957 = vmax.f32 %v569, %v925
      %v958 = vmax.f32 %v570, %v926
      %v959 = vmax.f32 %v571, %v927
      %v960 = vmax.f32 %v572, %v928
      %v961 = vmax.f32 %v573, %v929
      %v962 = vmax.f32 %v574, %v930
      %v963 = vmax.f32 %v575, %v931
      %v964 = vmax.f32 %v576, %v932
      %v965 = vmax.f32 %v577, %v933
      %v966 = vmax.f32 %v578, %v934
      %v967 = vmax.f32 %v579, %v935
      %v968 = vmax.f32 %v580, %v936
      %v969 = vmax.f32 %v581, %v937
      %v970 = vmax.f32 %v582, %v938
      %v971 = vmax.f32 %v583, %v939
      %v972 = vmax.f32 %v584, %v940
      %v973 = vmax.f32 %v585, %v941
      %v974 = vmax.f32 %v586, %v942
      %v975 = vmax.f32 %v587, %v943
      %v976 = vmax.f32 %v588, %v944
      %v977 = vmax.f32 %v589, %v945
      %v978 = vmax.f32 %v590, %v946
      %v979 = vmax.f32 %v591, %v947
      %v980 = vmax.f32 %v592, %v948
      %v981 = vmax.f32 %v593, %v949
      %v982 = vmax.f32 %v594, %v950
      %v983 = vpack.c.bf16 %v951, %v951
      %v984 = vpack.c.bf16 %v952, %v952
      %v985 = vpack.c.bf16 %v953, %v953
      %v986 = vpack.c.bf16 %v954, %v954
      %v987 = vpack.c.bf16 %v955, %v955
      %v988 = vpack.c.bf16 %v956, %v956
      %v989 = vpack.c.bf16 %v957, %v957
      %v990 = vpack.c.bf16 %v958, %v958
      %v991 = vpack.c.bf16 %v959, %v959
      %v992 = vpack.c.bf16 %v960, %v960
      %v993 = vpack.c.bf16 %v961, %v961
      %v994 = vpack.c.bf16 %v962, %v962
      %v995 = vpack.c.bf16 %v963, %v963
      %v996 = vpack.c.bf16 %v964, %v964
      %v997 = vpack.c.bf16 %v965, %v965
      %v998 = vpack.c.bf16 %v966, %v966
      %v999 = vpack.c.bf16 %v967, %v967
      %v1000 = vpack.c.bf16 %v968, %v968
      %v1001 = vpack.c.bf16 %v969, %v969
      %v1002 = vpack.c.bf16 %v970, %v970
      %v1003 = vpack.c.bf16 %v971, %v971
      %v1004 = vpack.c.bf16 %v972, %v972
      %v1005 = vpack.c.bf16 %v973, %v973
      %v1006 = vpack.c.bf16 %v974, %v974
      %v1007 = vpack.c.bf16 %v975, %v975
      %v1008 = vpack.c.bf16 %v976, %v976
      %v1009 = vpack.c.bf16 %v977, %v977
      %v1010 = vpack.c.bf16 %v978, %v978
      %v1011 = vpack.c.bf16 %v979, %v979
      %v1012 = vpack.c.bf16 %v980, %v980
      %v1013 = vpack.c.bf16 %v981, %v981
      %v1014 = vpack.c.bf16 %v982, %v982
      %vm1015 = vcmask 257024
      %1016 = vst.msk [vmem:[%s154] sm:$0xf] %vm1015, %v983
      %1017 = vst.msk [vmem:[%s154 + $0x4] sm:$0xf] %vm1015, %v984
      %1018 = vst.msk [vmem:[%s154 + $0x8] sm:$0xf] %vm1015, %v985
      %1019 = vst.msk [vmem:[%s154 + $0xc] sm:$0xf] %vm1015, %v986
      %1020 = vst.msk [vmem:[%s154 + $0x10] sm:$0xf] %vm1015, %v987
      %1021 = vst.msk [vmem:[%s154 + $0x14] sm:$0xf] %vm1015, %v988
      %1022 = vst.msk [vmem:[%s154 + $0x18] sm:$0xf] %vm1015, %v989
      %1023 = vst.msk [vmem:[%s154 + $0x1c] sm:$0xf] %vm1015, %v990
      %1024 = vst.msk [vmem:[%s154 + $0x20] sm:$0xf] %vm1015, %v991
      %1025 = vst.msk [vmem:[%s154 + $0x24] sm:$0xf] %vm1015, %v992
      %1026 = vst.msk [vmem:[%s154 + $0x28] sm:$0xf] %vm1015, %v993
      %1027 = vst.msk [vmem:[%s154 + $0x2c] sm:$0xf] %vm1015, %v994
      %1028 = vst.msk [vmem:[%s154 + $0x30] sm:$0xf] %vm1015, %v995
      %1029 = vst.msk [vmem:[%s154 + $0x34] sm:$0xf] %vm1015, %v996
      %1030 = vst.msk [vmem:[%s154 + $0x38] sm:$0xf] %vm1015, %v997
      %1031 = vst.msk [vmem:[%s154 + $0x3c] sm:$0xf] %vm1015, %v998
      %1032 = vst.msk [vmem:[%s154 + $0x40] sm:$0xf] %vm1015, %v999
      %1033 = vst.msk [vmem:[%s154 + $0x44] sm:$0xf] %vm1015, %v1000
      %1034 = vst.msk [vmem:[%s154 + $0x48] sm:$0xf] %vm1015, %v1001
      %1035 = vst.msk [vmem:[%s154 + $0x4c] sm:$0xf] %vm1015, %v1002
      %1036 = vst.msk [vmem:[%s154 + $0x50] sm:$0xf] %vm1015, %v1003
      %1037 = vst.msk [vmem:[%s154 + $0x54] sm:$0xf] %vm1015, %v1004
      %1038 = vst.msk [vmem:[%s154 + $0x58] sm:$0xf] %vm1015, %v1005
      %1039 = vst.msk [vmem:[%s154 + $0x5c] sm:$0xf] %vm1015, %v1006
      %1040 = vst.msk [vmem:[%s154 + $0x60] sm:$0xf] %vm1015, %v1007
      %1041 = vst.msk [vmem:[%s154 + $0x64] sm:$0xf] %vm1015, %v1008
      %1042 = vst.msk [vmem:[%s154 + $0x68] sm:$0xf] %vm1015, %v1009
      %1043 = vst.msk [vmem:[%s154 + $0x6c] sm:$0xf] %vm1015, %v1010
      %1044 = vst.msk [vmem:[%s154 + $0x70] sm:$0xf] %vm1015, %v1011
      %1045 = vst.msk [vmem:[%s154 + $0x74] sm:$0xf] %vm1015, %v1012
      %1046 = vst.msk [vmem:[%s154 + $0x78] sm:$0xf] %vm1015, %v1013
      %1047 = vst.msk [vmem:[%s154 + $0x7c] sm:$0xf] %vm1015, %v1014
      %s1048 = smul.u32 32, %s17
      %p1049 = scmp.lt.s32.totalorder %s16, 1
      %s1050 = scalar_select %p1049, %s16, 1
      %p1051 = scmp.lt.s32.totalorder %s1048, 63
      %s1052 = scalar_select %p1051, %s1048, 63
      %s1053 = smul.addr %s1050, 64
      %s1054 = sadd.s32 %s1052, %s1053
      %s1055 = smul.addr %s1054, 4
      %s1056 = scalar_lea.vmem %s1, %s1055
      // Predicated region
      $region25: #{simple_cnn_forward.6} parent=23 // pred_check
        %p1057 = pneg %p72
      $region26: #{simple_cnn_forward.6} parent=23 // pred_check_branch
        %1059 = sbr.rel (%p1057) target = $region28
      $region27: #{simple_cnn_forward.6} parent=23 // pred_region
        %s1060 = smul.u32 32, %s17
      $region28: #{simple_cnn_forward.6} parent=23 // pred_fallthru
        _
    $region24: #{simple_cnn_forward.6} parent=5 // pred_fallthru
      _
    %p1061 = scmp.le.s32.totalorder 2, %s7
    // Predicated region
    $region29: #{simple_cnn_forward.6} parent=5 // pred_check
      %p1062 = pneg %p1061
    $region30: #{simple_cnn_forward.6} parent=5 // pred_check_branch
      %1064 = sbr.rel (%p1062) target = $region32
    $region31: #{simple_cnn_forward.6} parent=5 // pred_region
      %s1065 = ssub.s32 %s7, 2
      // Predicated region
      $region33: #{simple_cnn_forward.6} parent=31 // pred_check
        %p1066 = pneg %p78
      $region34: #{simple_cnn_forward.6} parent=31 // pred_check_branch
        %1068 = sbr.rel (%p1066) target = $region36
      $region35: #{simple_cnn_forward.6} parent=31 // pred_region
        %s1069 = smul.u32 32, %s19
        %p1070 = scmp.lt.s32.totalorder %s18, 1
        %s1071 = scalar_select %p1070, %s18, 1
        %p1072 = scmp.lt.s32.totalorder %s1069, 63
        %s1073 = scalar_select %p1072, %s1069, 63
        %s1074 = smul.addr %s1071, 64
        %s1075 = sadd.s32 %s1073, %s1074
        %s1076 = smul.addr %s1075, 4
        %s1077 = scalar_lea.vmem %s1, %s1076
      $region36: #{simple_cnn_forward.6} parent=31 // pred_fallthru
        _
    $region32: #{simple_cnn_forward.6} parent=5 // pred_fallthru
      _
  $region6: #{simple_cnn_forward.6} parent=0 // loop_footer
    %s11 = sadd.s32 1, %s7
  $region7: #{simple_cnn_forward.6} parent=0 // loop_footer_branch
    %6 = sbr.rel target = $region3
  $region8: #{simple_cnn_forward.6} parent=0 // loop_exit
    _

// kernel: simple_cnn_forward.7
$region0: #{simple_cnn_forward.7}
  #allocation0 [shape = 'u32[]', space=smem, size = 0x4, offset = 0x4, fixed_abs, tag = 'smem constant byte address 0x4 - core index']
  #allocation1 [shape = 'u32[72,128]{1,0:T(1,128)}', space=vmem, size = 0x9000, scoped, tag = 'internal scratch']
  %s0 = inlined_call_operand.vmem [shape: bf16[2,144,1024], index: 0, kind: input, shape index: {}]
  %s1 = inlined_call_operand.vmem [shape: bf16[32,144], index: 1, kind: input, shape index: {}]
  %s2 = inlined_call_operand.vmem [shape: f32[32,1], index: 2, kind: input, shape index: {}]
  %s3 = inlined_call_operand.vmem [shape: bf16[2,32,1024], index: 3, kind: output, shape index: {}]
  %s4 = sld [smem:[#allocation0]]
  $region45: #{simple_cnn_forward.7} parent=0
    _
  %s6 = ssub.s32 1, %s4
  %s7 = scalar_select 0, %s6, %s4
  loop: start=0, step=1, limit=4
  $region2: #{simple_cnn_forward.7} parent=0 // loop_pre_header
    _
  $region3: #{simple_cnn_forward.7} parent=0 // loop_header
    %s9 = sphi 0, %s13
    %p10 = scmp.ge.s32.totalorder %s9, 4
    %s16 = sphi 0, %s28
    %s17 = sphi 0, %s24
    %s18 = sphi 0, %s16
    %s19 = sphi 0, %s17
    %s20 = sphi 0, %s18
    %s21 = sphi 0, %s19
    %s33 = sphi 0, %s35
    %s36 = sphi 0, %s33
    %s37 = sphi 0, %s36
    %s53 = sphi 0, %s37
    %s57 = sphi 0, %s57
    %s59 = sphi 0, %s57
    %s60 = sphi 0, %s59
    %s74 = sphi 0, %s60
    %s78 = sphi 0, %s78
    %s80 = sphi 0, %s78
    %s81 = sphi 0, %s80
    %s95 = sphi 0, %s81
    %s103 = sphi 0, %s105
    %s106 = sphi 0, %s103
    %s107 = sphi 0, %s106
    %s123 = sphi 0, %s107
  $region4: #{simple_cnn_forward.7} parent=0 // loop_header_branch
    %12 = sbr.rel (%p10) target = $region8
  $region5: #{simple_cnn_forward.7} parent=0 // loop_body
    %s14 = ssub.s32 %s9, 1
    %s15 = ssub.s32 %s9, 2
    %s22 = sadd.s32 1, %s17
    %p23 = scmp.ge.s32.totalorder %s22, 1
    %s24 = scalar_select %p23, 0, %s22
    %s25 = sadd.s32 1, %s16
    %s26 = scalar_select %p23, %s25, %s16
    %p27 = scmp.ge.s32.totalorder %s26, 2
    %s28 = scalar_select %p27, 0, %s26
    %s29 = ssub.s32 %s16, %s28
    %s30 = ssub.s32 %s17, %s24
    %s31 = sor.u32 %s29, %s30
    %p32 = scmp.eq.s32.totalorder %s31, 0
    %s34 = sadd.s32 %s33, 1
    %s35 = scalar_select %p32, %s33, %s34
    %p38 = pneg %p32
    %p39 = scmp.eq.s32.totalorder %s9, 1
    %p40 = por %p38, %p39
    %p41 = scmp.ne.s32.totalorder %s33, %s36
    %p42 = scmp.eq.s32.totalorder %s9, 0
    %p43 = por %p41, %p42
    %p44 = scmp.ne.s32.totalorder %s33, %s36
    %p45 = scmp.eq.s32.totalorder %s14, 1
    %p46 = por %p44, %p45
    %p47 = scmp.ne.s32.totalorder %s36, %s37
    %p48 = scmp.eq.s32.totalorder %s14, 0
    %p49 = por %p47, %p48
    %p50 = scmp.ne.s32.totalorder %s36, %s37
    %p51 = scmp.eq.s32.totalorder %s15, 1
    %p52 = por %p50, %p51
    %p54 = scmp.ne.s32.totalorder %s37, %s53
    %p55 = scmp.eq.s32.totalorder %s15, 0
    %p56 = por %p54, %p55
    %s58 = sadd.s32 %s57, 1
    %p61 = scmp.eq.s32.totalorder %s9, 1
    %p62 = scmp.ne.s32.totalorder %s57, %s59
    %p63 = scmp.eq.s32.totalorder %s9, 0
    %p64 = por %p62, %p63
    %p65 = scmp.ne.s32.totalorder %s57, %s59
    %p66 = scmp.eq.s32.totalorder %s14, 1
    %p67 = por %p65, %p66
    %p68 = scmp.ne.s32.totalorder %s59, %s60
    %p69 = scmp.eq.s32.totalorder %s14, 0
    %p70 = por %p68, %p69
    %p71 = scmp.ne.s32.totalorder %s59, %s60
    %p72 = scmp.eq.s32.totalorder %s15, 1
    %p73 = por %p71, %p72
    %p75 = scmp.ne.s32.totalorder %s60, %s74
    %p76 = scmp.eq.s32.totalorder %s15, 0
    %p77 = por %p75, %p76
    %s79 = sadd.s32 %s78, 1
    %p82 = scmp.eq.s32.totalorder %s9, 1
    %p83 = scmp.ne.s32.totalorder %s78, %s80
    %p84 = scmp.eq.s32.totalorder %s9, 0
    %p85 = por %p83, %p84
    %p86 = scmp.ne.s32.totalorder %s78, %s80
    %p87 = scmp.eq.s32.totalorder %s14, 1
    %p88 = por %p86, %p87
    %p89 = scmp.ne.s32.totalorder %s80, %s81
    %p90 = scmp.eq.s32.totalorder %s14, 0
    %p91 = por %p89, %p90
    %p92 = scmp.ne.s32.totalorder %s80, %s81
    %p93 = scmp.eq.s32.totalorder %s15, 1
    %p94 = por %p92, %p93
    %p96 = scmp.ne.s32.totalorder %s81, %s95
    %p97 = scmp.eq.s32.totalorder %s15, 0
    %p98 = por %p96, %p97
    %s99 = ssub.s32 %s16, %s28
    %s100 = ssub.s32 %s17, %s24
    %s101 = sor.u32 %s99, %s100
    %p102 = scmp.eq.s32.totalorder %s101, 0
    %s104 = sadd.s32 %s103, 1
    %s105 = scalar_select %p102, %s103, %s104
    %p108 = pneg %p102
    %p109 = scmp.eq.s32.totalorder %s9, 1
    %p110 = por %p108, %p109
    %p111 = scmp.ne.s32.totalorder %s103, %s106
    %p112 = scmp.eq.s32.totalorder %s9, 0
    %p113 = por %p111, %p112
    %p114 = scmp.ne.s32.totalorder %s103, %s106
    %p115 = scmp.eq.s32.totalorder %s14, 1
    %p116 = por %p114, %p115
    %p117 = scmp.ne.s32.totalorder %s106, %s107
    %p118 = scmp.eq.s32.totalorder %s14, 0
    %p119 = por %p117, %p118
    %p120 = scmp.ne.s32.totalorder %s106, %s107
    %p121 = scmp.eq.s32.totalorder %s15, 1
    %p122 = por %p120, %p121
    %p124 = scmp.ne.s32.totalorder %s107, %s123
    %p125 = scmp.eq.s32.totalorder %s15, 0
    %p126 = por %p124, %p125
    %p127 = scmp.le.s32.totalorder 1, %s9
    %p128 = scmp.lt.s32.totalorder %s9, 3
    %p129 = pnand %p127, %p128
    %p130 = pneg %p129
    // Predicated region
    $region9: #{simple_cnn_forward.7} parent=5 // pred_check
      _
    $region10: #{simple_cnn_forward.7} parent=5 // pred_check_branch
      %132 = sbr.rel (%p129) target = $region12
    $region11: #{simple_cnn_forward.7} parent=5 // pred_region
      %s133 = ssub.s32 %s9, 1
      // Predicated region
      $region13: #{simple_cnn_forward.7} parent=11 // pred_check
        %p134 = pneg %p70
      $region14: #{simple_cnn_forward.7} parent=11 // pred_check_branch
        %136 = sbr.rel (%p134) target = $region16
      $region15: #{simple_cnn_forward.7} parent=11 // pred_region
        _
      $region16: #{simple_cnn_forward.7} parent=11 // pred_fallthru
        _
      // Predicated region
      $region17: #{simple_cnn_forward.7} parent=11 // pred_check
        %p137 = pneg %p91
      $region18: #{simple_cnn_forward.7} parent=11 // pred_check_branch
        %139 = sbr.rel (%p137) target = $region20
      $region19: #{simple_cnn_forward.7} parent=11 // pred_region
        _
      $region20: #{simple_cnn_forward.7} parent=11 // pred_fallthru
        _
    $region12: #{simple_cnn_forward.7} parent=5 // pred_fallthru
      _
    %p140 = scmp.lt.s32.totalorder %s9, 2
    // Predicated region
    $region21: #{simple_cnn_forward.7} parent=5 // pred_check
      %p141 = pneg %p140
    $region22: #{simple_cnn_forward.7} parent=5 // pred_check_branch
      %143 = sbr.rel (%p141) target = $region24
    $region23: #{simple_cnn_forward.7} parent=5 // pred_region
      // Predicated region
      $region25: #{simple_cnn_forward.7} parent=23 // pred_check
        %p144 = pneg %p43
      $region26: #{simple_cnn_forward.7} parent=23 // pred_check_branch
        %146 = sbr.rel (%p144) target = $region28
      $region27: #{simple_cnn_forward.7} parent=23 // pred_region
        %s147 = smul.u32 8, %s17
        %p148 = scmp.lt.s32.totalorder %s16, 1
        %s149 = scalar_select %p148, %s16, 1
        %p150 = scmp.lt.s32.totalorder %s147, 7
        %s151 = scalar_select %p150, %s147, 7
        %s152 = smul.addr %s149, 144
        %s153 = sadd.s32 %s151, %s152
        %s154 = smul.addr %s153, 4
        %s155 = scalar_lea.vmem %s0, %s154
        %s156 = smul.u32 8, %s17
      $region28: #{simple_cnn_forward.7} parent=23 // pred_fallthru
        _
    $region24: #{simple_cnn_forward.7} parent=5 // pred_fallthru
      _
    %p157 = scmp.le.s32.totalorder 1, %s9
    %p158 = scmp.lt.s32.totalorder %s9, 3
    %p159 = pnand %p157, %p158
    %p160 = pneg %p159
    // Predicated region
    $region29: #{simple_cnn_forward.7} parent=5 // pred_check
      _
    $region30: #{simple_cnn_forward.7} parent=5 // pred_check_branch
      %162 = sbr.rel (%p159) target = $region32
    $region31: #{simple_cnn_forward.7} parent=5 // pred_region
      %s163 = ssub.s32 %s9, 1
      %s164 = smul.u32 8, %s19
      %p165 = scmp.lt.s32.totalorder %s18, 1
      %s166 = scalar_select %p165, %s18, 1
      %p167 = scmp.lt.s32.totalorder %s164, 7
      %s168 = scalar_select %p167, %s164, 7
      %s169 = smul.addr %s166, 144
      %s170 = sadd.s32 %s168, %s169
      %s171 = smul.addr %s170, 4
      %s172 = scalar_lea.vmem %s0, %s171
      %p173 = pneg %p49
      %p174 = pneg %p46
      %p175 = pneg %p70
      %p176 = pneg %p67
      %p177 = pneg %p91
      %p178 = pneg %p88
      %p179 = pneg %p119
      %p180 = pneg %p116
      %s181 = smul.u32 8, %s19
      %p182 = scmp.lt.s32.totalorder %s18, 1
      %s183 = scalar_select %p182, %s18, 1
      %p184 = scmp.lt.s32.totalorder %s181, 7
      %s185 = scalar_select %p184, %s181, 7
      %s186 = smul.addr %s183, 32
      %s187 = sadd.s32 %s185, %s186
      %s188 = smul.addr %s187, 4
      %s189 = scalar_lea.vmem %s3, %s188
      %s190 = smul.u32 8, %s19
      %p191 = scmp.lt.s32.totalorder %s18, 1
      %s192 = scalar_select %p191, %s18, 1
      %p193 = scmp.lt.s32.totalorder %s190, 7
      %s194 = scalar_select %p193, %s190, 7
      %s195 = smul.addr %s192, 144
      %s196 = sadd.s32 %s194, %s195
      %s197 = smul.addr %s196, 4
      %s198 = scalar_lea.vmem %s0, %s197
      %s199 = smul.u32 8, %s19
      %s200 = smul.u32 8, %s19
      %p201 = scmp.lt.s32.totalorder %s18, 1
      %s202 = scalar_select %p201, %s18, 1
      %p203 = scmp.lt.s32.totalorder %s200, 7
      %s204 = scalar_select %p203, %s200, 7
      %s205 = smul.addr %s202, 32
      %s206 = sadd.s32 %s204, %s205
      %s207 = smul.addr %s206, 4
      %s208 = scalar_lea.vmem %s3, %s207
      %s209 = smul.u32 8, %s19
      %v211 = vld [vmem:[%s1] sm:$0xff]
      %v212 = vld [vmem:[%s1 + $0x8] sm:$0xff]
      %v213 = vld [vmem:[%s1 + $0x10] sm:$0xff]
      %v214 = vld [vmem:[%s1 + $0x18] sm:$0xff]
      %v215 = vld [vmem:[%s198] sm:$0xff]
      %v216 = vld [vmem:[%s198 + $0x8] sm:$0xff]
      %v217 = vld [vmem:[%s198 + $0x10] sm:$0xff]
      %v218 = vld [vmem:[%s198 + $0x18] sm:$0xff]
      %v219 = vld [vmem:[%s198 + $0x20] sm:$0xff]
      %v220 = vld [vmem:[%s198 + $0x28] sm:$0xff]
      %v221 = vld [vmem:[%s198 + $0x30] sm:$0xff]
      %v222 = vld [vmem:[%s198 + $0x38] sm:$0xff]
      %v223 = vld [vmem:[%s198 + $0x40] sm:$0xff]
      %v224 = vld [vmem:[%s198 + $0x48] sm:$0xff]
      %v225 = vld [vmem:[%s198 + $0x50] sm:$0xff]
      %v226 = vld [vmem:[%s198 + $0x58] sm:$0xff]
      %v227 = vld [vmem:[%s198 + $0x60] sm:$0xff]
      %v228 = vld [vmem:[%s198 + $0x68] sm:$0xff]
      %v229 = vld [vmem:[%s198 + $0x70] sm:$0xff]
      %v230 = vld [vmem:[%s198 + $0x78] sm:$0xff]
      %v231 = vld [vmem:[%s198 + $0x80] sm:$0xff]
      %v232 = vld [vmem:[%s198 + $0x88] sm:$0xff]
      %v233 = vld [vmem:[%s198 + $0x90] sm:$0xff]
      %v234 = vld [vmem:[%s198 + $0x98] sm:$0xff]
      %v235 = vld [vmem:[%s198 + $0xa0] sm:$0xff]
      %v236 = vld [vmem:[%s198 + $0xa8] sm:$0xff]
      %v237 = vld [vmem:[%s198 + $0xb0] sm:$0xff]
      %v238 = vld [vmem:[%s198 + $0xb8] sm:$0xff]
      %v239 = vld [vmem:[%s198 + $0xc0] sm:$0xff]
      %v240 = vld [vmem:[%s198 + $0xc8] sm:$0xff]
      %v241 = vld [vmem:[%s198 + $0xd0] sm:$0xff]
      %v242 = vld [vmem:[%s198 + $0xd8] sm:$0xff]
      %v243 = vld [vmem:[%s198 + $0xe0] sm:$0xff]
      %v244 = vld [vmem:[%s198 + $0xe8] sm:$0xff]
      %v245 = vld [vmem:[%s198 + $0xf0] sm:$0xff]
      %v246 = vld [vmem:[%s198 + $0xf8] sm:$0xff]
      %v247 = vld [vmem:[%s198 + $0x100] sm:$0xff]
      %v248 = vld [vmem:[%s198 + $0x108] sm:$0xff]
      %v249 = vld [vmem:[%s198 + $0x110] sm:$0xff]
      %v250 = vld [vmem:[%s198 + $0x118] sm:$0xff]
      %v251 = vld [vmem:[%s198 + $0x120] sm:$0xff]
      %v252 = vld [vmem:[%s198 + $0x128] sm:$0xff]
      %v253 = vld [vmem:[%s198 + $0x130] sm:$0xff]
      %v254 = vld [vmem:[%s198 + $0x138] sm:$0xff]
      %v255 = vld [vmem:[%s198 + $0x140] sm:$0xff]
      %v256 = vld [vmem:[%s198 + $0x148] sm:$0xff]
      %v257 = vld [vmem:[%s198 + $0x150] sm:$0xff]
      %v258 = vld [vmem:[%s198 + $0x158] sm:$0xff]
      %v259 = vld [vmem:[%s198 + $0x160] sm:$0xff]
      %v260 = vld [vmem:[%s198 + $0x168] sm:$0xff]
      %v261 = vld [vmem:[%s198 + $0x170] sm:$0xff]
      %v262 = vld [vmem:[%s198 + $0x178] sm:$0xff]
      %v263 = vld [vmem:[%s198 + $0x180] sm:$0xff]
      %v264 = vld [vmem:[%s198 + $0x188] sm:$0xff]
      %v265 = vld [vmem:[%s198 + $0x190] sm:$0xff]
      %v266 = vld [vmem:[%s198 + $0x198] sm:$0xff]
      %v267 = vld [vmem:[%s198 + $0x1a0] sm:$0xff]
      %v268 = vld [vmem:[%s198 + $0x1a8] sm:$0xff]
      %v269 = vld [vmem:[%s198 + $0x1b0] sm:$0xff]
      %v270 = vld [vmem:[%s198 + $0x1b8] sm:$0xff]
      %v271 = vld [vmem:[%s198 + $0x1c0] sm:$0xff]
      %v272 = vld [vmem:[%s198 + $0x1c8] sm:$0xff]
      %v273 = vld [vmem:[%s198 + $0x1d0] sm:$0xff]
      %v274 = vld [vmem:[%s198 + $0x1d8] sm:$0xff]
      %v275 = vld [vmem:[%s198 + $0x1e0] sm:$0xff]
      %v276 = vld [vmem:[%s198 + $0x1e8] sm:$0xff]
      %v277 = vld [vmem:[%s198 + $0x1f0] sm:$0xff]
      %v278 = vld [vmem:[%s198 + $0x1f8] sm:$0xff]
      %v279 = vld [vmem:[%s198 + $0x200] sm:$0xff]
      %v280 = vld [vmem:[%s198 + $0x208] sm:$0xff]
      %v281 = vld [vmem:[%s198 + $0x210] sm:$0xff]
      %v282 = vld [vmem:[%s198 + $0x218] sm:$0xff]
      %v283 = vld [vmem:[%s198 + $0x220] sm:$0xff]
      %v284 = vld [vmem:[%s198 + $0x228] sm:$0xff]
      %v285 = vld [vmem:[%s198 + $0x230] sm:$0xff]
      %v286 = vld [vmem:[%s198 + $0x238] sm:$0xff]
      %v287 = vld [vmem:[%s2] sm:$0xff]
      %v288 = vld [vmem:[%s2 + $0x8] sm:$0xff]
      %v289 = vld [vmem:[%s2 + $0x10] sm:$0xff]
      %v290 = vld [vmem:[%s2 + $0x18] sm:$0xff]
      %292 = vset.pattern.permute.xlu0 0
      %293 = vperm.xlu0 %292, %v287
      %v294 = vpop.permute.xlu0 %293
      %297 = vset.pattern.permute.xlu0 0
      %298 = vperm.xlu0 %297, %v288
      %v299 = vpop.permute.xlu0 %298
      %302 = vset.pattern.permute.xlu0 0
      %303 = vperm.xlu0 %302, %v289
      %v304 = vpop.permute.xlu0 %303
      %307 = vset.pattern.permute.xlu0 0
      %308 = vperm.xlu0 %307, %v290
      %v309 = vpop.permute.xlu0 %308
      %v315 = vunpack.c.l.b16 %v211
      %v316 = vunpack.c.h.b16 %v211
      %v317 = vunpack.c.l.b16 %v212
      %v318 = vunpack.c.h.b16 %v212
      %v319 = vunpack.c.l.b16 %v213
      %v320 = vunpack.c.h.b16 %v213
      %v321 = vunpack.c.l.b16 %v214
      %v322 = vunpack.c.h.b16 %v214
      %v323 = vpack.c.b16 %v317, %v315
      %v324 = vpack.c.b16 %v318, %v316
      %v325 = vpack.c.b16 %v321, %v319
      %v326 = vpack.c.b16 %v322, %v320
      %v401 = vunpack.c.l.b16 %v215
      %v402 = vunpack.c.h.b16 %v215
      %v403 = vunpack.c.l.b16 %v216
      %v404 = vunpack.c.h.b16 %v216
      %v405 = vunpack.c.l.b16 %v217
      %v406 = vunpack.c.h.b16 %v217
      %v407 = vunpack.c.l.b16 %v218
      %v408 = vunpack.c.h.b16 %v218
      %v409 = vunpack.c.l.b16 %v219
      %v410 = vunpack.c.h.b16 %v219
      %v411 = vunpack.c.l.b16 %v220
      %v412 = vunpack.c.h.b16 %v220
      %v413 = vunpack.c.l.b16 %v221
      %v414 = vunpack.c.h.b16 %v221
      %v415 = vunpack.c.l.b16 %v222
      %v416 = vunpack.c.h.b16 %v222
      %v417 = vunpack.c.l.b16 %v223
      %v418 = vunpack.c.h.b16 %v223
      %v419 = vunpack.c.l.b16 %v224
      %v420 = vunpack.c.h.b16 %v224
      %v421 = vunpack.c.l.b16 %v225
      %v422 = vunpack.c.h.b16 %v225
      %v423 = vunpack.c.l.b16 %v226
      %v424 = vunpack.c.h.b16 %v226
      %v425 = vunpack.c.l.b16 %v227
      %v426 = vunpack.c.h.b16 %v227
      %v427 = vunpack.c.l.b16 %v228
      %v428 = vunpack.c.h.b16 %v228
      %v429 = vunpack.c.l.b16 %v229
      %v430 = vunpack.c.h.b16 %v229
      %v431 = vunpack.c.l.b16 %v230
      %v432 = vunpack.c.h.b16 %v230
      %v433 = vunpack.c.l.b16 %v231
      %v434 = vunpack.c.h.b16 %v231
      %v435 = vunpack.c.l.b16 %v232
      %v436 = vunpack.c.h.b16 %v232
      %v437 = vunpack.c.l.b16 %v233
      %v438 = vunpack.c.h.b16 %v233
      %v439 = vunpack.c.l.b16 %v234
      %v440 = vunpack.c.h.b16 %v234
      %v441 = vunpack.c.l.b16 %v235
      %v442 = vunpack.c.h.b16 %v235
      %v443 = vunpack.c.l.b16 %v236
      %v444 = vunpack.c.h.b16 %v236
      %v445 = vunpack.c.l.b16 %v237
      %v446 = vunpack.c.h.b16 %v237
      %v447 = vunpack.c.l.b16 %v238
      %v448 = vunpack.c.h.b16 %v238
      %v449 = vunpack.c.l.b16 %v239
      %v450 = vunpack.c.h.b16 %v239
      %v451 = vunpack.c.l.b16 %v240
      %v452 = vunpack.c.h.b16 %v240
      %v453 = vunpack.c.l.b16 %v241
      %v454 = vunpack.c.h.b16 %v241
      %v455 = vunpack.c.l.b16 %v242
      %v456 = vunpack.c.h.b16 %v242
      %v457 = vunpack.c.l.b16 %v243
      %v458 = vunpack.c.h.b16 %v243
      %v459 = vunpack.c.l.b16 %v244
      %v460 = vunpack.c.h.b16 %v244
      %v461 = vunpack.c.l.b16 %v245
      %v462 = vunpack.c.h.b16 %v245
      %v463 = vunpack.c.l.b16 %v246
      %v464 = vunpack.c.h.b16 %v246
      %v465 = vunpack.c.l.b16 %v247
      %v466 = vunpack.c.h.b16 %v247
      %v467 = vunpack.c.l.b16 %v248
      %v468 = vunpack.c.h.b16 %v248
      %v469 = vunpack.c.l.b16 %v249
      %v470 = vunpack.c.h.b16 %v249
      %v471 = vunpack.c.l.b16 %v250
      %v472 = vunpack.c.h.b16 %v250
      %v473 = vunpack.c.l.b16 %v251
      %v474 = vunpack.c.h.b16 %v251
      %v475 = vunpack.c.l.b16 %v252
      %v476 = vunpack.c.h.b16 %v252
      %v477 = vunpack.c.l.b16 %v253
      %v478 = vunpack.c.h.b16 %v253
      %v479 = vunpack.c.l.b16 %v254
      %v480 = vunpack.c.h.b16 %v254
      %v481 = vunpack.c.l.b16 %v255
      %v482 = vunpack.c.h.b16 %v255
      %v483 = vunpack.c.l.b16 %v256
      %v484 = vunpack.c.h.b16 %v256
      %v485 = vunpack.c.l.b16 %v257
      %v486 = vunpack.c.h.b16 %v257
      %v487 = vunpack.c.l.b16 %v258
      %v488 = vunpack.c.h.b16 %v258
      %v489 = vunpack.c.l.b16 %v259
      %v490 = vunpack.c.h.b16 %v259
      %v491 = vunpack.c.l.b16 %v260
      %v492 = vunpack.c.h.b16 %v260
      %v493 = vunpack.c.l.b16 %v261
      %v494 = vunpack.c.h.b16 %v261
      %v495 = vunpack.c.l.b16 %v262
      %v496 = vunpack.c.h.b16 %v262
      %v497 = vunpack.c.l.b16 %v263
      %v498 = vunpack.c.h.b16 %v263
      %v499 = vunpack.c.l.b16 %v264
      %v500 = vunpack.c.h.b16 %v264
      %v501 = vunpack.c.l.b16 %v265
      %v502 = vunpack.c.h.b16 %v265
      %v503 = vunpack.c.l.b16 %v266
      %v504 = vunpack.c.h.b16 %v266
      %v505 = vunpack.c.l.b16 %v267
      %v506 = vunpack.c.h.b16 %v267
      %v507 = vunpack.c.l.b16 %v268
      %v508 = vunpack.c.h.b16 %v268
      %v509 = vunpack.c.l.b16 %v269
      %v510 = vunpack.c.h.b16 %v269
      %v511 = vunpack.c.l.b16 %v270
      %v512 = vunpack.c.h.b16 %v270
      %v513 = vunpack.c.l.b16 %v271
      %v514 = vunpack.c.h.b16 %v271
      %v515 = vunpack.c.l.b16 %v272
      %v516 = vunpack.c.h.b16 %v272
      %v517 = vunpack.c.l.b16 %v273
      %v518 = vunpack.c.h.b16 %v273
      %v519 = vunpack.c.l.b16 %v274
      %v520 = vunpack.c.h.b16 %v274
      %v521 = vunpack.c.l.b16 %v275
      %v522 = vunpack.c.h.b16 %v275
      %v523 = vunpack.c.l.b16 %v276
      %v524 = vunpack.c.h.b16 %v276
      %v525 = vunpack.c.l.b16 %v277
      %v526 = vunpack.c.h.b16 %v277
      %v527 = vunpack.c.l.b16 %v278
      %v528 = vunpack.c.h.b16 %v278
      %v529 = vunpack.c.l.b16 %v279
      %v530 = vunpack.c.h.b16 %v279
      %v531 = vunpack.c.l.b16 %v280
      %v532 = vunpack.c.h.b16 %v280
      %v533 = vunpack.c.l.b16 %v281
      %v534 = vunpack.c.h.b16 %v281
      %v535 = vunpack.c.l.b16 %v282
      %v536 = vunpack.c.h.b16 %v282
      %v537 = vunpack.c.l.b16 %v283
      %v538 = vunpack.c.h.b16 %v283
      %v539 = vunpack.c.l.b16 %v284
      %v540 = vunpack.c.h.b16 %v284
      %v541 = vunpack.c.l.b16 %v285
      %v542 = vunpack.c.h.b16 %v285
      %v543 = vunpack.c.l.b16 %v286
      %v544 = vunpack.c.h.b16 %v286
      %v545 = vpack.c.b16 %v409, %v401
      %v546 = vpack.c.b16 %v410, %v402
      %v547 = vpack.c.b16 %v411, %v403
      %v548 = vpack.c.b16 %v412, %v404
      %v549 = vpack.c.b16 %v413, %v405
      %v550 = vpack.c.b16 %v414, %v406
      %v551 = vpack.c.b16 %v415, %v407
      %v552 = vpack.c.b16 %v416, %v408
      %v553 = vpack.c.b16 %v425, %v417
      %v554 = vpack.c.b16 %v426, %v418
      %v555 = vpack.c.b16 %v427, %v419
      %v556 = vpack.c.b16 %v428, %v420
      %v557 = vpack.c.b16 %v429, %v421
      %v558 = vpack.c.b16 %v430, %v422
      %v559 = vpack.c.b16 %v431, %v423
      %v560 = vpack.c.b16 %v432, %v424
      %v561 = vpack.c.b16 %v441, %v433
      %v562 = vpack.c.b16 %v442, %v434
      %v563 = vpack.c.b16 %v443, %v435
      %v564 = vpack.c.b16 %v444, %v436
      %v565 = vpack.c.b16 %v445, %v437
      %v566 = vpack.c.b16 %v446, %v438
      %v567 = vpack.c.b16 %v447, %v439
      %v568 = vpack.c.b16 %v448, %v440
      %v569 = vpack.c.b16 %v457, %v449
      %v570 = vpack.c.b16 %v458, %v450
      %v571 = vpack.c.b16 %v459, %v451
      %v572 = vpack.c.b16 %v460, %v452
      %v573 = vpack.c.b16 %v461, %v453
      %v574 = vpack.c.b16 %v462, %v454
      %v575 = vpack.c.b16 %v463, %v455
      %v576 = vpack.c.b16 %v464, %v456
      %v577 = vpack.c.b16 %v473, %v465
      %v578 = vpack.c.b16 %v474, %v466
      %v579 = vpack.c.b16 %v475, %v467
      %v580 = vpack.c.b16 %v476, %v468
      %v581 = vpack.c.b16 %v477, %v469
      %v582 = vpack.c.b16 %v478, %v470
      %v583 = vpack.c.b16 %v479, %v471
      %v584 = vpack.c.b16 %v480, %v472
      %v585 = vpack.c.b16 %v489, %v481
      %v586 = vpack.c.b16 %v490, %v482
      %v587 = vpack.c.b16 %v491, %v483
      %v588 = vpack.c.b16 %v492, %v484
      %v589 = vpack.c.b16 %v493, %v485
      %v590 = vpack.c.b16 %v494, %v486
      %v591 = vpack.c.b16 %v495, %v487
      %v592 = vpack.c.b16 %v496, %v488
      %v593 = vpack.c.b16 %v505, %v497
      %v594 = vpack.c.b16 %v506, %v498
      %v595 = vpack.c.b16 %v507, %v499
      %v596 = vpack.c.b16 %v508, %v500
      %v597 = vpack.c.b16 %v509, %v501
      %v598 = vpack.c.b16 %v510, %v502
      %v599 = vpack.c.b16 %v511, %v503
      %v600 = vpack.c.b16 %v512, %v504
      %v601 = vpack.c.b16 %v521, %v513
      %v602 = vpack.c.b16 %v522, %v514
      %v603 = vpack.c.b16 %v523, %v515
      %v604 = vpack.c.b16 %v524, %v516
      %v605 = vpack.c.b16 %v525, %v517
      %v606 = vpack.c.b16 %v526, %v518
      %v607 = vpack.c.b16 %v527, %v519
      %v608 = vpack.c.b16 %v528, %v520
      %v609 = vpack.c.b16 %v537, %v529
      %v610 = vpack.c.b16 %v538, %v530
      %v611 = vpack.c.b16 %v539, %v531
      %v612 = vpack.c.b16 %v540, %v532
      %v613 = vpack.c.b16 %v541, %v533
      %v614 = vpack.c.b16 %v542, %v534
      %v615 = vpack.c.b16 %v543, %v535
      %v616 = vpack.c.b16 %v544, %v536
      %vm689 = vcmask 130048
      %v691 = vsel %vm689, %v324, 0
      %v694 = vsel %vm689, %v326, 0
      %696 = vmatpush.bf16.msra.mxu0 %v601
      %697 = vmatpush.bf16.msra.mxu0 %v593
      %698 = vmatpush.bf16.msra.mxu0 %v585
      %699 = vmatpush.bf16.msra.mxu0 %v577
      %700 = vmatpush.bf16.msra.mxu0 %v569
      %701 = vmatpush.bf16.msra.mxu0 %v561
      %702 = vmatpush.bf16.msra.mxu0 %v553
      %703 = vmatpush.bf16.msra.mxu0 %v545
      %704 = vmatmul.bf16.gmra.mxu0 %v323
      %v705 = vpop.f32.mrf.mxu0
      %v706 = vadd.f32 %v294, %v705
      %v707 = vpop.f32.mrf.mxu0
      %v708 = vadd.f32 %v299, %v707
      %709 = vmatmul.bf16.gmra.mxu0 %v325
      %v710 = vpop.f32.mrf.mxu0
      %v711 = vadd.f32 %v304, %v710
      %v712 = vpop.f32.mrf.mxu0
      %v713 = vadd.f32 %v309, %v712
      %714 = vdwg.mxu0
      %715 = vmatpush.bf16.msra.mxu0 0
      %716 = vmatpush.bf16.msra.mxu0 0
      %717 = vmatpush.bf16.msra.mxu0 0
      %718 = vmatpush.bf16.msra.mxu0 0
      %719 = vmatpush.bf16.msra.mxu0 0
      %720 = vmatpush.bf16.msra.mxu0 0
      %721 = vmatpush.bf16.msra.mxu0 0
      %722 = vmatpush.bf16.msra.mxu0 %v609
      %723 = vmatmul.bf16.gmra.mxu0 %v691
      %v724 = vpop.f32.mrf.mxu0
      %v725 = vadd.f32 %v706, %v724
      %v726 = vpop.f32.mrf.mxu0
      %v727 = vadd.f32 %v708, %v726
      %728 = vmatmul.bf16.gmra.mxu0 %v694
      %v729 = vpop.f32.mrf.mxu0
      %v730 = vadd.f32 %v711, %v729
      %v731 = vpop.f32.mrf.mxu0
      %v732 = vadd.f32 %v713, %v731
      %733 = vdwg.mxu0
      %734 = vmatpush.bf16.msra.mxu0 %v602
      %735 = vmatpush.bf16.msra.mxu0 %v594
      %736 = vmatpush.bf16.msra.mxu0 %v586
      %737 = vmatpush.bf16.msra.mxu0 %v578
      %738 = vmatpush.bf16.msra.mxu0 %v570
      %739 = vmatpush.bf16.msra.mxu0 %v562
      %740 = vmatpush.bf16.msra.mxu0 %v554
      %741 = vmatpush.bf16.msra.mxu0 %v546
      %742 = vmatmul.bf16.gmra.mxu0 %v323
      %v743 = vpop.f32.mrf.mxu0
      %v744 = vadd.f32 %v294, %v743
      %v745 = vpop.f32.mrf.mxu0
      %v746 = vadd.f32 %v299, %v745
      %747 = vmatmul.bf16.gmra.mxu0 %v325
      %v748 = vpop.f32.mrf.mxu0
      %v749 = vadd.f32 %v304, %v748
      %v750 = vpop.f32.mrf.mxu0
      %v751 = vadd.f32 %v309, %v750
      %752 = vdwg.mxu0
      %753 = vmatpush.bf16.msra.mxu0 0
      %754 = vmatpush.bf16.msra.mxu0 0
      %755 = vmatpush.bf16.msra.mxu0 0
      %756 = vmatpush.bf16.msra.mxu0 0
      %757 = vmatpush.bf16.msra.mxu0 0
      %758 = vmatpush.bf16.msra.mxu0 0
      %759 = vmatpush.bf16.msra.mxu0 0
      %760 = vmatpush.bf16.msra.mxu0 %v610
      %761 = vmatmul.bf16.gmra.mxu0 %v691
      %v762 = vpop.f32.mrf.mxu0
      %v763 = vadd.f32 %v744, %v762
      %v764 = vpop.f32.mrf.mxu0
      %v765 = vadd.f32 %v746, %v764
      %766 = vmatmul.bf16.gmra.mxu0 %v694
      %v767 = vpop.f32.mrf.mxu0
      %v768 = vadd.f32 %v749, %v767
      %v769 = vpop.f32.mrf.mxu0
      %v770 = vadd.f32 %v751, %v769
      %771 = vdwg.mxu0
      %772 = vmatpush.bf16.msra.mxu0 %v603
      %773 = vmatpush.bf16.msra.mxu0 %v595
      %774 = vmatpush.bf16.msra.mxu0 %v587
      %775 = vmatpush.bf16.msra.mxu0 %v579
      %776 = vmatpush.bf16.msra.mxu0 %v571
      %777 = vmatpush.bf16.msra.mxu0 %v563
      %778 = vmatpush.bf16.msra.mxu0 %v555
      %779 = vmatpush.bf16.msra.mxu0 %v547
      %780 = vmatmul.bf16.gmra.mxu0 %v323
      %v781 = vpop.f32.mrf.mxu0
      %v782 = vadd.f32 %v294, %v781
      %v783 = vpop.f32.mrf.mxu0
      %v784 = vadd.f32 %v299, %v783
      %785 = vmatmul.bf16.gmra.mxu0 %v325
      %v786 = vpop.f32.mrf.mxu0
      %v787 = vadd.f32 %v304, %v786
      %v788 = vpop.f32.mrf.mxu0
      %v789 = vadd.f32 %v309, %v788
      %790 = vdwg.mxu0
      %791 = vmatpush.bf16.msra.mxu0 0
      %792 = vmatpush.bf16.msra.mxu0 0
      %793 = vmatpush.bf16.msra.mxu0 0
      %794 = vmatpush.bf16.msra.mxu0 0
      %795 = vmatpush.bf16.msra.mxu0 0
      %796 = vmatpush.bf16.msra.mxu0 0
      %797 = vmatpush.bf16.msra.mxu0 0
      %798 = vmatpush.bf16.msra.mxu0 %v611
      %799 = vmatmul.bf16.gmra.mxu0 %v691
      %v800 = vpop.f32.mrf.mxu0
      %v801 = vadd.f32 %v782, %v800
      %v802 = vpop.f32.mrf.mxu0
      %v803 = vadd.f32 %v784, %v802
      %804 = vmatmul.bf16.gmra.mxu0 %v694
      %v805 = vpop.f32.mrf.mxu0
      %v806 = vadd.f32 %v787, %v805
      %v807 = vpop.f32.mrf.mxu0
      %v808 = vadd.f32 %v789, %v807
      %809 = vdwg.mxu0
      %810 = vmatpush.bf16.msra.mxu0 %v604
      %811 = vmatpush.bf16.msra.mxu0 %v596
      %812 = vmatpush.bf16.msra.mxu0 %v588
      %813 = vmatpush.bf16.msra.mxu0 %v580
      %814 = vmatpush.bf16.msra.mxu0 %v572
      %815 = vmatpush.bf16.msra.mxu0 %v564
      %816 = vmatpush.bf16.msra.mxu0 %v556
      %817 = vmatpush.bf16.msra.mxu0 %v548
      %818 = vmatmul.bf16.gmra.mxu0 %v323
      %v819 = vpop.f32.mrf.mxu0
      %v820 = vadd.f32 %v294, %v819
      %v821 = vpop.f32.mrf.mxu0
      %v822 = vadd.f32 %v299, %v821
      %823 = vmatmul.bf16.gmra.mxu0 %v325
      %v824 = vpop.f32.mrf.mxu0
      %v825 = vadd.f32 %v304, %v824
      %v826 = vpop.f32.mrf.mxu0
      %v827 = vadd.f32 %v309, %v826
      %828 = vdwg.mxu0
      %829 = vmatpush.bf16.msra.mxu0 0
      %830 = vmatpush.bf16.msra.mxu0 0
      %831 = vmatpush.bf16.msra.mxu0 0
      %832 = vmatpush.bf16.msra.mxu0 0
      %833 = vmatpush.bf16.msra.mxu0 0
      %834 = vmatpush.bf16.msra.mxu0 0
      %835 = vmatpush.bf16.msra.mxu0 0
      %836 = vmatpush.bf16.msra.mxu0 %v612
      %837 = vmatmul.bf16.gmra.mxu0 %v691
      %v838 = vpop.f32.mrf.mxu0
      %v839 = vadd.f32 %v820, %v838
      %v840 = vpop.f32.mrf.mxu0
      %v841 = vadd.f32 %v822, %v840
      %842 = vmatmul.bf16.gmra.mxu0 %v694
      %v843 = vpop.f32.mrf.mxu0
      %v844 = vadd.f32 %v825, %v843
      %v845 = vpop.f32.mrf.mxu0
      %v846 = vadd.f32 %v827, %v845
      %847 = vdwg.mxu0
      %848 = vmatpush.bf16.msra.mxu0 %v605
      %849 = vmatpush.bf16.msra.mxu0 %v597
      %850 = vmatpush.bf16.msra.mxu0 %v589
      %851 = vmatpush.bf16.msra.mxu0 %v581
      %852 = vmatpush.bf16.msra.mxu0 %v573
      %853 = vmatpush.bf16.msra.mxu0 %v565
      %854 = vmatpush.bf16.msra.mxu0 %v557
      %855 = vmatpush.bf16.msra.mxu0 %v549
      %856 = vmatmul.bf16.gmra.mxu0 %v323
      %v857 = vpop.f32.mrf.mxu0
      %v858 = vadd.f32 %v294, %v857
      %v859 = vpop.f32.mrf.mxu0
      %v860 = vadd.f32 %v299, %v859
      %861 = vmatmul.bf16.gmra.mxu0 %v325
      %v862 = vpop.f32.mrf.mxu0
      %v863 = vadd.f32 %v304, %v862
      %v864 = vpop.f32.mrf.mxu0
      %v865 = vadd.f32 %v309, %v864
      %866 = vdwg.mxu0
      %867 = vmatpush.bf16.msra.mxu0 0
      %868 = vmatpush.bf16.msra.mxu0 0
      %869 = vmatpush.bf16.msra.mxu0 0
      %870 = vmatpush.bf16.msra.mxu0 0
      %871 = vmatpush.bf16.msra.mxu0 0
      %872 = vmatpush.bf16.msra.mxu0 0
      %873 = vmatpush.bf16.msra.mxu0 0
      %874 = vmatpush.bf16.msra.mxu0 %v613
      %875 = vmatmul.bf16.gmra.mxu0 %v691
      %v876 = vpop.f32.mrf.mxu0
      %v877 = vadd.f32 %v858, %v876
      %v878 = vpop.f32.mrf.mxu0
      %v879 = vadd.f32 %v860, %v878
      %880 = vmatmul.bf16.gmra.mxu0 %v694
      %v881 = vpop.f32.mrf.mxu0
      %v882 = vadd.f32 %v863, %v881
      %v883 = vpop.f32.mrf.mxu0
      %v884 = vadd.f32 %v865, %v883
      %885 = vdwg.mxu0
      %886 = vmatpush.bf16.msra.mxu0 %v606
      %887 = vmatpush.bf16.msra.mxu0 %v598
      %888 = vmatpush.bf16.msra.mxu0 %v590
      %889 = vmatpush.bf16.msra.mxu0 %v582
      %890 = vmatpush.bf16.msra.mxu0 %v574
      %891 = vmatpush.bf16.msra.mxu0 %v566
      %892 = vmatpush.bf16.msra.mxu0 %v558
      %893 = vmatpush.bf16.msra.mxu0 %v550
      %894 = vmatmul.bf16.gmra.mxu0 %v323
      %v895 = vpop.f32.mrf.mxu0
      %v896 = vadd.f32 %v294, %v895
      %v897 = vpop.f32.mrf.mxu0
      %v898 = vadd.f32 %v299, %v897
      %899 = vmatmul.bf16.gmra.mxu0 %v325
      %v900 = vpop.f32.mrf.mxu0
      %v901 = vadd.f32 %v304, %v900
      %v902 = vpop.f32.mrf.mxu0
      %v903 = vadd.f32 %v309, %v902
      %904 = vdwg.mxu0
      %905 = vmatpush.bf16.msra.mxu0 0
      %906 = vmatpush.bf16.msra.mxu0 0
      %907 = vmatpush.bf16.msra.mxu0 0
      %908 = vmatpush.bf16.msra.mxu0 0
      %909 = vmatpush.bf16.msra.mxu0 0
      %910 = vmatpush.bf16.msra.mxu0 0
      %911 = vmatpush.bf16.msra.mxu0 0
      %912 = vmatpush.bf16.msra.mxu0 %v614
      %913 = vmatmul.bf16.gmra.mxu0 %v691
      %v914 = vpop.f32.mrf.mxu0
      %v915 = vadd.f32 %v896, %v914
      %v916 = vpop.f32.mrf.mxu0
      %v917 = vadd.f32 %v898, %v916
      %918 = vmatmul.bf16.gmra.mxu0 %v694
      %v919 = vpop.f32.mrf.mxu0
      %v920 = vadd.f32 %v901, %v919
      %v921 = vpop.f32.mrf.mxu0
      %v922 = vadd.f32 %v903, %v921
      %923 = vdwg.mxu0
      %924 = vmatpush.bf16.msra.mxu0 %v607
      %925 = vmatpush.bf16.msra.mxu0 %v599
      %926 = vmatpush.bf16.msra.mxu0 %v591
      %927 = vmatpush.bf16.msra.mxu0 %v583
      %928 = vmatpush.bf16.msra.mxu0 %v575
      %929 = vmatpush.bf16.msra.mxu0 %v567
      %930 = vmatpush.bf16.msra.mxu0 %v559
      %931 = vmatpush.bf16.msra.mxu0 %v551
      %932 = vmatmul.bf16.gmra.mxu0 %v323
      %v933 = vpop.f32.mrf.mxu0
      %v934 = vadd.f32 %v294, %v933
      %v935 = vpop.f32.mrf.mxu0
      %v936 = vadd.f32 %v299, %v935
      %937 = vmatmul.bf16.gmra.mxu0 %v325
      %v938 = vpop.f32.mrf.mxu0
      %v939 = vadd.f32 %v304, %v938
      %v940 = vpop.f32.mrf.mxu0
      %v941 = vadd.f32 %v309, %v940
      %942 = vdwg.mxu0
      %943 = vmatpush.bf16.msra.mxu0 0
      %944 = vmatpush.bf16.msra.mxu0 0
      %945 = vmatpush.bf16.msra.mxu0 0
      %946 = vmatpush.bf16.msra.mxu0 0
      %947 = vmatpush.bf16.msra.mxu0 0
      %948 = vmatpush.bf16.msra.mxu0 0
      %949 = vmatpush.bf16.msra.mxu0 0
      %950 = vmatpush.bf16.msra.mxu0 %v615
      %951 = vmatmul.bf16.gmra.mxu0 %v691
      %v952 = vpop.f32.mrf.mxu0
      %v953 = vadd.f32 %v934, %v952
      %v954 = vpop.f32.mrf.mxu0
      %v955 = vadd.f32 %v936, %v954
      %956 = vmatmul.bf16.gmra.mxu0 %v694
      %v957 = vpop.f32.mrf.mxu0
      %v958 = vadd.f32 %v939, %v957
      %v959 = vpop.f32.mrf.mxu0
      %v960 = vadd.f32 %v941, %v959
      %961 = vdwg.mxu0
      %962 = vmatpush.bf16.msra.mxu0 %v608
      %963 = vmatpush.bf16.msra.mxu0 %v600
      %964 = vmatpush.bf16.msra.mxu0 %v592
      %965 = vmatpush.bf16.msra.mxu0 %v584
      %966 = vmatpush.bf16.msra.mxu0 %v576
      %967 = vmatpush.bf16.msra.mxu0 %v568
      %968 = vmatpush.bf16.msra.mxu0 %v560
      %969 = vmatpush.bf16.msra.mxu0 %v552
      %970 = vmatmul.bf16.gmra.mxu0 %v323
      %v971 = vpop.f32.mrf.mxu0
      %v972 = vadd.f32 %v294, %v971
      %v973 = vpop.f32.mrf.mxu0
      %v974 = vadd.f32 %v299, %v973
      %975 = vmatmul.bf16.gmra.mxu0 %v325
      %v976 = vpop.f32.mrf.mxu0
      %v977 = vadd.f32 %v304, %v976
      %v978 = vpop.f32.mrf.mxu0
      %v979 = vadd.f32 %v309, %v978
      %980 = vdwg.mxu0
      %981 = vmatpush.bf16.msra.mxu0 0
      %982 = vmatpush.bf16.msra.mxu0 0
      %983 = vmatpush.bf16.msra.mxu0 0
      %984 = vmatpush.bf16.msra.mxu0 0
      %985 = vmatpush.bf16.msra.mxu0 0
      %986 = vmatpush.bf16.msra.mxu0 0
      %987 = vmatpush.bf16.msra.mxu0 0
      %988 = vmatpush.bf16.msra.mxu0 %v616
      %989 = vmatmul.bf16.gmra.mxu0 %v691
      %v990 = vpop.f32.mrf.mxu0
      %v991 = vadd.f32 %v972, %v990
      %v992 = vpop.f32.mrf.mxu0
      %v993 = vadd.f32 %v974, %v992
      %994 = vmatmul.bf16.gmra.mxu0 %v694
      %v995 = vpop.f32.mrf.mxu0
      %v996 = vadd.f32 %v977, %v995
      %v997 = vpop.f32.mrf.mxu0
      %v998 = vadd.f32 %v979, %v997
      %999 = vdwg.mxu0
      %v1000 = vmax.f32 %v725, 0.0
      %v1001 = vmax.f32 %v763, 0.0
      %v1002 = vmax.f32 %v801, 0.0
      %v1003 = vmax.f32 %v839, 0.0
      %v1004 = vmax.f32 %v877, 0.0
      %v1005 = vmax.f32 %v915, 0.0
      %v1006 = vmax.f32 %v953, 0.0
      %v1007 = vmax.f32 %v991, 0.0
      %v1008 = vmax.f32 %v727, 0.0
      %v1009 = vmax.f32 %v765, 0.0
      %v1010 = vmax.f32 %v803, 0.0
      %v1011 = vmax.f32 %v841, 0.0
      %v1012 = vmax.f32 %v879, 0.0
      %v1013 = vmax.f32 %v917, 0.0
      %v1014 = vmax.f32 %v955, 0.0
      %v1015 = vmax.f32 %v993, 0.0
      %v1016 = vmax.f32 %v730, 0.0
      %v1017 = vmax.f32 %v768, 0.0
      %v1018 = vmax.f32 %v806, 0.0
      %v1019 = vmax.f32 %v844, 0.0
      %v1020 = vmax.f32 %v882, 0.0
      %v1021 = vmax.f32 %v920, 0.0
      %v1022 = vmax.f32 %v958, 0.0
      %v1023 = vmax.f32 %v996, 0.0
      %v1024 = vmax.f32 %v732, 0.0
      %v1025 = vmax.f32 %v770, 0.0
      %v1026 = vmax.f32 %v808, 0.0
      %v1027 = vmax.f32 %v846, 0.0
      %v1028 = vmax.f32 %v884, 0.0
      %v1029 = vmax.f32 %v922, 0.0
      %v1030 = vmax.f32 %v960, 0.0
      %v1031 = vmax.f32 %v998, 0.0
      %v1032 = vpack.c.bf16 %v1001, %v1000
      %v1033 = vpack.c.bf16 %v1003, %v1002
      %v1034 = vpack.c.bf16 %v1005, %v1004
      %v1035 = vpack.c.bf16 %v1007, %v1006
      %v1036 = vpack.c.bf16 %v1009, %v1008
      %v1037 = vpack.c.bf16 %v1011, %v1010
      %v1038 = vpack.c.bf16 %v1013, %v1012
      %v1039 = vpack.c.bf16 %v1015, %v1014
      %v1040 = vpack.c.bf16 %v1017, %v1016
      %v1041 = vpack.c.bf16 %v1019, %v1018
      %v1042 = vpack.c.bf16 %v1021, %v1020
      %v1043 = vpack.c.bf16 %v1023, %v1022
      %v1044 = vpack.c.bf16 %v1025, %v1024
      %v1045 = vpack.c.bf16 %v1027, %v1026
      %v1046 = vpack.c.bf16 %v1029, %v1028
      %v1047 = vpack.c.bf16 %v1031, %v1030
      %1048 = vst [vmem:[%s208] sm:$0xff] %v1032
      %1049 = vst [vmem:[%s208 + $0x8] sm:$0xff] %v1033
      %1050 = vst [vmem:[%s208 + $0x10] sm:$0xff] %v1034
      %1051 = vst [vmem:[%s208 + $0x18] sm:$0xff] %v1035
      %1052 = vst [vmem:[%s208 + $0x20] sm:$0xff] %v1036
      %1053 = vst [vmem:[%s208 + $0x28] sm:$0xff] %v1037
      %1054 = vst [vmem:[%s208 + $0x30] sm:$0xff] %v1038
      %1055 = vst [vmem:[%s208 + $0x38] sm:$0xff] %v1039
      %1056 = vst [vmem:[%s208 + $0x40] sm:$0xff] %v1040
      %1057 = vst [vmem:[%s208 + $0x48] sm:$0xff] %v1041
      %1058 = vst [vmem:[%s208 + $0x50] sm:$0xff] %v1042
      %1059 = vst [vmem:[%s208 + $0x58] sm:$0xff] %v1043
      %1060 = vst [vmem:[%s208 + $0x60] sm:$0xff] %v1044
      %1061 = vst [vmem:[%s208 + $0x68] sm:$0xff] %v1045
      %1062 = vst [vmem:[%s208 + $0x70] sm:$0xff] %v1046
      %1063 = vst [vmem:[%s208 + $0x78] sm:$0xff] %v1047
      %s1064 = smul.u32 8, %s19
      %p1065 = scmp.lt.s32.totalorder %s18, 1
      %s1066 = scalar_select %p1065, %s18, 1
      %p1067 = scmp.lt.s32.totalorder %s1064, 7
      %s1068 = scalar_select %p1067, %s1064, 7
      %s1069 = smul.addr %s1066, 32
      %s1070 = sadd.s32 %s1068, %s1069
      %s1071 = smul.addr %s1070, 4
      %s1072 = scalar_lea.vmem %s3, %s1071
      // Predicated region
      $region33: #{simple_cnn_forward.7} parent=31 // pred_check
        %p1073 = pneg %p116
      $region34: #{simple_cnn_forward.7} parent=31 // pred_check_branch
        %1075 = sbr.rel (%p1073) target = $region36
      $region35: #{simple_cnn_forward.7} parent=31 // pred_region
        %s1076 = smul.u32 8, %s19
      $region36: #{simple_cnn_forward.7} parent=31 // pred_fallthru
        _
    $region32: #{simple_cnn_forward.7} parent=5 // pred_fallthru
      _
    %p1077 = scmp.le.s32.totalorder 2, %s9
    // Predicated region
    $region37: #{simple_cnn_forward.7} parent=5 // pred_check
      %p1078 = pneg %p1077
    $region38: #{simple_cnn_forward.7} parent=5 // pred_check_branch
      %1080 = sbr.rel (%p1078) target = $region40
    $region39: #{simple_cnn_forward.7} parent=5 // pred_region
      %s1081 = ssub.s32 %s9, 2
      // Predicated region
      $region41: #{simple_cnn_forward.7} parent=39 // pred_check
        %p1082 = pneg %p122
      $region42: #{simple_cnn_forward.7} parent=39 // pred_check_branch
        %1084 = sbr.rel (%p1082) target = $region44
      $region43: #{simple_cnn_forward.7} parent=39 // pred_region
        %s1085 = smul.u32 8, %s21
        %p1086 = scmp.lt.s32.totalorder %s20, 1
        %s1087 = scalar_select %p1086, %s20, 1
        %p1088 = scmp.lt.s32.totalorder %s1085, 7
        %s1089 = scalar_select %p1088, %s1085, 7
        %s1090 = smul.addr %s1087, 32
        %s1091 = sadd.s32 %s1089, %s1090
        %s1092 = smul.addr %s1091, 4
        %s1093 = scalar_lea.vmem %s3, %s1092
      $region44: #{simple_cnn_forward.7} parent=39 // pred_fallthru
        _
    $region40: #{simple_cnn_forward.7} parent=5 // pred_fallthru
      _
  $region6: #{simple_cnn_forward.7} parent=0 // loop_footer
    %s13 = sadd.s32 1, %s9
  $region7: #{simple_cnn_forward.7} parent=0 // loop_footer_branch
    %8 = sbr.rel target = $region3
  $region8: #{simple_cnn_forward.7} parent=0 // loop_exit
    _

// kernel: simple_cnn_forward.8
$region0: #{simple_cnn_forward.8}
  #allocation0 [shape = 'u32[]', space=smem, size = 0x4, offset = 0x4, fixed_abs, tag = 'smem constant byte address 0x4 - core index']
  #allocation1 [shape = 'u32[72,128]{1,0:T(1,128)}', space=vmem, size = 0x9000, scoped, tag = 'internal scratch']
  %s0 = inlined_call_operand.vmem [shape: bf16[2,512,64], index: 0, kind: input, shape index: {}]
  %s1 = inlined_call_operand.vmem [shape: bf16[2,512,16], index: 1, kind: output, shape index: {}]
  %s2 = sld [smem:[#allocation0]]
  $region37: #{simple_cnn_forward.8} parent=0
    _
  %s4 = ssub.s32 1, %s2
  %s5 = scalar_select 0, %s4, %s2
  loop: start=0, step=1, limit=6
  $region2: #{simple_cnn_forward.8} parent=0 // loop_pre_header
    _
  $region3: #{simple_cnn_forward.8} parent=0 // loop_header
    %s7 = sphi 0, %s11
    %p8 = scmp.ge.s32.totalorder %s7, 6
    %s14 = sphi 0, %s26
    %s15 = sphi 0, %s22
    %s16 = sphi 0, %s14
    %s17 = sphi 0, %s15
    %s18 = sphi 0, %s16
    %s19 = sphi 0, %s17
    %s31 = sphi 0, %s33
    %s34 = sphi 0, %s31
    %s35 = sphi 0, %s34
    %s51 = sphi 0, %s35
    %s59 = sphi 0, %s61
    %s62 = sphi 0, %s59
    %s63 = sphi 0, %s62
    %s79 = sphi 0, %s63
  $region4: #{simple_cnn_forward.8} parent=0 // loop_header_branch
    %10 = sbr.rel (%p8) target = $region8
  $region5: #{simple_cnn_forward.8} parent=0 // loop_body
    %s12 = ssub.s32 %s7, 1
    %s13 = ssub.s32 %s7, 2
    %s20 = sadd.s32 1, %s15
    %p21 = scmp.ge.s32.totalorder %s20, 2
    %s22 = scalar_select %p21, 0, %s20
    %s23 = sadd.s32 1, %s14
    %s24 = scalar_select %p21, %s23, %s14
    %p25 = scmp.ge.s32.totalorder %s24, 2
    %s26 = scalar_select %p25, 0, %s24
    %s27 = ssub.s32 %s14, %s26
    %s28 = ssub.s32 %s15, %s22
    %s29 = sor.u32 %s27, %s28
    %p30 = scmp.eq.s32.totalorder %s29, 0
    %s32 = sadd.s32 %s31, 1
    %s33 = scalar_select %p30, %s31, %s32
    %p36 = pneg %p30
    %p37 = scmp.eq.s32.totalorder %s7, 3
    %p38 = por %p36, %p37
    %p39 = scmp.ne.s32.totalorder %s31, %s34
    %p40 = scmp.eq.s32.totalorder %s7, 0
    %p41 = por %p39, %p40
    %p42 = scmp.ne.s32.totalorder %s31, %s34
    %p43 = scmp.eq.s32.totalorder %s12, 3
    %p44 = por %p42, %p43
    %p45 = scmp.ne.s32.totalorder %s34, %s35
    %p46 = scmp.eq.s32.totalorder %s12, 0
    %p47 = por %p45, %p46
    %p48 = scmp.ne.s32.totalorder %s34, %s35
    %p49 = scmp.eq.s32.totalorder %s13, 3
    %p50 = por %p48, %p49
    %p52 = scmp.ne.s32.totalorder %s35, %s51
    %p53 = scmp.eq.s32.totalorder %s13, 0
    %p54 = por %p52, %p53
    %s55 = ssub.s32 %s14, %s26
    %s56 = ssub.s32 %s15, %s22
    %s57 = sor.u32 %s55, %s56
    %p58 = scmp.eq.s32.totalorder %s57, 0
    %s60 = sadd.s32 %s59, 1
    %s61 = scalar_select %p58, %s59, %s60
    %p64 = pneg %p58
    %p65 = scmp.eq.s32.totalorder %s7, 3
    %p66 = por %p64, %p65
    %p67 = scmp.ne.s32.totalorder %s59, %s62
    %p68 = scmp.eq.s32.totalorder %s7, 0
    %p69 = por %p67, %p68
    %p70 = scmp.ne.s32.totalorder %s59, %s62
    %p71 = scmp.eq.s32.totalorder %s12, 3
    %p72 = por %p70, %p71
    %p73 = scmp.ne.s32.totalorder %s62, %s63
    %p74 = scmp.eq.s32.totalorder %s12, 0
    %p75 = por %p73, %p74
    %p76 = scmp.ne.s32.totalorder %s62, %s63
    %p77 = scmp.eq.s32.totalorder %s13, 3
    %p78 = por %p76, %p77
    %p80 = scmp.ne.s32.totalorder %s63, %s79
    %p81 = scmp.eq.s32.totalorder %s13, 0
    %p82 = por %p80, %p81
    %p83 = scmp.le.s32.totalorder 1, %s7
    %p84 = scmp.lt.s32.totalorder %s7, 5
    %p85 = pnand %p83, %p84
    %p86 = pneg %p85
    // Predicated region
    $region9: #{simple_cnn_forward.8} parent=5 // pred_check
      _
    $region10: #{simple_cnn_forward.8} parent=5 // pred_check_branch
      %88 = sbr.rel (%p85) target = $region12
    $region11: #{simple_cnn_forward.8} parent=5 // pred_region
      %s89 = ssub.s32 %s7, 1
    $region12: #{simple_cnn_forward.8} parent=5 // pred_fallthru
      _
    %p90 = scmp.lt.s32.totalorder %s7, 4
    // Predicated region
    $region13: #{simple_cnn_forward.8} parent=5 // pred_check
      %p91 = pneg %p90
    $region14: #{simple_cnn_forward.8} parent=5 // pred_check_branch
      %93 = sbr.rel (%p91) target = $region16
    $region15: #{simple_cnn_forward.8} parent=5 // pred_region
      // Predicated region
      $region17: #{simple_cnn_forward.8} parent=15 // pred_check
        %p94 = pneg %p41
      $region18: #{simple_cnn_forward.8} parent=15 // pred_check_branch
        %96 = sbr.rel (%p94) target = $region20
      $region19: #{simple_cnn_forward.8} parent=15 // pred_region
        %s97 = smul.u32 32, %s15
        %p98 = scmp.lt.s32.totalorder %s14, 1
        %s99 = scalar_select %p98, %s14, 1
        %p100 = scmp.lt.s32.totalorder %s97, 63
        %s101 = scalar_select %p100, %s97, 63
        %s102 = smul.addr %s99, 64
        %s103 = sadd.s32 %s101, %s102
        %s104 = smul.addr %s103, 4
        %s105 = scalar_lea.vmem %s0, %s104
        %s106 = smul.u32 32, %s15
      $region20: #{simple_cnn_forward.8} parent=15 // pred_fallthru
        _
    $region16: #{simple_cnn_forward.8} parent=5 // pred_fallthru
      _
    %p107 = scmp.le.s32.totalorder 1, %s7
    %p108 = scmp.lt.s32.totalorder %s7, 5
    %p109 = pnand %p107, %p108
    %p110 = pneg %p109
    // Predicated region
    $region21: #{simple_cnn_forward.8} parent=5 // pred_check
      _
    $region22: #{simple_cnn_forward.8} parent=5 // pred_check_branch
      %112 = sbr.rel (%p109) target = $region24
    $region23: #{simple_cnn_forward.8} parent=5 // pred_region
      %s113 = ssub.s32 %s7, 1
      %s114 = smul.u32 32, %s17
      %p115 = scmp.lt.s32.totalorder %s16, 1
      %s116 = scalar_select %p115, %s16, 1
      %p117 = scmp.lt.s32.totalorder %s114, 63
      %s118 = scalar_select %p117, %s114, 63
      %s119 = smul.addr %s116, 64
      %s120 = sadd.s32 %s118, %s119
      %s121 = smul.addr %s120, 4
      %s122 = scalar_lea.vmem %s0, %s121
      %p123 = pneg %p47
      %p124 = pneg %p44
      %p125 = pneg %p75
      %p126 = pneg %p72
      %s127 = smul.u32 32, %s17
      %p128 = scmp.lt.s32.totalorder %s16, 1
      %s129 = scalar_select %p128, %s16, 1
      %p130 = scmp.lt.s32.totalorder %s127, 63
      %s131 = scalar_select %p130, %s127, 63
      %s132 = smul.addr %s129, 64
      %s133 = sadd.s32 %s131, %s132
      %s134 = smul.addr %s133, 4
      %s135 = scalar_lea.vmem %s1, %s134
      %s136 = smul.u32 32, %s17
      %p137 = scmp.lt.s32.totalorder %s16, 1
      %s138 = scalar_select %p137, %s16, 1
      %p139 = scmp.lt.s32.totalorder %s136, 63
      %s140 = scalar_select %p139, %s136, 63
      %s141 = smul.addr %s138, 64
      %s142 = sadd.s32 %s140, %s141
      %s143 = smul.addr %s142, 4
      %s144 = scalar_lea.vmem %s0, %s143
      %s145 = smul.u32 32, %s17
      %s146 = smul.u32 32, %s17
      %p147 = scmp.lt.s32.totalorder %s16, 1
      %s148 = scalar_select %p147, %s16, 1
      %p149 = scmp.lt.s32.totalorder %s146, 63
      %s150 = scalar_select %p149, %s146, 63
      %s151 = smul.addr %s148, 64
      %s152 = sadd.s32 %s150, %s151
      %s153 = smul.addr %s152, 4
      %s154 = scalar_lea.vmem %s1, %s153
      %s155 = smul.u32 32, %s17
      %v156 = vld [vmem:[%s144] sm:$0xf]
      %v157 = vld [vmem:[%s144 + $0x4] sm:$0xf]
      %v158 = vld [vmem:[%s144 + $0x8] sm:$0xf]
      %v159 = vld [vmem:[%s144 + $0xc] sm:$0xf]
      %v160 = vld [vmem:[%s144 + $0x10] sm:$0xf]
      %v161 = vld [vmem:[%s144 + $0x14] sm:$0xf]
      %v162 = vld [vmem:[%s144 + $0x18] sm:$0xf]
      %v163 = vld [vmem:[%s144 + $0x1c] sm:$0xf]
      %v164 = vld [vmem:[%s144 + $0x20] sm:$0xf]
      %v165 = vld [vmem:[%s144 + $0x24] sm:$0xf]
      %v166 = vld [vmem:[%s144 + $0x28] sm:$0xf]
      %v167 = vld [vmem:[%s144 + $0x2c] sm:$0xf]
      %v168 = vld [vmem:[%s144 + $0x30] sm:$0xf]
      %v169 = vld [vmem:[%s144 + $0x34] sm:$0xf]
      %v170 = vld [vmem:[%s144 + $0x38] sm:$0xf]
      %v171 = vld [vmem:[%s144 + $0x3c] sm:$0xf]
      %v172 = vld [vmem:[%s144 + $0x40] sm:$0xf]
      %v173 = vld [vmem:[%s144 + $0x44] sm:$0xf]
      %v174 = vld [vmem:[%s144 + $0x48] sm:$0xf]
      %v175 = vld [vmem:[%s144 + $0x4c] sm:$0xf]
      %v176 = vld [vmem:[%s144 + $0x50] sm:$0xf]
      %v177 = vld [vmem:[%s144 + $0x54] sm:$0xf]
      %v178 = vld [vmem:[%s144 + $0x58] sm:$0xf]
      %v179 = vld [vmem:[%s144 + $0x5c] sm:$0xf]
      %v180 = vld [vmem:[%s144 + $0x60] sm:$0xf]
      %v181 = vld [vmem:[%s144 + $0x64] sm:$0xf]
      %v182 = vld [vmem:[%s144 + $0x68] sm:$0xf]
      %v183 = vld [vmem:[%s144 + $0x6c] sm:$0xf]
      %v184 = vld [vmem:[%s144 + $0x70] sm:$0xf]
      %v185 = vld [vmem:[%s144 + $0x74] sm:$0xf]
      %v186 = vld [vmem:[%s144 + $0x78] sm:$0xf]
      %v187 = vld [vmem:[%s144 + $0x7c] sm:$0xf]
      %v188 = vunpack.c.l.bf16 %v156
      %v189 = vunpack.c.l.bf16 %v157
      %v190 = vunpack.c.l.bf16 %v158
      %v191 = vunpack.c.l.bf16 %v159
      %v192 = vunpack.c.l.bf16 %v160
      %v193 = vunpack.c.l.bf16 %v161
      %v194 = vunpack.c.l.bf16 %v162
      %v195 = vunpack.c.l.bf16 %v163
      %v196 = vunpack.c.l.bf16 %v164
      %v197 = vunpack.c.l.bf16 %v165
      %v198 = vunpack.c.l.bf16 %v166
      %v199 = vunpack.c.l.bf16 %v167
      %v200 = vunpack.c.l.bf16 %v168
      %v201 = vunpack.c.l.bf16 %v169
      %v202 = vunpack.c.l.bf16 %v170
      %v203 = vunpack.c.l.bf16 %v171
      %v204 = vunpack.c.l.bf16 %v172
      %v205 = vunpack.c.l.bf16 %v173
      %v206 = vunpack.c.l.bf16 %v174
      %v207 = vunpack.c.l.bf16 %v175
      %v208 = vunpack.c.l.bf16 %v176
      %v209 = vunpack.c.l.bf16 %v177
      %v210 = vunpack.c.l.bf16 %v178
      %v211 = vunpack.c.l.bf16 %v179
      %v212 = vunpack.c.l.bf16 %v180
      %v213 = vunpack.c.l.bf16 %v181
      %v214 = vunpack.c.l.bf16 %v182
      %v215 = vunpack.c.l.bf16 %v183
      %v216 = vunpack.c.l.bf16 %v184
      %v217 = vunpack.c.l.bf16 %v185
      %v218 = vunpack.c.l.bf16 %v186
      %v219 = vunpack.c.l.bf16 %v187
      %v220 = vlaneseq
      %v221 = vshrl.u32 %v220, 7
      %v222 = vadd.s32 %v221, 8
      %v223 = vadd.s32 %v221, 16
      %v224 = vadd.s32 %v221, 24
      %v225 = vadd.s32 %v221, 32
      %v226 = vadd.s32 %v221, 40
      %v227 = vadd.s32 %v221, 48
      %v228 = vadd.s32 %v221, 56
      %v229 = vlaneseq
      %v230 = vand.u32 %v229, 127
      %v231 = vmul.u32 %v230, 2
      %vm232 = vcmp.eq.s32.totalorder %v221, %v231
      %vm233 = vcmp.eq.s32.totalorder %v222, %v231
      %vm234 = vcmp.eq.s32.totalorder %v223, %v231
      %vm235 = vcmp.eq.s32.totalorder %v224, %v231
      %vm236 = vcmp.eq.s32.totalorder %v225, %v231
      %vm237 = vcmp.eq.s32.totalorder %v226, %v231
      %vm238 = vcmp.eq.s32.totalorder %v227, %v231
      %vm239 = vcmp.eq.s32.totalorder %v228, %v231
      %v240 = vsel %vm232, 1, 0
      %v241 = vsel %vm233, 1, 0
      %v242 = vsel %vm234, 1, 0
      %v243 = vsel %vm235, 1, 0
      %v244 = vsel %vm236, 1, 0
      %v245 = vsel %vm237, 1, 0
      %v246 = vsel %vm238, 1, 0
      %v247 = vsel %vm239, 1, 0
      %v248 = vcvt.s32.f32 %v240
      %v249 = vcvt.s32.f32 %v241
      %v250 = vcvt.s32.f32 %v242
      %v251 = vcvt.s32.f32 %v243
      %v252 = vcvt.s32.f32 %v244
      %v253 = vcvt.s32.f32 %v245
      %v254 = vcvt.s32.f32 %v246
      %v255 = vcvt.s32.f32 %v247
      %vm256 = vcmask 523264
      %v258 = vsel %vm256, %v188, 0
      %v261 = vsel %vm256, %v189, 0
      %v264 = vsel %vm256, %v190, 0
      %v267 = vsel %vm256, %v191, 0
      %v270 = vsel %vm256, %v192, 0
      %v273 = vsel %vm256, %v193, 0
      %v276 = vsel %vm256, %v194, 0
      %v279 = vsel %vm256, %v195, 0
      %v282 = vsel %vm256, %v196, 0
      %v285 = vsel %vm256, %v197, 0
      %v288 = vsel %vm256, %v198, 0
      %v291 = vsel %vm256, %v199, 0
      %v294 = vsel %vm256, %v200, 0
      %v297 = vsel %vm256, %v201, 0
      %v300 = vsel %vm256, %v202, 0
      %v303 = vsel %vm256, %v203, 0
      %v306 = vsel %vm256, %v204, 0
      %v309 = vsel %vm256, %v205, 0
      %v312 = vsel %vm256, %v206, 0
      %v315 = vsel %vm256, %v207, 0
      %v318 = vsel %vm256, %v208, 0
      %v321 = vsel %vm256, %v209, 0
      %v324 = vsel %vm256, %v210, 0
      %v327 = vsel %vm256, %v211, 0
      %v330 = vsel %vm256, %v212, 0
      %v333 = vsel %vm256, %v213, 0
      %v336 = vsel %vm256, %v214, 0
      %v339 = vsel %vm256, %v215, 0
      %v342 = vsel %vm256, %v216, 0
      %v345 = vsel %vm256, %v217, 0
      %v348 = vsel %vm256, %v218, 0
      %v351 = vsel %vm256, %v219, 0
      %353 = vmatpush.msra.mxu0 0.0
      %354 = vmatpush.msra.mxu0 0.0
      %355 = vmatpush.msra.mxu0 0.0
      %356 = vmatpush.msra.mxu0 0.0
      %357 = vmatpush.msra.mxu0 0.0
      %358 = vmatpush.msra.mxu0 0.0
      %359 = vmatpush.msra.mxu0 0.0
      %360 = vmatpush.msra.mxu0 0.0
      %361 = vmatpush.msra.mxu0 %v255
      %362 = vmatpush.msra.mxu0 %v254
      %363 = vmatpush.msra.mxu0 %v253
      %364 = vmatpush.msra.mxu0 %v252
      %365 = vmatpush.msra.mxu0 %v251
      %366 = vmatpush.msra.mxu0 %v250
      %367 = vmatpush.msra.mxu0 %v249
      %368 = vmatpush.msra.mxu0 %v248
      %369 = vmatmul.f32.gmra.mxu0 %v258
      %v370 = vpop.f32.mrf.mxu0
      %v371 = vadd.f32 0.0, %v370
      %372 = vmatmul.f32.gmra.mxu0 %v261
      %v373 = vpop.f32.mrf.mxu0
      %v374 = vadd.f32 0.0, %v373
      %375 = vmatmul.f32.gmra.mxu0 %v264
      %v376 = vpop.f32.mrf.mxu0
      %v377 = vadd.f32 0.0, %v376
      %378 = vmatmul.f32.gmra.mxu0 %v267
      %v379 = vpop.f32.mrf.mxu0
      %v380 = vadd.f32 0.0, %v379
      %381 = vmatmul.f32.gmra.mxu0 %v270
      %v382 = vpop.f32.mrf.mxu0
      %v383 = vadd.f32 0.0, %v382
      %384 = vmatmul.f32.gmra.mxu0 %v273
      %v385 = vpop.f32.mrf.mxu0
      %v386 = vadd.f32 0.0, %v385
      %387 = vmatmul.f32.gmra.mxu0 %v276
      %v388 = vpop.f32.mrf.mxu0
      %v389 = vadd.f32 0.0, %v388
      %390 = vmatmul.f32.gmra.mxu0 %v279
      %v391 = vpop.f32.mrf.mxu0
      %v392 = vadd.f32 0.0, %v391
      %393 = vmatmul.f32.gmra.mxu0 %v282
      %v394 = vpop.f32.mrf.mxu0
      %v395 = vadd.f32 0.0, %v394
      %396 = vmatmul.f32.gmra.mxu0 %v285
      %v397 = vpop.f32.mrf.mxu0
      %v398 = vadd.f32 0.0, %v397
      %399 = vmatmul.f32.gmra.mxu0 %v288
      %v400 = vpop.f32.mrf.mxu0
      %v401 = vadd.f32 0.0, %v400
      %402 = vmatmul.f32.gmra.mxu0 %v291
      %v403 = vpop.f32.mrf.mxu0
      %v404 = vadd.f32 0.0, %v403
      %405 = vmatmul.f32.gmra.mxu0 %v294
      %v406 = vpop.f32.mrf.mxu0
      %v407 = vadd.f32 0.0, %v406
      %408 = vmatmul.f32.gmra.mxu0 %v297
      %v409 = vpop.f32.mrf.mxu0
      %v410 = vadd.f32 0.0, %v409
      %411 = vmatmul.f32.gmra.mxu0 %v300
      %v412 = vpop.f32.mrf.mxu0
      %v413 = vadd.f32 0.0, %v412
      %414 = vmatmul.f32.gmra.mxu0 %v303
      %v415 = vpop.f32.mrf.mxu0
      %v416 = vadd.f32 0.0, %v415
      %417 = vmatmul.f32.gmra.mxu0 %v306
      %v418 = vpop.f32.mrf.mxu0
      %v419 = vadd.f32 0.0, %v418
      %420 = vmatmul.f32.gmra.mxu0 %v309
      %v421 = vpop.f32.mrf.mxu0
      %v422 = vadd.f32 0.0, %v421
      %423 = vmatmul.f32.gmra.mxu0 %v312
      %v424 = vpop.f32.mrf.mxu0
      %v425 = vadd.f32 0.0, %v424
      %426 = vmatmul.f32.gmra.mxu0 %v315
      %v427 = vpop.f32.mrf.mxu0
      %v428 = vadd.f32 0.0, %v427
      %429 = vmatmul.f32.gmra.mxu0 %v318
      %v430 = vpop.f32.mrf.mxu0
      %v431 = vadd.f32 0.0, %v430
      %432 = vmatmul.f32.gmra.mxu0 %v321
      %v433 = vpop.f32.mrf.mxu0
      %v434 = vadd.f32 0.0, %v433
      %435 = vmatmul.f32.gmra.mxu0 %v324
      %v436 = vpop.f32.mrf.mxu0
      %v437 = vadd.f32 0.0, %v436
      %438 = vmatmul.f32.gmra.mxu0 %v327
      %v439 = vpop.f32.mrf.mxu0
      %v440 = vadd.f32 0.0, %v439
      %441 = vmatmul.f32.gmra.mxu0 %v330
      %v442 = vpop.f32.mrf.mxu0
      %v443 = vadd.f32 0.0, %v442
      %444 = vmatmul.f32.gmra.mxu0 %v333
      %v445 = vpop.f32.mrf.mxu0
      %v446 = vadd.f32 0.0, %v445
      %447 = vmatmul.f32.gmra.mxu0 %v336
      %v448 = vpop.f32.mrf.mxu0
      %v449 = vadd.f32 0.0, %v448
      %450 = vmatmul.f32.gmra.mxu0 %v339
      %v451 = vpop.f32.mrf.mxu0
      %v452 = vadd.f32 0.0, %v451
      %453 = vmatmul.f32.gmra.mxu0 %v342
      %v454 = vpop.f32.mrf.mxu0
      %v455 = vadd.f32 0.0, %v454
      %456 = vmatmul.f32.gmra.mxu0 %v345
      %v457 = vpop.f32.mrf.mxu0
      %v458 = vadd.f32 0.0, %v457
      %459 = vmatmul.f32.gmra.mxu0 %v348
      %v460 = vpop.f32.mrf.mxu0
      %v461 = vadd.f32 0.0, %v460
      %462 = vmatmul.f32.gmra.mxu0 %v351
      %v463 = vpop.f32.mrf.mxu0
      %v464 = vadd.f32 0.0, %v463
      %465 = vdwg.mxu0
      %v466 = vadd.s32 %v231, 1
      %vm467 = vcmp.eq.s32.totalorder %v221, %v466
      %vm468 = vcmp.eq.s32.totalorder %v222, %v466
      %vm469 = vcmp.eq.s32.totalorder %v223, %v466
      %vm470 = vcmp.eq.s32.totalorder %v224, %v466
      %vm471 = vcmp.eq.s32.totalorder %v225, %v466
      %vm472 = vcmp.eq.s32.totalorder %v226, %v466
      %vm473 = vcmp.eq.s32.totalorder %v227, %v466
      %vm474 = vcmp.eq.s32.totalorder %v228, %v466
      %v475 = vsel %vm467, 1, 0
      %v476 = vsel %vm468, 1, 0
      %v477 = vsel %vm469, 1, 0
      %v478 = vsel %vm470, 1, 0
      %v479 = vsel %vm471, 1, 0
      %v480 = vsel %vm472, 1, 0
      %v481 = vsel %vm473, 1, 0
      %v482 = vsel %vm474, 1, 0
      %v483 = vcvt.s32.f32 %v475
      %v484 = vcvt.s32.f32 %v476
      %v485 = vcvt.s32.f32 %v477
      %v486 = vcvt.s32.f32 %v478
      %v487 = vcvt.s32.f32 %v479
      %v488 = vcvt.s32.f32 %v480
      %v489 = vcvt.s32.f32 %v481
      %v490 = vcvt.s32.f32 %v482
      %491 = vmatpush.msra.mxu0 0.0
      %492 = vmatpush.msra.mxu0 0.0
      %493 = vmatpush.msra.mxu0 0.0
      %494 = vmatpush.msra.mxu0 0.0
      %495 = vmatpush.msra.mxu0 0.0
      %496 = vmatpush.msra.mxu0 0.0
      %497 = vmatpush.msra.mxu0 0.0
      %498 = vmatpush.msra.mxu0 0.0
      %499 = vmatpush.msra.mxu0 %v490
      %500 = vmatpush.msra.mxu0 %v489
      %501 = vmatpush.msra.mxu0 %v488
      %502 = vmatpush.msra.mxu0 %v487
      %503 = vmatpush.msra.mxu0 %v486
      %504 = vmatpush.msra.mxu0 %v485
      %505 = vmatpush.msra.mxu0 %v484
      %506 = vmatpush.msra.mxu0 %v483
      %507 = vmatmul.f32.gmra.mxu0 %v258
      %v508 = vpop.f32.mrf.mxu0
      %v509 = vadd.f32 0.0, %v508
      %510 = vmatmul.f32.gmra.mxu0 %v261
      %v511 = vpop.f32.mrf.mxu0
      %v512 = vadd.f32 0.0, %v511
      %513 = vmatmul.f32.gmra.mxu0 %v264
      %v514 = vpop.f32.mrf.mxu0
      %v515 = vadd.f32 0.0, %v514
      %516 = vmatmul.f32.gmra.mxu0 %v267
      %v517 = vpop.f32.mrf.mxu0
      %v518 = vadd.f32 0.0, %v517
      %519 = vmatmul.f32.gmra.mxu0 %v270
      %v520 = vpop.f32.mrf.mxu0
      %v521 = vadd.f32 0.0, %v520
      %522 = vmatmul.f32.gmra.mxu0 %v273
      %v523 = vpop.f32.mrf.mxu0
      %v524 = vadd.f32 0.0, %v523
      %525 = vmatmul.f32.gmra.mxu0 %v276
      %v526 = vpop.f32.mrf.mxu0
      %v527 = vadd.f32 0.0, %v526
      %528 = vmatmul.f32.gmra.mxu0 %v279
      %v529 = vpop.f32.mrf.mxu0
      %v530 = vadd.f32 0.0, %v529
      %531 = vmatmul.f32.gmra.mxu0 %v282
      %v532 = vpop.f32.mrf.mxu0
      %v533 = vadd.f32 0.0, %v532
      %534 = vmatmul.f32.gmra.mxu0 %v285
      %v535 = vpop.f32.mrf.mxu0
      %v536 = vadd.f32 0.0, %v535
      %537 = vmatmul.f32.gmra.mxu0 %v288
      %v538 = vpop.f32.mrf.mxu0
      %v539 = vadd.f32 0.0, %v538
      %540 = vmatmul.f32.gmra.mxu0 %v291
      %v541 = vpop.f32.mrf.mxu0
      %v542 = vadd.f32 0.0, %v541
      %543 = vmatmul.f32.gmra.mxu0 %v294
      %v544 = vpop.f32.mrf.mxu0
      %v545 = vadd.f32 0.0, %v544
      %546 = vmatmul.f32.gmra.mxu0 %v297
      %v547 = vpop.f32.mrf.mxu0
      %v548 = vadd.f32 0.0, %v547
      %549 = vmatmul.f32.gmra.mxu0 %v300
      %v550 = vpop.f32.mrf.mxu0
      %v551 = vadd.f32 0.0, %v550
      %552 = vmatmul.f32.gmra.mxu0 %v303
      %v553 = vpop.f32.mrf.mxu0
      %v554 = vadd.f32 0.0, %v553
      %555 = vmatmul.f32.gmra.mxu0 %v306
      %v556 = vpop.f32.mrf.mxu0
      %v557 = vadd.f32 0.0, %v556
      %558 = vmatmul.f32.gmra.mxu0 %v309
      %v559 = vpop.f32.mrf.mxu0
      %v560 = vadd.f32 0.0, %v559
      %561 = vmatmul.f32.gmra.mxu0 %v312
      %v562 = vpop.f32.mrf.mxu0
      %v563 = vadd.f32 0.0, %v562
      %564 = vmatmul.f32.gmra.mxu0 %v315
      %v565 = vpop.f32.mrf.mxu0
      %v566 = vadd.f32 0.0, %v565
      %567 = vmatmul.f32.gmra.mxu0 %v318
      %v568 = vpop.f32.mrf.mxu0
      %v569 = vadd.f32 0.0, %v568
      %570 = vmatmul.f32.gmra.mxu0 %v321
      %v571 = vpop.f32.mrf.mxu0
      %v572 = vadd.f32 0.0, %v571
      %573 = vmatmul.f32.gmra.mxu0 %v324
      %v574 = vpop.f32.mrf.mxu0
      %v575 = vadd.f32 0.0, %v574
      %576 = vmatmul.f32.gmra.mxu0 %v327
      %v577 = vpop.f32.mrf.mxu0
      %v578 = vadd.f32 0.0, %v577
      %579 = vmatmul.f32.gmra.mxu0 %v330
      %v580 = vpop.f32.mrf.mxu0
      %v581 = vadd.f32 0.0, %v580
      %582 = vmatmul.f32.gmra.mxu0 %v333
      %v583 = vpop.f32.mrf.mxu0
      %v584 = vadd.f32 0.0, %v583
      %585 = vmatmul.f32.gmra.mxu0 %v336
      %v586 = vpop.f32.mrf.mxu0
      %v587 = vadd.f32 0.0, %v586
      %588 = vmatmul.f32.gmra.mxu0 %v339
      %v589 = vpop.f32.mrf.mxu0
      %v590 = vadd.f32 0.0, %v589
      %591 = vmatmul.f32.gmra.mxu0 %v342
      %v592 = vpop.f32.mrf.mxu0
      %v593 = vadd.f32 0.0, %v592
      %594 = vmatmul.f32.gmra.mxu0 %v345
      %v595 = vpop.f32.mrf.mxu0
      %v596 = vadd.f32 0.0, %v595
      %597 = vmatmul.f32.gmra.mxu0 %v348
      %v598 = vpop.f32.mrf.mxu0
      %v599 = vadd.f32 0.0, %v598
      %600 = vmatmul.f32.gmra.mxu0 %v351
      %v601 = vpop.f32.mrf.mxu0
      %v602 = vadd.f32 0.0, %v601
      %603 = vdwg.mxu0
      %v604 = vmax.f32 %v371, %v509
      %v605 = vmax.f32 %v374, %v512
      %v606 = vmax.f32 %v377, %v515
      %v607 = vmax.f32 %v380, %v518
      %v608 = vmax.f32 %v383, %v521
      %v609 = vmax.f32 %v386, %v524
      %v610 = vmax.f32 %v389, %v527
      %v611 = vmax.f32 %v392, %v530
      %v612 = vmax.f32 %v395, %v533
      %v613 = vmax.f32 %v398, %v536
      %v614 = vmax.f32 %v401, %v539
      %v615 = vmax.f32 %v404, %v542
      %v616 = vmax.f32 %v407, %v545
      %v617 = vmax.f32 %v410, %v548
      %v618 = vmax.f32 %v413, %v551
      %v619 = vmax.f32 %v416, %v554
      %v620 = vmax.f32 %v419, %v557
      %v621 = vmax.f32 %v422, %v560
      %v622 = vmax.f32 %v425, %v563
      %v623 = vmax.f32 %v428, %v566
      %v624 = vmax.f32 %v431, %v569
      %v625 = vmax.f32 %v434, %v572
      %v626 = vmax.f32 %v437, %v575
      %v627 = vmax.f32 %v440, %v578
      %v628 = vmax.f32 %v443, %v581
      %v629 = vmax.f32 %v446, %v584
      %v630 = vmax.f32 %v449, %v587
      %v631 = vmax.f32 %v452, %v590
      %v632 = vmax.f32 %v455, %v593
      %v633 = vmax.f32 %v458, %v596
      %v634 = vmax.f32 %v461, %v599
      %v635 = vmax.f32 %v464, %v602
      %v636 = vadd.s32 %v231, 32
      %vm637 = vcmp.eq.s32.totalorder %v221, %v636
      %vm638 = vcmp.eq.s32.totalorder %v222, %v636
      %vm639 = vcmp.eq.s32.totalorder %v223, %v636
      %vm640 = vcmp.eq.s32.totalorder %v224, %v636
      %vm641 = vcmp.eq.s32.totalorder %v225, %v636
      %vm642 = vcmp.eq.s32.totalorder %v226, %v636
      %vm643 = vcmp.eq.s32.totalorder %v227, %v636
      %vm644 = vcmp.eq.s32.totalorder %v228, %v636
      %v645 = vsel %vm637, 1, 0
      %v646 = vsel %vm638, 1, 0
      %v647 = vsel %vm639, 1, 0
      %v648 = vsel %vm640, 1, 0
      %v649 = vsel %vm641, 1, 0
      %v650 = vsel %vm642, 1, 0
      %v651 = vsel %vm643, 1, 0
      %v652 = vsel %vm644, 1, 0
      %v653 = vcvt.s32.f32 %v645
      %v654 = vcvt.s32.f32 %v646
      %v655 = vcvt.s32.f32 %v647
      %v656 = vcvt.s32.f32 %v648
      %v657 = vcvt.s32.f32 %v649
      %v658 = vcvt.s32.f32 %v650
      %v659 = vcvt.s32.f32 %v651
      %v660 = vcvt.s32.f32 %v652
      %661 = vmatpush.msra.mxu0 0.0
      %662 = vmatpush.msra.mxu0 0.0
      %663 = vmatpush.msra.mxu0 0.0
      %664 = vmatpush.msra.mxu0 0.0
      %665 = vmatpush.msra.mxu0 0.0
      %666 = vmatpush.msra.mxu0 0.0
      %667 = vmatpush.msra.mxu0 0.0
      %668 = vmatpush.msra.mxu0 0.0
      %669 = vmatpush.msra.mxu0 %v660
      %670 = vmatpush.msra.mxu0 %v659
      %671 = vmatpush.msra.mxu0 %v658
      %672 = vmatpush.msra.mxu0 %v657
      %673 = vmatpush.msra.mxu0 %v656
      %674 = vmatpush.msra.mxu0 %v655
      %675 = vmatpush.msra.mxu0 %v654
      %676 = vmatpush.msra.mxu0 %v653
      %677 = vmatmul.f32.gmra.mxu0 %v258
      %v678 = vpop.f32.mrf.mxu0
      %v679 = vadd.f32 0.0, %v678
      %680 = vmatmul.f32.gmra.mxu0 %v261
      %v681 = vpop.f32.mrf.mxu0
      %v682 = vadd.f32 0.0, %v681
      %683 = vmatmul.f32.gmra.mxu0 %v264
      %v684 = vpop.f32.mrf.mxu0
      %v685 = vadd.f32 0.0, %v684
      %686 = vmatmul.f32.gmra.mxu0 %v267
      %v687 = vpop.f32.mrf.mxu0
      %v688 = vadd.f32 0.0, %v687
      %689 = vmatmul.f32.gmra.mxu0 %v270
      %v690 = vpop.f32.mrf.mxu0
      %v691 = vadd.f32 0.0, %v690
      %692 = vmatmul.f32.gmra.mxu0 %v273
      %v693 = vpop.f32.mrf.mxu0
      %v694 = vadd.f32 0.0, %v693
      %695 = vmatmul.f32.gmra.mxu0 %v276
      %v696 = vpop.f32.mrf.mxu0
      %v697 = vadd.f32 0.0, %v696
      %698 = vmatmul.f32.gmra.mxu0 %v279
      %v699 = vpop.f32.mrf.mxu0
      %v700 = vadd.f32 0.0, %v699
      %701 = vmatmul.f32.gmra.mxu0 %v282
      %v702 = vpop.f32.mrf.mxu0
      %v703 = vadd.f32 0.0, %v702
      %704 = vmatmul.f32.gmra.mxu0 %v285
      %v705 = vpop.f32.mrf.mxu0
      %v706 = vadd.f32 0.0, %v705
      %707 = vmatmul.f32.gmra.mxu0 %v288
      %v708 = vpop.f32.mrf.mxu0
      %v709 = vadd.f32 0.0, %v708
      %710 = vmatmul.f32.gmra.mxu0 %v291
      %v711 = vpop.f32.mrf.mxu0
      %v712 = vadd.f32 0.0, %v711
      %713 = vmatmul.f32.gmra.mxu0 %v294
      %v714 = vpop.f32.mrf.mxu0
      %v715 = vadd.f32 0.0, %v714
      %716 = vmatmul.f32.gmra.mxu0 %v297
      %v717 = vpop.f32.mrf.mxu0
      %v718 = vadd.f32 0.0, %v717
      %719 = vmatmul.f32.gmra.mxu0 %v300
      %v720 = vpop.f32.mrf.mxu0
      %v721 = vadd.f32 0.0, %v720
      %722 = vmatmul.f32.gmra.mxu0 %v303
      %v723 = vpop.f32.mrf.mxu0
      %v724 = vadd.f32 0.0, %v723
      %725 = vmatmul.f32.gmra.mxu0 %v306
      %v726 = vpop.f32.mrf.mxu0
      %v727 = vadd.f32 0.0, %v726
      %728 = vmatmul.f32.gmra.mxu0 %v309
      %v729 = vpop.f32.mrf.mxu0
      %v730 = vadd.f32 0.0, %v729
      %731 = vmatmul.f32.gmra.mxu0 %v312
      %v732 = vpop.f32.mrf.mxu0
      %v733 = vadd.f32 0.0, %v732
      %734 = vmatmul.f32.gmra.mxu0 %v315
      %v735 = vpop.f32.mrf.mxu0
      %v736 = vadd.f32 0.0, %v735
      %737 = vmatmul.f32.gmra.mxu0 %v318
      %v738 = vpop.f32.mrf.mxu0
      %v739 = vadd.f32 0.0, %v738
      %740 = vmatmul.f32.gmra.mxu0 %v321
      %v741 = vpop.f32.mrf.mxu0
      %v742 = vadd.f32 0.0, %v741
      %743 = vmatmul.f32.gmra.mxu0 %v324
      %v744 = vpop.f32.mrf.mxu0
      %v745 = vadd.f32 0.0, %v744
      %746 = vmatmul.f32.gmra.mxu0 %v327
      %v747 = vpop.f32.mrf.mxu0
      %v748 = vadd.f32 0.0, %v747
      %749 = vmatmul.f32.gmra.mxu0 %v330
      %v750 = vpop.f32.mrf.mxu0
      %v751 = vadd.f32 0.0, %v750
      %752 = vmatmul.f32.gmra.mxu0 %v333
      %v753 = vpop.f32.mrf.mxu0
      %v754 = vadd.f32 0.0, %v753
      %755 = vmatmul.f32.gmra.mxu0 %v336
      %v756 = vpop.f32.mrf.mxu0
      %v757 = vadd.f32 0.0, %v756
      %758 = vmatmul.f32.gmra.mxu0 %v339
      %v759 = vpop.f32.mrf.mxu0
      %v760 = vadd.f32 0.0, %v759
      %761 = vmatmul.f32.gmra.mxu0 %v342
      %v762 = vpop.f32.mrf.mxu0
      %v763 = vadd.f32 0.0, %v762
      %764 = vmatmul.f32.gmra.mxu0 %v345
      %v765 = vpop.f32.mrf.mxu0
      %v766 = vadd.f32 0.0, %v765
      %767 = vmatmul.f32.gmra.mxu0 %v348
      %v768 = vpop.f32.mrf.mxu0
      %v769 = vadd.f32 0.0, %v768
      %770 = vmatmul.f32.gmra.mxu0 %v351
      %v771 = vpop.f32.mrf.mxu0
      %v772 = vadd.f32 0.0, %v771
      %773 = vdwg.mxu0
      %v774 = vadd.s32 %v231, 33
      %vm775 = vcmp.eq.s32.totalorder %v221, %v774
      %vm776 = vcmp.eq.s32.totalorder %v222, %v774
      %vm777 = vcmp.eq.s32.totalorder %v223, %v774
      %vm778 = vcmp.eq.s32.totalorder %v224, %v774
      %vm779 = vcmp.eq.s32.totalorder %v225, %v774
      %vm780 = vcmp.eq.s32.totalorder %v226, %v774
      %vm781 = vcmp.eq.s32.totalorder %v227, %v774
      %vm782 = vcmp.eq.s32.totalorder %v228, %v774
      %v783 = vsel %vm775, 1, 0
      %v784 = vsel %vm776, 1, 0
      %v785 = vsel %vm777, 1, 0
      %v786 = vsel %vm778, 1, 0
      %v787 = vsel %vm779, 1, 0
      %v788 = vsel %vm780, 1, 0
      %v789 = vsel %vm781, 1, 0
      %v790 = vsel %vm782, 1, 0
      %v791 = vcvt.s32.f32 %v783
      %v792 = vcvt.s32.f32 %v784
      %v793 = vcvt.s32.f32 %v785
      %v794 = vcvt.s32.f32 %v786
      %v795 = vcvt.s32.f32 %v787
      %v796 = vcvt.s32.f32 %v788
      %v797 = vcvt.s32.f32 %v789
      %v798 = vcvt.s32.f32 %v790
      %799 = vmatpush.msra.mxu0 0.0
      %800 = vmatpush.msra.mxu0 0.0
      %801 = vmatpush.msra.mxu0 0.0
      %802 = vmatpush.msra.mxu0 0.0
      %803 = vmatpush.msra.mxu0 0.0
      %804 = vmatpush.msra.mxu0 0.0
      %805 = vmatpush.msra.mxu0 0.0
      %806 = vmatpush.msra.mxu0 0.0
      %807 = vmatpush.msra.mxu0 %v798
      %808 = vmatpush.msra.mxu0 %v797
      %809 = vmatpush.msra.mxu0 %v796
      %810 = vmatpush.msra.mxu0 %v795
      %811 = vmatpush.msra.mxu0 %v794
      %812 = vmatpush.msra.mxu0 %v793
      %813 = vmatpush.msra.mxu0 %v792
      %814 = vmatpush.msra.mxu0 %v791
      %815 = vmatmul.f32.gmra.mxu0 %v258
      %v816 = vpop.f32.mrf.mxu0
      %v817 = vadd.f32 0.0, %v816
      %818 = vmatmul.f32.gmra.mxu0 %v261
      %v819 = vpop.f32.mrf.mxu0
      %v820 = vadd.f32 0.0, %v819
      %821 = vmatmul.f32.gmra.mxu0 %v264
      %v822 = vpop.f32.mrf.mxu0
      %v823 = vadd.f32 0.0, %v822
      %824 = vmatmul.f32.gmra.mxu0 %v267
      %v825 = vpop.f32.mrf.mxu0
      %v826 = vadd.f32 0.0, %v825
      %827 = vmatmul.f32.gmra.mxu0 %v270
      %v828 = vpop.f32.mrf.mxu0
      %v829 = vadd.f32 0.0, %v828
      %830 = vmatmul.f32.gmra.mxu0 %v273
      %v831 = vpop.f32.mrf.mxu0
      %v832 = vadd.f32 0.0, %v831
      %833 = vmatmul.f32.gmra.mxu0 %v276
      %v834 = vpop.f32.mrf.mxu0
      %v835 = vadd.f32 0.0, %v834
      %836 = vmatmul.f32.gmra.mxu0 %v279
      %v837 = vpop.f32.mrf.mxu0
      %v838 = vadd.f32 0.0, %v837
      %839 = vmatmul.f32.gmra.mxu0 %v282
      %v840 = vpop.f32.mrf.mxu0
      %v841 = vadd.f32 0.0, %v840
      %842 = vmatmul.f32.gmra.mxu0 %v285
      %v843 = vpop.f32.mrf.mxu0
      %v844 = vadd.f32 0.0, %v843
      %845 = vmatmul.f32.gmra.mxu0 %v288
      %v846 = vpop.f32.mrf.mxu0
      %v847 = vadd.f32 0.0, %v846
      %848 = vmatmul.f32.gmra.mxu0 %v291
      %v849 = vpop.f32.mrf.mxu0
      %v850 = vadd.f32 0.0, %v849
      %851 = vmatmul.f32.gmra.mxu0 %v294
      %v852 = vpop.f32.mrf.mxu0
      %v853 = vadd.f32 0.0, %v852
      %854 = vmatmul.f32.gmra.mxu0 %v297
      %v855 = vpop.f32.mrf.mxu0
      %v856 = vadd.f32 0.0, %v855
      %857 = vmatmul.f32.gmra.mxu0 %v300
      %v858 = vpop.f32.mrf.mxu0
      %v859 = vadd.f32 0.0, %v858
      %860 = vmatmul.f32.gmra.mxu0 %v303
      %v861 = vpop.f32.mrf.mxu0
      %v862 = vadd.f32 0.0, %v861
      %863 = vmatmul.f32.gmra.mxu0 %v306
      %v864 = vpop.f32.mrf.mxu0
      %v865 = vadd.f32 0.0, %v864
      %866 = vmatmul.f32.gmra.mxu0 %v309
      %v867 = vpop.f32.mrf.mxu0
      %v868 = vadd.f32 0.0, %v867
      %869 = vmatmul.f32.gmra.mxu0 %v312
      %v870 = vpop.f32.mrf.mxu0
      %v871 = vadd.f32 0.0, %v870
      %872 = vmatmul.f32.gmra.mxu0 %v315
      %v873 = vpop.f32.mrf.mxu0
      %v874 = vadd.f32 0.0, %v873
      %875 = vmatmul.f32.gmra.mxu0 %v318
      %v876 = vpop.f32.mrf.mxu0
      %v877 = vadd.f32 0.0, %v876
      %878 = vmatmul.f32.gmra.mxu0 %v321
      %v879 = vpop.f32.mrf.mxu0
      %v880 = vadd.f32 0.0, %v879
      %881 = vmatmul.f32.gmra.mxu0 %v324
      %v882 = vpop.f32.mrf.mxu0
      %v883 = vadd.f32 0.0, %v882
      %884 = vmatmul.f32.gmra.mxu0 %v327
      %v885 = vpop.f32.mrf.mxu0
      %v886 = vadd.f32 0.0, %v885
      %887 = vmatmul.f32.gmra.mxu0 %v330
      %v888 = vpop.f32.mrf.mxu0
      %v889 = vadd.f32 0.0, %v888
      %890 = vmatmul.f32.gmra.mxu0 %v333
      %v891 = vpop.f32.mrf.mxu0
      %v892 = vadd.f32 0.0, %v891
      %893 = vmatmul.f32.gmra.mxu0 %v336
      %v894 = vpop.f32.mrf.mxu0
      %v895 = vadd.f32 0.0, %v894
      %896 = vmatmul.f32.gmra.mxu0 %v339
      %v897 = vpop.f32.mrf.mxu0
      %v898 = vadd.f32 0.0, %v897
      %899 = vmatmul.f32.gmra.mxu0 %v342
      %v900 = vpop.f32.mrf.mxu0
      %v901 = vadd.f32 0.0, %v900
      %902 = vmatmul.f32.gmra.mxu0 %v345
      %v903 = vpop.f32.mrf.mxu0
      %v904 = vadd.f32 0.0, %v903
      %905 = vmatmul.f32.gmra.mxu0 %v348
      %v906 = vpop.f32.mrf.mxu0
      %v907 = vadd.f32 0.0, %v906
      %908 = vmatmul.f32.gmra.mxu0 %v351
      %v909 = vpop.f32.mrf.mxu0
      %v910 = vadd.f32 0.0, %v909
      %911 = vdwg.mxu0
      %v912 = vmax.f32 %v679, %v817
      %v913 = vmax.f32 %v682, %v820
      %v914 = vmax.f32 %v685, %v823
      %v915 = vmax.f32 %v688, %v826
      %v916 = vmax.f32 %v691, %v829
      %v917 = vmax.f32 %v694, %v832
      %v918 = vmax.f32 %v697, %v835
      %v919 = vmax.f32 %v700, %v838
      %v920 = vmax.f32 %v703, %v841
      %v921 = vmax.f32 %v706, %v844
      %v922 = vmax.f32 %v709, %v847
      %v923 = vmax.f32 %v712, %v850
      %v924 = vmax.f32 %v715, %v853
      %v925 = vmax.f32 %v718, %v856
      %v926 = vmax.f32 %v721, %v859
      %v927 = vmax.f32 %v724, %v862
      %v928 = vmax.f32 %v727, %v865
      %v929 = vmax.f32 %v730, %v868
      %v930 = vmax.f32 %v733, %v871
      %v931 = vmax.f32 %v736, %v874
      %v932 = vmax.f32 %v739, %v877
      %v933 = vmax.f32 %v742, %v880
      %v934 = vmax.f32 %v745, %v883
      %v935 = vmax.f32 %v748, %v886
      %v936 = vmax.f32 %v751, %v889
      %v937 = vmax.f32 %v754, %v892
      %v938 = vmax.f32 %v757, %v895
      %v939 = vmax.f32 %v760, %v898
      %v940 = vmax.f32 %v763, %v901
      %v941 = vmax.f32 %v766, %v904
      %v942 = vmax.f32 %v769, %v907
      %v943 = vmax.f32 %v772, %v910
      %v944 = vmax.f32 %v604, %v912
      %v945 = vmax.f32 %v605, %v913
      %v946 = vmax.f32 %v606, %v914
      %v947 = vmax.f32 %v607, %v915
      %v948 = vmax.f32 %v608, %v916
      %v949 = vmax.f32 %v609, %v917
      %v950 = vmax.f32 %v610, %v918
      %v951 = vmax.f32 %v611, %v919
      %v952 = vmax.f32 %v612, %v920
      %v953 = vmax.f32 %v613, %v921
      %v954 = vmax.f32 %v614, %v922
      %v955 = vmax.f32 %v615, %v923
      %v956 = vmax.f32 %v616, %v924
      %v957 = vmax.f32 %v617, %v925
      %v958 = vmax.f32 %v618, %v926
      %v959 = vmax.f32 %v619, %v927
      %v960 = vmax.f32 %v620, %v928
      %v961 = vmax.f32 %v621, %v929
      %v962 = vmax.f32 %v622, %v930
      %v963 = vmax.f32 %v623, %v931
      %v964 = vmax.f32 %v624, %v932
      %v965 = vmax.f32 %v625, %v933
      %v966 = vmax.f32 %v626, %v934
      %v967 = vmax.f32 %v627, %v935
      %v968 = vmax.f32 %v628, %v936
      %v969 = vmax.f32 %v629, %v937
      %v970 = vmax.f32 %v630, %v938
      %v971 = vmax.f32 %v631, %v939
      %v972 = vmax.f32 %v632, %v940
      %v973 = vmax.f32 %v633, %v941
      %v974 = vmax.f32 %v634, %v942
      %v975 = vmax.f32 %v635, %v943
      %v976 = vpack.c.bf16 %v944, %v944
      %v977 = vpack.c.bf16 %v945, %v945
      %v978 = vpack.c.bf16 %v946, %v946
      %v979 = vpack.c.bf16 %v947, %v947
      %v980 = vpack.c.bf16 %v948, %v948
      %v981 = vpack.c.bf16 %v949, %v949
      %v982 = vpack.c.bf16 %v950, %v950
      %v983 = vpack.c.bf16 %v951, %v951
      %v984 = vpack.c.bf16 %v952, %v952
      %v985 = vpack.c.bf16 %v953, %v953
      %v986 = vpack.c.bf16 %v954, %v954
      %v987 = vpack.c.bf16 %v955, %v955
      %v988 = vpack.c.bf16 %v956, %v956
      %v989 = vpack.c.bf16 %v957, %v957
      %v990 = vpack.c.bf16 %v958, %v958
      %v991 = vpack.c.bf16 %v959, %v959
      %v992 = vpack.c.bf16 %v960, %v960
      %v993 = vpack.c.bf16 %v961, %v961
      %v994 = vpack.c.bf16 %v962, %v962
      %v995 = vpack.c.bf16 %v963, %v963
      %v996 = vpack.c.bf16 %v964, %v964
      %v997 = vpack.c.bf16 %v965, %v965
      %v998 = vpack.c.bf16 %v966, %v966
      %v999 = vpack.c.bf16 %v967, %v967
      %v1000 = vpack.c.bf16 %v968, %v968
      %v1001 = vpack.c.bf16 %v969, %v969
      %v1002 = vpack.c.bf16 %v970, %v970
      %v1003 = vpack.c.bf16 %v971, %v971
      %v1004 = vpack.c.bf16 %v972, %v972
      %v1005 = vpack.c.bf16 %v973, %v973
      %v1006 = vpack.c.bf16 %v974, %v974
      %v1007 = vpack.c.bf16 %v975, %v975
      %vm1008 = vcmask 125952
      %1009 = vst.msk [vmem:[%s154] sm:$0xf] %vm1008, %v976
      %1010 = vst.msk [vmem:[%s154 + $0x4] sm:$0xf] %vm1008, %v977
      %1011 = vst.msk [vmem:[%s154 + $0x8] sm:$0xf] %vm1008, %v978
      %1012 = vst.msk [vmem:[%s154 + $0xc] sm:$0xf] %vm1008, %v979
      %1013 = vst.msk [vmem:[%s154 + $0x10] sm:$0xf] %vm1008, %v980
      %1014 = vst.msk [vmem:[%s154 + $0x14] sm:$0xf] %vm1008, %v981
      %1015 = vst.msk [vmem:[%s154 + $0x18] sm:$0xf] %vm1008, %v982
      %1016 = vst.msk [vmem:[%s154 + $0x1c] sm:$0xf] %vm1008, %v983
      %1017 = vst.msk [vmem:[%s154 + $0x20] sm:$0xf] %vm1008, %v984
      %1018 = vst.msk [vmem:[%s154 + $0x24] sm:$0xf] %vm1008, %v985
      %1019 = vst.msk [vmem:[%s154 + $0x28] sm:$0xf] %vm1008, %v986
      %1020 = vst.msk [vmem:[%s154 + $0x2c] sm:$0xf] %vm1008, %v987
      %1021 = vst.msk [vmem:[%s154 + $0x30] sm:$0xf] %vm1008, %v988
      %1022 = vst.msk [vmem:[%s154 + $0x34] sm:$0xf] %vm1008, %v989
      %1023 = vst.msk [vmem:[%s154 + $0x38] sm:$0xf] %vm1008, %v990
      %1024 = vst.msk [vmem:[%s154 + $0x3c] sm:$0xf] %vm1008, %v991
      %1025 = vst.msk [vmem:[%s154 + $0x40] sm:$0xf] %vm1008, %v992
      %1026 = vst.msk [vmem:[%s154 + $0x44] sm:$0xf] %vm1008, %v993
      %1027 = vst.msk [vmem:[%s154 + $0x48] sm:$0xf] %vm1008, %v994
      %1028 = vst.msk [vmem:[%s154 + $0x4c] sm:$0xf] %vm1008, %v995
      %1029 = vst.msk [vmem:[%s154 + $0x50] sm:$0xf] %vm1008, %v996
      %1030 = vst.msk [vmem:[%s154 + $0x54] sm:$0xf] %vm1008, %v997
      %1031 = vst.msk [vmem:[%s154 + $0x58] sm:$0xf] %vm1008, %v998
      %1032 = vst.msk [vmem:[%s154 + $0x5c] sm:$0xf] %vm1008, %v999
      %1033 = vst.msk [vmem:[%s154 + $0x60] sm:$0xf] %vm1008, %v1000
      %1034 = vst.msk [vmem:[%s154 + $0x64] sm:$0xf] %vm1008, %v1001
      %1035 = vst.msk [vmem:[%s154 + $0x68] sm:$0xf] %vm1008, %v1002
      %1036 = vst.msk [vmem:[%s154 + $0x6c] sm:$0xf] %vm1008, %v1003
      %1037 = vst.msk [vmem:[%s154 + $0x70] sm:$0xf] %vm1008, %v1004
      %1038 = vst.msk [vmem:[%s154 + $0x74] sm:$0xf] %vm1008, %v1005
      %1039 = vst.msk [vmem:[%s154 + $0x78] sm:$0xf] %vm1008, %v1006
      %1040 = vst.msk [vmem:[%s154 + $0x7c] sm:$0xf] %vm1008, %v1007
      %s1041 = smul.u32 32, %s17
      %p1042 = scmp.lt.s32.totalorder %s16, 1
      %s1043 = scalar_select %p1042, %s16, 1
      %p1044 = scmp.lt.s32.totalorder %s1041, 63
      %s1045 = scalar_select %p1044, %s1041, 63
      %s1046 = smul.addr %s1043, 64
      %s1047 = sadd.s32 %s1045, %s1046
      %s1048 = smul.addr %s1047, 4
      %s1049 = scalar_lea.vmem %s1, %s1048
      // Predicated region
      $region25: #{simple_cnn_forward.8} parent=23 // pred_check
        %p1050 = pneg %p72
      $region26: #{simple_cnn_forward.8} parent=23 // pred_check_branch
        %1052 = sbr.rel (%p1050) target = $region28
      $region27: #{simple_cnn_forward.8} parent=23 // pred_region
        %s1053 = smul.u32 32, %s17
      $region28: #{simple_cnn_forward.8} parent=23 // pred_fallthru
        _
    $region24: #{simple_cnn_forward.8} parent=5 // pred_fallthru
      _
    %p1054 = scmp.le.s32.totalorder 2, %s7
    // Predicated region
    $region29: #{simple_cnn_forward.8} parent=5 // pred_check
      %p1055 = pneg %p1054
    $region30: #{simple_cnn_forward.8} parent=5 // pred_check_branch
      %1057 = sbr.rel (%p1055) target = $region32
    $region31: #{simple_cnn_forward.8} parent=5 // pred_region
      %s1058 = ssub.s32 %s7, 2
      // Predicated region
      $region33: #{simple_cnn_forward.8} parent=31 // pred_check
        %p1059 = pneg %p78
      $region34: #{simple_cnn_forward.8} parent=31 // pred_check_branch
        %1061 = sbr.rel (%p1059) target = $region36
      $region35: #{simple_cnn_forward.8} parent=31 // pred_region
        %s1062 = smul.u32 32, %s19
        %p1063 = scmp.lt.s32.totalorder %s18, 1
        %s1064 = scalar_select %p1063, %s18, 1
        %p1065 = scmp.lt.s32.totalorder %s1062, 63
        %s1066 = scalar_select %p1065, %s1062, 63
        %s1067 = smul.addr %s1064, 64
        %s1068 = sadd.s32 %s1066, %s1067
        %s1069 = smul.addr %s1068, 4
        %s1070 = scalar_lea.vmem %s1, %s1069
      $region36: #{simple_cnn_forward.8} parent=31 // pred_fallthru
        _
    $region32: #{simple_cnn_forward.8} parent=5 // pred_fallthru
      _
  $region6: #{simple_cnn_forward.8} parent=0 // loop_footer
    %s11 = sadd.s32 1, %s7
  $region7: #{simple_cnn_forward.8} parent=0 // loop_footer_branch
    %6 = sbr.rel target = $region3
  $region8: #{simple_cnn_forward.8} parent=0 // loop_exit
    _

// kernel: simple_cnn_forward.9
$region0: #{simple_cnn_forward.9}
  #allocation0 [shape = 'u32[]', space=smem, size = 0x4, offset = 0x4, fixed_abs, tag = 'smem constant byte address 0x4 - core index']
  #allocation1 [shape = 'u32[72,128]{1,0:T(1,128)}', space=vmem, size = 0x9000, scoped, tag = 'internal scratch']
  %s0 = inlined_call_operand.vmem [shape: bf16[2,8192], index: 0, kind: input, shape index: {}]
  %s1 = inlined_call_operand.vmem [shape: bf16[8192,128], index: 1, kind: input, shape index: {}]
  %s2 = inlined_call_operand.vmem [shape: f32[1,128], index: 2, kind: input, shape index: {}]
  %s3 = inlined_call_operand.vmem [shape: f32[128,10], index: 3, kind: input, shape index: {}]
  %s4 = inlined_call_operand.vmem [shape: f32[1,10], index: 4, kind: input, shape index: {}]
  %s5 = inlined_call_operand.hbm [shape: f32[2,10], index: 5, kind: output, shape index: {}]
  %s6 = sld [smem:[#allocation0]]
  $region30: #{simple_cnn_forward.9} parent=0
    _
  %s8 = ssub.s32 1, %s6
  %s9 = scalar_select 0, %s8, %s6
  $region1: #{simple_cnn_forward.9} parent=0
    #allocation2 [shape = 'u8[1024]{0}', space=vmem, size = 0x400, scoped, tag = 'output window, operand 0, single buffered']
    #allocation3 [shape = 's32[1]{0}', space=sflag, size = 0x4, scoped, tag = 'scoped memory for simple_cnn_forward.9']
    %10 = vsyncpa [#allocation3], 0
    // Predicated region
    $region2: #{simple_cnn_forward.9} parent=1 // pred_check
      _
    $region3: #{simple_cnn_forward.9} parent=1 // pred_check_branch
      %12 = sbr.rel (0) target = $region5
    $region4: #{simple_cnn_forward.9} parent=1 // pred_region
      _
    $region5: #{simple_cnn_forward.9} parent=1 // pred_fallthru
      _
    // Predicated region
    $region6: #{simple_cnn_forward.9} parent=1 // pred_check
      _
    $region7: #{simple_cnn_forward.9} parent=1 // pred_check_branch
      %14 = sbr.rel (0) target = $region9
    $region8: #{simple_cnn_forward.9} parent=1 // pred_region
      _
    $region9: #{simple_cnn_forward.9} parent=1 // pred_fallthru
      _
    // Predicated region
    $region10: #{simple_cnn_forward.9} parent=1 // pred_check
      _
    $region11: #{simple_cnn_forward.9} parent=1 // pred_check_branch
      %16 = sbr.rel (0) target = $region13
    $region12: #{simple_cnn_forward.9} parent=1 // pred_region
      _
    $region13: #{simple_cnn_forward.9} parent=1 // pred_fallthru
      _
    // Predicated region
    $region14: #{simple_cnn_forward.9} parent=1 // pred_check
      _
    $region15: #{simple_cnn_forward.9} parent=1 // pred_check_branch
      %18 = sbr.rel (0) target = $region17
    $region16: #{simple_cnn_forward.9} parent=1 // pred_region
      _
    $region17: #{simple_cnn_forward.9} parent=1 // pred_fallthru
      _
    // Predicated region
    $region18: #{simple_cnn_forward.9} parent=1 // pred_check
      _
    $region19: #{simple_cnn_forward.9} parent=1 // pred_check_branch
      %20 = sbr.rel (0) target = $region21
    $region20: #{simple_cnn_forward.9} parent=1 // pred_region
      _
    $region21: #{simple_cnn_forward.9} parent=1 // pred_fallthru
      _
    %v21 = vld [vmem:[%s0] sm:$0xff]
    %v22 = vld [vmem:[%s0 + $0x8] sm:$0xff]
    %v23 = vld [vmem:[%s0 + $0x10] sm:$0xff]
    %v24 = vld [vmem:[%s0 + $0x18] sm:$0xff]
    %v25 = vld [vmem:[%s0 + $0x20] sm:$0xff]
    %v26 = vld [vmem:[%s0 + $0x28] sm:$0xff]
    %v27 = vld [vmem:[%s0 + $0x30] sm:$0xff]
    %v28 = vld [vmem:[%s0 + $0x38] sm:$0xff]
    %v29 = vld [vmem:[%s1] sm:$0xf]
    %v30 = vld [vmem:[%s1 + $0x4] sm:$0xf]
    %v31 = vld [vmem:[%s1 + $0x8] sm:$0xf]
    %v32 = vld [vmem:[%s1 + $0xc] sm:$0xf]
    %v33 = vld [vmem:[%s1 + $0x10] sm:$0xf]
    %v34 = vld [vmem:[%s1 + $0x14] sm:$0xf]
    %v35 = vld [vmem:[%s1 + $0x18] sm:$0xf]
    %v36 = vld [vmem:[%s1 + $0x1c] sm:$0xf]
    %v37 = vld [vmem:[%s1 + $0x20] sm:$0xf]
    %v38 = vld [vmem:[%s1 + $0x24] sm:$0xf]
    %v39 = vld [vmem:[%s1 + $0x28] sm:$0xf]
    %v40 = vld [vmem:[%s1 + $0x2c] sm:$0xf]
    %v41 = vld [vmem:[%s1 + $0x30] sm:$0xf]
    %v42 = vld [vmem:[%s1 + $0x34] sm:$0xf]
    %v43 = vld [vmem:[%s1 + $0x38] sm:$0xf]
    %v44 = vld [vmem:[%s1 + $0x3c] sm:$0xf]
    %v45 = vld [vmem:[%s1 + $0x40] sm:$0xf]
    %v46 = vld [vmem:[%s1 + $0x44] sm:$0xf]
    %v47 = vld [vmem:[%s1 + $0x48] sm:$0xf]
    %v48 = vld [vmem:[%s1 + $0x4c] sm:$0xf]
    %v49 = vld [vmem:[%s1 + $0x50] sm:$0xf]
    %v50 = vld [vmem:[%s1 + $0x54] sm:$0xf]
    %v51 = vld [vmem:[%s1 + $0x58] sm:$0xf]
    %v52 = vld [vmem:[%s1 + $0x5c] sm:$0xf]
    %v53 = vld [vmem:[%s1 + $0x60] sm:$0xf]
    %v54 = vld [vmem:[%s1 + $0x64] sm:$0xf]
    %v55 = vld [vmem:[%s1 + $0x68] sm:$0xf]
    %v56 = vld [vmem:[%s1 + $0x6c] sm:$0xf]
    %v57 = vld [vmem:[%s1 + $0x70] sm:$0xf]
    %v58 = vld [vmem:[%s1 + $0x74] sm:$0xf]
    %v59 = vld [vmem:[%s1 + $0x78] sm:$0xf]
    %v60 = vld [vmem:[%s1 + $0x7c] sm:$0xf]
    %v61 = vld [vmem:[%s1 + $0x80] sm:$0xf]
    %v62 = vld [vmem:[%s1 + $0x84] sm:$0xf]
    %v63 = vld [vmem:[%s1 + $0x88] sm:$0xf]
    %v64 = vld [vmem:[%s1 + $0x8c] sm:$0xf]
    %v65 = vld [vmem:[%s1 + $0x90] sm:$0xf]
    %v66 = vld [vmem:[%s1 + $0x94] sm:$0xf]
    %v67 = vld [vmem:[%s1 + $0x98] sm:$0xf]
    %v68 = vld [vmem:[%s1 + $0x9c] sm:$0xf]
    %v69 = vld [vmem:[%s1 + $0xa0] sm:$0xf]
    %v70 = vld [vmem:[%s1 + $0xa4] sm:$0xf]
    %v71 = vld [vmem:[%s1 + $0xa8] sm:$0xf]
    %v72 = vld [vmem:[%s1 + $0xac] sm:$0xf]
    %v73 = vld [vmem:[%s1 + $0xb0] sm:$0xf]
    %v74 = vld [vmem:[%s1 + $0xb4] sm:$0xf]
    %v75 = vld [vmem:[%s1 + $0xb8] sm:$0xf]
    %v76 = vld [vmem:[%s1 + $0xbc] sm:$0xf]
    %v77 = vld [vmem:[%s1 + $0xc0] sm:$0xf]
    %v78 = vld [vmem:[%s1 + $0xc4] sm:$0xf]
    %v79 = vld [vmem:[%s1 + $0xc8] sm:$0xf]
    %v80 = vld [vmem:[%s1 + $0xcc] sm:$0xf]
    %v81 = vld [vmem:[%s1 + $0xd0] sm:$0xf]
    %v82 = vld [vmem:[%s1 + $0xd4] sm:$0xf]
    %v83 = vld [vmem:[%s1 + $0xd8] sm:$0xf]
    %v84 = vld [vmem:[%s1 + $0xdc] sm:$0xf]
    %v85 = vld [vmem:[%s1 + $0xe0] sm:$0xf]
    %v86 = vld [vmem:[%s1 + $0xe4] sm:$0xf]
    %v87 = vld [vmem:[%s1 + $0xe8] sm:$0xf]
    %v88 = vld [vmem:[%s1 + $0xec] sm:$0xf]
    %v89 = vld [vmem:[%s1 + $0xf0] sm:$0xf]
    %v90 = vld [vmem:[%s1 + $0xf4] sm:$0xf]
    %v91 = vld [vmem:[%s1 + $0xf8] sm:$0xf]
    %v92 = vld [vmem:[%s1 + $0xfc] sm:$0xf]
    %v93 = vld [vmem:[%s1 + $0x100] sm:$0xf]
    %v94 = vld [vmem:[%s1 + $0x104] sm:$0xf]
    %v95 = vld [vmem:[%s1 + $0x108] sm:$0xf]
    %v96 = vld [vmem:[%s1 + $0x10c] sm:$0xf]
    %v97 = vld [vmem:[%s1 + $0x110] sm:$0xf]
    %v98 = vld [vmem:[%s1 + $0x114] sm:$0xf]
    %v99 = vld [vmem:[%s1 + $0x118] sm:$0xf]
    %v100 = vld [vmem:[%s1 + $0x11c] sm:$0xf]
    %v101 = vld [vmem:[%s1 + $0x120] sm:$0xf]
    %v102 = vld [vmem:[%s1 + $0x124] sm:$0xf]
    %v103 = vld [vmem:[%s1 + $0x128] sm:$0xf]
    %v104 = vld [vmem:[%s1 + $0x12c] sm:$0xf]
    %v105 = vld [vmem:[%s1 + $0x130] sm:$0xf]
    %v106 = vld [vmem:[%s1 + $0x134] sm:$0xf]
    %v107 = vld [vmem:[%s1 + $0x138] sm:$0xf]
    %v108 = vld [vmem:[%s1 + $0x13c] sm:$0xf]
    %v109 = vld [vmem:[%s1 + $0x140] sm:$0xf]
    %v110 = vld [vmem:[%s1 + $0x144] sm:$0xf]
    %v111 = vld [vmem:[%s1 + $0x148] sm:$0xf]
    %v112 = vld [vmem:[%s1 + $0x14c] sm:$0xf]
    %v113 = vld [vmem:[%s1 + $0x150] sm:$0xf]
    %v114 = vld [vmem:[%s1 + $0x154] sm:$0xf]
    %v115 = vld [vmem:[%s1 + $0x158] sm:$0xf]
    %v116 = vld [vmem:[%s1 + $0x15c] sm:$0xf]
    %v117 = vld [vmem:[%s1 + $0x160] sm:$0xf]
    %v118 = vld [vmem:[%s1 + $0x164] sm:$0xf]
    %v119 = vld [vmem:[%s1 + $0x168] sm:$0xf]
    %v120 = vld [vmem:[%s1 + $0x16c] sm:$0xf]
    %v121 = vld [vmem:[%s1 + $0x170] sm:$0xf]
    %v122 = vld [vmem:[%s1 + $0x174] sm:$0xf]
    %v123 = vld [vmem:[%s1 + $0x178] sm:$0xf]
    %v124 = vld [vmem:[%s1 + $0x17c] sm:$0xf]
    %v125 = vld [vmem:[%s1 + $0x180] sm:$0xf]
    %v126 = vld [vmem:[%s1 + $0x184] sm:$0xf]
    %v127 = vld [vmem:[%s1 + $0x188] sm:$0xf]
    %v128 = vld [vmem:[%s1 + $0x18c] sm:$0xf]
    %v129 = vld [vmem:[%s1 + $0x190] sm:$0xf]
    %v130 = vld [vmem:[%s1 + $0x194] sm:$0xf]
    %v131 = vld [vmem:[%s1 + $0x198] sm:$0xf]
    %v132 = vld [vmem:[%s1 + $0x19c] sm:$0xf]
    %v133 = vld [vmem:[%s1 + $0x1a0] sm:$0xf]
    %v134 = vld [vmem:[%s1 + $0x1a4] sm:$0xf]
    %v135 = vld [vmem:[%s1 + $0x1a8] sm:$0xf]
    %v136 = vld [vmem:[%s1 + $0x1ac] sm:$0xf]
    %v137 = vld [vmem:[%s1 + $0x1b0] sm:$0xf]
    %v138 = vld [vmem:[%s1 + $0x1b4] sm:$0xf]
    %v139 = vld [vmem:[%s1 + $0x1b8] sm:$0xf]
    %v140 = vld [vmem:[%s1 + $0x1bc] sm:$0xf]
    %v141 = vld [vmem:[%s1 + $0x1c0] sm:$0xf]
    %v142 = vld [vmem:[%s1 + $0x1c4] sm:$0xf]
    %v143 = vld [vmem:[%s1 + $0x1c8] sm:$0xf]
    %v144 = vld [vmem:[%s1 + $0x1cc] sm:$0xf]
    %v145 = vld [vmem:[%s1 + $0x1d0] sm:$0xf]
    %v146 = vld [vmem:[%s1 + $0x1d4] sm:$0xf]
    %v147 = vld [vmem:[%s1 + $0x1d8] sm:$0xf]
    %v148 = vld [vmem:[%s1 + $0x1dc] sm:$0xf]
    %v149 = vld [vmem:[%s1 + $0x1e0] sm:$0xf]
    %v150 = vld [vmem:[%s1 + $0x1e4] sm:$0xf]
    %v151 = vld [vmem:[%s1 + $0x1e8] sm:$0xf]
    %v152 = vld [vmem:[%s1 + $0x1ec] sm:$0xf]
    %v153 = vld [vmem:[%s1 + $0x1f0] sm:$0xf]
    %v154 = vld [vmem:[%s1 + $0x1f4] sm:$0xf]
    %v155 = vld [vmem:[%s1 + $0x1f8] sm:$0xf]
    %v156 = vld [vmem:[%s1 + $0x1fc] sm:$0xf]
    %v157 = vld [vmem:[%s1 + $0x200] sm:$0xf]
    %v158 = vld [vmem:[%s1 + $0x204] sm:$0xf]
    %v159 = vld [vmem:[%s1 + $0x208] sm:$0xf]
    %v160 = vld [vmem:[%s1 + $0x20c] sm:$0xf]
    %v161 = vld [vmem:[%s1 + $0x210] sm:$0xf]
    %v162 = vld [vmem:[%s1 + $0x214] sm:$0xf]
    %v163 = vld [vmem:[%s1 + $0x218] sm:$0xf]
    %v164 = vld [vmem:[%s1 + $0x21c] sm:$0xf]
    %v165 = vld [vmem:[%s1 + $0x220] sm:$0xf]
    %v166 = vld [vmem:[%s1 + $0x224] sm:$0xf]
    %v167 = vld [vmem:[%s1 + $0x228] sm:$0xf]
    %v168 = vld [vmem:[%s1 + $0x22c] sm:$0xf]
    %v169 = vld [vmem:[%s1 + $0x230] sm:$0xf]
    %v170 = vld [vmem:[%s1 + $0x234] sm:$0xf]
    %v171 = vld [vmem:[%s1 + $0x238] sm:$0xf]
    %v172 = vld [vmem:[%s1 + $0x23c] sm:$0xf]
    %v173 = vld [vmem:[%s1 + $0x240] sm:$0xf]
    %v174 = vld [vmem:[%s1 + $0x244] sm:$0xf]
    %v175 = vld [vmem:[%s1 + $0x248] sm:$0xf]
    %v176 = vld [vmem:[%s1 + $0x24c] sm:$0xf]
    %v177 = vld [vmem:[%s1 + $0x250] sm:$0xf]
    %v178 = vld [vmem:[%s1 + $0x254] sm:$0xf]
    %v179 = vld [vmem:[%s1 + $0x258] sm:$0xf]
    %v180 = vld [vmem:[%s1 + $0x25c] sm:$0xf]
    %v181 = vld [vmem:[%s1 + $0x260] sm:$0xf]
    %v182 = vld [vmem:[%s1 + $0x264] sm:$0xf]
    %v183 = vld [vmem:[%s1 + $0x268] sm:$0xf]
    %v184 = vld [vmem:[%s1 + $0x26c] sm:$0xf]
    %v185 = vld [vmem:[%s1 + $0x270] sm:$0xf]
    %v186 = vld [vmem:[%s1 + $0x274] sm:$0xf]
    %v187 = vld [vmem:[%s1 + $0x278] sm:$0xf]
    %v188 = vld [vmem:[%s1 + $0x27c] sm:$0xf]
    %v189 = vld [vmem:[%s1 + $0x280] sm:$0xf]
    %v190 = vld [vmem:[%s1 + $0x284] sm:$0xf]
    %v191 = vld [vmem:[%s1 + $0x288] sm:$0xf]
    %v192 = vld [vmem:[%s1 + $0x28c] sm:$0xf]
    %v193 = vld [vmem:[%s1 + $0x290] sm:$0xf]
    %v194 = vld [vmem:[%s1 + $0x294] sm:$0xf]
    %v195 = vld [vmem:[%s1 + $0x298] sm:$0xf]
    %v196 = vld [vmem:[%s1 + $0x29c] sm:$0xf]
    %v197 = vld [vmem:[%s1 + $0x2a0] sm:$0xf]
    %v198 = vld [vmem:[%s1 + $0x2a4] sm:$0xf]
    %v199 = vld [vmem:[%s1 + $0x2a8] sm:$0xf]
    %v200 = vld [vmem:[%s1 + $0x2ac] sm:$0xf]
    %v201 = vld [vmem:[%s1 + $0x2b0] sm:$0xf]
    %v202 = vld [vmem:[%s1 + $0x2b4] sm:$0xf]
    %v203 = vld [vmem:[%s1 + $0x2b8] sm:$0xf]
    %v204 = vld [vmem:[%s1 + $0x2bc] sm:$0xf]
    %v205 = vld [vmem:[%s1 + $0x2c0] sm:$0xf]
    %v206 = vld [vmem:[%s1 + $0x2c4] sm:$0xf]
    %v207 = vld [vmem:[%s1 + $0x2c8] sm:$0xf]
    %v208 = vld [vmem:[%s1 + $0x2cc] sm:$0xf]
    %v209 = vld [vmem:[%s1 + $0x2d0] sm:$0xf]
    %v210 = vld [vmem:[%s1 + $0x2d4] sm:$0xf]
    %v211 = vld [vmem:[%s1 + $0x2d8] sm:$0xf]
    %v212 = vld [vmem:[%s1 + $0x2dc] sm:$0xf]
    %v213 = vld [vmem:[%s1 + $0x2e0] sm:$0xf]
    %v214 = vld [vmem:[%s1 + $0x2e4] sm:$0xf]
    %v215 = vld [vmem:[%s1 + $0x2e8] sm:$0xf]
    %v216 = vld [vmem:[%s1 + $0x2ec] sm:$0xf]
    %v217 = vld [vmem:[%s1 + $0x2f0] sm:$0xf]
    %v218 = vld [vmem:[%s1 + $0x2f4] sm:$0xf]
    %v219 = vld [vmem:[%s1 + $0x2f8] sm:$0xf]
    %v220 = vld [vmem:[%s1 + $0x2fc] sm:$0xf]
    %v221 = vld [vmem:[%s1 + $0x300] sm:$0xf]
    %v222 = vld [vmem:[%s1 + $0x304] sm:$0xf]
    %v223 = vld [vmem:[%s1 + $0x308] sm:$0xf]
    %v224 = vld [vmem:[%s1 + $0x30c] sm:$0xf]
    %v225 = vld [vmem:[%s1 + $0x310] sm:$0xf]
    %v226 = vld [vmem:[%s1 + $0x314] sm:$0xf]
    %v227 = vld [vmem:[%s1 + $0x318] sm:$0xf]
    %v228 = vld [vmem:[%s1 + $0x31c] sm:$0xf]
    %v229 = vld [vmem:[%s1 + $0x320] sm:$0xf]
    %v230 = vld [vmem:[%s1 + $0x324] sm:$0xf]
    %v231 = vld [vmem:[%s1 + $0x328] sm:$0xf]
    %v232 = vld [vmem:[%s1 + $0x32c] sm:$0xf]
    %v233 = vld [vmem:[%s1 + $0x330] sm:$0xf]
    %v234 = vld [vmem:[%s1 + $0x334] sm:$0xf]
    %v235 = vld [vmem:[%s1 + $0x338] sm:$0xf]
    %v236 = vld [vmem:[%s1 + $0x33c] sm:$0xf]
    %v237 = vld [vmem:[%s1 + $0x340] sm:$0xf]
    %v238 = vld [vmem:[%s1 + $0x344] sm:$0xf]
    %v239 = vld [vmem:[%s1 + $0x348] sm:$0xf]
    %v240 = vld [vmem:[%s1 + $0x34c] sm:$0xf]
    %v241 = vld [vmem:[%s1 + $0x350] sm:$0xf]
    %v242 = vld [vmem:[%s1 + $0x354] sm:$0xf]
    %v243 = vld [vmem:[%s1 + $0x358] sm:$0xf]
    %v244 = vld [vmem:[%s1 + $0x35c] sm:$0xf]
    %v245 = vld [vmem:[%s1 + $0x360] sm:$0xf]
    %v246 = vld [vmem:[%s1 + $0x364] sm:$0xf]
    %v247 = vld [vmem:[%s1 + $0x368] sm:$0xf]
    %v248 = vld [vmem:[%s1 + $0x36c] sm:$0xf]
    %v249 = vld [vmem:[%s1 + $0x370] sm:$0xf]
    %v250 = vld [vmem:[%s1 + $0x374] sm:$0xf]
    %v251 = vld [vmem:[%s1 + $0x378] sm:$0xf]
    %v252 = vld [vmem:[%s1 + $0x37c] sm:$0xf]
    %v253 = vld [vmem:[%s1 + $0x380] sm:$0xf]
    %v254 = vld [vmem:[%s1 + $0x384] sm:$0xf]
    %v255 = vld [vmem:[%s1 + $0x388] sm:$0xf]
    %v256 = vld [vmem:[%s1 + $0x38c] sm:$0xf]
    %v257 = vld [vmem:[%s1 + $0x390] sm:$0xf]
    %v258 = vld [vmem:[%s1 + $0x394] sm:$0xf]
    %v259 = vld [vmem:[%s1 + $0x398] sm:$0xf]
    %v260 = vld [vmem:[%s1 + $0x39c] sm:$0xf]
    %v261 = vld [vmem:[%s1 + $0x3a0] sm:$0xf]
    %v262 = vld [vmem:[%s1 + $0x3a4] sm:$0xf]
    %v263 = vld [vmem:[%s1 + $0x3a8] sm:$0xf]
    %v264 = vld [vmem:[%s1 + $0x3ac] sm:$0xf]
    %v265 = vld [vmem:[%s1 + $0x3b0] sm:$0xf]
    %v266 = vld [vmem:[%s1 + $0x3b4] sm:$0xf]
    %v267 = vld [vmem:[%s1 + $0x3b8] sm:$0xf]
    %v268 = vld [vmem:[%s1 + $0x3bc] sm:$0xf]
    %v269 = vld [vmem:[%s1 + $0x3c0] sm:$0xf]
    %v270 = vld [vmem:[%s1 + $0x3c4] sm:$0xf]
    %v271 = vld [vmem:[%s1 + $0x3c8] sm:$0xf]
    %v272 = vld [vmem:[%s1 + $0x3cc] sm:$0xf]
    %v273 = vld [vmem:[%s1 + $0x3d0] sm:$0xf]
    %v274 = vld [vmem:[%s1 + $0x3d4] sm:$0xf]
    %v275 = vld [vmem:[%s1 + $0x3d8] sm:$0xf]
    %v276 = vld [vmem:[%s1 + $0x3dc] sm:$0xf]
    %v277 = vld [vmem:[%s1 + $0x3e0] sm:$0xf]
    %v278 = vld [vmem:[%s1 + $0x3e4] sm:$0xf]
    %v279 = vld [vmem:[%s1 + $0x3e8] sm:$0xf]
    %v280 = vld [vmem:[%s1 + $0x3ec] sm:$0xf]
    %v281 = vld [vmem:[%s1 + $0x3f0] sm:$0xf]
    %v282 = vld [vmem:[%s1 + $0x3f4] sm:$0xf]
    %v283 = vld [vmem:[%s1 + $0x3f8] sm:$0xf]
    %v284 = vld [vmem:[%s1 + $0x3fc] sm:$0xf]
    %v285 = vld [vmem:[%s1 + $0x400] sm:$0xf]
    %v286 = vld [vmem:[%s1 + $0x404] sm:$0xf]
    %v287 = vld [vmem:[%s1 + $0x408] sm:$0xf]
    %v288 = vld [vmem:[%s1 + $0x40c] sm:$0xf]
    %v289 = vld [vmem:[%s1 + $0x410] sm:$0xf]
    %v290 = vld [vmem:[%s1 + $0x414] sm:$0xf]
    %v291 = vld [vmem:[%s1 + $0x418] sm:$0xf]
    %v292 = vld [vmem:[%s1 + $0x41c] sm:$0xf]
    %v293 = vld [vmem:[%s1 + $0x420] sm:$0xf]
    %v294 = vld [vmem:[%s1 + $0x424] sm:$0xf]
    %v295 = vld [vmem:[%s1 + $0x428] sm:$0xf]
    %v296 = vld [vmem:[%s1 + $0x42c] sm:$0xf]
    %v297 = vld [vmem:[%s1 + $0x430] sm:$0xf]
    %v298 = vld [vmem:[%s1 + $0x434] sm:$0xf]
    %v299 = vld [vmem:[%s1 + $0x438] sm:$0xf]
    %v300 = vld [vmem:[%s1 + $0x43c] sm:$0xf]
    %v301 = vld [vmem:[%s1 + $0x440] sm:$0xf]
    %v302 = vld [vmem:[%s1 + $0x444] sm:$0xf]
    %v303 = vld [vmem:[%s1 + $0x448] sm:$0xf]
    %v304 = vld [vmem:[%s1 + $0x44c] sm:$0xf]
    %v305 = vld [vmem:[%s1 + $0x450] sm:$0xf]
    %v306 = vld [vmem:[%s1 + $0x454] sm:$0xf]
    %v307 = vld [vmem:[%s1 + $0x458] sm:$0xf]
    %v308 = vld [vmem:[%s1 + $0x45c] sm:$0xf]
    %v309 = vld [vmem:[%s1 + $0x460] sm:$0xf]
    %v310 = vld [vmem:[%s1 + $0x464] sm:$0xf]
    %v311 = vld [vmem:[%s1 + $0x468] sm:$0xf]
    %v312 = vld [vmem:[%s1 + $0x46c] sm:$0xf]
    %v313 = vld [vmem:[%s1 + $0x470] sm:$0xf]
    %v314 = vld [vmem:[%s1 + $0x474] sm:$0xf]
    %v315 = vld [vmem:[%s1 + $0x478] sm:$0xf]
    %v316 = vld [vmem:[%s1 + $0x47c] sm:$0xf]
    %v317 = vld [vmem:[%s1 + $0x480] sm:$0xf]
    %v318 = vld [vmem:[%s1 + $0x484] sm:$0xf]
    %v319 = vld [vmem:[%s1 + $0x488] sm:$0xf]
    %v320 = vld [vmem:[%s1 + $0x48c] sm:$0xf]
    %v321 = vld [vmem:[%s1 + $0x490] sm:$0xf]
    %v322 = vld [vmem:[%s1 + $0x494] sm:$0xf]
    %v323 = vld [vmem:[%s1 + $0x498] sm:$0xf]
    %v324 = vld [vmem:[%s1 + $0x49c] sm:$0xf]
    %v325 = vld [vmem:[%s1 + $0x4a0] sm:$0xf]
    %v326 = vld [vmem:[%s1 + $0x4a4] sm:$0xf]
    %v327 = vld [vmem:[%s1 + $0x4a8] sm:$0xf]
    %v328 = vld [vmem:[%s1 + $0x4ac] sm:$0xf]
    %v329 = vld [vmem:[%s1 + $0x4b0] sm:$0xf]
    %v330 = vld [vmem:[%s1 + $0x4b4] sm:$0xf]
    %v331 = vld [vmem:[%s1 + $0x4b8] sm:$0xf]
    %v332 = vld [vmem:[%s1 + $0x4bc] sm:$0xf]
    %v333 = vld [vmem:[%s1 + $0x4c0] sm:$0xf]
    %v334 = vld [vmem:[%s1 + $0x4c4] sm:$0xf]
    %v335 = vld [vmem:[%s1 + $0x4c8] sm:$0xf]
    %v336 = vld [vmem:[%s1 + $0x4cc] sm:$0xf]
    %v337 = vld [vmem:[%s1 + $0x4d0] sm:$0xf]
    %v338 = vld [vmem:[%s1 + $0x4d4] sm:$0xf]
    %v339 = vld [vmem:[%s1 + $0x4d8] sm:$0xf]
    %v340 = vld [vmem:[%s1 + $0x4dc] sm:$0xf]
    %v341 = vld [vmem:[%s1 + $0x4e0] sm:$0xf]
    %v342 = vld [vmem:[%s1 + $0x4e4] sm:$0xf]
    %v343 = vld [vmem:[%s1 + $0x4e8] sm:$0xf]
    %v344 = vld [vmem:[%s1 + $0x4ec] sm:$0xf]
    %v345 = vld [vmem:[%s1 + $0x4f0] sm:$0xf]
    %v346 = vld [vmem:[%s1 + $0x4f4] sm:$0xf]
    %v347 = vld [vmem:[%s1 + $0x4f8] sm:$0xf]
    %v348 = vld [vmem:[%s1 + $0x4fc] sm:$0xf]
    %v349 = vld [vmem:[%s1 + $0x500] sm:$0xf]
    %v350 = vld [vmem:[%s1 + $0x504] sm:$0xf]
    %v351 = vld [vmem:[%s1 + $0x508] sm:$0xf]
    %v352 = vld [vmem:[%s1 + $0x50c] sm:$0xf]
    %v353 = vld [vmem:[%s1 + $0x510] sm:$0xf]
    %v354 = vld [vmem:[%s1 + $0x514] sm:$0xf]
    %v355 = vld [vmem:[%s1 + $0x518] sm:$0xf]
    %v356 = vld [vmem:[%s1 + $0x51c] sm:$0xf]
    %v357 = vld [vmem:[%s1 + $0x520] sm:$0xf]
    %v358 = vld [vmem:[%s1 + $0x524] sm:$0xf]
    %v359 = vld [vmem:[%s1 + $0x528] sm:$0xf]
    %v360 = vld [vmem:[%s1 + $0x52c] sm:$0xf]
    %v361 = vld [vmem:[%s1 + $0x530] sm:$0xf]
    %v362 = vld [vmem:[%s1 + $0x534] sm:$0xf]
    %v363 = vld [vmem:[%s1 + $0x538] sm:$0xf]
    %v364 = vld [vmem:[%s1 + $0x53c] sm:$0xf]
    %v365 = vld [vmem:[%s1 + $0x540] sm:$0xf]
    %v366 = vld [vmem:[%s1 + $0x544] sm:$0xf]
    %v367 = vld [vmem:[%s1 + $0x548] sm:$0xf]
    %v368 = vld [vmem:[%s1 + $0x54c] sm:$0xf]
    %v369 = vld [vmem:[%s1 + $0x550] sm:$0xf]
    %v370 = vld [vmem:[%s1 + $0x554] sm:$0xf]
    %v371 = vld [vmem:[%s1 + $0x558] sm:$0xf]
    %v372 = vld [vmem:[%s1 + $0x55c] sm:$0xf]
    %v373 = vld [vmem:[%s1 + $0x560] sm:$0xf]
    %v374 = vld [vmem:[%s1 + $0x564] sm:$0xf]
    %v375 = vld [vmem:[%s1 + $0x568] sm:$0xf]
    %v376 = vld [vmem:[%s1 + $0x56c] sm:$0xf]
    %v377 = vld [vmem:[%s1 + $0x570] sm:$0xf]
    %v378 = vld [vmem:[%s1 + $0x574] sm:$0xf]
    %v379 = vld [vmem:[%s1 + $0x578] sm:$0xf]
    %v380 = vld [vmem:[%s1 + $0x57c] sm:$0xf]
    %v381 = vld [vmem:[%s1 + $0x580] sm:$0xf]
    %v382 = vld [vmem:[%s1 + $0x584] sm:$0xf]
    %v383 = vld [vmem:[%s1 + $0x588] sm:$0xf]
    %v384 = vld [vmem:[%s1 + $0x58c] sm:$0xf]
    %v385 = vld [vmem:[%s1 + $0x590] sm:$0xf]
    %v386 = vld [vmem:[%s1 + $0x594] sm:$0xf]
    %v387 = vld [vmem:[%s1 + $0x598] sm:$0xf]
    %v388 = vld [vmem:[%s1 + $0x59c] sm:$0xf]
    %v389 = vld [vmem:[%s1 + $0x5a0] sm:$0xf]
    %v390 = vld [vmem:[%s1 + $0x5a4] sm:$0xf]
    %v391 = vld [vmem:[%s1 + $0x5a8] sm:$0xf]
    %v392 = vld [vmem:[%s1 + $0x5ac] sm:$0xf]
    %v393 = vld [vmem:[%s1 + $0x5b0] sm:$0xf]
    %v394 = vld [vmem:[%s1 + $0x5b4] sm:$0xf]
    %v395 = vld [vmem:[%s1 + $0x5b8] sm:$0xf]
    %v396 = vld [vmem:[%s1 + $0x5bc] sm:$0xf]
    %v397 = vld [vmem:[%s1 + $0x5c0] sm:$0xf]
    %v398 = vld [vmem:[%s1 + $0x5c4] sm:$0xf]
    %v399 = vld [vmem:[%s1 + $0x5c8] sm:$0xf]
    %v400 = vld [vmem:[%s1 + $0x5cc] sm:$0xf]
    %v401 = vld [vmem:[%s1 + $0x5d0] sm:$0xf]
    %v402 = vld [vmem:[%s1 + $0x5d4] sm:$0xf]
    %v403 = vld [vmem:[%s1 + $0x5d8] sm:$0xf]
    %v404 = vld [vmem:[%s1 + $0x5dc] sm:$0xf]
    %v405 = vld [vmem:[%s1 + $0x5e0] sm:$0xf]
    %v406 = vld [vmem:[%s1 + $0x5e4] sm:$0xf]
    %v407 = vld [vmem:[%s1 + $0x5e8] sm:$0xf]
    %v408 = vld [vmem:[%s1 + $0x5ec] sm:$0xf]
    %v409 = vld [vmem:[%s1 + $0x5f0] sm:$0xf]
    %v410 = vld [vmem:[%s1 + $0x5f4] sm:$0xf]
    %v411 = vld [vmem:[%s1 + $0x5f8] sm:$0xf]
    %v412 = vld [vmem:[%s1 + $0x5fc] sm:$0xf]
    %v413 = vld [vmem:[%s1 + $0x600] sm:$0xf]
    %v414 = vld [vmem:[%s1 + $0x604] sm:$0xf]
    %v415 = vld [vmem:[%s1 + $0x608] sm:$0xf]
    %v416 = vld [vmem:[%s1 + $0x60c] sm:$0xf]
    %v417 = vld [vmem:[%s1 + $0x610] sm:$0xf]
    %v418 = vld [vmem:[%s1 + $0x614] sm:$0xf]
    %v419 = vld [vmem:[%s1 + $0x618] sm:$0xf]
    %v420 = vld [vmem:[%s1 + $0x61c] sm:$0xf]
    %v421 = vld [vmem:[%s1 + $0x620] sm:$0xf]
    %v422 = vld [vmem:[%s1 + $0x624] sm:$0xf]
    %v423 = vld [vmem:[%s1 + $0x628] sm:$0xf]
    %v424 = vld [vmem:[%s1 + $0x62c] sm:$0xf]
    %v425 = vld [vmem:[%s1 + $0x630] sm:$0xf]
    %v426 = vld [vmem:[%s1 + $0x634] sm:$0xf]
    %v427 = vld [vmem:[%s1 + $0x638] sm:$0xf]
    %v428 = vld [vmem:[%s1 + $0x63c] sm:$0xf]
    %v429 = vld [vmem:[%s1 + $0x640] sm:$0xf]
    %v430 = vld [vmem:[%s1 + $0x644] sm:$0xf]
    %v431 = vld [vmem:[%s1 + $0x648] sm:$0xf]
    %v432 = vld [vmem:[%s1 + $0x64c] sm:$0xf]
    %v433 = vld [vmem:[%s1 + $0x650] sm:$0xf]
    %v434 = vld [vmem:[%s1 + $0x654] sm:$0xf]
    %v435 = vld [vmem:[%s1 + $0x658] sm:$0xf]
    %v436 = vld [vmem:[%s1 + $0x65c] sm:$0xf]
    %v437 = vld [vmem:[%s1 + $0x660] sm:$0xf]
    %v438 = vld [vmem:[%s1 + $0x664] sm:$0xf]
    %v439 = vld [vmem:[%s1 + $0x668] sm:$0xf]
    %v440 = vld [vmem:[%s1 + $0x66c] sm:$0xf]
    %v441 = vld [vmem:[%s1 + $0x670] sm:$0xf]
    %v442 = vld [vmem:[%s1 + $0x674] sm:$0xf]
    %v443 = vld [vmem:[%s1 + $0x678] sm:$0xf]
    %v444 = vld [vmem:[%s1 + $0x67c] sm:$0xf]
    %v445 = vld [vmem:[%s1 + $0x680] sm:$0xf]
    %v446 = vld [vmem:[%s1 + $0x684] sm:$0xf]
    %v447 = vld [vmem:[%s1 + $0x688] sm:$0xf]
    %v448 = vld [vmem:[%s1 + $0x68c] sm:$0xf]
    %v449 = vld [vmem:[%s1 + $0x690] sm:$0xf]
    %v450 = vld [vmem:[%s1 + $0x694] sm:$0xf]
    %v451 = vld [vmem:[%s1 + $0x698] sm:$0xf]
    %v452 = vld [vmem:[%s1 + $0x69c] sm:$0xf]
    %v453 = vld [vmem:[%s1 + $0x6a0] sm:$0xf]
    %v454 = vld [vmem:[%s1 + $0x6a4] sm:$0xf]
    %v455 = vld [vmem:[%s1 + $0x6a8] sm:$0xf]
    %v456 = vld [vmem:[%s1 + $0x6ac] sm:$0xf]
    %v457 = vld [vmem:[%s1 + $0x6b0] sm:$0xf]
    %v458 = vld [vmem:[%s1 + $0x6b4] sm:$0xf]
    %v459 = vld [vmem:[%s1 + $0x6b8] sm:$0xf]
    %v460 = vld [vmem:[%s1 + $0x6bc] sm:$0xf]
    %v461 = vld [vmem:[%s1 + $0x6c0] sm:$0xf]
    %v462 = vld [vmem:[%s1 + $0x6c4] sm:$0xf]
    %v463 = vld [vmem:[%s1 + $0x6c8] sm:$0xf]
    %v464 = vld [vmem:[%s1 + $0x6cc] sm:$0xf]
    %v465 = vld [vmem:[%s1 + $0x6d0] sm:$0xf]
    %v466 = vld [vmem:[%s1 + $0x6d4] sm:$0xf]
    %v467 = vld [vmem:[%s1 + $0x6d8] sm:$0xf]
    %v468 = vld [vmem:[%s1 + $0x6dc] sm:$0xf]
    %v469 = vld [vmem:[%s1 + $0x6e0] sm:$0xf]
    %v470 = vld [vmem:[%s1 + $0x6e4] sm:$0xf]
    %v471 = vld [vmem:[%s1 + $0x6e8] sm:$0xf]
    %v472 = vld [vmem:[%s1 + $0x6ec] sm:$0xf]
    %v473 = vld [vmem:[%s1 + $0x6f0] sm:$0xf]
    %v474 = vld [vmem:[%s1 + $0x6f4] sm:$0xf]
    %v475 = vld [vmem:[%s1 + $0x6f8] sm:$0xf]
    %v476 = vld [vmem:[%s1 + $0x6fc] sm:$0xf]
    %v477 = vld [vmem:[%s1 + $0x700] sm:$0xf]
    %v478 = vld [vmem:[%s1 + $0x704] sm:$0xf]
    %v479 = vld [vmem:[%s1 + $0x708] sm:$0xf]
    %v480 = vld [vmem:[%s1 + $0x70c] sm:$0xf]
    %v481 = vld [vmem:[%s1 + $0x710] sm:$0xf]
    %v482 = vld [vmem:[%s1 + $0x714] sm:$0xf]
    %v483 = vld [vmem:[%s1 + $0x718] sm:$0xf]
    %v484 = vld [vmem:[%s1 + $0x71c] sm:$0xf]
    %v485 = vld [vmem:[%s1 + $0x720] sm:$0xf]
    %v486 = vld [vmem:[%s1 + $0x724] sm:$0xf]
    %v487 = vld [vmem:[%s1 + $0x728] sm:$0xf]
    %v488 = vld [vmem:[%s1 + $0x72c] sm:$0xf]
    %v489 = vld [vmem:[%s1 + $0x730] sm:$0xf]
    %v490 = vld [vmem:[%s1 + $0x734] sm:$0xf]
    %v491 = vld [vmem:[%s1 + $0x738] sm:$0xf]
    %v492 = vld [vmem:[%s1 + $0x73c] sm:$0xf]
    %v493 = vld [vmem:[%s1 + $0x740] sm:$0xf]
    %v494 = vld [vmem:[%s1 + $0x744] sm:$0xf]
    %v495 = vld [vmem:[%s1 + $0x748] sm:$0xf]
    %v496 = vld [vmem:[%s1 + $0x74c] sm:$0xf]
    %v497 = vld [vmem:[%s1 + $0x750] sm:$0xf]
    %v498 = vld [vmem:[%s1 + $0x754] sm:$0xf]
    %v499 = vld [vmem:[%s1 + $0x758] sm:$0xf]
    %v500 = vld [vmem:[%s1 + $0x75c] sm:$0xf]
    %v501 = vld [vmem:[%s1 + $0x760] sm:$0xf]
    %v502 = vld [vmem:[%s1 + $0x764] sm:$0xf]
    %v503 = vld [vmem:[%s1 + $0x768] sm:$0xf]
    %v504 = vld [vmem:[%s1 + $0x76c] sm:$0xf]
    %v505 = vld [vmem:[%s1 + $0x770] sm:$0xf]
    %v506 = vld [vmem:[%s1 + $0x774] sm:$0xf]
    %v507 = vld [vmem:[%s1 + $0x778] sm:$0xf]
    %v508 = vld [vmem:[%s1 + $0x77c] sm:$0xf]
    %v509 = vld [vmem:[%s1 + $0x780] sm:$0xf]
    %v510 = vld [vmem:[%s1 + $0x784] sm:$0xf]
    %v511 = vld [vmem:[%s1 + $0x788] sm:$0xf]
    %v512 = vld [vmem:[%s1 + $0x78c] sm:$0xf]
    %v513 = vld [vmem:[%s1 + $0x790] sm:$0xf]
    %v514 = vld [vmem:[%s1 + $0x794] sm:$0xf]
    %v515 = vld [vmem:[%s1 + $0x798] sm:$0xf]
    %v516 = vld [vmem:[%s1 + $0x79c] sm:$0xf]
    %v517 = vld [vmem:[%s1 + $0x7a0] sm:$0xf]
    %v518 = vld [vmem:[%s1 + $0x7a4] sm:$0xf]
    %v519 = vld [vmem:[%s1 + $0x7a8] sm:$0xf]
    %v520 = vld [vmem:[%s1 + $0x7ac] sm:$0xf]
    %v521 = vld [vmem:[%s1 + $0x7b0] sm:$0xf]
    %v522 = vld [vmem:[%s1 + $0x7b4] sm:$0xf]
    %v523 = vld [vmem:[%s1 + $0x7b8] sm:$0xf]
    %v524 = vld [vmem:[%s1 + $0x7bc] sm:$0xf]
    %v525 = vld [vmem:[%s1 + $0x7c0] sm:$0xf]
    %v526 = vld [vmem:[%s1 + $0x7c4] sm:$0xf]
    %v527 = vld [vmem:[%s1 + $0x7c8] sm:$0xf]
    %v528 = vld [vmem:[%s1 + $0x7cc] sm:$0xf]
    %v529 = vld [vmem:[%s1 + $0x7d0] sm:$0xf]
    %v530 = vld [vmem:[%s1 + $0x7d4] sm:$0xf]
    %v531 = vld [vmem:[%s1 + $0x7d8] sm:$0xf]
    %v532 = vld [vmem:[%s1 + $0x7dc] sm:$0xf]
    %v533 = vld [vmem:[%s1 + $0x7e0] sm:$0xf]
    %v534 = vld [vmem:[%s1 + $0x7e4] sm:$0xf]
    %v535 = vld [vmem:[%s1 + $0x7e8] sm:$0xf]
    %v536 = vld [vmem:[%s1 + $0x7ec] sm:$0xf]
    %v537 = vld [vmem:[%s1 + $0x7f0] sm:$0xf]
    %v538 = vld [vmem:[%s1 + $0x7f4] sm:$0xf]
    %v539 = vld [vmem:[%s1 + $0x7f8] sm:$0xf]
    %v540 = vld [vmem:[%s1 + $0x7fc] sm:$0xf]
    %v541 = vld [vmem:[%s1 + $0x800] sm:$0xf]
    %v542 = vld [vmem:[%s1 + $0x804] sm:$0xf]
    %v543 = vld [vmem:[%s1 + $0x808] sm:$0xf]
    %v544 = vld [vmem:[%s1 + $0x80c] sm:$0xf]
    %v545 = vld [vmem:[%s1 + $0x810] sm:$0xf]
    %v546 = vld [vmem:[%s1 + $0x814] sm:$0xf]
    %v547 = vld [vmem:[%s1 + $0x818] sm:$0xf]
    %v548 = vld [vmem:[%s1 + $0x81c] sm:$0xf]
    %v549 = vld [vmem:[%s1 + $0x820] sm:$0xf]
    %v550 = vld [vmem:[%s1 + $0x824] sm:$0xf]
    %v551 = vld [vmem:[%s1 + $0x828] sm:$0xf]
    %v552 = vld [vmem:[%s1 + $0x82c] sm:$0xf]
    %v553 = vld [vmem:[%s1 + $0x830] sm:$0xf]
    %v554 = vld [vmem:[%s1 + $0x834] sm:$0xf]
    %v555 = vld [vmem:[%s1 + $0x838] sm:$0xf]
    %v556 = vld [vmem:[%s1 + $0x83c] sm:$0xf]
    %v557 = vld [vmem:[%s1 + $0x840] sm:$0xf]
    %v558 = vld [vmem:[%s1 + $0x844] sm:$0xf]
    %v559 = vld [vmem:[%s1 + $0x848] sm:$0xf]
    %v560 = vld [vmem:[%s1 + $0x84c] sm:$0xf]
    %v561 = vld [vmem:[%s1 + $0x850] sm:$0xf]
    %v562 = vld [vmem:[%s1 + $0x854] sm:$0xf]
    %v563 = vld [vmem:[%s1 + $0x858] sm:$0xf]
    %v564 = vld [vmem:[%s1 + $0x85c] sm:$0xf]
    %v565 = vld [vmem:[%s1 + $0x860] sm:$0xf]
    %v566 = vld [vmem:[%s1 + $0x864] sm:$0xf]
    %v567 = vld [vmem:[%s1 + $0x868] sm:$0xf]
    %v568 = vld [vmem:[%s1 + $0x86c] sm:$0xf]
    %v569 = vld [vmem:[%s1 + $0x870] sm:$0xf]
    %v570 = vld [vmem:[%s1 + $0x874] sm:$0xf]
    %v571 = vld [vmem:[%s1 + $0x878] sm:$0xf]
    %v572 = vld [vmem:[%s1 + $0x87c] sm:$0xf]
    %v573 = vld [vmem:[%s1 + $0x880] sm:$0xf]
    %v574 = vld [vmem:[%s1 + $0x884] sm:$0xf]
    %v575 = vld [vmem:[%s1 + $0x888] sm:$0xf]
    %v576 = vld [vmem:[%s1 + $0x88c] sm:$0xf]
    %v577 = vld [vmem:[%s1 + $0x890] sm:$0xf]
    %v578 = vld [vmem:[%s1 + $0x894] sm:$0xf]
    %v579 = vld [vmem:[%s1 + $0x898] sm:$0xf]
    %v580 = vld [vmem:[%s1 + $0x89c] sm:$0xf]
    %v581 = vld [vmem:[%s1 + $0x8a0] sm:$0xf]
    %v582 = vld [vmem:[%s1 + $0x8a4] sm:$0xf]
    %v583 = vld [vmem:[%s1 + $0x8a8] sm:$0xf]
    %v584 = vld [vmem:[%s1 + $0x8ac] sm:$0xf]
    %v585 = vld [vmem:[%s1 + $0x8b0] sm:$0xf]
    %v586 = vld [vmem:[%s1 + $0x8b4] sm:$0xf]
    %v587 = vld [vmem:[%s1 + $0x8b8] sm:$0xf]
    %v588 = vld [vmem:[%s1 + $0x8bc] sm:$0xf]
    %v589 = vld [vmem:[%s1 + $0x8c0] sm:$0xf]
    %v590 = vld [vmem:[%s1 + $0x8c4] sm:$0xf]
    %v591 = vld [vmem:[%s1 + $0x8c8] sm:$0xf]
    %v592 = vld [vmem:[%s1 + $0x8cc] sm:$0xf]
    %v593 = vld [vmem:[%s1 + $0x8d0] sm:$0xf]
    %v594 = vld [vmem:[%s1 + $0x8d4] sm:$0xf]
    %v595 = vld [vmem:[%s1 + $0x8d8] sm:$0xf]
    %v596 = vld [vmem:[%s1 + $0x8dc] sm:$0xf]
    %v597 = vld [vmem:[%s1 + $0x8e0] sm:$0xf]
    %v598 = vld [vmem:[%s1 + $0x8e4] sm:$0xf]
    %v599 = vld [vmem:[%s1 + $0x8e8] sm:$0xf]
    %v600 = vld [vmem:[%s1 + $0x8ec] sm:$0xf]
    %v601 = vld [vmem:[%s1 + $0x8f0] sm:$0xf]
    %v602 = vld [vmem:[%s1 + $0x8f4] sm:$0xf]
    %v603 = vld [vmem:[%s1 + $0x8f8] sm:$0xf]
    %v604 = vld [vmem:[%s1 + $0x8fc] sm:$0xf]
    %v605 = vld [vmem:[%s1 + $0x900] sm:$0xf]
    %v606 = vld [vmem:[%s1 + $0x904] sm:$0xf]
    %v607 = vld [vmem:[%s1 + $0x908] sm:$0xf]
    %v608 = vld [vmem:[%s1 + $0x90c] sm:$0xf]
    %v609 = vld [vmem:[%s1 + $0x910] sm:$0xf]
    %v610 = vld [vmem:[%s1 + $0x914] sm:$0xf]
    %v611 = vld [vmem:[%s1 + $0x918] sm:$0xf]
    %v612 = vld [vmem:[%s1 + $0x91c] sm:$0xf]
    %v613 = vld [vmem:[%s1 + $0x920] sm:$0xf]
    %v614 = vld [vmem:[%s1 + $0x924] sm:$0xf]
    %v615 = vld [vmem:[%s1 + $0x928] sm:$0xf]
    %v616 = vld [vmem:[%s1 + $0x92c] sm:$0xf]
    %v617 = vld [vmem:[%s1 + $0x930] sm:$0xf]
    %v618 = vld [vmem:[%s1 + $0x934] sm:$0xf]
    %v619 = vld [vmem:[%s1 + $0x938] sm:$0xf]
    %v620 = vld [vmem:[%s1 + $0x93c] sm:$0xf]
    %v621 = vld [vmem:[%s1 + $0x940] sm:$0xf]
    %v622 = vld [vmem:[%s1 + $0x944] sm:$0xf]
    %v623 = vld [vmem:[%s1 + $0x948] sm:$0xf]
    %v624 = vld [vmem:[%s1 + $0x94c] sm:$0xf]
    %v625 = vld [vmem:[%s1 + $0x950] sm:$0xf]
    %v626 = vld [vmem:[%s1 + $0x954] sm:$0xf]
    %v627 = vld [vmem:[%s1 + $0x958] sm:$0xf]
    %v628 = vld [vmem:[%s1 + $0x95c] sm:$0xf]
    %v629 = vld [vmem:[%s1 + $0x960] sm:$0xf]
    %v630 = vld [vmem:[%s1 + $0x964] sm:$0xf]
    %v631 = vld [vmem:[%s1 + $0x968] sm:$0xf]
    %v632 = vld [vmem:[%s1 + $0x96c] sm:$0xf]
    %v633 = vld [vmem:[%s1 + $0x970] sm:$0xf]
    %v634 = vld [vmem:[%s1 + $0x974] sm:$0xf]
    %v635 = vld [vmem:[%s1 + $0x978] sm:$0xf]
    %v636 = vld [vmem:[%s1 + $0x97c] sm:$0xf]
    %v637 = vld [vmem:[%s1 + $0x980] sm:$0xf]
    %v638 = vld [vmem:[%s1 + $0x984] sm:$0xf]
    %v639 = vld [vmem:[%s1 + $0x988] sm:$0xf]
    %v640 = vld [vmem:[%s1 + $0x98c] sm:$0xf]
    %v641 = vld [vmem:[%s1 + $0x990] sm:$0xf]
    %v642 = vld [vmem:[%s1 + $0x994] sm:$0xf]
    %v643 = vld [vmem:[%s1 + $0x998] sm:$0xf]
    %v644 = vld [vmem:[%s1 + $0x99c] sm:$0xf]
    %v645 = vld [vmem:[%s1 + $0x9a0] sm:$0xf]
    %v646 = vld [vmem:[%s1 + $0x9a4] sm:$0xf]
    %v647 = vld [vmem:[%s1 + $0x9a8] sm:$0xf]
    %v648 = vld [vmem:[%s1 + $0x9ac] sm:$0xf]
    %v649 = vld [vmem:[%s1 + $0x9b0] sm:$0xf]
    %v650 = vld [vmem:[%s1 + $0x9b4] sm:$0xf]
    %v651 = vld [vmem:[%s1 + $0x9b8] sm:$0xf]
    %v652 = vld [vmem:[%s1 + $0x9bc] sm:$0xf]
    %v653 = vld [vmem:[%s1 + $0x9c0] sm:$0xf]
    %v654 = vld [vmem:[%s1 + $0x9c4] sm:$0xf]
    %v655 = vld [vmem:[%s1 + $0x9c8] sm:$0xf]
    %v656 = vld [vmem:[%s1 + $0x9cc] sm:$0xf]
    %v657 = vld [vmem:[%s1 + $0x9d0] sm:$0xf]
    %v658 = vld [vmem:[%s1 + $0x9d4] sm:$0xf]
    %v659 = vld [vmem:[%s1 + $0x9d8] sm:$0xf]
    %v660 = vld [vmem:[%s1 + $0x9dc] sm:$0xf]
    %v661 = vld [vmem:[%s1 + $0x9e0] sm:$0xf]
    %v662 = vld [vmem:[%s1 + $0x9e4] sm:$0xf]
    %v663 = vld [vmem:[%s1 + $0x9e8] sm:$0xf]
    %v664 = vld [vmem:[%s1 + $0x9ec] sm:$0xf]
    %v665 = vld [vmem:[%s1 + $0x9f0] sm:$0xf]
    %v666 = vld [vmem:[%s1 + $0x9f4] sm:$0xf]
    %v667 = vld [vmem:[%s1 + $0x9f8] sm:$0xf]
    %v668 = vld [vmem:[%s1 + $0x9fc] sm:$0xf]
    %v669 = vld [vmem:[%s1 + $0xa00] sm:$0xf]
    %v670 = vld [vmem:[%s1 + $0xa04] sm:$0xf]
    %v671 = vld [vmem:[%s1 + $0xa08] sm:$0xf]
    %v672 = vld [vmem:[%s1 + $0xa0c] sm:$0xf]
    %v673 = vld [vmem:[%s1 + $0xa10] sm:$0xf]
    %v674 = vld [vmem:[%s1 + $0xa14] sm:$0xf]
    %v675 = vld [vmem:[%s1 + $0xa18] sm:$0xf]
    %v676 = vld [vmem:[%s1 + $0xa1c] sm:$0xf]
    %v677 = vld [vmem:[%s1 + $0xa20] sm:$0xf]
    %v678 = vld [vmem:[%s1 + $0xa24] sm:$0xf]
    %v679 = vld [vmem:[%s1 + $0xa28] sm:$0xf]
    %v680 = vld [vmem:[%s1 + $0xa2c] sm:$0xf]
    %v681 = vld [vmem:[%s1 + $0xa30] sm:$0xf]
    %v682 = vld [vmem:[%s1 + $0xa34] sm:$0xf]
    %v683 = vld [vmem:[%s1 + $0xa38] sm:$0xf]
    %v684 = vld [vmem:[%s1 + $0xa3c] sm:$0xf]
    %v685 = vld [vmem:[%s1 + $0xa40] sm:$0xf]
    %v686 = vld [vmem:[%s1 + $0xa44] sm:$0xf]
    %v687 = vld [vmem:[%s1 + $0xa48] sm:$0xf]
    %v688 = vld [vmem:[%s1 + $0xa4c] sm:$0xf]
    %v689 = vld [vmem:[%s1 + $0xa50] sm:$0xf]
    %v690 = vld [vmem:[%s1 + $0xa54] sm:$0xf]
    %v691 = vld [vmem:[%s1 + $0xa58] sm:$0xf]
    %v692 = vld [vmem:[%s1 + $0xa5c] sm:$0xf]
    %v693 = vld [vmem:[%s1 + $0xa60] sm:$0xf]
    %v694 = vld [vmem:[%s1 + $0xa64] sm:$0xf]
    %v695 = vld [vmem:[%s1 + $0xa68] sm:$0xf]
    %v696 = vld [vmem:[%s1 + $0xa6c] sm:$0xf]
    %v697 = vld [vmem:[%s1 + $0xa70] sm:$0xf]
    %v698 = vld [vmem:[%s1 + $0xa74] sm:$0xf]
    %v699 = vld [vmem:[%s1 + $0xa78] sm:$0xf]
    %v700 = vld [vmem:[%s1 + $0xa7c] sm:$0xf]
    %v701 = vld [vmem:[%s1 + $0xa80] sm:$0xf]
    %v702 = vld [vmem:[%s1 + $0xa84] sm:$0xf]
    %v703 = vld [vmem:[%s1 + $0xa88] sm:$0xf]
    %v704 = vld [vmem:[%s1 + $0xa8c] sm:$0xf]
    %v705 = vld [vmem:[%s1 + $0xa90] sm:$0xf]
    %v706 = vld [vmem:[%s1 + $0xa94] sm:$0xf]
    %v707 = vld [vmem:[%s1 + $0xa98] sm:$0xf]
    %v708 = vld [vmem:[%s1 + $0xa9c] sm:$0xf]
    %v709 = vld [vmem:[%s1 + $0xaa0] sm:$0xf]
    %v710 = vld [vmem:[%s1 + $0xaa4] sm:$0xf]
    %v711 = vld [vmem:[%s1 + $0xaa8] sm:$0xf]
    %v712 = vld [vmem:[%s1 + $0xaac] sm:$0xf]
    %v713 = vld [vmem:[%s1 + $0xab0] sm:$0xf]
    %v714 = vld [vmem:[%s1 + $0xab4] sm:$0xf]
    %v715 = vld [vmem:[%s1 + $0xab8] sm:$0xf]
    %v716 = vld [vmem:[%s1 + $0xabc] sm:$0xf]
    %v717 = vld [vmem:[%s1 + $0xac0] sm:$0xf]
    %v718 = vld [vmem:[%s1 + $0xac4] sm:$0xf]
    %v719 = vld [vmem:[%s1 + $0xac8] sm:$0xf]
    %v720 = vld [vmem:[%s1 + $0xacc] sm:$0xf]
    %v721 = vld [vmem:[%s1 + $0xad0] sm:$0xf]
    %v722 = vld [vmem:[%s1 + $0xad4] sm:$0xf]
    %v723 = vld [vmem:[%s1 + $0xad8] sm:$0xf]
    %v724 = vld [vmem:[%s1 + $0xadc] sm:$0xf]
    %v725 = vld [vmem:[%s1 + $0xae0] sm:$0xf]
    %v726 = vld [vmem:[%s1 + $0xae4] sm:$0xf]
    %v727 = vld [vmem:[%s1 + $0xae8] sm:$0xf]
    %v728 = vld [vmem:[%s1 + $0xaec] sm:$0xf]
    %v729 = vld [vmem:[%s1 + $0xaf0] sm:$0xf]
    %v730 = vld [vmem:[%s1 + $0xaf4] sm:$0xf]
    %v731 = vld [vmem:[%s1 + $0xaf8] sm:$0xf]
    %v732 = vld [vmem:[%s1 + $0xafc] sm:$0xf]
    %v733 = vld [vmem:[%s1 + $0xb00] sm:$0xf]
    %v734 = vld [vmem:[%s1 + $0xb04] sm:$0xf]
    %v735 = vld [vmem:[%s1 + $0xb08] sm:$0xf]
    %v736 = vld [vmem:[%s1 + $0xb0c] sm:$0xf]
    %v737 = vld [vmem:[%s1 + $0xb10] sm:$0xf]
    %v738 = vld [vmem:[%s1 + $0xb14] sm:$0xf]
    %v739 = vld [vmem:[%s1 + $0xb18] sm:$0xf]
    %v740 = vld [vmem:[%s1 + $0xb1c] sm:$0xf]
    %v741 = vld [vmem:[%s1 + $0xb20] sm:$0xf]
    %v742 = vld [vmem:[%s1 + $0xb24] sm:$0xf]
    %v743 = vld [vmem:[%s1 + $0xb28] sm:$0xf]
    %v744 = vld [vmem:[%s1 + $0xb2c] sm:$0xf]
    %v745 = vld [vmem:[%s1 + $0xb30] sm:$0xf]
    %v746 = vld [vmem:[%s1 + $0xb34] sm:$0xf]
    %v747 = vld [vmem:[%s1 + $0xb38] sm:$0xf]
    %v748 = vld [vmem:[%s1 + $0xb3c] sm:$0xf]
    %v749 = vld [vmem:[%s1 + $0xb40] sm:$0xf]
    %v750 = vld [vmem:[%s1 + $0xb44] sm:$0xf]
    %v751 = vld [vmem:[%s1 + $0xb48] sm:$0xf]
    %v752 = vld [vmem:[%s1 + $0xb4c] sm:$0xf]
    %v753 = vld [vmem:[%s1 + $0xb50] sm:$0xf]
    %v754 = vld [vmem:[%s1 + $0xb54] sm:$0xf]
    %v755 = vld [vmem:[%s1 + $0xb58] sm:$0xf]
    %v756 = vld [vmem:[%s1 + $0xb5c] sm:$0xf]
    %v757 = vld [vmem:[%s1 + $0xb60] sm:$0xf]
    %v758 = vld [vmem:[%s1 + $0xb64] sm:$0xf]
    %v759 = vld [vmem:[%s1 + $0xb68] sm:$0xf]
    %v760 = vld [vmem:[%s1 + $0xb6c] sm:$0xf]
    %v761 = vld [vmem:[%s1 + $0xb70] sm:$0xf]
    %v762 = vld [vmem:[%s1 + $0xb74] sm:$0xf]
    %v763 = vld [vmem:[%s1 + $0xb78] sm:$0xf]
    %v764 = vld [vmem:[%s1 + $0xb7c] sm:$0xf]
    %v765 = vld [vmem:[%s1 + $0xb80] sm:$0xf]
    %v766 = vld [vmem:[%s1 + $0xb84] sm:$0xf]
    %v767 = vld [vmem:[%s1 + $0xb88] sm:$0xf]
    %v768 = vld [vmem:[%s1 + $0xb8c] sm:$0xf]
    %v769 = vld [vmem:[%s1 + $0xb90] sm:$0xf]
    %v770 = vld [vmem:[%s1 + $0xb94] sm:$0xf]
    %v771 = vld [vmem:[%s1 + $0xb98] sm:$0xf]
    %v772 = vld [vmem:[%s1 + $0xb9c] sm:$0xf]
    %v773 = vld [vmem:[%s1 + $0xba0] sm:$0xf]
    %v774 = vld [vmem:[%s1 + $0xba4] sm:$0xf]
    %v775 = vld [vmem:[%s1 + $0xba8] sm:$0xf]
    %v776 = vld [vmem:[%s1 + $0xbac] sm:$0xf]
    %v777 = vld [vmem:[%s1 + $0xbb0] sm:$0xf]
    %v778 = vld [vmem:[%s1 + $0xbb4] sm:$0xf]
    %v779 = vld [vmem:[%s1 + $0xbb8] sm:$0xf]
    %v780 = vld [vmem:[%s1 + $0xbbc] sm:$0xf]
    %v781 = vld [vmem:[%s1 + $0xbc0] sm:$0xf]
    %v782 = vld [vmem:[%s1 + $0xbc4] sm:$0xf]
    %v783 = vld [vmem:[%s1 + $0xbc8] sm:$0xf]
    %v784 = vld [vmem:[%s1 + $0xbcc] sm:$0xf]
    %v785 = vld [vmem:[%s1 + $0xbd0] sm:$0xf]
    %v786 = vld [vmem:[%s1 + $0xbd4] sm:$0xf]
    %v787 = vld [vmem:[%s1 + $0xbd8] sm:$0xf]
    %v788 = vld [vmem:[%s1 + $0xbdc] sm:$0xf]
    %v789 = vld [vmem:[%s1 + $0xbe0] sm:$0xf]
    %v790 = vld [vmem:[%s1 + $0xbe4] sm:$0xf]
    %v791 = vld [vmem:[%s1 + $0xbe8] sm:$0xf]
    %v792 = vld [vmem:[%s1 + $0xbec] sm:$0xf]
    %v793 = vld [vmem:[%s1 + $0xbf0] sm:$0xf]
    %v794 = vld [vmem:[%s1 + $0xbf4] sm:$0xf]
    %v795 = vld [vmem:[%s1 + $0xbf8] sm:$0xf]
    %v796 = vld [vmem:[%s1 + $0xbfc] sm:$0xf]
    %v797 = vld [vmem:[%s1 + $0xc00] sm:$0xf]
    %v798 = vld [vmem:[%s1 + $0xc04] sm:$0xf]
    %v799 = vld [vmem:[%s1 + $0xc08] sm:$0xf]
    %v800 = vld [vmem:[%s1 + $0xc0c] sm:$0xf]
    %v801 = vld [vmem:[%s1 + $0xc10] sm:$0xf]
    %v802 = vld [vmem:[%s1 + $0xc14] sm:$0xf]
    %v803 = vld [vmem:[%s1 + $0xc18] sm:$0xf]
    %v804 = vld [vmem:[%s1 + $0xc1c] sm:$0xf]
    %v805 = vld [vmem:[%s1 + $0xc20] sm:$0xf]
    %v806 = vld [vmem:[%s1 + $0xc24] sm:$0xf]
    %v807 = vld [vmem:[%s1 + $0xc28] sm:$0xf]
    %v808 = vld [vmem:[%s1 + $0xc2c] sm:$0xf]
    %v809 = vld [vmem:[%s1 + $0xc30] sm:$0xf]
    %v810 = vld [vmem:[%s1 + $0xc34] sm:$0xf]
    %v811 = vld [vmem:[%s1 + $0xc38] sm:$0xf]
    %v812 = vld [vmem:[%s1 + $0xc3c] sm:$0xf]
    %v813 = vld [vmem:[%s1 + $0xc40] sm:$0xf]
    %v814 = vld [vmem:[%s1 + $0xc44] sm:$0xf]
    %v815 = vld [vmem:[%s1 + $0xc48] sm:$0xf]
    %v816 = vld [vmem:[%s1 + $0xc4c] sm:$0xf]
    %v817 = vld [vmem:[%s1 + $0xc50] sm:$0xf]
    %v818 = vld [vmem:[%s1 + $0xc54] sm:$0xf]
    %v819 = vld [vmem:[%s1 + $0xc58] sm:$0xf]
    %v820 = vld [vmem:[%s1 + $0xc5c] sm:$0xf]
    %v821 = vld [vmem:[%s1 + $0xc60] sm:$0xf]
    %v822 = vld [vmem:[%s1 + $0xc64] sm:$0xf]
    %v823 = vld [vmem:[%s1 + $0xc68] sm:$0xf]
    %v824 = vld [vmem:[%s1 + $0xc6c] sm:$0xf]
    %v825 = vld [vmem:[%s1 + $0xc70] sm:$0xf]
    %v826 = vld [vmem:[%s1 + $0xc74] sm:$0xf]
    %v827 = vld [vmem:[%s1 + $0xc78] sm:$0xf]
    %v828 = vld [vmem:[%s1 + $0xc7c] sm:$0xf]
    %v829 = vld [vmem:[%s1 + $0xc80] sm:$0xf]
    %v830 = vld [vmem:[%s1 + $0xc84] sm:$0xf]
    %v831 = vld [vmem:[%s1 + $0xc88] sm:$0xf]
    %v832 = vld [vmem:[%s1 + $0xc8c] sm:$0xf]
    %v833 = vld [vmem:[%s1 + $0xc90] sm:$0xf]
    %v834 = vld [vmem:[%s1 + $0xc94] sm:$0xf]
    %v835 = vld [vmem:[%s1 + $0xc98] sm:$0xf]
    %v836 = vld [vmem:[%s1 + $0xc9c] sm:$0xf]
    %v837 = vld [vmem:[%s1 + $0xca0] sm:$0xf]
    %v838 = vld [vmem:[%s1 + $0xca4] sm:$0xf]
    %v839 = vld [vmem:[%s1 + $0xca8] sm:$0xf]
    %v840 = vld [vmem:[%s1 + $0xcac] sm:$0xf]
    %v841 = vld [vmem:[%s1 + $0xcb0] sm:$0xf]
    %v842 = vld [vmem:[%s1 + $0xcb4] sm:$0xf]
    %v843 = vld [vmem:[%s1 + $0xcb8] sm:$0xf]
    %v844 = vld [vmem:[%s1 + $0xcbc] sm:$0xf]
    %v845 = vld [vmem:[%s1 + $0xcc0] sm:$0xf]
    %v846 = vld [vmem:[%s1 + $0xcc4] sm:$0xf]
    %v847 = vld [vmem:[%s1 + $0xcc8] sm:$0xf]
    %v848 = vld [vmem:[%s1 + $0xccc] sm:$0xf]
    %v849 = vld [vmem:[%s1 + $0xcd0] sm:$0xf]
    %v850 = vld [vmem:[%s1 + $0xcd4] sm:$0xf]
    %v851 = vld [vmem:[%s1 + $0xcd8] sm:$0xf]
    %v852 = vld [vmem:[%s1 + $0xcdc] sm:$0xf]
    %v853 = vld [vmem:[%s1 + $0xce0] sm:$0xf]
    %v854 = vld [vmem:[%s1 + $0xce4] sm:$0xf]
    %v855 = vld [vmem:[%s1 + $0xce8] sm:$0xf]
    %v856 = vld [vmem:[%s1 + $0xcec] sm:$0xf]
    %v857 = vld [vmem:[%s1 + $0xcf0] sm:$0xf]
    %v858 = vld [vmem:[%s1 + $0xcf4] sm:$0xf]
    %v859 = vld [vmem:[%s1 + $0xcf8] sm:$0xf]
    %v860 = vld [vmem:[%s1 + $0xcfc] sm:$0xf]
    %v861 = vld [vmem:[%s1 + $0xd00] sm:$0xf]
    %v862 = vld [vmem:[%s1 + $0xd04] sm:$0xf]
    %v863 = vld [vmem:[%s1 + $0xd08] sm:$0xf]
    %v864 = vld [vmem:[%s1 + $0xd0c] sm:$0xf]
    %v865 = vld [vmem:[%s1 + $0xd10] sm:$0xf]
    %v866 = vld [vmem:[%s1 + $0xd14] sm:$0xf]
    %v867 = vld [vmem:[%s1 + $0xd18] sm:$0xf]
    %v868 = vld [vmem:[%s1 + $0xd1c] sm:$0xf]
    %v869 = vld [vmem:[%s1 + $0xd20] sm:$0xf]
    %v870 = vld [vmem:[%s1 + $0xd24] sm:$0xf]
    %v871 = vld [vmem:[%s1 + $0xd28] sm:$0xf]
    %v872 = vld [vmem:[%s1 + $0xd2c] sm:$0xf]
    %v873 = vld [vmem:[%s1 + $0xd30] sm:$0xf]
    %v874 = vld [vmem:[%s1 + $0xd34] sm:$0xf]
    %v875 = vld [vmem:[%s1 + $0xd38] sm:$0xf]
    %v876 = vld [vmem:[%s1 + $0xd3c] sm:$0xf]
    %v877 = vld [vmem:[%s1 + $0xd40] sm:$0xf]
    %v878 = vld [vmem:[%s1 + $0xd44] sm:$0xf]
    %v879 = vld [vmem:[%s1 + $0xd48] sm:$0xf]
    %v880 = vld [vmem:[%s1 + $0xd4c] sm:$0xf]
    %v881 = vld [vmem:[%s1 + $0xd50] sm:$0xf]
    %v882 = vld [vmem:[%s1 + $0xd54] sm:$0xf]
    %v883 = vld [vmem:[%s1 + $0xd58] sm:$0xf]
    %v884 = vld [vmem:[%s1 + $0xd5c] sm:$0xf]
    %v885 = vld [vmem:[%s1 + $0xd60] sm:$0xf]
    %v886 = vld [vmem:[%s1 + $0xd64] sm:$0xf]
    %v887 = vld [vmem:[%s1 + $0xd68] sm:$0xf]
    %v888 = vld [vmem:[%s1 + $0xd6c] sm:$0xf]
    %v889 = vld [vmem:[%s1 + $0xd70] sm:$0xf]
    %v890 = vld [vmem:[%s1 + $0xd74] sm:$0xf]
    %v891 = vld [vmem:[%s1 + $0xd78] sm:$0xf]
    %v892 = vld [vmem:[%s1 + $0xd7c] sm:$0xf]
    %v893 = vld [vmem:[%s1 + $0xd80] sm:$0xf]
    %v894 = vld [vmem:[%s1 + $0xd84] sm:$0xf]
    %v895 = vld [vmem:[%s1 + $0xd88] sm:$0xf]
    %v896 = vld [vmem:[%s1 + $0xd8c] sm:$0xf]
    %v897 = vld [vmem:[%s1 + $0xd90] sm:$0xf]
    %v898 = vld [vmem:[%s1 + $0xd94] sm:$0xf]
    %v899 = vld [vmem:[%s1 + $0xd98] sm:$0xf]
    %v900 = vld [vmem:[%s1 + $0xd9c] sm:$0xf]
    %v901 = vld [vmem:[%s1 + $0xda0] sm:$0xf]
    %v902 = vld [vmem:[%s1 + $0xda4] sm:$0xf]
    %v903 = vld [vmem:[%s1 + $0xda8] sm:$0xf]
    %v904 = vld [vmem:[%s1 + $0xdac] sm:$0xf]
    %v905 = vld [vmem:[%s1 + $0xdb0] sm:$0xf]
    %v906 = vld [vmem:[%s1 + $0xdb4] sm:$0xf]
    %v907 = vld [vmem:[%s1 + $0xdb8] sm:$0xf]
    %v908 = vld [vmem:[%s1 + $0xdbc] sm:$0xf]
    %v909 = vld [vmem:[%s1 + $0xdc0] sm:$0xf]
    %v910 = vld [vmem:[%s1 + $0xdc4] sm:$0xf]
    %v911 = vld [vmem:[%s1 + $0xdc8] sm:$0xf]
    %v912 = vld [vmem:[%s1 + $0xdcc] sm:$0xf]
    %v913 = vld [vmem:[%s1 + $0xdd0] sm:$0xf]
    %v914 = vld [vmem:[%s1 + $0xdd4] sm:$0xf]
    %v915 = vld [vmem:[%s1 + $0xdd8] sm:$0xf]
    %v916 = vld [vmem:[%s1 + $0xddc] sm:$0xf]
    %v917 = vld [vmem:[%s1 + $0xde0] sm:$0xf]
    %v918 = vld [vmem:[%s1 + $0xde4] sm:$0xf]
    %v919 = vld [vmem:[%s1 + $0xde8] sm:$0xf]
    %v920 = vld [vmem:[%s1 + $0xdec] sm:$0xf]
    %v921 = vld [vmem:[%s1 + $0xdf0] sm:$0xf]
    %v922 = vld [vmem:[%s1 + $0xdf4] sm:$0xf]
    %v923 = vld [vmem:[%s1 + $0xdf8] sm:$0xf]
    %v924 = vld [vmem:[%s1 + $0xdfc] sm:$0xf]
    %v925 = vld [vmem:[%s1 + $0xe00] sm:$0xf]
    %v926 = vld [vmem:[%s1 + $0xe04] sm:$0xf]
    %v927 = vld [vmem:[%s1 + $0xe08] sm:$0xf]
    %v928 = vld [vmem:[%s1 + $0xe0c] sm:$0xf]
    %v929 = vld [vmem:[%s1 + $0xe10] sm:$0xf]
    %v930 = vld [vmem:[%s1 + $0xe14] sm:$0xf]
    %v931 = vld [vmem:[%s1 + $0xe18] sm:$0xf]
    %v932 = vld [vmem:[%s1 + $0xe1c] sm:$0xf]
    %v933 = vld [vmem:[%s1 + $0xe20] sm:$0xf]
    %v934 = vld [vmem:[%s1 + $0xe24] sm:$0xf]
    %v935 = vld [vmem:[%s1 + $0xe28] sm:$0xf]
    %v936 = vld [vmem:[%s1 + $0xe2c] sm:$0xf]
    %v937 = vld [vmem:[%s1 + $0xe30] sm:$0xf]
    %v938 = vld [vmem:[%s1 + $0xe34] sm:$0xf]
    %v939 = vld [vmem:[%s1 + $0xe38] sm:$0xf]
    %v940 = vld [vmem:[%s1 + $0xe3c] sm:$0xf]
    %v941 = vld [vmem:[%s1 + $0xe40] sm:$0xf]
    %v942 = vld [vmem:[%s1 + $0xe44] sm:$0xf]
    %v943 = vld [vmem:[%s1 + $0xe48] sm:$0xf]
    %v944 = vld [vmem:[%s1 + $0xe4c] sm:$0xf]
    %v945 = vld [vmem:[%s1 + $0xe50] sm:$0xf]
    %v946 = vld [vmem:[%s1 + $0xe54] sm:$0xf]
    %v947 = vld [vmem:[%s1 + $0xe58] sm:$0xf]
    %v948 = vld [vmem:[%s1 + $0xe5c] sm:$0xf]
    %v949 = vld [vmem:[%s1 + $0xe60] sm:$0xf]
    %v950 = vld [vmem:[%s1 + $0xe64] sm:$0xf]
    %v951 = vld [vmem:[%s1 + $0xe68] sm:$0xf]
    %v952 = vld [vmem:[%s1 + $0xe6c] sm:$0xf]
    %v953 = vld [vmem:[%s1 + $0xe70] sm:$0xf]
    %v954 = vld [vmem:[%s1 + $0xe74] sm:$0xf]
    %v955 = vld [vmem:[%s1 + $0xe78] sm:$0xf]
    %v956 = vld [vmem:[%s1 + $0xe7c] sm:$0xf]
    %v957 = vld [vmem:[%s1 + $0xe80] sm:$0xf]
    %v958 = vld [vmem:[%s1 + $0xe84] sm:$0xf]
    %v959 = vld [vmem:[%s1 + $0xe88] sm:$0xf]
    %v960 = vld [vmem:[%s1 + $0xe8c] sm:$0xf]
    %v961 = vld [vmem:[%s1 + $0xe90] sm:$0xf]
    %v962 = vld [vmem:[%s1 + $0xe94] sm:$0xf]
    %v963 = vld [vmem:[%s1 + $0xe98] sm:$0xf]
    %v964 = vld [vmem:[%s1 + $0xe9c] sm:$0xf]
    %v965 = vld [vmem:[%s1 + $0xea0] sm:$0xf]
    %v966 = vld [vmem:[%s1 + $0xea4] sm:$0xf]
    %v967 = vld [vmem:[%s1 + $0xea8] sm:$0xf]
    %v968 = vld [vmem:[%s1 + $0xeac] sm:$0xf]
    %v969 = vld [vmem:[%s1 + $0xeb0] sm:$0xf]
    %v970 = vld [vmem:[%s1 + $0xeb4] sm:$0xf]
    %v971 = vld [vmem:[%s1 + $0xeb8] sm:$0xf]
    %v972 = vld [vmem:[%s1 + $0xebc] sm:$0xf]
    %v973 = vld [vmem:[%s1 + $0xec0] sm:$0xf]
    %v974 = vld [vmem:[%s1 + $0xec4] sm:$0xf]
    %v975 = vld [vmem:[%s1 + $0xec8] sm:$0xf]
    %v976 = vld [vmem:[%s1 + $0xecc] sm:$0xf]
    %v977 = vld [vmem:[%s1 + $0xed0] sm:$0xf]
    %v978 = vld [vmem:[%s1 + $0xed4] sm:$0xf]
    %v979 = vld [vmem:[%s1 + $0xed8] sm:$0xf]
    %v980 = vld [vmem:[%s1 + $0xedc] sm:$0xf]
    %v981 = vld [vmem:[%s1 + $0xee0] sm:$0xf]
    %v982 = vld [vmem:[%s1 + $0xee4] sm:$0xf]
    %v983 = vld [vmem:[%s1 + $0xee8] sm:$0xf]
    %v984 = vld [vmem:[%s1 + $0xeec] sm:$0xf]
    %v985 = vld [vmem:[%s1 + $0xef0] sm:$0xf]
    %v986 = vld [vmem:[%s1 + $0xef4] sm:$0xf]
    %v987 = vld [vmem:[%s1 + $0xef8] sm:$0xf]
    %v988 = vld [vmem:[%s1 + $0xefc] sm:$0xf]
    %v989 = vld [vmem:[%s1 + $0xf00] sm:$0xf]
    %v990 = vld [vmem:[%s1 + $0xf04] sm:$0xf]
    %v991 = vld [vmem:[%s1 + $0xf08] sm:$0xf]
    %v992 = vld [vmem:[%s1 + $0xf0c] sm:$0xf]
    %v993 = vld [vmem:[%s1 + $0xf10] sm:$0xf]
    %v994 = vld [vmem:[%s1 + $0xf14] sm:$0xf]
    %v995 = vld [vmem:[%s1 + $0xf18] sm:$0xf]
    %v996 = vld [vmem:[%s1 + $0xf1c] sm:$0xf]
    %v997 = vld [vmem:[%s1 + $0xf20] sm:$0xf]
    %v998 = vld [vmem:[%s1 + $0xf24] sm:$0xf]
    %v999 = vld [vmem:[%s1 + $0xf28] sm:$0xf]
    %v1000 = vld [vmem:[%s1 + $0xf2c] sm:$0xf]
    %v1001 = vld [vmem:[%s1 + $0xf30] sm:$0xf]
    %v1002 = vld [vmem:[%s1 + $0xf34] sm:$0xf]
    %v1003 = vld [vmem:[%s1 + $0xf38] sm:$0xf]
    %v1004 = vld [vmem:[%s1 + $0xf3c] sm:$0xf]
    %v1005 = vld [vmem:[%s1 + $0xf40] sm:$0xf]
    %v1006 = vld [vmem:[%s1 + $0xf44] sm:$0xf]
    %v1007 = vld [vmem:[%s1 + $0xf48] sm:$0xf]
    %v1008 = vld [vmem:[%s1 + $0xf4c] sm:$0xf]
    %v1009 = vld [vmem:[%s1 + $0xf50] sm:$0xf]
    %v1010 = vld [vmem:[%s1 + $0xf54] sm:$0xf]
    %v1011 = vld [vmem:[%s1 + $0xf58] sm:$0xf]
    %v1012 = vld [vmem:[%s1 + $0xf5c] sm:$0xf]
    %v1013 = vld [vmem:[%s1 + $0xf60] sm:$0xf]
    %v1014 = vld [vmem:[%s1 + $0xf64] sm:$0xf]
    %v1015 = vld [vmem:[%s1 + $0xf68] sm:$0xf]
    %v1016 = vld [vmem:[%s1 + $0xf6c] sm:$0xf]
    %v1017 = vld [vmem:[%s1 + $0xf70] sm:$0xf]
    %v1018 = vld [vmem:[%s1 + $0xf74] sm:$0xf]
    %v1019 = vld [vmem:[%s1 + $0xf78] sm:$0xf]
    %v1020 = vld [vmem:[%s1 + $0xf7c] sm:$0xf]
    %v1021 = vld [vmem:[%s1 + $0xf80] sm:$0xf]
    %v1022 = vld [vmem:[%s1 + $0xf84] sm:$0xf]
    %v1023 = vld [vmem:[%s1 + $0xf88] sm:$0xf]
    %v1024 = vld [vmem:[%s1 + $0xf8c] sm:$0xf]
    %v1025 = vld [vmem:[%s1 + $0xf90] sm:$0xf]
    %v1026 = vld [vmem:[%s1 + $0xf94] sm:$0xf]
    %v1027 = vld [vmem:[%s1 + $0xf98] sm:$0xf]
    %v1028 = vld [vmem:[%s1 + $0xf9c] sm:$0xf]
    %v1029 = vld [vmem:[%s1 + $0xfa0] sm:$0xf]
    %v1030 = vld [vmem:[%s1 + $0xfa4] sm:$0xf]
    %v1031 = vld [vmem:[%s1 + $0xfa8] sm:$0xf]
    %v1032 = vld [vmem:[%s1 + $0xfac] sm:$0xf]
    %v1033 = vld [vmem:[%s1 + $0xfb0] sm:$0xf]
    %v1034 = vld [vmem:[%s1 + $0xfb4] sm:$0xf]
    %v1035 = vld [vmem:[%s1 + $0xfb8] sm:$0xf]
    %v1036 = vld [vmem:[%s1 + $0xfbc] sm:$0xf]
    %v1037 = vld [vmem:[%s1 + $0xfc0] sm:$0xf]
    %v1038 = vld [vmem:[%s1 + $0xfc4] sm:$0xf]
    %v1039 = vld [vmem:[%s1 + $0xfc8] sm:$0xf]
    %v1040 = vld [vmem:[%s1 + $0xfcc] sm:$0xf]
    %v1041 = vld [vmem:[%s1 + $0xfd0] sm:$0xf]
    %v1042 = vld [vmem:[%s1 + $0xfd4] sm:$0xf]
    %v1043 = vld [vmem:[%s1 + $0xfd8] sm:$0xf]
    %v1044 = vld [vmem:[%s1 + $0xfdc] sm:$0xf]
    %v1045 = vld [vmem:[%s1 + $0xfe0] sm:$0xf]
    %v1046 = vld [vmem:[%s1 + $0xfe4] sm:$0xf]
    %v1047 = vld [vmem:[%s1 + $0xfe8] sm:$0xf]
    %v1048 = vld [vmem:[%s1 + $0xfec] sm:$0xf]
    %v1049 = vld [vmem:[%s1 + $0xff0] sm:$0xf]
    %v1050 = vld [vmem:[%s1 + $0xff4] sm:$0xf]
    %v1051 = vld [vmem:[%s1 + $0xff8] sm:$0xf]
    %v1052 = vld [vmem:[%s1 + $0xffc] sm:$0xf]
    %v1053 = vld [vmem:[%s2] sm:$0x1]
    %v1055 = vperm.slane %v1053, 0
    %1058 = vst [vmem:[#allocation1] ss:$9 sm:$0xff] %v21
    %v1059 = vld [vmem:[#allocation1] sm:$0xff]
    %v1060 = vld [vmem:[#allocation1 + $0x9] sm:$0xff]
    %v1061 = vld [vmem:[#allocation1 + $0x12] sm:$0xff]
    %v1062 = vld [vmem:[#allocation1 + $0x1b] sm:$0xff]
    %v1063 = vld [vmem:[#allocation1 + $0x24] sm:$0xff]
    %v1064 = vld [vmem:[#allocation1 + $0x2d] sm:$0xff]
    %v1065 = vld [vmem:[#allocation1 + $0x36] sm:$0xff]
    %v1066 = vld [vmem:[#allocation1 + $0x3f] sm:$0xff]
    %1068 = vst [vmem:[#allocation1] ss:$9 sm:$0xff] %v22
    %v1069 = vld [vmem:[#allocation1] sm:$0xff]
    %v1070 = vld [vmem:[#allocation1 + $0x9] sm:$0xff]
    %v1071 = vld [vmem:[#allocation1 + $0x12] sm:$0xff]
    %v1072 = vld [vmem:[#allocation1 + $0x1b] sm:$0xff]
    %v1073 = vld [vmem:[#allocation1 + $0x24] sm:$0xff]
    %v1074 = vld [vmem:[#allocation1 + $0x2d] sm:$0xff]
    %v1075 = vld [vmem:[#allocation1 + $0x36] sm:$0xff]
    %v1076 = vld [vmem:[#allocation1 + $0x3f] sm:$0xff]
    %1078 = vst [vmem:[#allocation1] ss:$9 sm:$0xff] %v23
    %v1079 = vld [vmem:[#allocation1] sm:$0xff]
    %v1080 = vld [vmem:[#allocation1 + $0x9] sm:$0xff]
    %v1081 = vld [vmem:[#allocation1 + $0x12] sm:$0xff]
    %v1082 = vld [vmem:[#allocation1 + $0x1b] sm:$0xff]
    %v1083 = vld [vmem:[#allocation1 + $0x24] sm:$0xff]
    %v1084 = vld [vmem:[#allocation1 + $0x2d] sm:$0xff]
    %v1085 = vld [vmem:[#allocation1 + $0x36] sm:$0xff]
    %v1086 = vld [vmem:[#allocation1 + $0x3f] sm:$0xff]
    %1088 = vst [vmem:[#allocation1] ss:$9 sm:$0xff] %v24
    %v1089 = vld [vmem:[#allocation1] sm:$0xff]
    %v1090 = vld [vmem:[#allocation1 + $0x9] sm:$0xff]
    %v1091 = vld [vmem:[#allocation1 + $0x12] sm:$0xff]
    %v1092 = vld [vmem:[#allocation1 + $0x1b] sm:$0xff]
    %v1093 = vld [vmem:[#allocation1 + $0x24] sm:$0xff]
    %v1094 = vld [vmem:[#allocation1 + $0x2d] sm:$0xff]
    %v1095 = vld [vmem:[#allocation1 + $0x36] sm:$0xff]
    %v1096 = vld [vmem:[#allocation1 + $0x3f] sm:$0xff]
    %1098 = vst [vmem:[#allocation1] ss:$9 sm:$0xff] %v25
    %v1099 = vld [vmem:[#allocation1] sm:$0xff]
    %v1100 = vld [vmem:[#allocation1 + $0x9] sm:$0xff]
    %v1101 = vld [vmem:[#allocation1 + $0x12] sm:$0xff]
    %v1102 = vld [vmem:[#allocation1 + $0x1b] sm:$0xff]
    %v1103 = vld [vmem:[#allocation1 + $0x24] sm:$0xff]
    %v1104 = vld [vmem:[#allocation1 + $0x2d] sm:$0xff]
    %v1105 = vld [vmem:[#allocation1 + $0x36] sm:$0xff]
    %v1106 = vld [vmem:[#allocation1 + $0x3f] sm:$0xff]
    %1108 = vst [vmem:[#allocation1] ss:$9 sm:$0xff] %v26
    %v1109 = vld [vmem:[#allocation1] sm:$0xff]
    %v1110 = vld [vmem:[#allocation1 + $0x9] sm:$0xff]
    %v1111 = vld [vmem:[#allocation1 + $0x12] sm:$0xff]
    %v1112 = vld [vmem:[#allocation1 + $0x1b] sm:$0xff]
    %v1113 = vld [vmem:[#allocation1 + $0x24] sm:$0xff]
    %v1114 = vld [vmem:[#allocation1 + $0x2d] sm:$0xff]
    %v1115 = vld [vmem:[#allocation1 + $0x36] sm:$0xff]
    %v1116 = vld [vmem:[#allocation1 + $0x3f] sm:$0xff]
    %1118 = vst [vmem:[#allocation1] ss:$9 sm:$0xff] %v27
    %v1119 = vld [vmem:[#allocation1] sm:$0xff]
    %v1120 = vld [vmem:[#allocation1 + $0x9] sm:$0xff]
    %v1121 = vld [vmem:[#allocation1 + $0x12] sm:$0xff]
    %v1122 = vld [vmem:[#allocation1 + $0x1b] sm:$0xff]
    %v1123 = vld [vmem:[#allocation1 + $0x24] sm:$0xff]
    %v1124 = vld [vmem:[#allocation1 + $0x2d] sm:$0xff]
    %v1125 = vld [vmem:[#allocation1 + $0x36] sm:$0xff]
    %v1126 = vld [vmem:[#allocation1 + $0x3f] sm:$0xff]
    %1128 = vst [vmem:[#allocation1] ss:$9 sm:$0xff] %v28
    %v1129 = vld [vmem:[#allocation1] sm:$0xff]
    %v1130 = vld [vmem:[#allocation1 + $0x9] sm:$0xff]
    %v1131 = vld [vmem:[#allocation1 + $0x12] sm:$0xff]
    %v1132 = vld [vmem:[#allocation1 + $0x1b] sm:$0xff]
    %v1133 = vld [vmem:[#allocation1 + $0x24] sm:$0xff]
    %v1134 = vld [vmem:[#allocation1 + $0x2d] sm:$0xff]
    %v1135 = vld [vmem:[#allocation1 + $0x36] sm:$0xff]
    %v1136 = vld [vmem:[#allocation1 + $0x3f] sm:$0xff]
    %v2225 = vunpack.c.l.b16 %v29
    %v2226 = vunpack.c.l.b16 %v30
    %v2227 = vunpack.c.l.b16 %v31
    %v2228 = vunpack.c.l.b16 %v32
    %v2229 = vunpack.c.l.b16 %v33
    %v2230 = vunpack.c.l.b16 %v34
    %v2231 = vunpack.c.l.b16 %v35
    %v2232 = vunpack.c.l.b16 %v36
    %v2233 = vunpack.c.l.b16 %v37
    %v2234 = vunpack.c.l.b16 %v38
    %v2235 = vunpack.c.l.b16 %v39
    %v2236 = vunpack.c.l.b16 %v40
    %v2237 = vunpack.c.l.b16 %v41
    %v2238 = vunpack.c.l.b16 %v42
    %v2239 = vunpack.c.l.b16 %v43
    %v2240 = vunpack.c.l.b16 %v44
    %v2241 = vunpack.c.l.b16 %v45
    %v2242 = vunpack.c.l.b16 %v46
    %v2243 = vunpack.c.l.b16 %v47
    %v2244 = vunpack.c.l.b16 %v48
    %v2245 = vunpack.c.l.b16 %v49
    %v2246 = vunpack.c.l.b16 %v50
    %v2247 = vunpack.c.l.b16 %v51
    %v2248 = vunpack.c.l.b16 %v52
    %v2249 = vunpack.c.l.b16 %v53
    %v2250 = vunpack.c.l.b16 %v54
    %v2251 = vunpack.c.l.b16 %v55
    %v2252 = vunpack.c.l.b16 %v56
    %v2253 = vunpack.c.l.b16 %v57
    %v2254 = vunpack.c.l.b16 %v58
    %v2255 = vunpack.c.l.b16 %v59
    %v2256 = vunpack.c.l.b16 %v60
    %v2257 = vunpack.c.l.b16 %v61
    %v2258 = vunpack.c.l.b16 %v62
    %v2259 = vunpack.c.l.b16 %v63
    %v2260 = vunpack.c.l.b16 %v64
    %v2261 = vunpack.c.l.b16 %v65
    %v2262 = vunpack.c.l.b16 %v66
    %v2263 = vunpack.c.l.b16 %v67
    %v2264 = vunpack.c.l.b16 %v68
    %v2265 = vunpack.c.l.b16 %v69
    %v2266 = vunpack.c.l.b16 %v70
    %v2267 = vunpack.c.l.b16 %v71
    %v2268 = vunpack.c.l.b16 %v72
    %v2269 = vunpack.c.l.b16 %v73
    %v2270 = vunpack.c.l.b16 %v74
    %v2271 = vunpack.c.l.b16 %v75
    %v2272 = vunpack.c.l.b16 %v76
    %v2273 = vunpack.c.l.b16 %v77
    %v2274 = vunpack.c.l.b16 %v78
    %v2275 = vunpack.c.l.b16 %v79
    %v2276 = vunpack.c.l.b16 %v80
    %v2277 = vunpack.c.l.b16 %v81
    %v2278 = vunpack.c.l.b16 %v82
    %v2279 = vunpack.c.l.b16 %v83
    %v2280 = vunpack.c.l.b16 %v84
    %v2281 = vunpack.c.l.b16 %v85
    %v2282 = vunpack.c.l.b16 %v86
    %v2283 = vunpack.c.l.b16 %v87
    %v2284 = vunpack.c.l.b16 %v88
    %v2285 = vunpack.c.l.b16 %v89
    %v2286 = vunpack.c.l.b16 %v90
    %v2287 = vunpack.c.l.b16 %v91
    %v2288 = vunpack.c.l.b16 %v92
    %v2289 = vunpack.c.l.b16 %v93
    %v2290 = vunpack.c.l.b16 %v94
    %v2291 = vunpack.c.l.b16 %v95
    %v2292 = vunpack.c.l.b16 %v96
    %v2293 = vunpack.c.l.b16 %v97
    %v2294 = vunpack.c.l.b16 %v98
    %v2295 = vunpack.c.l.b16 %v99
    %v2296 = vunpack.c.l.b16 %v100
    %v2297 = vunpack.c.l.b16 %v101
    %v2298 = vunpack.c.l.b16 %v102
    %v2299 = vunpack.c.l.b16 %v103
    %v2300 = vunpack.c.l.b16 %v104
    %v2301 = vunpack.c.l.b16 %v105
    %v2302 = vunpack.c.l.b16 %v106
    %v2303 = vunpack.c.l.b16 %v107
    %v2304 = vunpack.c.l.b16 %v108
    %v2305 = vunpack.c.l.b16 %v109
    %v2306 = vunpack.c.l.b16 %v110
    %v2307 = vunpack.c.l.b16 %v111
    %v2308 = vunpack.c.l.b16 %v112
    %v2309 = vunpack.c.l.b16 %v113
    %v2310 = vunpack.c.l.b16 %v114
    %v2311 = vunpack.c.l.b16 %v115
    %v2312 = vunpack.c.l.b16 %v116
    %v2313 = vunpack.c.l.b16 %v117
    %v2314 = vunpack.c.l.b16 %v118
    %v2315 = vunpack.c.l.b16 %v119
    %v2316 = vunpack.c.l.b16 %v120
    %v2317 = vunpack.c.l.b16 %v121
    %v2318 = vunpack.c.l.b16 %v122
    %v2319 = vunpack.c.l.b16 %v123
    %v2320 = vunpack.c.l.b16 %v124
    %v2321 = vunpack.c.l.b16 %v125
    %v2322 = vunpack.c.l.b16 %v126
    %v2323 = vunpack.c.l.b16 %v127
    %v2324 = vunpack.c.l.b16 %v128
    %v2325 = vunpack.c.l.b16 %v129
    %v2326 = vunpack.c.l.b16 %v130
    %v2327 = vunpack.c.l.b16 %v131
    %v2328 = vunpack.c.l.b16 %v132
    %v2329 = vunpack.c.l.b16 %v133
    %v2330 = vunpack.c.l.b16 %v134
    %v2331 = vunpack.c.l.b16 %v135
    %v2332 = vunpack.c.l.b16 %v136
    %v2333 = vunpack.c.l.b16 %v137
    %v2334 = vunpack.c.l.b16 %v138
    %v2335 = vunpack.c.l.b16 %v139
    %v2336 = vunpack.c.l.b16 %v140
    %v2337 = vunpack.c.l.b16 %v141
    %v2338 = vunpack.c.l.b16 %v142
    %v2339 = vunpack.c.l.b16 %v143
    %v2340 = vunpack.c.l.b16 %v144
    %v2341 = vunpack.c.l.b16 %v145
    %v2342 = vunpack.c.l.b16 %v146
    %v2343 = vunpack.c.l.b16 %v147
    %v2344 = vunpack.c.l.b16 %v148
    %v2345 = vunpack.c.l.b16 %v149
    %v2346 = vunpack.c.l.b16 %v150
    %v2347 = vunpack.c.l.b16 %v151
    %v2348 = vunpack.c.l.b16 %v152
    %v2349 = vunpack.c.l.b16 %v153
    %v2350 = vunpack.c.l.b16 %v154
    %v2351 = vunpack.c.l.b16 %v155
    %v2352 = vunpack.c.l.b16 %v156
    %v2353 = vunpack.c.l.b16 %v157
    %v2354 = vunpack.c.l.b16 %v158
    %v2355 = vunpack.c.l.b16 %v159
    %v2356 = vunpack.c.l.b16 %v160
    %v2357 = vunpack.c.l.b16 %v161
    %v2358 = vunpack.c.l.b16 %v162
    %v2359 = vunpack.c.l.b16 %v163
    %v2360 = vunpack.c.l.b16 %v164
    %v2361 = vunpack.c.l.b16 %v165
    %v2362 = vunpack.c.l.b16 %v166
    %v2363 = vunpack.c.l.b16 %v167
    %v2364 = vunpack.c.l.b16 %v168
    %v2365 = vunpack.c.l.b16 %v169
    %v2366 = vunpack.c.l.b16 %v170
    %v2367 = vunpack.c.l.b16 %v171
    %v2368 = vunpack.c.l.b16 %v172
    %v2369 = vunpack.c.l.b16 %v173
    %v2370 = vunpack.c.l.b16 %v174
    %v2371 = vunpack.c.l.b16 %v175
    %v2372 = vunpack.c.l.b16 %v176
    %v2373 = vunpack.c.l.b16 %v177
    %v2374 = vunpack.c.l.b16 %v178
    %v2375 = vunpack.c.l.b16 %v179
    %v2376 = vunpack.c.l.b16 %v180
    %v2377 = vunpack.c.l.b16 %v181
    %v2378 = vunpack.c.l.b16 %v182
    %v2379 = vunpack.c.l.b16 %v183
    %v2380 = vunpack.c.l.b16 %v184
    %v2381 = vunpack.c.l.b16 %v185
    %v2382 = vunpack.c.l.b16 %v186
    %v2383 = vunpack.c.l.b16 %v187
    %v2384 = vunpack.c.l.b16 %v188
    %v2385 = vunpack.c.l.b16 %v189
    %v2386 = vunpack.c.l.b16 %v190
    %v2387 = vunpack.c.l.b16 %v191
    %v2388 = vunpack.c.l.b16 %v192
    %v2389 = vunpack.c.l.b16 %v193
    %v2390 = vunpack.c.l.b16 %v194
    %v2391 = vunpack.c.l.b16 %v195
    %v2392 = vunpack.c.l.b16 %v196
    %v2393 = vunpack.c.l.b16 %v197
    %v2394 = vunpack.c.l.b16 %v198
    %v2395 = vunpack.c.l.b16 %v199
    %v2396 = vunpack.c.l.b16 %v200
    %v2397 = vunpack.c.l.b16 %v201
    %v2398 = vunpack.c.l.b16 %v202
    %v2399 = vunpack.c.l.b16 %v203
    %v2400 = vunpack.c.l.b16 %v204
    %v2401 = vunpack.c.l.b16 %v205
    %v2402 = vunpack.c.l.b16 %v206
    %v2403 = vunpack.c.l.b16 %v207
    %v2404 = vunpack.c.l.b16 %v208
    %v2405 = vunpack.c.l.b16 %v209
    %v2406 = vunpack.c.l.b16 %v210
    %v2407 = vunpack.c.l.b16 %v211
    %v2408 = vunpack.c.l.b16 %v212
    %v2409 = vunpack.c.l.b16 %v213
    %v2410 = vunpack.c.l.b16 %v214
    %v2411 = vunpack.c.l.b16 %v215
    %v2412 = vunpack.c.l.b16 %v216
    %v2413 = vunpack.c.l.b16 %v217
    %v2414 = vunpack.c.l.b16 %v218
    %v2415 = vunpack.c.l.b16 %v219
    %v2416 = vunpack.c.l.b16 %v220
    %v2417 = vunpack.c.l.b16 %v221
    %v2418 = vunpack.c.l.b16 %v222
    %v2419 = vunpack.c.l.b16 %v223
    %v2420 = vunpack.c.l.b16 %v224
    %v2421 = vunpack.c.l.b16 %v225
    %v2422 = vunpack.c.l.b16 %v226
    %v2423 = vunpack.c.l.b16 %v227
    %v2424 = vunpack.c.l.b16 %v228
    %v2425 = vunpack.c.l.b16 %v229
    %v2426 = vunpack.c.l.b16 %v230
    %v2427 = vunpack.c.l.b16 %v231
    %v2428 = vunpack.c.l.b16 %v232
    %v2429 = vunpack.c.l.b16 %v233
    %v2430 = vunpack.c.l.b16 %v234
    %v2431 = vunpack.c.l.b16 %v235
    %v2432 = vunpack.c.l.b16 %v236
    %v2433 = vunpack.c.l.b16 %v237
    %v2434 = vunpack.c.l.b16 %v238
    %v2435 = vunpack.c.l.b16 %v239
    %v2436 = vunpack.c.l.b16 %v240
    %v2437 = vunpack.c.l.b16 %v241
    %v2438 = vunpack.c.l.b16 %v242
    %v2439 = vunpack.c.l.b16 %v243
    %v2440 = vunpack.c.l.b16 %v244
    %v2441 = vunpack.c.l.b16 %v245
    %v2442 = vunpack.c.l.b16 %v246
    %v2443 = vunpack.c.l.b16 %v247
    %v2444 = vunpack.c.l.b16 %v248
    %v2445 = vunpack.c.l.b16 %v249
    %v2446 = vunpack.c.l.b16 %v250
    %v2447 = vunpack.c.l.b16 %v251
    %v2448 = vunpack.c.l.b16 %v252
    %v2449 = vunpack.c.l.b16 %v253
    %v2450 = vunpack.c.l.b16 %v254
    %v2451 = vunpack.c.l.b16 %v255
    %v2452 = vunpack.c.l.b16 %v256
    %v2453 = vunpack.c.l.b16 %v257
    %v2454 = vunpack.c.l.b16 %v258
    %v2455 = vunpack.c.l.b16 %v259
    %v2456 = vunpack.c.l.b16 %v260
    %v2457 = vunpack.c.l.b16 %v261
    %v2458 = vunpack.c.l.b16 %v262
    %v2459 = vunpack.c.l.b16 %v263
    %v2460 = vunpack.c.l.b16 %v264
    %v2461 = vunpack.c.l.b16 %v265
    %v2462 = vunpack.c.l.b16 %v266
    %v2463 = vunpack.c.l.b16 %v267
    %v2464 = vunpack.c.l.b16 %v268
    %v2465 = vunpack.c.l.b16 %v269
    %v2466 = vunpack.c.l.b16 %v270
    %v2467 = vunpack.c.l.b16 %v271
    %v2468 = vunpack.c.l.b16 %v272
    %v2469 = vunpack.c.l.b16 %v273
    %v2470 = vunpack.c.l.b16 %v274
    %v2471 = vunpack.c.l.b16 %v275
    %v2472 = vunpack.c.l.b16 %v276
    %v2473 = vunpack.c.l.b16 %v277
    %v2474 = vunpack.c.l.b16 %v278
    %v2475 = vunpack.c.l.b16 %v279
    %v2476 = vunpack.c.l.b16 %v280
    %v2477 = vunpack.c.l.b16 %v281
    %v2478 = vunpack.c.l.b16 %v282
    %v2479 = vunpack.c.l.b16 %v283
    %v2480 = vunpack.c.l.b16 %v284
    %v2481 = vunpack.c.l.b16 %v285
    %v2482 = vunpack.c.l.b16 %v286
    %v2483 = vunpack.c.l.b16 %v287
    %v2484 = vunpack.c.l.b16 %v288
    %v2485 = vunpack.c.l.b16 %v289
    %v2486 = vunpack.c.l.b16 %v290
    %v2487 = vunpack.c.l.b16 %v291
    %v2488 = vunpack.c.l.b16 %v292
    %v2489 = vunpack.c.l.b16 %v293
    %v2490 = vunpack.c.l.b16 %v294
    %v2491 = vunpack.c.l.b16 %v295
    %v2492 = vunpack.c.l.b16 %v296
    %v2493 = vunpack.c.l.b16 %v297
    %v2494 = vunpack.c.l.b16 %v298
    %v2495 = vunpack.c.l.b16 %v299
    %v2496 = vunpack.c.l.b16 %v300
    %v2497 = vunpack.c.l.b16 %v301
    %v2498 = vunpack.c.l.b16 %v302
    %v2499 = vunpack.c.l.b16 %v303
    %v2500 = vunpack.c.l.b16 %v304
    %v2501 = vunpack.c.l.b16 %v305
    %v2502 = vunpack.c.l.b16 %v306
    %v2503 = vunpack.c.l.b16 %v307
    %v2504 = vunpack.c.l.b16 %v308
    %v2505 = vunpack.c.l.b16 %v309
    %v2506 = vunpack.c.l.b16 %v310
    %v2507 = vunpack.c.l.b16 %v311
    %v2508 = vunpack.c.l.b16 %v312
    %v2509 = vunpack.c.l.b16 %v313
    %v2510 = vunpack.c.l.b16 %v314
    %v2511 = vunpack.c.l.b16 %v315
    %v2512 = vunpack.c.l.b16 %v316
    %v2513 = vunpack.c.l.b16 %v317
    %v2514 = vunpack.c.l.b16 %v318
    %v2515 = vunpack.c.l.b16 %v319
    %v2516 = vunpack.c.l.b16 %v320
    %v2517 = vunpack.c.l.b16 %v321
    %v2518 = vunpack.c.l.b16 %v322
    %v2519 = vunpack.c.l.b16 %v323
    %v2520 = vunpack.c.l.b16 %v324
    %v2521 = vunpack.c.l.b16 %v325
    %v2522 = vunpack.c.l.b16 %v326
    %v2523 = vunpack.c.l.b16 %v327
    %v2524 = vunpack.c.l.b16 %v328
    %v2525 = vunpack.c.l.b16 %v329
    %v2526 = vunpack.c.l.b16 %v330
    %v2527 = vunpack.c.l.b16 %v331
    %v2528 = vunpack.c.l.b16 %v332
    %v2529 = vunpack.c.l.b16 %v333
    %v2530 = vunpack.c.l.b16 %v334
    %v2531 = vunpack.c.l.b16 %v335
    %v2532 = vunpack.c.l.b16 %v336
    %v2533 = vunpack.c.l.b16 %v337
    %v2534 = vunpack.c.l.b16 %v338
    %v2535 = vunpack.c.l.b16 %v339
    %v2536 = vunpack.c.l.b16 %v340
    %v2537 = vunpack.c.l.b16 %v341
    %v2538 = vunpack.c.l.b16 %v342
    %v2539 = vunpack.c.l.b16 %v343
    %v2540 = vunpack.c.l.b16 %v344
    %v2541 = vunpack.c.l.b16 %v345
    %v2542 = vunpack.c.l.b16 %v346
    %v2543 = vunpack.c.l.b16 %v347
    %v2544 = vunpack.c.l.b16 %v348
    %v2545 = vunpack.c.l.b16 %v349
    %v2546 = vunpack.c.l.b16 %v350
    %v2547 = vunpack.c.l.b16 %v351
    %v2548 = vunpack.c.l.b16 %v352
    %v2549 = vunpack.c.l.b16 %v353
    %v2550 = vunpack.c.l.b16 %v354
    %v2551 = vunpack.c.l.b16 %v355
    %v2552 = vunpack.c.l.b16 %v356
    %v2553 = vunpack.c.l.b16 %v357
    %v2554 = vunpack.c.l.b16 %v358
    %v2555 = vunpack.c.l.b16 %v359
    %v2556 = vunpack.c.l.b16 %v360
    %v2557 = vunpack.c.l.b16 %v361
    %v2558 = vunpack.c.l.b16 %v362
    %v2559 = vunpack.c.l.b16 %v363
    %v2560 = vunpack.c.l.b16 %v364
    %v2561 = vunpack.c.l.b16 %v365
    %v2562 = vunpack.c.l.b16 %v366
    %v2563 = vunpack.c.l.b16 %v367
    %v2564 = vunpack.c.l.b16 %v368
    %v2565 = vunpack.c.l.b16 %v369
    %v2566 = vunpack.c.l.b16 %v370
    %v2567 = vunpack.c.l.b16 %v371
    %v2568 = vunpack.c.l.b16 %v372
    %v2569 = vunpack.c.l.b16 %v373
    %v2570 = vunpack.c.l.b16 %v374
    %v2571 = vunpack.c.l.b16 %v375
    %v2572 = vunpack.c.l.b16 %v376
    %v2573 = vunpack.c.l.b16 %v377
    %v2574 = vunpack.c.l.b16 %v378
    %v2575 = vunpack.c.l.b16 %v379
    %v2576 = vunpack.c.l.b16 %v380
    %v2577 = vunpack.c.l.b16 %v381
    %v2578 = vunpack.c.l.b16 %v382
    %v2579 = vunpack.c.l.b16 %v383
    %v2580 = vunpack.c.l.b16 %v384
    %v2581 = vunpack.c.l.b16 %v385
    %v2582 = vunpack.c.l.b16 %v386
    %v2583 = vunpack.c.l.b16 %v387
    %v2584 = vunpack.c.l.b16 %v388
    %v2585 = vunpack.c.l.b16 %v389
    %v2586 = vunpack.c.l.b16 %v390
    %v2587 = vunpack.c.l.b16 %v391
    %v2588 = vunpack.c.l.b16 %v392
    %v2589 = vunpack.c.l.b16 %v393
    %v2590 = vunpack.c.l.b16 %v394
    %v2591 = vunpack.c.l.b16 %v395
    %v2592 = vunpack.c.l.b16 %v396
    %v2593 = vunpack.c.l.b16 %v397
    %v2594 = vunpack.c.l.b16 %v398
    %v2595 = vunpack.c.l.b16 %v399
    %v2596 = vunpack.c.l.b16 %v400
    %v2597 = vunpack.c.l.b16 %v401
    %v2598 = vunpack.c.l.b16 %v402
    %v2599 = vunpack.c.l.b16 %v403
    %v2600 = vunpack.c.l.b16 %v404
    %v2601 = vunpack.c.l.b16 %v405
    %v2602 = vunpack.c.l.b16 %v406
    %v2603 = vunpack.c.l.b16 %v407
    %v2604 = vunpack.c.l.b16 %v408
    %v2605 = vunpack.c.l.b16 %v409
    %v2606 = vunpack.c.l.b16 %v410
    %v2607 = vunpack.c.l.b16 %v411
    %v2608 = vunpack.c.l.b16 %v412
    %v2609 = vunpack.c.l.b16 %v413
    %v2610 = vunpack.c.l.b16 %v414
    %v2611 = vunpack.c.l.b16 %v415
    %v2612 = vunpack.c.l.b16 %v416
    %v2613 = vunpack.c.l.b16 %v417
    %v2614 = vunpack.c.l.b16 %v418
    %v2615 = vunpack.c.l.b16 %v419
    %v2616 = vunpack.c.l.b16 %v420
    %v2617 = vunpack.c.l.b16 %v421
    %v2618 = vunpack.c.l.b16 %v422
    %v2619 = vunpack.c.l.b16 %v423
    %v2620 = vunpack.c.l.b16 %v424
    %v2621 = vunpack.c.l.b16 %v425
    %v2622 = vunpack.c.l.b16 %v426
    %v2623 = vunpack.c.l.b16 %v427
    %v2624 = vunpack.c.l.b16 %v428
    %v2625 = vunpack.c.l.b16 %v429
    %v2626 = vunpack.c.l.b16 %v430
    %v2627 = vunpack.c.l.b16 %v431
    %v2628 = vunpack.c.l.b16 %v432
    %v2629 = vunpack.c.l.b16 %v433
    %v2630 = vunpack.c.l.b16 %v434
    %v2631 = vunpack.c.l.b16 %v435
    %v2632 = vunpack.c.l.b16 %v436
    %v2633 = vunpack.c.l.b16 %v437
    %v2634 = vunpack.c.l.b16 %v438
    %v2635 = vunpack.c.l.b16 %v439
    %v2636 = vunpack.c.l.b16 %v440
    %v2637 = vunpack.c.l.b16 %v441
    %v2638 = vunpack.c.l.b16 %v442
    %v2639 = vunpack.c.l.b16 %v443
    %v2640 = vunpack.c.l.b16 %v444
    %v2641 = vunpack.c.l.b16 %v445
    %v2642 = vunpack.c.l.b16 %v446
    %v2643 = vunpack.c.l.b16 %v447
    %v2644 = vunpack.c.l.b16 %v448
    %v2645 = vunpack.c.l.b16 %v449
    %v2646 = vunpack.c.l.b16 %v450
    %v2647 = vunpack.c.l.b16 %v451
    %v2648 = vunpack.c.l.b16 %v452
    %v2649 = vunpack.c.l.b16 %v453
    %v2650 = vunpack.c.l.b16 %v454
    %v2651 = vunpack.c.l.b16 %v455
    %v2652 = vunpack.c.l.b16 %v456
    %v2653 = vunpack.c.l.b16 %v457
    %v2654 = vunpack.c.l.b16 %v458
    %v2655 = vunpack.c.l.b16 %v459
    %v2656 = vunpack.c.l.b16 %v460
    %v2657 = vunpack.c.l.b16 %v461
    %v2658 = vunpack.c.l.b16 %v462
    %v2659 = vunpack.c.l.b16 %v463
    %v2660 = vunpack.c.l.b16 %v464
    %v2661 = vunpack.c.l.b16 %v465
    %v2662 = vunpack.c.l.b16 %v466
    %v2663 = vunpack.c.l.b16 %v467
    %v2664 = vunpack.c.l.b16 %v468
    %v2665 = vunpack.c.l.b16 %v469
    %v2666 = vunpack.c.l.b16 %v470
    %v2667 = vunpack.c.l.b16 %v471
    %v2668 = vunpack.c.l.b16 %v472
    %v2669 = vunpack.c.l.b16 %v473
    %v2670 = vunpack.c.l.b16 %v474
    %v2671 = vunpack.c.l.b16 %v475
    %v2672 = vunpack.c.l.b16 %v476
    %v2673 = vunpack.c.l.b16 %v477
    %v2674 = vunpack.c.l.b16 %v478
    %v2675 = vunpack.c.l.b16 %v479
    %v2676 = vunpack.c.l.b16 %v480
    %v2677 = vunpack.c.l.b16 %v481
    %v2678 = vunpack.c.l.b16 %v482
    %v2679 = vunpack.c.l.b16 %v483
    %v2680 = vunpack.c.l.b16 %v484
    %v2681 = vunpack.c.l.b16 %v485
    %v2682 = vunpack.c.l.b16 %v486
    %v2683 = vunpack.c.l.b16 %v487
    %v2684 = vunpack.c.l.b16 %v488
    %v2685 = vunpack.c.l.b16 %v489
    %v2686 = vunpack.c.l.b16 %v490
    %v2687 = vunpack.c.l.b16 %v491
    %v2688 = vunpack.c.l.b16 %v492
    %v2689 = vunpack.c.l.b16 %v493
    %v2690 = vunpack.c.l.b16 %v494
    %v2691 = vunpack.c.l.b16 %v495
    %v2692 = vunpack.c.l.b16 %v496
    %v2693 = vunpack.c.l.b16 %v497
    %v2694 = vunpack.c.l.b16 %v498
    %v2695 = vunpack.c.l.b16 %v499
    %v2696 = vunpack.c.l.b16 %v500
    %v2697 = vunpack.c.l.b16 %v501
    %v2698 = vunpack.c.l.b16 %v502
    %v2699 = vunpack.c.l.b16 %v503
    %v2700 = vunpack.c.l.b16 %v504
    %v2701 = vunpack.c.l.b16 %v505
    %v2702 = vunpack.c.l.b16 %v506
    %v2703 = vunpack.c.l.b16 %v507
    %v2704 = vunpack.c.l.b16 %v508
    %v2705 = vunpack.c.l.b16 %v509
    %v2706 = vunpack.c.l.b16 %v510
    %v2707 = vunpack.c.l.b16 %v511
    %v2708 = vunpack.c.l.b16 %v512
    %v2709 = vunpack.c.l.b16 %v513
    %v2710 = vunpack.c.l.b16 %v514
    %v2711 = vunpack.c.l.b16 %v515
    %v2712 = vunpack.c.l.b16 %v516
    %v2713 = vunpack.c.l.b16 %v517
    %v2714 = vunpack.c.l.b16 %v518
    %v2715 = vunpack.c.l.b16 %v519
    %v2716 = vunpack.c.l.b16 %v520
    %v2717 = vunpack.c.l.b16 %v521
    %v2718 = vunpack.c.l.b16 %v522
    %v2719 = vunpack.c.l.b16 %v523
    %v2720 = vunpack.c.l.b16 %v524
    %v2721 = vunpack.c.l.b16 %v525
    %v2722 = vunpack.c.l.b16 %v526
    %v2723 = vunpack.c.l.b16 %v527
    %v2724 = vunpack.c.l.b16 %v528
    %v2725 = vunpack.c.l.b16 %v529
    %v2726 = vunpack.c.l.b16 %v530
    %v2727 = vunpack.c.l.b16 %v531
    %v2728 = vunpack.c.l.b16 %v532
    %v2729 = vunpack.c.l.b16 %v533
    %v2730 = vunpack.c.l.b16 %v534
    %v2731 = vunpack.c.l.b16 %v535
    %v2732 = vunpack.c.l.b16 %v536
    %v2733 = vunpack.c.l.b16 %v537
    %v2734 = vunpack.c.l.b16 %v538
    %v2735 = vunpack.c.l.b16 %v539
    %v2736 = vunpack.c.l.b16 %v540
    %v2737 = vunpack.c.l.b16 %v541
    %v2738 = vunpack.c.l.b16 %v542
    %v2739 = vunpack.c.l.b16 %v543
    %v2740 = vunpack.c.l.b16 %v544
    %v2741 = vunpack.c.l.b16 %v545
    %v2742 = vunpack.c.l.b16 %v546
    %v2743 = vunpack.c.l.b16 %v547
    %v2744 = vunpack.c.l.b16 %v548
    %v2745 = vunpack.c.l.b16 %v549
    %v2746 = vunpack.c.l.b16 %v550
    %v2747 = vunpack.c.l.b16 %v551
    %v2748 = vunpack.c.l.b16 %v552
    %v2749 = vunpack.c.l.b16 %v553
    %v2750 = vunpack.c.l.b16 %v554
    %v2751 = vunpack.c.l.b16 %v555
    %v2752 = vunpack.c.l.b16 %v556
    %v2753 = vunpack.c.l.b16 %v557
    %v2754 = vunpack.c.l.b16 %v558
    %v2755 = vunpack.c.l.b16 %v559
    %v2756 = vunpack.c.l.b16 %v560
    %v2757 = vunpack.c.l.b16 %v561
    %v2758 = vunpack.c.l.b16 %v562
    %v2759 = vunpack.c.l.b16 %v563
    %v2760 = vunpack.c.l.b16 %v564
    %v2761 = vunpack.c.l.b16 %v565
    %v2762 = vunpack.c.l.b16 %v566
    %v2763 = vunpack.c.l.b16 %v567
    %v2764 = vunpack.c.l.b16 %v568
    %v2765 = vunpack.c.l.b16 %v569
    %v2766 = vunpack.c.l.b16 %v570
    %v2767 = vunpack.c.l.b16 %v571
    %v2768 = vunpack.c.l.b16 %v572
    %v2769 = vunpack.c.l.b16 %v573
    %v2770 = vunpack.c.l.b16 %v574
    %v2771 = vunpack.c.l.b16 %v575
    %v2772 = vunpack.c.l.b16 %v576
    %v2773 = vunpack.c.l.b16 %v577
    %v2774 = vunpack.c.l.b16 %v578
    %v2775 = vunpack.c.l.b16 %v579
    %v2776 = vunpack.c.l.b16 %v580
    %v2777 = vunpack.c.l.b16 %v581
    %v2778 = vunpack.c.l.b16 %v582
    %v2779 = vunpack.c.l.b16 %v583
    %v2780 = vunpack.c.l.b16 %v584
    %v2781 = vunpack.c.l.b16 %v585
    %v2782 = vunpack.c.l.b16 %v586
    %v2783 = vunpack.c.l.b16 %v587
    %v2784 = vunpack.c.l.b16 %v588
    %v2785 = vunpack.c.l.b16 %v589
    %v2786 = vunpack.c.l.b16 %v590
    %v2787 = vunpack.c.l.b16 %v591
    %v2788 = vunpack.c.l.b16 %v592
    %v2789 = vunpack.c.l.b16 %v593
    %v2790 = vunpack.c.l.b16 %v594
    %v2791 = vunpack.c.l.b16 %v595
    %v2792 = vunpack.c.l.b16 %v596
    %v2793 = vunpack.c.l.b16 %v597
    %v2794 = vunpack.c.l.b16 %v598
    %v2795 = vunpack.c.l.b16 %v599
    %v2796 = vunpack.c.l.b16 %v600
    %v2797 = vunpack.c.l.b16 %v601
    %v2798 = vunpack.c.l.b16 %v602
    %v2799 = vunpack.c.l.b16 %v603
    %v2800 = vunpack.c.l.b16 %v604
    %v2801 = vunpack.c.l.b16 %v605
    %v2802 = vunpack.c.l.b16 %v606
    %v2803 = vunpack.c.l.b16 %v607
    %v2804 = vunpack.c.l.b16 %v608
    %v2805 = vunpack.c.l.b16 %v609
    %v2806 = vunpack.c.l.b16 %v610
    %v2807 = vunpack.c.l.b16 %v611
    %v2808 = vunpack.c.l.b16 %v612
    %v2809 = vunpack.c.l.b16 %v613
    %v2810 = vunpack.c.l.b16 %v614
    %v2811 = vunpack.c.l.b16 %v615
    %v2812 = vunpack.c.l.b16 %v616
    %v2813 = vunpack.c.l.b16 %v617
    %v2814 = vunpack.c.l.b16 %v618
    %v2815 = vunpack.c.l.b16 %v619
    %v2816 = vunpack.c.l.b16 %v620
    %v2817 = vunpack.c.l.b16 %v621
    %v2818 = vunpack.c.l.b16 %v622
    %v2819 = vunpack.c.l.b16 %v623
    %v2820 = vunpack.c.l.b16 %v624
    %v2821 = vunpack.c.l.b16 %v625
    %v2822 = vunpack.c.l.b16 %v626
    %v2823 = vunpack.c.l.b16 %v627
    %v2824 = vunpack.c.l.b16 %v628
    %v2825 = vunpack.c.l.b16 %v629
    %v2826 = vunpack.c.l.b16 %v630
    %v2827 = vunpack.c.l.b16 %v631
    %v2828 = vunpack.c.l.b16 %v632
    %v2829 = vunpack.c.l.b16 %v633
    %v2830 = vunpack.c.l.b16 %v634
    %v2831 = vunpack.c.l.b16 %v635
    %v2832 = vunpack.c.l.b16 %v636
    %v2833 = vunpack.c.l.b16 %v637
    %v2834 = vunpack.c.l.b16 %v638
    %v2835 = vunpack.c.l.b16 %v639
    %v2836 = vunpack.c.l.b16 %v640
    %v2837 = vunpack.c.l.b16 %v641
    %v2838 = vunpack.c.l.b16 %v642
    %v2839 = vunpack.c.l.b16 %v643
    %v2840 = vunpack.c.l.b16 %v644
    %v2841 = vunpack.c.l.b16 %v645
    %v2842 = vunpack.c.l.b16 %v646
    %v2843 = vunpack.c.l.b16 %v647
    %v2844 = vunpack.c.l.b16 %v648
    %v2845 = vunpack.c.l.b16 %v649
    %v2846 = vunpack.c.l.b16 %v650
    %v2847 = vunpack.c.l.b16 %v651
    %v2848 = vunpack.c.l.b16 %v652
    %v2849 = vunpack.c.l.b16 %v653
    %v2850 = vunpack.c.l.b16 %v654
    %v2851 = vunpack.c.l.b16 %v655
    %v2852 = vunpack.c.l.b16 %v656
    %v2853 = vunpack.c.l.b16 %v657
    %v2854 = vunpack.c.l.b16 %v658
    %v2855 = vunpack.c.l.b16 %v659
    %v2856 = vunpack.c.l.b16 %v660
    %v2857 = vunpack.c.l.b16 %v661
    %v2858 = vunpack.c.l.b16 %v662
    %v2859 = vunpack.c.l.b16 %v663
    %v2860 = vunpack.c.l.b16 %v664
    %v2861 = vunpack.c.l.b16 %v665
    %v2862 = vunpack.c.l.b16 %v666
    %v2863 = vunpack.c.l.b16 %v667
    %v2864 = vunpack.c.l.b16 %v668
    %v2865 = vunpack.c.l.b16 %v669
    %v2866 = vunpack.c.l.b16 %v670
    %v2867 = vunpack.c.l.b16 %v671
    %v2868 = vunpack.c.l.b16 %v672
    %v2869 = vunpack.c.l.b16 %v673
    %v2870 = vunpack.c.l.b16 %v674
    %v2871 = vunpack.c.l.b16 %v675
    %v2872 = vunpack.c.l.b16 %v676
    %v2873 = vunpack.c.l.b16 %v677
    %v2874 = vunpack.c.l.b16 %v678
    %v2875 = vunpack.c.l.b16 %v679
    %v2876 = vunpack.c.l.b16 %v680
    %v2877 = vunpack.c.l.b16 %v681
    %v2878 = vunpack.c.l.b16 %v682
    %v2879 = vunpack.c.l.b16 %v683
    %v2880 = vunpack.c.l.b16 %v684
    %v2881 = vunpack.c.l.b16 %v685
    %v2882 = vunpack.c.l.b16 %v686
    %v2883 = vunpack.c.l.b16 %v687
    %v2884 = vunpack.c.l.b16 %v688
    %v2885 = vunpack.c.l.b16 %v689
    %v2886 = vunpack.c.l.b16 %v690
    %v2887 = vunpack.c.l.b16 %v691
    %v2888 = vunpack.c.l.b16 %v692
    %v2889 = vunpack.c.l.b16 %v693
    %v2890 = vunpack.c.l.b16 %v694
    %v2891 = vunpack.c.l.b16 %v695
    %v2892 = vunpack.c.l.b16 %v696
    %v2893 = vunpack.c.l.b16 %v697
    %v2894 = vunpack.c.l.b16 %v698
    %v2895 = vunpack.c.l.b16 %v699
    %v2896 = vunpack.c.l.b16 %v700
    %v2897 = vunpack.c.l.b16 %v701
    %v2898 = vunpack.c.l.b16 %v702
    %v2899 = vunpack.c.l.b16 %v703
    %v2900 = vunpack.c.l.b16 %v704
    %v2901 = vunpack.c.l.b16 %v705
    %v2902 = vunpack.c.l.b16 %v706
    %v2903 = vunpack.c.l.b16 %v707
    %v2904 = vunpack.c.l.b16 %v708
    %v2905 = vunpack.c.l.b16 %v709
    %v2906 = vunpack.c.l.b16 %v710
    %v2907 = vunpack.c.l.b16 %v711
    %v2908 = vunpack.c.l.b16 %v712
    %v2909 = vunpack.c.l.b16 %v713
    %v2910 = vunpack.c.l.b16 %v714
    %v2911 = vunpack.c.l.b16 %v715
    %v2912 = vunpack.c.l.b16 %v716
    %v2913 = vunpack.c.l.b16 %v717
    %v2914 = vunpack.c.l.b16 %v718
    %v2915 = vunpack.c.l.b16 %v719
    %v2916 = vunpack.c.l.b16 %v720
    %v2917 = vunpack.c.l.b16 %v721
    %v2918 = vunpack.c.l.b16 %v722
    %v2919 = vunpack.c.l.b16 %v723
    %v2920 = vunpack.c.l.b16 %v724
    %v2921 = vunpack.c.l.b16 %v725
    %v2922 = vunpack.c.l.b16 %v726
    %v2923 = vunpack.c.l.b16 %v727
    %v2924 = vunpack.c.l.b16 %v728
    %v2925 = vunpack.c.l.b16 %v729
    %v2926 = vunpack.c.l.b16 %v730
    %v2927 = vunpack.c.l.b16 %v731
    %v2928 = vunpack.c.l.b16 %v732
    %v2929 = vunpack.c.l.b16 %v733
    %v2930 = vunpack.c.l.b16 %v734
    %v2931 = vunpack.c.l.b16 %v735
    %v2932 = vunpack.c.l.b16 %v736
    %v2933 = vunpack.c.l.b16 %v737
    %v2934 = vunpack.c.l.b16 %v738
    %v2935 = vunpack.c.l.b16 %v739
    %v2936 = vunpack.c.l.b16 %v740
    %v2937 = vunpack.c.l.b16 %v741
    %v2938 = vunpack.c.l.b16 %v742
    %v2939 = vunpack.c.l.b16 %v743
    %v2940 = vunpack.c.l.b16 %v744
    %v2941 = vunpack.c.l.b16 %v745
    %v2942 = vunpack.c.l.b16 %v746
    %v2943 = vunpack.c.l.b16 %v747
    %v2944 = vunpack.c.l.b16 %v748
    %v2945 = vunpack.c.l.b16 %v749
    %v2946 = vunpack.c.l.b16 %v750
    %v2947 = vunpack.c.l.b16 %v751
    %v2948 = vunpack.c.l.b16 %v752
    %v2949 = vunpack.c.l.b16 %v753
    %v2950 = vunpack.c.l.b16 %v754
    %v2951 = vunpack.c.l.b16 %v755
    %v2952 = vunpack.c.l.b16 %v756
    %v2953 = vunpack.c.l.b16 %v757
    %v2954 = vunpack.c.l.b16 %v758
    %v2955 = vunpack.c.l.b16 %v759
    %v2956 = vunpack.c.l.b16 %v760
    %v2957 = vunpack.c.l.b16 %v761
    %v2958 = vunpack.c.l.b16 %v762
    %v2959 = vunpack.c.l.b16 %v763
    %v2960 = vunpack.c.l.b16 %v764
    %v2961 = vunpack.c.l.b16 %v765
    %v2962 = vunpack.c.l.b16 %v766
    %v2963 = vunpack.c.l.b16 %v767
    %v2964 = vunpack.c.l.b16 %v768
    %v2965 = vunpack.c.l.b16 %v769
    %v2966 = vunpack.c.l.b16 %v770
    %v2967 = vunpack.c.l.b16 %v771
    %v2968 = vunpack.c.l.b16 %v772
    %v2969 = vunpack.c.l.b16 %v773
    %v2970 = vunpack.c.l.b16 %v774
    %v2971 = vunpack.c.l.b16 %v775
    %v2972 = vunpack.c.l.b16 %v776
    %v2973 = vunpack.c.l.b16 %v777
    %v2974 = vunpack.c.l.b16 %v778
    %v2975 = vunpack.c.l.b16 %v779
    %v2976 = vunpack.c.l.b16 %v780
    %v2977 = vunpack.c.l.b16 %v781
    %v2978 = vunpack.c.l.b16 %v782
    %v2979 = vunpack.c.l.b16 %v783
    %v2980 = vunpack.c.l.b16 %v784
    %v2981 = vunpack.c.l.b16 %v785
    %v2982 = vunpack.c.l.b16 %v786
    %v2983 = vunpack.c.l.b16 %v787
    %v2984 = vunpack.c.l.b16 %v788
    %v2985 = vunpack.c.l.b16 %v789
    %v2986 = vunpack.c.l.b16 %v790
    %v2987 = vunpack.c.l.b16 %v791
    %v2988 = vunpack.c.l.b16 %v792
    %v2989 = vunpack.c.l.b16 %v793
    %v2990 = vunpack.c.l.b16 %v794
    %v2991 = vunpack.c.l.b16 %v795
    %v2992 = vunpack.c.l.b16 %v796
    %v2993 = vunpack.c.l.b16 %v797
    %v2994 = vunpack.c.l.b16 %v798
    %v2995 = vunpack.c.l.b16 %v799
    %v2996 = vunpack.c.l.b16 %v800
    %v2997 = vunpack.c.l.b16 %v801
    %v2998 = vunpack.c.l.b16 %v802
    %v2999 = vunpack.c.l.b16 %v803
    %v3000 = vunpack.c.l.b16 %v804
    %v3001 = vunpack.c.l.b16 %v805
    %v3002 = vunpack.c.l.b16 %v806
    %v3003 = vunpack.c.l.b16 %v807
    %v3004 = vunpack.c.l.b16 %v808
    %v3005 = vunpack.c.l.b16 %v809
    %v3006 = vunpack.c.l.b16 %v810
    %v3007 = vunpack.c.l.b16 %v811
    %v3008 = vunpack.c.l.b16 %v812
    %v3009 = vunpack.c.l.b16 %v813
    %v3010 = vunpack.c.l.b16 %v814
    %v3011 = vunpack.c.l.b16 %v815
    %v3012 = vunpack.c.l.b16 %v816
    %v3013 = vunpack.c.l.b16 %v817
    %v3014 = vunpack.c.l.b16 %v818
    %v3015 = vunpack.c.l.b16 %v819
    %v3016 = vunpack.c.l.b16 %v820
    %v3017 = vunpack.c.l.b16 %v821
    %v3018 = vunpack.c.l.b16 %v822
    %v3019 = vunpack.c.l.b16 %v823
    %v3020 = vunpack.c.l.b16 %v824
    %v3021 = vunpack.c.l.b16 %v825
    %v3022 = vunpack.c.l.b16 %v826
    %v3023 = vunpack.c.l.b16 %v827
    %v3024 = vunpack.c.l.b16 %v828
    %v3025 = vunpack.c.l.b16 %v829
    %v3026 = vunpack.c.l.b16 %v830
    %v3027 = vunpack.c.l.b16 %v831
    %v3028 = vunpack.c.l.b16 %v832
    %v3029 = vunpack.c.l.b16 %v833
    %v3030 = vunpack.c.l.b16 %v834
    %v3031 = vunpack.c.l.b16 %v835
    %v3032 = vunpack.c.l.b16 %v836
    %v3033 = vunpack.c.l.b16 %v837
    %v3034 = vunpack.c.l.b16 %v838
    %v3035 = vunpack.c.l.b16 %v839
    %v3036 = vunpack.c.l.b16 %v840
    %v3037 = vunpack.c.l.b16 %v841
    %v3038 = vunpack.c.l.b16 %v842
    %v3039 = vunpack.c.l.b16 %v843
    %v3040 = vunpack.c.l.b16 %v844
    %v3041 = vunpack.c.l.b16 %v845
    %v3042 = vunpack.c.l.b16 %v846
    %v3043 = vunpack.c.l.b16 %v847
    %v3044 = vunpack.c.l.b16 %v848
    %v3045 = vunpack.c.l.b16 %v849
    %v3046 = vunpack.c.l.b16 %v850
    %v3047 = vunpack.c.l.b16 %v851
    %v3048 = vunpack.c.l.b16 %v852
    %v3049 = vunpack.c.l.b16 %v853
    %v3050 = vunpack.c.l.b16 %v854
    %v3051 = vunpack.c.l.b16 %v855
    %v3052 = vunpack.c.l.b16 %v856
    %v3053 = vunpack.c.l.b16 %v857
    %v3054 = vunpack.c.l.b16 %v858
    %v3055 = vunpack.c.l.b16 %v859
    %v3056 = vunpack.c.l.b16 %v860
    %v3057 = vunpack.c.l.b16 %v861
    %v3058 = vunpack.c.l.b16 %v862
    %v3059 = vunpack.c.l.b16 %v863
    %v3060 = vunpack.c.l.b16 %v864
    %v3061 = vunpack.c.l.b16 %v865
    %v3062 = vunpack.c.l.b16 %v866
    %v3063 = vunpack.c.l.b16 %v867
    %v3064 = vunpack.c.l.b16 %v868
    %v3065 = vunpack.c.l.b16 %v869
    %v3066 = vunpack.c.l.b16 %v870
    %v3067 = vunpack.c.l.b16 %v871
    %v3068 = vunpack.c.l.b16 %v872
    %v3069 = vunpack.c.l.b16 %v873
    %v3070 = vunpack.c.l.b16 %v874
    %v3071 = vunpack.c.l.b16 %v875
    %v3072 = vunpack.c.l.b16 %v876
    %v3073 = vunpack.c.l.b16 %v877
    %v3074 = vunpack.c.l.b16 %v878
    %v3075 = vunpack.c.l.b16 %v879
    %v3076 = vunpack.c.l.b16 %v880
    %v3077 = vunpack.c.l.b16 %v881
    %v3078 = vunpack.c.l.b16 %v882
    %v3079 = vunpack.c.l.b16 %v883
    %v3080 = vunpack.c.l.b16 %v884
    %v3081 = vunpack.c.l.b16 %v885
    %v3082 = vunpack.c.l.b16 %v886
    %v3083 = vunpack.c.l.b16 %v887
    %v3084 = vunpack.c.l.b16 %v888
    %v3085 = vunpack.c.l.b16 %v889
    %v3086 = vunpack.c.l.b16 %v890
    %v3087 = vunpack.c.l.b16 %v891
    %v3088 = vunpack.c.l.b16 %v892
    %v3089 = vunpack.c.l.b16 %v893
    %v3090 = vunpack.c.l.b16 %v894
    %v3091 = vunpack.c.l.b16 %v895
    %v3092 = vunpack.c.l.b16 %v896
    %v3093 = vunpack.c.l.b16 %v897
    %v3094 = vunpack.c.l.b16 %v898
    %v3095 = vunpack.c.l.b16 %v899
    %v3096 = vunpack.c.l.b16 %v900
    %v3097 = vunpack.c.l.b16 %v901
    %v3098 = vunpack.c.l.b16 %v902
    %v3099 = vunpack.c.l.b16 %v903
    %v3100 = vunpack.c.l.b16 %v904
    %v3101 = vunpack.c.l.b16 %v905
    %v3102 = vunpack.c.l.b16 %v906
    %v3103 = vunpack.c.l.b16 %v907
    %v3104 = vunpack.c.l.b16 %v908
    %v3105 = vunpack.c.l.b16 %v909
    %v3106 = vunpack.c.l.b16 %v910
    %v3107 = vunpack.c.l.b16 %v911
    %v3108 = vunpack.c.l.b16 %v912
    %v3109 = vunpack.c.l.b16 %v913
    %v3110 = vunpack.c.l.b16 %v914
    %v3111 = vunpack.c.l.b16 %v915
    %v3112 = vunpack.c.l.b16 %v916
    %v3113 = vunpack.c.l.b16 %v917
    %v3114 = vunpack.c.l.b16 %v918
    %v3115 = vunpack.c.l.b16 %v919
    %v3116 = vunpack.c.l.b16 %v920
    %v3117 = vunpack.c.l.b16 %v921
    %v3118 = vunpack.c.l.b16 %v922
    %v3119 = vunpack.c.l.b16 %v923
    %v3120 = vunpack.c.l.b16 %v924
    %v3121 = vunpack.c.l.b16 %v925
    %v3122 = vunpack.c.l.b16 %v926
    %v3123 = vunpack.c.l.b16 %v927
    %v3124 = vunpack.c.l.b16 %v928
    %v3125 = vunpack.c.l.b16 %v929
    %v3126 = vunpack.c.l.b16 %v930
    %v3127 = vunpack.c.l.b16 %v931
    %v3128 = vunpack.c.l.b16 %v932
    %v3129 = vunpack.c.l.b16 %v933
    %v3130 = vunpack.c.l.b16 %v934
    %v3131 = vunpack.c.l.b16 %v935
    %v3132 = vunpack.c.l.b16 %v936
    %v3133 = vunpack.c.l.b16 %v937
    %v3134 = vunpack.c.l.b16 %v938
    %v3135 = vunpack.c.l.b16 %v939
    %v3136 = vunpack.c.l.b16 %v940
    %v3137 = vunpack.c.l.b16 %v941
    %v3138 = vunpack.c.l.b16 %v942
    %v3139 = vunpack.c.l.b16 %v943
    %v3140 = vunpack.c.l.b16 %v944
    %v3141 = vunpack.c.l.b16 %v945
    %v3142 = vunpack.c.l.b16 %v946
    %v3143 = vunpack.c.l.b16 %v947
    %v3144 = vunpack.c.l.b16 %v948
    %v3145 = vunpack.c.l.b16 %v949
    %v3146 = vunpack.c.l.b16 %v950
    %v3147 = vunpack.c.l.b16 %v951
    %v3148 = vunpack.c.l.b16 %v952
    %v3149 = vunpack.c.l.b16 %v953
    %v3150 = vunpack.c.l.b16 %v954
    %v3151 = vunpack.c.l.b16 %v955
    %v3152 = vunpack.c.l.b16 %v956
    %v3153 = vunpack.c.l.b16 %v957
    %v3154 = vunpack.c.l.b16 %v958
    %v3155 = vunpack.c.l.b16 %v959
    %v3156 = vunpack.c.l.b16 %v960
    %v3157 = vunpack.c.l.b16 %v961
    %v3158 = vunpack.c.l.b16 %v962
    %v3159 = vunpack.c.l.b16 %v963
    %v3160 = vunpack.c.l.b16 %v964
    %v3161 = vunpack.c.l.b16 %v965
    %v3162 = vunpack.c.l.b16 %v966
    %v3163 = vunpack.c.l.b16 %v967
    %v3164 = vunpack.c.l.b16 %v968
    %v3165 = vunpack.c.l.b16 %v969
    %v3166 = vunpack.c.l.b16 %v970
    %v3167 = vunpack.c.l.b16 %v971
    %v3168 = vunpack.c.l.b16 %v972
    %v3169 = vunpack.c.l.b16 %v973
    %v3170 = vunpack.c.l.b16 %v974
    %v3171 = vunpack.c.l.b16 %v975
    %v3172 = vunpack.c.l.b16 %v976
    %v3173 = vunpack.c.l.b16 %v977
    %v3174 = vunpack.c.l.b16 %v978
    %v3175 = vunpack.c.l.b16 %v979
    %v3176 = vunpack.c.l.b16 %v980
    %v3177 = vunpack.c.l.b16 %v981
    %v3178 = vunpack.c.l.b16 %v982
    %v3179 = vunpack.c.l.b16 %v983
    %v3180 = vunpack.c.l.b16 %v984
    %v3181 = vunpack.c.l.b16 %v985
    %v3182 = vunpack.c.l.b16 %v986
    %v3183 = vunpack.c.l.b16 %v987
    %v3184 = vunpack.c.l.b16 %v988
    %v3185 = vunpack.c.l.b16 %v989
    %v3186 = vunpack.c.l.b16 %v990
    %v3187 = vunpack.c.l.b16 %v991
    %v3188 = vunpack.c.l.b16 %v992
    %v3189 = vunpack.c.l.b16 %v993
    %v3190 = vunpack.c.l.b16 %v994
    %v3191 = vunpack.c.l.b16 %v995
    %v3192 = vunpack.c.l.b16 %v996
    %v3193 = vunpack.c.l.b16 %v997
    %v3194 = vunpack.c.l.b16 %v998
    %v3195 = vunpack.c.l.b16 %v999
    %v3196 = vunpack.c.l.b16 %v1000
    %v3197 = vunpack.c.l.b16 %v1001
    %v3198 = vunpack.c.l.b16 %v1002
    %v3199 = vunpack.c.l.b16 %v1003
    %v3200 = vunpack.c.l.b16 %v1004
    %v3201 = vunpack.c.l.b16 %v1005
    %v3202 = vunpack.c.l.b16 %v1006
    %v3203 = vunpack.c.l.b16 %v1007
    %v3204 = vunpack.c.l.b16 %v1008
    %v3205 = vunpack.c.l.b16 %v1009
    %v3206 = vunpack.c.l.b16 %v1010
    %v3207 = vunpack.c.l.b16 %v1011
    %v3208 = vunpack.c.l.b16 %v1012
    %v3209 = vunpack.c.l.b16 %v1013
    %v3210 = vunpack.c.l.b16 %v1014
    %v3211 = vunpack.c.l.b16 %v1015
    %v3212 = vunpack.c.l.b16 %v1016
    %v3213 = vunpack.c.l.b16 %v1017
    %v3214 = vunpack.c.l.b16 %v1018
    %v3215 = vunpack.c.l.b16 %v1019
    %v3216 = vunpack.c.l.b16 %v1020
    %v3217 = vunpack.c.l.b16 %v1021
    %v3218 = vunpack.c.l.b16 %v1022
    %v3219 = vunpack.c.l.b16 %v1023
    %v3220 = vunpack.c.l.b16 %v1024
    %v3221 = vunpack.c.l.b16 %v1025
    %v3222 = vunpack.c.l.b16 %v1026
    %v3223 = vunpack.c.l.b16 %v1027
    %v3224 = vunpack.c.l.b16 %v1028
    %v3225 = vunpack.c.l.b16 %v1029
    %v3226 = vunpack.c.l.b16 %v1030
    %v3227 = vunpack.c.l.b16 %v1031
    %v3228 = vunpack.c.l.b16 %v1032
    %v3229 = vunpack.c.l.b16 %v1033
    %v3230 = vunpack.c.l.b16 %v1034
    %v3231 = vunpack.c.l.b16 %v1035
    %v3232 = vunpack.c.l.b16 %v1036
    %v3233 = vunpack.c.l.b16 %v1037
    %v3234 = vunpack.c.l.b16 %v1038
    %v3235 = vunpack.c.l.b16 %v1039
    %v3236 = vunpack.c.l.b16 %v1040
    %v3237 = vunpack.c.l.b16 %v1041
    %v3238 = vunpack.c.l.b16 %v1042
    %v3239 = vunpack.c.l.b16 %v1043
    %v3240 = vunpack.c.l.b16 %v1044
    %v3241 = vunpack.c.l.b16 %v1045
    %v3242 = vunpack.c.l.b16 %v1046
    %v3243 = vunpack.c.l.b16 %v1047
    %v3244 = vunpack.c.l.b16 %v1048
    %v3245 = vunpack.c.l.b16 %v1049
    %v3246 = vunpack.c.l.b16 %v1050
    %v3247 = vunpack.c.l.b16 %v1051
    %v3248 = vunpack.c.l.b16 %v1052
    %v3249 = vpack.c.b16 %v2226, %v2225
    %v3250 = vpack.c.b16 %v2228, %v2227
    %v3251 = vpack.c.b16 %v2230, %v2229
    %v3252 = vpack.c.b16 %v2232, %v2231
    %v3253 = vpack.c.b16 %v2234, %v2233
    %v3254 = vpack.c.b16 %v2236, %v2235
    %v3255 = vpack.c.b16 %v2238, %v2237
    %v3256 = vpack.c.b16 %v2240, %v2239
    %v3257 = vpack.c.b16 %v2242, %v2241
    %v3258 = vpack.c.b16 %v2244, %v2243
    %v3259 = vpack.c.b16 %v2246, %v2245
    %v3260 = vpack.c.b16 %v2248, %v2247
    %v3261 = vpack.c.b16 %v2250, %v2249
    %v3262 = vpack.c.b16 %v2252, %v2251
    %v3263 = vpack.c.b16 %v2254, %v2253
    %v3264 = vpack.c.b16 %v2256, %v2255
    %v3265 = vpack.c.b16 %v2258, %v2257
    %v3266 = vpack.c.b16 %v2260, %v2259
    %v3267 = vpack.c.b16 %v2262, %v2261
    %v3268 = vpack.c.b16 %v2264, %v2263
    %v3269 = vpack.c.b16 %v2266, %v2265
    %v3270 = vpack.c.b16 %v2268, %v2267
    %v3271 = vpack.c.b16 %v2270, %v2269
    %v3272 = vpack.c.b16 %v2272, %v2271
    %v3273 = vpack.c.b16 %v2274, %v2273
    %v3274 = vpack.c.b16 %v2276, %v2275
    %v3275 = vpack.c.b16 %v2278, %v2277
    %v3276 = vpack.c.b16 %v2280, %v2279
    %v3277 = vpack.c.b16 %v2282, %v2281
    %v3278 = vpack.c.b16 %v2284, %v2283
    %v3279 = vpack.c.b16 %v2286, %v2285
    %v3280 = vpack.c.b16 %v2288, %v2287
    %v3281 = vpack.c.b16 %v2290, %v2289
    %v3282 = vpack.c.b16 %v2292, %v2291
    %v3283 = vpack.c.b16 %v2294, %v2293
    %v3284 = vpack.c.b16 %v2296, %v2295
    %v3285 = vpack.c.b16 %v2298, %v2297
    %v3286 = vpack.c.b16 %v2300, %v2299
    %v3287 = vpack.c.b16 %v2302, %v2301
    %v3288 = vpack.c.b16 %v2304, %v2303
    %v3289 = vpack.c.b16 %v2306, %v2305
    %v3290 = vpack.c.b16 %v2308, %v2307
    %v3291 = vpack.c.b16 %v2310, %v2309
    %v3292 = vpack.c.b16 %v2312, %v2311
    %v3293 = vpack.c.b16 %v2314, %v2313
    %v3294 = vpack.c.b16 %v2316, %v2315
    %v3295 = vpack.c.b16 %v2318, %v2317
    %v3296 = vpack.c.b16 %v2320, %v2319
    %v3297 = vpack.c.b16 %v2322, %v2321
    %v3298 = vpack.c.b16 %v2324, %v2323
    %v3299 = vpack.c.b16 %v2326, %v2325
    %v3300 = vpack.c.b16 %v2328, %v2327
    %v3301 = vpack.c.b16 %v2330, %v2329
    %v3302 = vpack.c.b16 %v2332, %v2331
    %v3303 = vpack.c.b16 %v2334, %v2333
    %v3304 = vpack.c.b16 %v2336, %v2335
    %v3305 = vpack.c.b16 %v2338, %v2337
    %v3306 = vpack.c.b16 %v2340, %v2339
    %v3307 = vpack.c.b16 %v2342, %v2341
    %v3308 = vpack.c.b16 %v2344, %v2343
    %v3309 = vpack.c.b16 %v2346, %v2345
    %v3310 = vpack.c.b16 %v2348, %v2347
    %v3311 = vpack.c.b16 %v2350, %v2349
    %v3312 = vpack.c.b16 %v2352, %v2351
    %v3313 = vpack.c.b16 %v2354, %v2353
    %v3314 = vpack.c.b16 %v2356, %v2355
    %v3315 = vpack.c.b16 %v2358, %v2357
    %v3316 = vpack.c.b16 %v2360, %v2359
    %v3317 = vpack.c.b16 %v2362, %v2361
    %v3318 = vpack.c.b16 %v2364, %v2363
    %v3319 = vpack.c.b16 %v2366, %v2365
    %v3320 = vpack.c.b16 %v2368, %v2367
    %v3321 = vpack.c.b16 %v2370, %v2369
    %v3322 = vpack.c.b16 %v2372, %v2371
    %v3323 = vpack.c.b16 %v2374, %v2373
    %v3324 = vpack.c.b16 %v2376, %v2375
    %v3325 = vpack.c.b16 %v2378, %v2377
    %v3326 = vpack.c.b16 %v2380, %v2379
    %v3327 = vpack.c.b16 %v2382, %v2381
    %v3328 = vpack.c.b16 %v2384, %v2383
    %v3329 = vpack.c.b16 %v2386, %v2385
    %v3330 = vpack.c.b16 %v2388, %v2387
    %v3331 = vpack.c.b16 %v2390, %v2389
    %v3332 = vpack.c.b16 %v2392, %v2391
    %v3333 = vpack.c.b16 %v2394, %v2393
    %v3334 = vpack.c.b16 %v2396, %v2395
    %v3335 = vpack.c.b16 %v2398, %v2397
    %v3336 = vpack.c.b16 %v2400, %v2399
    %v3337 = vpack.c.b16 %v2402, %v2401
    %v3338 = vpack.c.b16 %v2404, %v2403
    %v3339 = vpack.c.b16 %v2406, %v2405
    %v3340 = vpack.c.b16 %v2408, %v2407
    %v3341 = vpack.c.b16 %v2410, %v2409
    %v3342 = vpack.c.b16 %v2412, %v2411
    %v3343 = vpack.c.b16 %v2414, %v2413
    %v3344 = vpack.c.b16 %v2416, %v2415
    %v3345 = vpack.c.b16 %v2418, %v2417
    %v3346 = vpack.c.b16 %v2420, %v2419
    %v3347 = vpack.c.b16 %v2422, %v2421
    %v3348 = vpack.c.b16 %v2424, %v2423
    %v3349 = vpack.c.b16 %v2426, %v2425
    %v3350 = vpack.c.b16 %v2428, %v2427
    %v3351 = vpack.c.b16 %v2430, %v2429
    %v3352 = vpack.c.b16 %v2432, %v2431
    %v3353 = vpack.c.b16 %v2434, %v2433
    %v3354 = vpack.c.b16 %v2436, %v2435
    %v3355 = vpack.c.b16 %v2438, %v2437
    %v3356 = vpack.c.b16 %v2440, %v2439
    %v3357 = vpack.c.b16 %v2442, %v2441
    %v3358 = vpack.c.b16 %v2444, %v2443
    %v3359 = vpack.c.b16 %v2446, %v2445
    %v3360 = vpack.c.b16 %v2448, %v2447
    %v3361 = vpack.c.b16 %v2450, %v2449
    %v3362 = vpack.c.b16 %v2452, %v2451
    %v3363 = vpack.c.b16 %v2454, %v2453
    %v3364 = vpack.c.b16 %v2456, %v2455
    %v3365 = vpack.c.b16 %v2458, %v2457
    %v3366 = vpack.c.b16 %v2460, %v2459
    %v3367 = vpack.c.b16 %v2462, %v2461
    %v3368 = vpack.c.b16 %v2464, %v2463
    %v3369 = vpack.c.b16 %v2466, %v2465
    %v3370 = vpack.c.b16 %v2468, %v2467
    %v3371 = vpack.c.b16 %v2470, %v2469
    %v3372 = vpack.c.b16 %v2472, %v2471
    %v3373 = vpack.c.b16 %v2474, %v2473
    %v3374 = vpack.c.b16 %v2476, %v2475
    %v3375 = vpack.c.b16 %v2478, %v2477
    %v3376 = vpack.c.b16 %v2480, %v2479
    %v3377 = vpack.c.b16 %v2482, %v2481
    %v3378 = vpack.c.b16 %v2484, %v2483
    %v3379 = vpack.c.b16 %v2486, %v2485
    %v3380 = vpack.c.b16 %v2488, %v2487
    %v3381 = vpack.c.b16 %v2490, %v2489
    %v3382 = vpack.c.b16 %v2492, %v2491
    %v3383 = vpack.c.b16 %v2494, %v2493
    %v3384 = vpack.c.b16 %v2496, %v2495
    %v3385 = vpack.c.b16 %v2498, %v2497
    %v3386 = vpack.c.b16 %v2500, %v2499
    %v3387 = vpack.c.b16 %v2502, %v2501
    %v3388 = vpack.c.b16 %v2504, %v2503
    %v3389 = vpack.c.b16 %v2506, %v2505
    %v3390 = vpack.c.b16 %v2508, %v2507
    %v3391 = vpack.c.b16 %v2510, %v2509
    %v3392 = vpack.c.b16 %v2512, %v2511
    %v3393 = vpack.c.b16 %v2514, %v2513
    %v3394 = vpack.c.b16 %v2516, %v2515
    %v3395 = vpack.c.b16 %v2518, %v2517
    %v3396 = vpack.c.b16 %v2520, %v2519
    %v3397 = vpack.c.b16 %v2522, %v2521
    %v3398 = vpack.c.b16 %v2524, %v2523
    %v3399 = vpack.c.b16 %v2526, %v2525
    %v3400 = vpack.c.b16 %v2528, %v2527
    %v3401 = vpack.c.b16 %v2530, %v2529
    %v3402 = vpack.c.b16 %v2532, %v2531
    %v3403 = vpack.c.b16 %v2534, %v2533
    %v3404 = vpack.c.b16 %v2536, %v2535
    %v3405 = vpack.c.b16 %v2538, %v2537
    %v3406 = vpack.c.b16 %v2540, %v2539
    %v3407 = vpack.c.b16 %v2542, %v2541
    %v3408 = vpack.c.b16 %v2544, %v2543
    %v3409 = vpack.c.b16 %v2546, %v2545
    %v3410 = vpack.c.b16 %v2548, %v2547
    %v3411 = vpack.c.b16 %v2550, %v2549
    %v3412 = vpack.c.b16 %v2552, %v2551
    %v3413 = vpack.c.b16 %v2554, %v2553
    %v3414 = vpack.c.b16 %v2556, %v2555
    %v3415 = vpack.c.b16 %v2558, %v2557
    %v3416 = vpack.c.b16 %v2560, %v2559
    %v3417 = vpack.c.b16 %v2562, %v2561
    %v3418 = vpack.c.b16 %v2564, %v2563
    %v3419 = vpack.c.b16 %v2566, %v2565
    %v3420 = vpack.c.b16 %v2568, %v2567
    %v3421 = vpack.c.b16 %v2570, %v2569
    %v3422 = vpack.c.b16 %v2572, %v2571
    %v3423 = vpack.c.b16 %v2574, %v2573
    %v3424 = vpack.c.b16 %v2576, %v2575
    %v3425 = vpack.c.b16 %v2578, %v2577
    %v3426 = vpack.c.b16 %v2580, %v2579
    %v3427 = vpack.c.b16 %v2582, %v2581
    %v3428 = vpack.c.b16 %v2584, %v2583
    %v3429 = vpack.c.b16 %v2586, %v2585
    %v3430 = vpack.c.b16 %v2588, %v2587
    %v3431 = vpack.c.b16 %v2590, %v2589
    %v3432 = vpack.c.b16 %v2592, %v2591
    %v3433 = vpack.c.b16 %v2594, %v2593
    %v3434 = vpack.c.b16 %v2596, %v2595
    %v3435 = vpack.c.b16 %v2598, %v2597
    %v3436 = vpack.c.b16 %v2600, %v2599
    %v3437 = vpack.c.b16 %v2602, %v2601
    %v3438 = vpack.c.b16 %v2604, %v2603
    %v3439 = vpack.c.b16 %v2606, %v2605
    %v3440 = vpack.c.b16 %v2608, %v2607
    %v3441 = vpack.c.b16 %v2610, %v2609
    %v3442 = vpack.c.b16 %v2612, %v2611
    %v3443 = vpack.c.b16 %v2614, %v2613
    %v3444 = vpack.c.b16 %v2616, %v2615
    %v3445 = vpack.c.b16 %v2618, %v2617
    %v3446 = vpack.c.b16 %v2620, %v2619
    %v3447 = vpack.c.b16 %v2622, %v2621
    %v3448 = vpack.c.b16 %v2624, %v2623
    %v3449 = vpack.c.b16 %v2626, %v2625
    %v3450 = vpack.c.b16 %v2628, %v2627
    %v3451 = vpack.c.b16 %v2630, %v2629
    %v3452 = vpack.c.b16 %v2632, %v2631
    %v3453 = vpack.c.b16 %v2634, %v2633
    %v3454 = vpack.c.b16 %v2636, %v2635
    %v3455 = vpack.c.b16 %v2638, %v2637
    %v3456 = vpack.c.b16 %v2640, %v2639
    %v3457 = vpack.c.b16 %v2642, %v2641
    %v3458 = vpack.c.b16 %v2644, %v2643
    %v3459 = vpack.c.b16 %v2646, %v2645
    %v3460 = vpack.c.b16 %v2648, %v2647
    %v3461 = vpack.c.b16 %v2650, %v2649
    %v3462 = vpack.c.b16 %v2652, %v2651
    %v3463 = vpack.c.b16 %v2654, %v2653
    %v3464 = vpack.c.b16 %v2656, %v2655
    %v3465 = vpack.c.b16 %v2658, %v2657
    %v3466 = vpack.c.b16 %v2660, %v2659
    %v3467 = vpack.c.b16 %v2662, %v2661
    %v3468 = vpack.c.b16 %v2664, %v2663
    %v3469 = vpack.c.b16 %v2666, %v2665
    %v3470 = vpack.c.b16 %v2668, %v2667
    %v3471 = vpack.c.b16 %v2670, %v2669
    %v3472 = vpack.c.b16 %v2672, %v2671
    %v3473 = vpack.c.b16 %v2674, %v2673
    %v3474 = vpack.c.b16 %v2676, %v2675
    %v3475 = vpack.c.b16 %v2678, %v2677
    %v3476 = vpack.c.b16 %v2680, %v2679
    %v3477 = vpack.c.b16 %v2682, %v2681
    %v3478 = vpack.c.b16 %v2684, %v2683
    %v3479 = vpack.c.b16 %v2686, %v2685
    %v3480 = vpack.c.b16 %v2688, %v2687
    %v3481 = vpack.c.b16 %v2690, %v2689
    %v3482 = vpack.c.b16 %v2692, %v2691
    %v3483 = vpack.c.b16 %v2694, %v2693
    %v3484 = vpack.c.b16 %v2696, %v2695
    %v3485 = vpack.c.b16 %v2698, %v2697
    %v3486 = vpack.c.b16 %v2700, %v2699
    %v3487 = vpack.c.b16 %v2702, %v2701
    %v3488 = vpack.c.b16 %v2704, %v2703
    %v3489 = vpack.c.b16 %v2706, %v2705
    %v3490 = vpack.c.b16 %v2708, %v2707
    %v3491 = vpack.c.b16 %v2710, %v2709
    %v3492 = vpack.c.b16 %v2712, %v2711
    %v3493 = vpack.c.b16 %v2714, %v2713
    %v3494 = vpack.c.b16 %v2716, %v2715
    %v3495 = vpack.c.b16 %v2718, %v2717
    %v3496 = vpack.c.b16 %v2720, %v2719
    %v3497 = vpack.c.b16 %v2722, %v2721
    %v3498 = vpack.c.b16 %v2724, %v2723
    %v3499 = vpack.c.b16 %v2726, %v2725
    %v3500 = vpack.c.b16 %v2728, %v2727
    %v3501 = vpack.c.b16 %v2730, %v2729
    %v3502 = vpack.c.b16 %v2732, %v2731
    %v3503 = vpack.c.b16 %v2734, %v2733
    %v3504 = vpack.c.b16 %v2736, %v2735
    %v3505 = vpack.c.b16 %v2738, %v2737
    %v3506 = vpack.c.b16 %v2740, %v2739
    %v3507 = vpack.c.b16 %v2742, %v2741
    %v3508 = vpack.c.b16 %v2744, %v2743
    %v3509 = vpack.c.b16 %v2746, %v2745
    %v3510 = vpack.c.b16 %v2748, %v2747
    %v3511 = vpack.c.b16 %v2750, %v2749
    %v3512 = vpack.c.b16 %v2752, %v2751
    %v3513 = vpack.c.b16 %v2754, %v2753
    %v3514 = vpack.c.b16 %v2756, %v2755
    %v3515 = vpack.c.b16 %v2758, %v2757
    %v3516 = vpack.c.b16 %v2760, %v2759
    %v3517 = vpack.c.b16 %v2762, %v2761
    %v3518 = vpack.c.b16 %v2764, %v2763
    %v3519 = vpack.c.b16 %v2766, %v2765
    %v3520 = vpack.c.b16 %v2768, %v2767
    %v3521 = vpack.c.b16 %v2770, %v2769
    %v3522 = vpack.c.b16 %v2772, %v2771
    %v3523 = vpack.c.b16 %v2774, %v2773
    %v3524 = vpack.c.b16 %v2776, %v2775
    %v3525 = vpack.c.b16 %v2778, %v2777
    %v3526 = vpack.c.b16 %v2780, %v2779
    %v3527 = vpack.c.b16 %v2782, %v2781
    %v3528 = vpack.c.b16 %v2784, %v2783
    %v3529 = vpack.c.b16 %v2786, %v2785
    %v3530 = vpack.c.b16 %v2788, %v2787
    %v3531 = vpack.c.b16 %v2790, %v2789
    %v3532 = vpack.c.b16 %v2792, %v2791
    %v3533 = vpack.c.b16 %v2794, %v2793
    %v3534 = vpack.c.b16 %v2796, %v2795
    %v3535 = vpack.c.b16 %v2798, %v2797
    %v3536 = vpack.c.b16 %v2800, %v2799
    %v3537 = vpack.c.b16 %v2802, %v2801
    %v3538 = vpack.c.b16 %v2804, %v2803
    %v3539 = vpack.c.b16 %v2806, %v2805
    %v3540 = vpack.c.b16 %v2808, %v2807
    %v3541 = vpack.c.b16 %v2810, %v2809
    %v3542 = vpack.c.b16 %v2812, %v2811
    %v3543 = vpack.c.b16 %v2814, %v2813
    %v3544 = vpack.c.b16 %v2816, %v2815
    %v3545 = vpack.c.b16 %v2818, %v2817
    %v3546 = vpack.c.b16 %v2820, %v2819
    %v3547 = vpack.c.b16 %v2822, %v2821
    %v3548 = vpack.c.b16 %v2824, %v2823
    %v3549 = vpack.c.b16 %v2826, %v2825
    %v3550 = vpack.c.b16 %v2828, %v2827
    %v3551 = vpack.c.b16 %v2830, %v2829
    %v3552 = vpack.c.b16 %v2832, %v2831
    %v3553 = vpack.c.b16 %v2834, %v2833
    %v3554 = vpack.c.b16 %v2836, %v2835
    %v3555 = vpack.c.b16 %v2838, %v2837
    %v3556 = vpack.c.b16 %v2840, %v2839
    %v3557 = vpack.c.b16 %v2842, %v2841
    %v3558 = vpack.c.b16 %v2844, %v2843
    %v3559 = vpack.c.b16 %v2846, %v2845
    %v3560 = vpack.c.b16 %v2848, %v2847
    %v3561 = vpack.c.b16 %v2850, %v2849
    %v3562 = vpack.c.b16 %v2852, %v2851
    %v3563 = vpack.c.b16 %v2854, %v2853
    %v3564 = vpack.c.b16 %v2856, %v2855
    %v3565 = vpack.c.b16 %v2858, %v2857
    %v3566 = vpack.c.b16 %v2860, %v2859
    %v3567 = vpack.c.b16 %v2862, %v2861
    %v3568 = vpack.c.b16 %v2864, %v2863
    %v3569 = vpack.c.b16 %v2866, %v2865
    %v3570 = vpack.c.b16 %v2868, %v2867
    %v3571 = vpack.c.b16 %v2870, %v2869
    %v3572 = vpack.c.b16 %v2872, %v2871
    %v3573 = vpack.c.b16 %v2874, %v2873
    %v3574 = vpack.c.b16 %v2876, %v2875
    %v3575 = vpack.c.b16 %v2878, %v2877
    %v3576 = vpack.c.b16 %v2880, %v2879
    %v3577 = vpack.c.b16 %v2882, %v2881
    %v3578 = vpack.c.b16 %v2884, %v2883
    %v3579 = vpack.c.b16 %v2886, %v2885
    %v3580 = vpack.c.b16 %v2888, %v2887
    %v3581 = vpack.c.b16 %v2890, %v2889
    %v3582 = vpack.c.b16 %v2892, %v2891
    %v3583 = vpack.c.b16 %v2894, %v2893
    %v3584 = vpack.c.b16 %v2896, %v2895
    %v3585 = vpack.c.b16 %v2898, %v2897
    %v3586 = vpack.c.b16 %v2900, %v2899
    %v3587 = vpack.c.b16 %v2902, %v2901
    %v3588 = vpack.c.b16 %v2904, %v2903
    %v3589 = vpack.c.b16 %v2906, %v2905
    %v3590 = vpack.c.b16 %v2908, %v2907
    %v3591 = vpack.c.b16 %v2910, %v2909
    %v3592 = vpack.c.b16 %v2912, %v2911
    %v3593 = vpack.c.b16 %v2914, %v2913
    %v3594 = vpack.c.b16 %v2916, %v2915
    %v3595 = vpack.c.b16 %v2918, %v2917
    %v3596 = vpack.c.b16 %v2920, %v2919
    %v3597 = vpack.c.b16 %v2922, %v2921
    %v3598 = vpack.c.b16 %v2924, %v2923
    %v3599 = vpack.c.b16 %v2926, %v2925
    %v3600 = vpack.c.b16 %v2928, %v2927
    %v3601 = vpack.c.b16 %v2930, %v2929
    %v3602 = vpack.c.b16 %v2932, %v2931
    %v3603 = vpack.c.b16 %v2934, %v2933
    %v3604 = vpack.c.b16 %v2936, %v2935
    %v3605 = vpack.c.b16 %v2938, %v2937
    %v3606 = vpack.c.b16 %v2940, %v2939
    %v3607 = vpack.c.b16 %v2942, %v2941
    %v3608 = vpack.c.b16 %v2944, %v2943
    %v3609 = vpack.c.b16 %v2946, %v2945
    %v3610 = vpack.c.b16 %v2948, %v2947
    %v3611 = vpack.c.b16 %v2950, %v2949
    %v3612 = vpack.c.b16 %v2952, %v2951
    %v3613 = vpack.c.b16 %v2954, %v2953
    %v3614 = vpack.c.b16 %v2956, %v2955
    %v3615 = vpack.c.b16 %v2958, %v2957
    %v3616 = vpack.c.b16 %v2960, %v2959
    %v3617 = vpack.c.b16 %v2962, %v2961
    %v3618 = vpack.c.b16 %v2964, %v2963
    %v3619 = vpack.c.b16 %v2966, %v2965
    %v3620 = vpack.c.b16 %v2968, %v2967
    %v3621 = vpack.c.b16 %v2970, %v2969
    %v3622 = vpack.c.b16 %v2972, %v2971
    %v3623 = vpack.c.b16 %v2974, %v2973
    %v3624 = vpack.c.b16 %v2976, %v2975
    %v3625 = vpack.c.b16 %v2978, %v2977
    %v3626 = vpack.c.b16 %v2980, %v2979
    %v3627 = vpack.c.b16 %v2982, %v2981
    %v3628 = vpack.c.b16 %v2984, %v2983
    %v3629 = vpack.c.b16 %v2986, %v2985
    %v3630 = vpack.c.b16 %v2988, %v2987
    %v3631 = vpack.c.b16 %v2990, %v2989
    %v3632 = vpack.c.b16 %v2992, %v2991
    %v3633 = vpack.c.b16 %v2994, %v2993
    %v3634 = vpack.c.b16 %v2996, %v2995
    %v3635 = vpack.c.b16 %v2998, %v2997
    %v3636 = vpack.c.b16 %v3000, %v2999
    %v3637 = vpack.c.b16 %v3002, %v3001
    %v3638 = vpack.c.b16 %v3004, %v3003
    %v3639 = vpack.c.b16 %v3006, %v3005
    %v3640 = vpack.c.b16 %v3008, %v3007
    %v3641 = vpack.c.b16 %v3010, %v3009
    %v3642 = vpack.c.b16 %v3012, %v3011
    %v3643 = vpack.c.b16 %v3014, %v3013
    %v3644 = vpack.c.b16 %v3016, %v3015
    %v3645 = vpack.c.b16 %v3018, %v3017
    %v3646 = vpack.c.b16 %v3020, %v3019
    %v3647 = vpack.c.b16 %v3022, %v3021
    %v3648 = vpack.c.b16 %v3024, %v3023
    %v3649 = vpack.c.b16 %v3026, %v3025
    %v3650 = vpack.c.b16 %v3028, %v3027
    %v3651 = vpack.c.b16 %v3030, %v3029
    %v3652 = vpack.c.b16 %v3032, %v3031
    %v3653 = vpack.c.b16 %v3034, %v3033
    %v3654 = vpack.c.b16 %v3036, %v3035
    %v3655 = vpack.c.b16 %v3038, %v3037
    %v3656 = vpack.c.b16 %v3040, %v3039
    %v3657 = vpack.c.b16 %v3042, %v3041
    %v3658 = vpack.c.b16 %v3044, %v3043
    %v3659 = vpack.c.b16 %v3046, %v3045
    %v3660 = vpack.c.b16 %v3048, %v3047
    %v3661 = vpack.c.b16 %v3050, %v3049
    %v3662 = vpack.c.b16 %v3052, %v3051
    %v3663 = vpack.c.b16 %v3054, %v3053
    %v3664 = vpack.c.b16 %v3056, %v3055
    %v3665 = vpack.c.b16 %v3058, %v3057
    %v3666 = vpack.c.b16 %v3060, %v3059
    %v3667 = vpack.c.b16 %v3062, %v3061
    %v3668 = vpack.c.b16 %v3064, %v3063
    %v3669 = vpack.c.b16 %v3066, %v3065
    %v3670 = vpack.c.b16 %v3068, %v3067
    %v3671 = vpack.c.b16 %v3070, %v3069
    %v3672 = vpack.c.b16 %v3072, %v3071
    %v3673 = vpack.c.b16 %v3074, %v3073
    %v3674 = vpack.c.b16 %v3076, %v3075
    %v3675 = vpack.c.b16 %v3078, %v3077
    %v3676 = vpack.c.b16 %v3080, %v3079
    %v3677 = vpack.c.b16 %v3082, %v3081
    %v3678 = vpack.c.b16 %v3084, %v3083
    %v3679 = vpack.c.b16 %v3086, %v3085
    %v3680 = vpack.c.b16 %v3088, %v3087
    %v3681 = vpack.c.b16 %v3090, %v3089
    %v3682 = vpack.c.b16 %v3092, %v3091
    %v3683 = vpack.c.b16 %v3094, %v3093
    %v3684 = vpack.c.b16 %v3096, %v3095
    %v3685 = vpack.c.b16 %v3098, %v3097
    %v3686 = vpack.c.b16 %v3100, %v3099
    %v3687 = vpack.c.b16 %v3102, %v3101
    %v3688 = vpack.c.b16 %v3104, %v3103
    %v3689 = vpack.c.b16 %v3106, %v3105
    %v3690 = vpack.c.b16 %v3108, %v3107
    %v3691 = vpack.c.b16 %v3110, %v3109
    %v3692 = vpack.c.b16 %v3112, %v3111
    %v3693 = vpack.c.b16 %v3114, %v3113
    %v3694 = vpack.c.b16 %v3116, %v3115
    %v3695 = vpack.c.b16 %v3118, %v3117
    %v3696 = vpack.c.b16 %v3120, %v3119
    %v3697 = vpack.c.b16 %v3122, %v3121
    %v3698 = vpack.c.b16 %v3124, %v3123
    %v3699 = vpack.c.b16 %v3126, %v3125
    %v3700 = vpack.c.b16 %v3128, %v3127
    %v3701 = vpack.c.b16 %v3130, %v3129
    %v3702 = vpack.c.b16 %v3132, %v3131
    %v3703 = vpack.c.b16 %v3134, %v3133
    %v3704 = vpack.c.b16 %v3136, %v3135
    %v3705 = vpack.c.b16 %v3138, %v3137
    %v3706 = vpack.c.b16 %v3140, %v3139
    %v3707 = vpack.c.b16 %v3142, %v3141
    %v3708 = vpack.c.b16 %v3144, %v3143
    %v3709 = vpack.c.b16 %v3146, %v3145
    %v3710 = vpack.c.b16 %v3148, %v3147
    %v3711 = vpack.c.b16 %v3150, %v3149
    %v3712 = vpack.c.b16 %v3152, %v3151
    %v3713 = vpack.c.b16 %v3154, %v3153
    %v3714 = vpack.c.b16 %v3156, %v3155
    %v3715 = vpack.c.b16 %v3158, %v3157
    %v3716 = vpack.c.b16 %v3160, %v3159
    %v3717 = vpack.c.b16 %v3162, %v3161
    %v3718 = vpack.c.b16 %v3164, %v3163
    %v3719 = vpack.c.b16 %v3166, %v3165
    %v3720 = vpack.c.b16 %v3168, %v3167
    %v3721 = vpack.c.b16 %v3170, %v3169
    %v3722 = vpack.c.b16 %v3172, %v3171
    %v3723 = vpack.c.b16 %v3174, %v3173
    %v3724 = vpack.c.b16 %v3176, %v3175
    %v3725 = vpack.c.b16 %v3178, %v3177
    %v3726 = vpack.c.b16 %v3180, %v3179
    %v3727 = vpack.c.b16 %v3182, %v3181
    %v3728 = vpack.c.b16 %v3184, %v3183
    %v3729 = vpack.c.b16 %v3186, %v3185
    %v3730 = vpack.c.b16 %v3188, %v3187
    %v3731 = vpack.c.b16 %v3190, %v3189
    %v3732 = vpack.c.b16 %v3192, %v3191
    %v3733 = vpack.c.b16 %v3194, %v3193
    %v3734 = vpack.c.b16 %v3196, %v3195
    %v3735 = vpack.c.b16 %v3198, %v3197
    %v3736 = vpack.c.b16 %v3200, %v3199
    %v3737 = vpack.c.b16 %v3202, %v3201
    %v3738 = vpack.c.b16 %v3204, %v3203
    %v3739 = vpack.c.b16 %v3206, %v3205
    %v3740 = vpack.c.b16 %v3208, %v3207
    %v3741 = vpack.c.b16 %v3210, %v3209
    %v3742 = vpack.c.b16 %v3212, %v3211
    %v3743 = vpack.c.b16 %v3214, %v3213
    %v3744 = vpack.c.b16 %v3216, %v3215
    %v3745 = vpack.c.b16 %v3218, %v3217
    %v3746 = vpack.c.b16 %v3220, %v3219
    %v3747 = vpack.c.b16 %v3222, %v3221
    %v3748 = vpack.c.b16 %v3224, %v3223
    %v3749 = vpack.c.b16 %v3226, %v3225
    %v3750 = vpack.c.b16 %v3228, %v3227
    %v3751 = vpack.c.b16 %v3230, %v3229
    %v3752 = vpack.c.b16 %v3232, %v3231
    %v3753 = vpack.c.b16 %v3234, %v3233
    %v3754 = vpack.c.b16 %v3236, %v3235
    %v3755 = vpack.c.b16 %v3238, %v3237
    %v3756 = vpack.c.b16 %v3240, %v3239
    %v3757 = vpack.c.b16 %v3242, %v3241
    %v3758 = vpack.c.b16 %v3244, %v3243
    %v3759 = vpack.c.b16 %v3246, %v3245
    %v3760 = vpack.c.b16 %v3248, %v3247
    %4273 = vmatpush.bf16.msra.mxu0 %v3256
    %4274 = vmatpush.bf16.msra.mxu0 %v3255
    %4275 = vmatpush.bf16.msra.mxu0 %v3254
    %4276 = vmatpush.bf16.msra.mxu0 %v3253
    %4277 = vmatpush.bf16.msra.mxu0 %v3252
    %4278 = vmatpush.bf16.msra.mxu0 %v3251
    %4279 = vmatpush.bf16.msra.mxu0 %v3250
    %4280 = vmatpush.bf16.msra.mxu0 %v3249
    %4281 = vmatmul.bf16.gmra.mxu0 %v1059
    %v4282 = vpop.f32.mrf.mxu0
    %v4283 = vadd.f32 %v1055, %v4282
    %v4284 = vpop.f32.mrf.mxu0
    %4285 = vdwg.mxu0
    %4286 = vmatpush.bf16.msra.mxu0 %v3264
    %4287 = vmatpush.bf16.msra.mxu0 %v3263
    %4288 = vmatpush.bf16.msra.mxu0 %v3262
    %4289 = vmatpush.bf16.msra.mxu0 %v3261
    %4290 = vmatpush.bf16.msra.mxu0 %v3260
    %4291 = vmatpush.bf16.msra.mxu0 %v3259
    %4292 = vmatpush.bf16.msra.mxu0 %v3258
    %4293 = vmatpush.bf16.msra.mxu0 %v3257
    %4294 = vmatmul.bf16.gmra.mxu0 %v1060
    %v4295 = vpop.f32.mrf.mxu0
    %v4296 = vadd.f32 %v4283, %v4295
    %v4297 = vpop.f32.mrf.mxu0
    %4298 = vdwg.mxu0
    %4299 = vmatpush.bf16.msra.mxu0 %v3272
    %4300 = vmatpush.bf16.msra.mxu0 %v3271
    %4301 = vmatpush.bf16.msra.mxu0 %v3270
    %4302 = vmatpush.bf16.msra.mxu0 %v3269
    %4303 = vmatpush.bf16.msra.mxu0 %v3268
    %4304 = vmatpush.bf16.msra.mxu0 %v3267
    %4305 = vmatpush.bf16.msra.mxu0 %v3266
    %4306 = vmatpush.bf16.msra.mxu0 %v3265
    %4307 = vmatmul.bf16.gmra.mxu0 %v1061
    %v4308 = vpop.f32.mrf.mxu0
    %v4309 = vadd.f32 %v4296, %v4308
    %v4310 = vpop.f32.mrf.mxu0
    %4311 = vdwg.mxu0
    %4312 = vmatpush.bf16.msra.mxu0 %v3280
    %4313 = vmatpush.bf16.msra.mxu0 %v3279
    %4314 = vmatpush.bf16.msra.mxu0 %v3278
    %4315 = vmatpush.bf16.msra.mxu0 %v3277
    %4316 = vmatpush.bf16.msra.mxu0 %v3276
    %4317 = vmatpush.bf16.msra.mxu0 %v3275
    %4318 = vmatpush.bf16.msra.mxu0 %v3274
    %4319 = vmatpush.bf16.msra.mxu0 %v3273
    %4320 = vmatmul.bf16.gmra.mxu0 %v1062
    %v4321 = vpop.f32.mrf.mxu0
    %v4322 = vadd.f32 %v4309, %v4321
    %v4323 = vpop.f32.mrf.mxu0
    %4324 = vdwg.mxu0
    %4325 = vmatpush.bf16.msra.mxu0 %v3288
    %4326 = vmatpush.bf16.msra.mxu0 %v3287
    %4327 = vmatpush.bf16.msra.mxu0 %v3286
    %4328 = vmatpush.bf16.msra.mxu0 %v3285
    %4329 = vmatpush.bf16.msra.mxu0 %v3284
    %4330 = vmatpush.bf16.msra.mxu0 %v3283
    %4331 = vmatpush.bf16.msra.mxu0 %v3282
    %4332 = vmatpush.bf16.msra.mxu0 %v3281
    %4333 = vmatmul.bf16.gmra.mxu0 %v1063
    %v4334 = vpop.f32.mrf.mxu0
    %v4335 = vadd.f32 %v4322, %v4334
    %v4336 = vpop.f32.mrf.mxu0
    %4337 = vdwg.mxu0
    %4338 = vmatpush.bf16.msra.mxu0 %v3296
    %4339 = vmatpush.bf16.msra.mxu0 %v3295
    %4340 = vmatpush.bf16.msra.mxu0 %v3294
    %4341 = vmatpush.bf16.msra.mxu0 %v3293
    %4342 = vmatpush.bf16.msra.mxu0 %v3292
    %4343 = vmatpush.bf16.msra.mxu0 %v3291
    %4344 = vmatpush.bf16.msra.mxu0 %v3290
    %4345 = vmatpush.bf16.msra.mxu0 %v3289
    %4346 = vmatmul.bf16.gmra.mxu0 %v1064
    %v4347 = vpop.f32.mrf.mxu0
    %v4348 = vadd.f32 %v4335, %v4347
    %v4349 = vpop.f32.mrf.mxu0
    %4350 = vdwg.mxu0
    %4351 = vmatpush.bf16.msra.mxu0 %v3304
    %4352 = vmatpush.bf16.msra.mxu0 %v3303
    %4353 = vmatpush.bf16.msra.mxu0 %v3302
    %4354 = vmatpush.bf16.msra.mxu0 %v3301
    %4355 = vmatpush.bf16.msra.mxu0 %v3300
    %4356 = vmatpush.bf16.msra.mxu0 %v3299
    %4357 = vmatpush.bf16.msra.mxu0 %v3298
    %4358 = vmatpush.bf16.msra.mxu0 %v3297
    %4359 = vmatmul.bf16.gmra.mxu0 %v1065
    %v4360 = vpop.f32.mrf.mxu0
    %v4361 = vadd.f32 %v4348, %v4360
    %v4362 = vpop.f32.mrf.mxu0
    %4363 = vdwg.mxu0
    %4364 = vmatpush.bf16.msra.mxu0 %v3312
    %4365 = vmatpush.bf16.msra.mxu0 %v3311
    %4366 = vmatpush.bf16.msra.mxu0 %v3310
    %4367 = vmatpush.bf16.msra.mxu0 %v3309
    %4368 = vmatpush.bf16.msra.mxu0 %v3308
    %4369 = vmatpush.bf16.msra.mxu0 %v3307
    %4370 = vmatpush.bf16.msra.mxu0 %v3306
    %4371 = vmatpush.bf16.msra.mxu0 %v3305
    %4372 = vmatmul.bf16.gmra.mxu0 %v1066
    %v4373 = vpop.f32.mrf.mxu0
    %v4374 = vadd.f32 %v4361, %v4373
    %v4375 = vpop.f32.mrf.mxu0
    %4376 = vdwg.mxu0
    %4377 = vmatpush.bf16.msra.mxu0 %v3320
    %4378 = vmatpush.bf16.msra.mxu0 %v3319
    %4379 = vmatpush.bf16.msra.mxu0 %v3318
    %4380 = vmatpush.bf16.msra.mxu0 %v3317
    %4381 = vmatpush.bf16.msra.mxu0 %v3316
    %4382 = vmatpush.bf16.msra.mxu0 %v3315
    %4383 = vmatpush.bf16.msra.mxu0 %v3314
    %4384 = vmatpush.bf16.msra.mxu0 %v3313
    %4385 = vmatmul.bf16.gmra.mxu0 %v1069
    %v4386 = vpop.f32.mrf.mxu0
    %v4387 = vadd.f32 %v4374, %v4386
    %v4388 = vpop.f32.mrf.mxu0
    %4389 = vdwg.mxu0
    %4390 = vmatpush.bf16.msra.mxu0 %v3328
    %4391 = vmatpush.bf16.msra.mxu0 %v3327
    %4392 = vmatpush.bf16.msra.mxu0 %v3326
    %4393 = vmatpush.bf16.msra.mxu0 %v3325
    %4394 = vmatpush.bf16.msra.mxu0 %v3324
    %4395 = vmatpush.bf16.msra.mxu0 %v3323
    %4396 = vmatpush.bf16.msra.mxu0 %v3322
    %4397 = vmatpush.bf16.msra.mxu0 %v3321
    %4398 = vmatmul.bf16.gmra.mxu0 %v1070
    %v4399 = vpop.f32.mrf.mxu0
    %v4400 = vadd.f32 %v4387, %v4399
    %v4401 = vpop.f32.mrf.mxu0
    %4402 = vdwg.mxu0
    %4403 = vmatpush.bf16.msra.mxu0 %v3336
    %4404 = vmatpush.bf16.msra.mxu0 %v3335
    %4405 = vmatpush.bf16.msra.mxu0 %v3334
    %4406 = vmatpush.bf16.msra.mxu0 %v3333
    %4407 = vmatpush.bf16.msra.mxu0 %v3332
    %4408 = vmatpush.bf16.msra.mxu0 %v3331
    %4409 = vmatpush.bf16.msra.mxu0 %v3330
    %4410 = vmatpush.bf16.msra.mxu0 %v3329
    %4411 = vmatmul.bf16.gmra.mxu0 %v1071
    %v4412 = vpop.f32.mrf.mxu0
    %v4413 = vadd.f32 %v4400, %v4412
    %v4414 = vpop.f32.mrf.mxu0
    %4415 = vdwg.mxu0
    %4416 = vmatpush.bf16.msra.mxu0 %v3344
    %4417 = vmatpush.bf16.msra.mxu0 %v3343
    %4418 = vmatpush.bf16.msra.mxu0 %v3342
    %4419 = vmatpush.bf16.msra.mxu0 %v3341
    %4420 = vmatpush.bf16.msra.mxu0 %v3340
    %4421 = vmatpush.bf16.msra.mxu0 %v3339
    %4422 = vmatpush.bf16.msra.mxu0 %v3338
    %4423 = vmatpush.bf16.msra.mxu0 %v3337
    %4424 = vmatmul.bf16.gmra.mxu0 %v1072
    %v4425 = vpop.f32.mrf.mxu0
    %v4426 = vadd.f32 %v4413, %v4425
    %v4427 = vpop.f32.mrf.mxu0
    %4428 = vdwg.mxu0
    %4429 = vmatpush.bf16.msra.mxu0 %v3352
    %4430 = vmatpush.bf16.msra.mxu0 %v3351
    %4431 = vmatpush.bf16.msra.mxu0 %v3350
    %4432 = vmatpush.bf16.msra.mxu0 %v3349
    %4433 = vmatpush.bf16.msra.mxu0 %v3348
    %4434 = vmatpush.bf16.msra.mxu0 %v3347
    %4435 = vmatpush.bf16.msra.mxu0 %v3346
    %4436 = vmatpush.bf16.msra.mxu0 %v3345
    %4437 = vmatmul.bf16.gmra.mxu0 %v1073
    %v4438 = vpop.f32.mrf.mxu0
    %v4439 = vadd.f32 %v4426, %v4438
    %v4440 = vpop.f32.mrf.mxu0
    %4441 = vdwg.mxu0
    %4442 = vmatpush.bf16.msra.mxu0 %v3360
    %4443 = vmatpush.bf16.msra.mxu0 %v3359
    %4444 = vmatpush.bf16.msra.mxu0 %v3358
    %4445 = vmatpush.bf16.msra.mxu0 %v3357
    %4446 = vmatpush.bf16.msra.mxu0 %v3356
    %4447 = vmatpush.bf16.msra.mxu0 %v3355
    %4448 = vmatpush.bf16.msra.mxu0 %v3354
    %4449 = vmatpush.bf16.msra.mxu0 %v3353
    %4450 = vmatmul.bf16.gmra.mxu0 %v1074
    %v4451 = vpop.f32.mrf.mxu0
    %v4452 = vadd.f32 %v4439, %v4451
    %v4453 = vpop.f32.mrf.mxu0
    %4454 = vdwg.mxu0
    %4455 = vmatpush.bf16.msra.mxu0 %v3368
    %4456 = vmatpush.bf16.msra.mxu0 %v3367
    %4457 = vmatpush.bf16.msra.mxu0 %v3366
    %4458 = vmatpush.bf16.msra.mxu0 %v3365
    %4459 = vmatpush.bf16.msra.mxu0 %v3364
    %4460 = vmatpush.bf16.msra.mxu0 %v3363
    %4461 = vmatpush.bf16.msra.mxu0 %v3362
    %4462 = vmatpush.bf16.msra.mxu0 %v3361
    %4463 = vmatmul.bf16.gmra.mxu0 %v1075
    %v4464 = vpop.f32.mrf.mxu0
    %v4465 = vadd.f32 %v4452, %v4464
    %v4466 = vpop.f32.mrf.mxu0
    %4467 = vdwg.mxu0
    %4468 = vmatpush.bf16.msra.mxu0 %v3376
    %4469 = vmatpush.bf16.msra.mxu0 %v3375
    %4470 = vmatpush.bf16.msra.mxu0 %v3374
    %4471 = vmatpush.bf16.msra.mxu0 %v3373
    %4472 = vmatpush.bf16.msra.mxu0 %v3372
    %4473 = vmatpush.bf16.msra.mxu0 %v3371
    %4474 = vmatpush.bf16.msra.mxu0 %v3370
    %4475 = vmatpush.bf16.msra.mxu0 %v3369
    %4476 = vmatmul.bf16.gmra.mxu0 %v1076
    %v4477 = vpop.f32.mrf.mxu0
    %v4478 = vadd.f32 %v4465, %v4477
    %v4479 = vpop.f32.mrf.mxu0
    %4480 = vdwg.mxu0
    %4481 = vmatpush.bf16.msra.mxu0 %v3384
    %4482 = vmatpush.bf16.msra.mxu0 %v3383
    %4483 = vmatpush.bf16.msra.mxu0 %v3382
    %4484 = vmatpush.bf16.msra.mxu0 %v3381
    %4485 = vmatpush.bf16.msra.mxu0 %v3380
    %4486 = vmatpush.bf16.msra.mxu0 %v3379
    %4487 = vmatpush.bf16.msra.mxu0 %v3378
    %4488 = vmatpush.bf16.msra.mxu0 %v3377
    %4489 = vmatmul.bf16.gmra.mxu0 %v1079
    %v4490 = vpop.f32.mrf.mxu0
    %v4491 = vadd.f32 %v4478, %v4490
    %v4492 = vpop.f32.mrf.mxu0
    %4493 = vdwg.mxu0
    %4494 = vmatpush.bf16.msra.mxu0 %v3392
    %4495 = vmatpush.bf16.msra.mxu0 %v3391
    %4496 = vmatpush.bf16.msra.mxu0 %v3390
    %4497 = vmatpush.bf16.msra.mxu0 %v3389
    %4498 = vmatpush.bf16.msra.mxu0 %v3388
    %4499 = vmatpush.bf16.msra.mxu0 %v3387
    %4500 = vmatpush.bf16.msra.mxu0 %v3386
    %4501 = vmatpush.bf16.msra.mxu0 %v3385
    %4502 = vmatmul.bf16.gmra.mxu0 %v1080
    %v4503 = vpop.f32.mrf.mxu0
    %v4504 = vadd.f32 %v4491, %v4503
    %v4505 = vpop.f32.mrf.mxu0
    %4506 = vdwg.mxu0
    %4507 = vmatpush.bf16.msra.mxu0 %v3400
    %4508 = vmatpush.bf16.msra.mxu0 %v3399
    %4509 = vmatpush.bf16.msra.mxu0 %v3398
    %4510 = vmatpush.bf16.msra.mxu0 %v3397
    %4511 = vmatpush.bf16.msra.mxu0 %v3396
    %4512 = vmatpush.bf16.msra.mxu0 %v3395
    %4513 = vmatpush.bf16.msra.mxu0 %v3394
    %4514 = vmatpush.bf16.msra.mxu0 %v3393
    %4515 = vmatmul.bf16.gmra.mxu0 %v1081
    %v4516 = vpop.f32.mrf.mxu0
    %v4517 = vadd.f32 %v4504, %v4516
    %v4518 = vpop.f32.mrf.mxu0
    %4519 = vdwg.mxu0
    %4520 = vmatpush.bf16.msra.mxu0 %v3408
    %4521 = vmatpush.bf16.msra.mxu0 %v3407
    %4522 = vmatpush.bf16.msra.mxu0 %v3406
    %4523 = vmatpush.bf16.msra.mxu0 %v3405
    %4524 = vmatpush.bf16.msra.mxu0 %v3404
    %4525 = vmatpush.bf16.msra.mxu0 %v3403
    %4526 = vmatpush.bf16.msra.mxu0 %v3402
    %4527 = vmatpush.bf16.msra.mxu0 %v3401
    %4528 = vmatmul.bf16.gmra.mxu0 %v1082
    %v4529 = vpop.f32.mrf.mxu0
    %v4530 = vadd.f32 %v4517, %v4529
    %v4531 = vpop.f32.mrf.mxu0
    %4532 = vdwg.mxu0
    %4533 = vmatpush.bf16.msra.mxu0 %v3416
    %4534 = vmatpush.bf16.msra.mxu0 %v3415
    %4535 = vmatpush.bf16.msra.mxu0 %v3414
    %4536 = vmatpush.bf16.msra.mxu0 %v3413
    %4537 = vmatpush.bf16.msra.mxu0 %v3412
    %4538 = vmatpush.bf16.msra.mxu0 %v3411
    %4539 = vmatpush.bf16.msra.mxu0 %v3410
    %4540 = vmatpush.bf16.msra.mxu0 %v3409
    %4541 = vmatmul.bf16.gmra.mxu0 %v1083
    %v4542 = vpop.f32.mrf.mxu0
    %v4543 = vadd.f32 %v4530, %v4542
    %v4544 = vpop.f32.mrf.mxu0
    %4545 = vdwg.mxu0
    %4546 = vmatpush.bf16.msra.mxu0 %v3424
    %4547 = vmatpush.bf16.msra.mxu0 %v3423
    %4548 = vmatpush.bf16.msra.mxu0 %v3422
    %4549 = vmatpush.bf16.msra.mxu0 %v3421
    %4550 = vmatpush.bf16.msra.mxu0 %v3420
    %4551 = vmatpush.bf16.msra.mxu0 %v3419
    %4552 = vmatpush.bf16.msra.mxu0 %v3418
    %4553 = vmatpush.bf16.msra.mxu0 %v3417
    %4554 = vmatmul.bf16.gmra.mxu0 %v1084
    %v4555 = vpop.f32.mrf.mxu0
    %v4556 = vadd.f32 %v4543, %v4555
    %v4557 = vpop.f32.mrf.mxu0
    %4558 = vdwg.mxu0
    %4559 = vmatpush.bf16.msra.mxu0 %v3432
    %4560 = vmatpush.bf16.msra.mxu0 %v3431
    %4561 = vmatpush.bf16.msra.mxu0 %v3430
    %4562 = vmatpush.bf16.msra.mxu0 %v3429
    %4563 = vmatpush.bf16.msra.mxu0 %v3428
    %4564 = vmatpush.bf16.msra.mxu0 %v3427
    %4565 = vmatpush.bf16.msra.mxu0 %v3426
    %4566 = vmatpush.bf16.msra.mxu0 %v3425
    %4567 = vmatmul.bf16.gmra.mxu0 %v1085
    %v4568 = vpop.f32.mrf.mxu0
    %v4569 = vadd.f32 %v4556, %v4568
    %v4570 = vpop.f32.mrf.mxu0
    %4571 = vdwg.mxu0
    %4572 = vmatpush.bf16.msra.mxu0 %v3440
    %4573 = vmatpush.bf16.msra.mxu0 %v3439
    %4574 = vmatpush.bf16.msra.mxu0 %v3438
    %4575 = vmatpush.bf16.msra.mxu0 %v3437
    %4576 = vmatpush.bf16.msra.mxu0 %v3436
    %4577 = vmatpush.bf16.msra.mxu0 %v3435
    %4578 = vmatpush.bf16.msra.mxu0 %v3434
    %4579 = vmatpush.bf16.msra.mxu0 %v3433
    %4580 = vmatmul.bf16.gmra.mxu0 %v1086
    %v4581 = vpop.f32.mrf.mxu0
    %v4582 = vadd.f32 %v4569, %v4581
    %v4583 = vpop.f32.mrf.mxu0
    %4584 = vdwg.mxu0
    %4585 = vmatpush.bf16.msra.mxu0 %v3448
    %4586 = vmatpush.bf16.msra.mxu0 %v3447
    %4587 = vmatpush.bf16.msra.mxu0 %v3446
    %4588 = vmatpush.bf16.msra.mxu0 %v3445
    %4589 = vmatpush.bf16.msra.mxu0 %v3444
    %4590 = vmatpush.bf16.msra.mxu0 %v3443
    %4591 = vmatpush.bf16.msra.mxu0 %v3442
    %4592 = vmatpush.bf16.msra.mxu0 %v3441
    %4593 = vmatmul.bf16.gmra.mxu0 %v1089
    %v4594 = vpop.f32.mrf.mxu0
    %v4595 = vadd.f32 %v4582, %v4594
    %v4596 = vpop.f32.mrf.mxu0
    %4597 = vdwg.mxu0
    %4598 = vmatpush.bf16.msra.mxu0 %v3456
    %4599 = vmatpush.bf16.msra.mxu0 %v3455
    %4600 = vmatpush.bf16.msra.mxu0 %v3454
    %4601 = vmatpush.bf16.msra.mxu0 %v3453
    %4602 = vmatpush.bf16.msra.mxu0 %v3452
    %4603 = vmatpush.bf16.msra.mxu0 %v3451
    %4604 = vmatpush.bf16.msra.mxu0 %v3450
    %4605 = vmatpush.bf16.msra.mxu0 %v3449
    %4606 = vmatmul.bf16.gmra.mxu0 %v1090
    %v4607 = vpop.f32.mrf.mxu0
    %v4608 = vadd.f32 %v4595, %v4607
    %v4609 = vpop.f32.mrf.mxu0
    %4610 = vdwg.mxu0
    %4611 = vmatpush.bf16.msra.mxu0 %v3464
    %4612 = vmatpush.bf16.msra.mxu0 %v3463
    %4613 = vmatpush.bf16.msra.mxu0 %v3462
    %4614 = vmatpush.bf16.msra.mxu0 %v3461
    %4615 = vmatpush.bf16.msra.mxu0 %v3460
    %4616 = vmatpush.bf16.msra.mxu0 %v3459
    %4617 = vmatpush.bf16.msra.mxu0 %v3458
    %4618 = vmatpush.bf16.msra.mxu0 %v3457
    %4619 = vmatmul.bf16.gmra.mxu0 %v1091
    %v4620 = vpop.f32.mrf.mxu0
    %v4621 = vadd.f32 %v4608, %v4620
    %v4622 = vpop.f32.mrf.mxu0
    %4623 = vdwg.mxu0
    %4624 = vmatpush.bf16.msra.mxu0 %v3472
    %4625 = vmatpush.bf16.msra.mxu0 %v3471
    %4626 = vmatpush.bf16.msra.mxu0 %v3470
    %4627 = vmatpush.bf16.msra.mxu0 %v3469
    %4628 = vmatpush.bf16.msra.mxu0 %v3468
    %4629 = vmatpush.bf16.msra.mxu0 %v3467
    %4630 = vmatpush.bf16.msra.mxu0 %v3466
    %4631 = vmatpush.bf16.msra.mxu0 %v3465
    %4632 = vmatmul.bf16.gmra.mxu0 %v1092
    %v4633 = vpop.f32.mrf.mxu0
    %v4634 = vadd.f32 %v4621, %v4633
    %v4635 = vpop.f32.mrf.mxu0
    %4636 = vdwg.mxu0
    %4637 = vmatpush.bf16.msra.mxu0 %v3480
    %4638 = vmatpush.bf16.msra.mxu0 %v3479
    %4639 = vmatpush.bf16.msra.mxu0 %v3478
    %4640 = vmatpush.bf16.msra.mxu0 %v3477
    %4641 = vmatpush.bf16.msra.mxu0 %v3476
    %4642 = vmatpush.bf16.msra.mxu0 %v3475
    %4643 = vmatpush.bf16.msra.mxu0 %v3474
    %4644 = vmatpush.bf16.msra.mxu0 %v3473
    %4645 = vmatmul.bf16.gmra.mxu0 %v1093
    %v4646 = vpop.f32.mrf.mxu0
    %v4647 = vadd.f32 %v4634, %v4646
    %v4648 = vpop.f32.mrf.mxu0
    %4649 = vdwg.mxu0
    %4650 = vmatpush.bf16.msra.mxu0 %v3488
    %4651 = vmatpush.bf16.msra.mxu0 %v3487
    %4652 = vmatpush.bf16.msra.mxu0 %v3486
    %4653 = vmatpush.bf16.msra.mxu0 %v3485
    %4654 = vmatpush.bf16.msra.mxu0 %v3484
    %4655 = vmatpush.bf16.msra.mxu0 %v3483
    %4656 = vmatpush.bf16.msra.mxu0 %v3482
    %4657 = vmatpush.bf16.msra.mxu0 %v3481
    %4658 = vmatmul.bf16.gmra.mxu0 %v1094
    %v4659 = vpop.f32.mrf.mxu0
    %v4660 = vadd.f32 %v4647, %v4659
    %v4661 = vpop.f32.mrf.mxu0
    %4662 = vdwg.mxu0
    %4663 = vmatpush.bf16.msra.mxu0 %v3496
    %4664 = vmatpush.bf16.msra.mxu0 %v3495
    %4665 = vmatpush.bf16.msra.mxu0 %v3494
    %4666 = vmatpush.bf16.msra.mxu0 %v3493
    %4667 = vmatpush.bf16.msra.mxu0 %v3492
    %4668 = vmatpush.bf16.msra.mxu0 %v3491
    %4669 = vmatpush.bf16.msra.mxu0 %v3490
    %4670 = vmatpush.bf16.msra.mxu0 %v3489
    %4671 = vmatmul.bf16.gmra.mxu0 %v1095
    %v4672 = vpop.f32.mrf.mxu0
    %v4673 = vadd.f32 %v4660, %v4672
    %v4674 = vpop.f32.mrf.mxu0
    %4675 = vdwg.mxu0
    %4676 = vmatpush.bf16.msra.mxu0 %v3504
    %4677 = vmatpush.bf16.msra.mxu0 %v3503
    %4678 = vmatpush.bf16.msra.mxu0 %v3502
    %4679 = vmatpush.bf16.msra.mxu0 %v3501
    %4680 = vmatpush.bf16.msra.mxu0 %v3500
    %4681 = vmatpush.bf16.msra.mxu0 %v3499
    %4682 = vmatpush.bf16.msra.mxu0 %v3498
    %4683 = vmatpush.bf16.msra.mxu0 %v3497
    %4684 = vmatmul.bf16.gmra.mxu0 %v1096
    %v4685 = vpop.f32.mrf.mxu0
    %v4686 = vadd.f32 %v4673, %v4685
    %v4687 = vpop.f32.mrf.mxu0
    %4688 = vdwg.mxu0
    %4689 = vmatpush.bf16.msra.mxu0 %v3512
    %4690 = vmatpush.bf16.msra.mxu0 %v3511
    %4691 = vmatpush.bf16.msra.mxu0 %v3510
    %4692 = vmatpush.bf16.msra.mxu0 %v3509
    %4693 = vmatpush.bf16.msra.mxu0 %v3508
    %4694 = vmatpush.bf16.msra.mxu0 %v3507
    %4695 = vmatpush.bf16.msra.mxu0 %v3506
    %4696 = vmatpush.bf16.msra.mxu0 %v3505
    %4697 = vmatmul.bf16.gmra.mxu0 %v1099
    %v4698 = vpop.f32.mrf.mxu0
    %v4699 = vadd.f32 %v4686, %v4698
    %v4700 = vpop.f32.mrf.mxu0
    %4701 = vdwg.mxu0
    %4702 = vmatpush.bf16.msra.mxu0 %v3520
    %4703 = vmatpush.bf16.msra.mxu0 %v3519
    %4704 = vmatpush.bf16.msra.mxu0 %v3518
    %4705 = vmatpush.bf16.msra.mxu0 %v3517
    %4706 = vmatpush.bf16.msra.mxu0 %v3516
    %4707 = vmatpush.bf16.msra.mxu0 %v3515
    %4708 = vmatpush.bf16.msra.mxu0 %v3514
    %4709 = vmatpush.bf16.msra.mxu0 %v3513
    %4710 = vmatmul.bf16.gmra.mxu0 %v1100
    %v4711 = vpop.f32.mrf.mxu0
    %v4712 = vadd.f32 %v4699, %v4711
    %v4713 = vpop.f32.mrf.mxu0
    %4714 = vdwg.mxu0
    %4715 = vmatpush.bf16.msra.mxu0 %v3528
    %4716 = vmatpush.bf16.msra.mxu0 %v3527
    %4717 = vmatpush.bf16.msra.mxu0 %v3526
    %4718 = vmatpush.bf16.msra.mxu0 %v3525
    %4719 = vmatpush.bf16.msra.mxu0 %v3524
    %4720 = vmatpush.bf16.msra.mxu0 %v3523
    %4721 = vmatpush.bf16.msra.mxu0 %v3522
    %4722 = vmatpush.bf16.msra.mxu0 %v3521
    %4723 = vmatmul.bf16.gmra.mxu0 %v1101
    %v4724 = vpop.f32.mrf.mxu0
    %v4725 = vadd.f32 %v4712, %v4724
    %v4726 = vpop.f32.mrf.mxu0
    %4727 = vdwg.mxu0
    %4728 = vmatpush.bf16.msra.mxu0 %v3536
    %4729 = vmatpush.bf16.msra.mxu0 %v3535
    %4730 = vmatpush.bf16.msra.mxu0 %v3534
    %4731 = vmatpush.bf16.msra.mxu0 %v3533
    %4732 = vmatpush.bf16.msra.mxu0 %v3532
    %4733 = vmatpush.bf16.msra.mxu0 %v3531
    %4734 = vmatpush.bf16.msra.mxu0 %v3530
    %4735 = vmatpush.bf16.msra.mxu0 %v3529
    %4736 = vmatmul.bf16.gmra.mxu0 %v1102
    %v4737 = vpop.f32.mrf.mxu0
    %v4738 = vadd.f32 %v4725, %v4737
    %v4739 = vpop.f32.mrf.mxu0
    %4740 = vdwg.mxu0
    %4741 = vmatpush.bf16.msra.mxu0 %v3544
    %4742 = vmatpush.bf16.msra.mxu0 %v3543
    %4743 = vmatpush.bf16.msra.mxu0 %v3542
    %4744 = vmatpush.bf16.msra.mxu0 %v3541
    %4745 = vmatpush.bf16.msra.mxu0 %v3540
    %4746 = vmatpush.bf16.msra.mxu0 %v3539
    %4747 = vmatpush.bf16.msra.mxu0 %v3538
    %4748 = vmatpush.bf16.msra.mxu0 %v3537
    %4749 = vmatmul.bf16.gmra.mxu0 %v1103
    %v4750 = vpop.f32.mrf.mxu0
    %v4751 = vadd.f32 %v4738, %v4750
    %v4752 = vpop.f32.mrf.mxu0
    %4753 = vdwg.mxu0
    %4754 = vmatpush.bf16.msra.mxu0 %v3552
    %4755 = vmatpush.bf16.msra.mxu0 %v3551
    %4756 = vmatpush.bf16.msra.mxu0 %v3550
    %4757 = vmatpush.bf16.msra.mxu0 %v3549
    %4758 = vmatpush.bf16.msra.mxu0 %v3548
    %4759 = vmatpush.bf16.msra.mxu0 %v3547
    %4760 = vmatpush.bf16.msra.mxu0 %v3546
    %4761 = vmatpush.bf16.msra.mxu0 %v3545
    %4762 = vmatmul.bf16.gmra.mxu0 %v1104
    %v4763 = vpop.f32.mrf.mxu0
    %v4764 = vadd.f32 %v4751, %v4763
    %v4765 = vpop.f32.mrf.mxu0
    %4766 = vdwg.mxu0
    %4767 = vmatpush.bf16.msra.mxu0 %v3560
    %4768 = vmatpush.bf16.msra.mxu0 %v3559
    %4769 = vmatpush.bf16.msra.mxu0 %v3558
    %4770 = vmatpush.bf16.msra.mxu0 %v3557
    %4771 = vmatpush.bf16.msra.mxu0 %v3556
    %4772 = vmatpush.bf16.msra.mxu0 %v3555
    %4773 = vmatpush.bf16.msra.mxu0 %v3554
    %4774 = vmatpush.bf16.msra.mxu0 %v3553
    %4775 = vmatmul.bf16.gmra.mxu0 %v1105
    %v4776 = vpop.f32.mrf.mxu0
    %v4777 = vadd.f32 %v4764, %v4776
    %v4778 = vpop.f32.mrf.mxu0
    %4779 = vdwg.mxu0
    %4780 = vmatpush.bf16.msra.mxu0 %v3568
    %4781 = vmatpush.bf16.msra.mxu0 %v3567
    %4782 = vmatpush.bf16.msra.mxu0 %v3566
    %4783 = vmatpush.bf16.msra.mxu0 %v3565
    %4784 = vmatpush.bf16.msra.mxu0 %v3564
    %4785 = vmatpush.bf16.msra.mxu0 %v3563
    %4786 = vmatpush.bf16.msra.mxu0 %v3562
    %4787 = vmatpush.bf16.msra.mxu0 %v3561
    %4788 = vmatmul.bf16.gmra.mxu0 %v1106
    %v4789 = vpop.f32.mrf.mxu0
    %v4790 = vadd.f32 %v4777, %v4789
    %v4791 = vpop.f32.mrf.mxu0
    %4792 = vdwg.mxu0
    %4793 = vmatpush.bf16.msra.mxu0 %v3576
    %4794 = vmatpush.bf16.msra.mxu0 %v3575
    %4795 = vmatpush.bf16.msra.mxu0 %v3574
    %4796 = vmatpush.bf16.msra.mxu0 %v3573
    %4797 = vmatpush.bf16.msra.mxu0 %v3572
    %4798 = vmatpush.bf16.msra.mxu0 %v3571
    %4799 = vmatpush.bf16.msra.mxu0 %v3570
    %4800 = vmatpush.bf16.msra.mxu0 %v3569
    %4801 = vmatmul.bf16.gmra.mxu0 %v1109
    %v4802 = vpop.f32.mrf.mxu0
    %v4803 = vadd.f32 %v4790, %v4802
    %v4804 = vpop.f32.mrf.mxu0
    %4805 = vdwg.mxu0
    %4806 = vmatpush.bf16.msra.mxu0 %v3584
    %4807 = vmatpush.bf16.msra.mxu0 %v3583
    %4808 = vmatpush.bf16.msra.mxu0 %v3582
    %4809 = vmatpush.bf16.msra.mxu0 %v3581
    %4810 = vmatpush.bf16.msra.mxu0 %v3580
    %4811 = vmatpush.bf16.msra.mxu0 %v3579
    %4812 = vmatpush.bf16.msra.mxu0 %v3578
    %4813 = vmatpush.bf16.msra.mxu0 %v3577
    %4814 = vmatmul.bf16.gmra.mxu0 %v1110
    %v4815 = vpop.f32.mrf.mxu0
    %v4816 = vadd.f32 %v4803, %v4815
    %v4817 = vpop.f32.mrf.mxu0
    %4818 = vdwg.mxu0
    %4819 = vmatpush.bf16.msra.mxu0 %v3592
    %4820 = vmatpush.bf16.msra.mxu0 %v3591
    %4821 = vmatpush.bf16.msra.mxu0 %v3590
    %4822 = vmatpush.bf16.msra.mxu0 %v3589
    %4823 = vmatpush.bf16.msra.mxu0 %v3588
    %4824 = vmatpush.bf16.msra.mxu0 %v3587
    %4825 = vmatpush.bf16.msra.mxu0 %v3586
    %4826 = vmatpush.bf16.msra.mxu0 %v3585
    %4827 = vmatmul.bf16.gmra.mxu0 %v1111
    %v4828 = vpop.f32.mrf.mxu0
    %v4829 = vadd.f32 %v4816, %v4828
    %v4830 = vpop.f32.mrf.mxu0
    %4831 = vdwg.mxu0
    %4832 = vmatpush.bf16.msra.mxu0 %v3600
    %4833 = vmatpush.bf16.msra.mxu0 %v3599
    %4834 = vmatpush.bf16.msra.mxu0 %v3598
    %4835 = vmatpush.bf16.msra.mxu0 %v3597
    %4836 = vmatpush.bf16.msra.mxu0 %v3596
    %4837 = vmatpush.bf16.msra.mxu0 %v3595
    %4838 = vmatpush.bf16.msra.mxu0 %v3594
    %4839 = vmatpush.bf16.msra.mxu0 %v3593
    %4840 = vmatmul.bf16.gmra.mxu0 %v1112
    %v4841 = vpop.f32.mrf.mxu0
    %v4842 = vadd.f32 %v4829, %v4841
    %v4843 = vpop.f32.mrf.mxu0
    %4844 = vdwg.mxu0
    %4845 = vmatpush.bf16.msra.mxu0 %v3608
    %4846 = vmatpush.bf16.msra.mxu0 %v3607
    %4847 = vmatpush.bf16.msra.mxu0 %v3606
    %4848 = vmatpush.bf16.msra.mxu0 %v3605
    %4849 = vmatpush.bf16.msra.mxu0 %v3604
    %4850 = vmatpush.bf16.msra.mxu0 %v3603
    %4851 = vmatpush.bf16.msra.mxu0 %v3602
    %4852 = vmatpush.bf16.msra.mxu0 %v3601
    %4853 = vmatmul.bf16.gmra.mxu0 %v1113
    %v4854 = vpop.f32.mrf.mxu0
    %v4855 = vadd.f32 %v4842, %v4854
    %v4856 = vpop.f32.mrf.mxu0
    %4857 = vdwg.mxu0
    %4858 = vmatpush.bf16.msra.mxu0 %v3616
    %4859 = vmatpush.bf16.msra.mxu0 %v3615
    %4860 = vmatpush.bf16.msra.mxu0 %v3614
    %4861 = vmatpush.bf16.msra.mxu0 %v3613
    %4862 = vmatpush.bf16.msra.mxu0 %v3612
    %4863 = vmatpush.bf16.msra.mxu0 %v3611
    %4864 = vmatpush.bf16.msra.mxu0 %v3610
    %4865 = vmatpush.bf16.msra.mxu0 %v3609
    %4866 = vmatmul.bf16.gmra.mxu0 %v1114
    %v4867 = vpop.f32.mrf.mxu0
    %v4868 = vadd.f32 %v4855, %v4867
    %v4869 = vpop.f32.mrf.mxu0
    %4870 = vdwg.mxu0
    %4871 = vmatpush.bf16.msra.mxu0 %v3624
    %4872 = vmatpush.bf16.msra.mxu0 %v3623
    %4873 = vmatpush.bf16.msra.mxu0 %v3622
    %4874 = vmatpush.bf16.msra.mxu0 %v3621
    %4875 = vmatpush.bf16.msra.mxu0 %v3620
    %4876 = vmatpush.bf16.msra.mxu0 %v3619
    %4877 = vmatpush.bf16.msra.mxu0 %v3618
    %4878 = vmatpush.bf16.msra.mxu0 %v3617
    %4879 = vmatmul.bf16.gmra.mxu0 %v1115
    %v4880 = vpop.f32.mrf.mxu0
    %v4881 = vadd.f32 %v4868, %v4880
    %v4882 = vpop.f32.mrf.mxu0
    %4883 = vdwg.mxu0
    %4884 = vmatpush.bf16.msra.mxu0 %v3632
    %4885 = vmatpush.bf16.msra.mxu0 %v3631
    %4886 = vmatpush.bf16.msra.mxu0 %v3630
    %4887 = vmatpush.bf16.msra.mxu0 %v3629
    %4888 = vmatpush.bf16.msra.mxu0 %v3628
    %4889 = vmatpush.bf16.msra.mxu0 %v3627
    %4890 = vmatpush.bf16.msra.mxu0 %v3626
    %4891 = vmatpush.bf16.msra.mxu0 %v3625
    %4892 = vmatmul.bf16.gmra.mxu0 %v1116
    %v4893 = vpop.f32.mrf.mxu0
    %v4894 = vadd.f32 %v4881, %v4893
    %v4895 = vpop.f32.mrf.mxu0
    %4896 = vdwg.mxu0
    %4897 = vmatpush.bf16.msra.mxu0 %v3640
    %4898 = vmatpush.bf16.msra.mxu0 %v3639
    %4899 = vmatpush.bf16.msra.mxu0 %v3638
    %4900 = vmatpush.bf16.msra.mxu0 %v3637
    %4901 = vmatpush.bf16.msra.mxu0 %v3636
    %4902 = vmatpush.bf16.msra.mxu0 %v3635
    %4903 = vmatpush.bf16.msra.mxu0 %v3634
    %4904 = vmatpush.bf16.msra.mxu0 %v3633
    %4905 = vmatmul.bf16.gmra.mxu0 %v1119
    %v4906 = vpop.f32.mrf.mxu0
    %v4907 = vadd.f32 %v4894, %v4906
    %v4908 = vpop.f32.mrf.mxu0
    %4909 = vdwg.mxu0
    %4910 = vmatpush.bf16.msra.mxu0 %v3648
    %4911 = vmatpush.bf16.msra.mxu0 %v3647
    %4912 = vmatpush.bf16.msra.mxu0 %v3646
    %4913 = vmatpush.bf16.msra.mxu0 %v3645
    %4914 = vmatpush.bf16.msra.mxu0 %v3644
    %4915 = vmatpush.bf16.msra.mxu0 %v3643
    %4916 = vmatpush.bf16.msra.mxu0 %v3642
    %4917 = vmatpush.bf16.msra.mxu0 %v3641
    %4918 = vmatmul.bf16.gmra.mxu0 %v1120
    %v4919 = vpop.f32.mrf.mxu0
    %v4920 = vadd.f32 %v4907, %v4919
    %v4921 = vpop.f32.mrf.mxu0
    %4922 = vdwg.mxu0
    %4923 = vmatpush.bf16.msra.mxu0 %v3656
    %4924 = vmatpush.bf16.msra.mxu0 %v3655
    %4925 = vmatpush.bf16.msra.mxu0 %v3654
    %4926 = vmatpush.bf16.msra.mxu0 %v3653
    %4927 = vmatpush.bf16.msra.mxu0 %v3652
    %4928 = vmatpush.bf16.msra.mxu0 %v3651
    %4929 = vmatpush.bf16.msra.mxu0 %v3650
    %4930 = vmatpush.bf16.msra.mxu0 %v3649
    %4931 = vmatmul.bf16.gmra.mxu0 %v1121
    %v4932 = vpop.f32.mrf.mxu0
    %v4933 = vadd.f32 %v4920, %v4932
    %v4934 = vpop.f32.mrf.mxu0
    %4935 = vdwg.mxu0
    %4936 = vmatpush.bf16.msra.mxu0 %v3664
    %4937 = vmatpush.bf16.msra.mxu0 %v3663
    %4938 = vmatpush.bf16.msra.mxu0 %v3662
    %4939 = vmatpush.bf16.msra.mxu0 %v3661
    %4940 = vmatpush.bf16.msra.mxu0 %v3660
    %4941 = vmatpush.bf16.msra.mxu0 %v3659
    %4942 = vmatpush.bf16.msra.mxu0 %v3658
    %4943 = vmatpush.bf16.msra.mxu0 %v3657
    %4944 = vmatmul.bf16.gmra.mxu0 %v1122
    %v4945 = vpop.f32.mrf.mxu0
    %v4946 = vadd.f32 %v4933, %v4945
    %v4947 = vpop.f32.mrf.mxu0
    %4948 = vdwg.mxu0
    %4949 = vmatpush.bf16.msra.mxu0 %v3672
    %4950 = vmatpush.bf16.msra.mxu0 %v3671
    %4951 = vmatpush.bf16.msra.mxu0 %v3670
    %4952 = vmatpush.bf16.msra.mxu0 %v3669
    %4953 = vmatpush.bf16.msra.mxu0 %v3668
    %4954 = vmatpush.bf16.msra.mxu0 %v3667
    %4955 = vmatpush.bf16.msra.mxu0 %v3666
    %4956 = vmatpush.bf16.msra.mxu0 %v3665
    %4957 = vmatmul.bf16.gmra.mxu0 %v1123
    %v4958 = vpop.f32.mrf.mxu0
    %v4959 = vadd.f32 %v4946, %v4958
    %v4960 = vpop.f32.mrf.mxu0
    %4961 = vdwg.mxu0
    %4962 = vmatpush.bf16.msra.mxu0 %v3680
    %4963 = vmatpush.bf16.msra.mxu0 %v3679
    %4964 = vmatpush.bf16.msra.mxu0 %v3678
    %4965 = vmatpush.bf16.msra.mxu0 %v3677
    %4966 = vmatpush.bf16.msra.mxu0 %v3676
    %4967 = vmatpush.bf16.msra.mxu0 %v3675
    %4968 = vmatpush.bf16.msra.mxu0 %v3674
    %4969 = vmatpush.bf16.msra.mxu0 %v3673
    %4970 = vmatmul.bf16.gmra.mxu0 %v1124
    %v4971 = vpop.f32.mrf.mxu0
    %v4972 = vadd.f32 %v4959, %v4971
    %v4973 = vpop.f32.mrf.mxu0
    %4974 = vdwg.mxu0
    %4975 = vmatpush.bf16.msra.mxu0 %v3688
    %4976 = vmatpush.bf16.msra.mxu0 %v3687
    %4977 = vmatpush.bf16.msra.mxu0 %v3686
    %4978 = vmatpush.bf16.msra.mxu0 %v3685
    %4979 = vmatpush.bf16.msra.mxu0 %v3684
    %4980 = vmatpush.bf16.msra.mxu0 %v3683
    %4981 = vmatpush.bf16.msra.mxu0 %v3682
    %4982 = vmatpush.bf16.msra.mxu0 %v3681
    %4983 = vmatmul.bf16.gmra.mxu0 %v1125
    %v4984 = vpop.f32.mrf.mxu0
    %v4985 = vadd.f32 %v4972, %v4984
    %v4986 = vpop.f32.mrf.mxu0
    %4987 = vdwg.mxu0
    %4988 = vmatpush.bf16.msra.mxu0 %v3696
    %4989 = vmatpush.bf16.msra.mxu0 %v3695
    %4990 = vmatpush.bf16.msra.mxu0 %v3694
    %4991 = vmatpush.bf16.msra.mxu0 %v3693
    %4992 = vmatpush.bf16.msra.mxu0 %v3692
    %4993 = vmatpush.bf16.msra.mxu0 %v3691
    %4994 = vmatpush.bf16.msra.mxu0 %v3690
    %4995 = vmatpush.bf16.msra.mxu0 %v3689
    %4996 = vmatmul.bf16.gmra.mxu0 %v1126
    %v4997 = vpop.f32.mrf.mxu0
    %v4998 = vadd.f32 %v4985, %v4997
    %v4999 = vpop.f32.mrf.mxu0
    %5000 = vdwg.mxu0
    %5001 = vmatpush.bf16.msra.mxu0 %v3704
    %5002 = vmatpush.bf16.msra.mxu0 %v3703
    %5003 = vmatpush.bf16.msra.mxu0 %v3702
    %5004 = vmatpush.bf16.msra.mxu0 %v3701
    %5005 = vmatpush.bf16.msra.mxu0 %v3700
    %5006 = vmatpush.bf16.msra.mxu0 %v3699
    %5007 = vmatpush.bf16.msra.mxu0 %v3698
    %5008 = vmatpush.bf16.msra.mxu0 %v3697
    %5009 = vmatmul.bf16.gmra.mxu0 %v1129
    %v5010 = vpop.f32.mrf.mxu0
    %v5011 = vadd.f32 %v4998, %v5010
    %v5012 = vpop.f32.mrf.mxu0
    %5013 = vdwg.mxu0
    %5014 = vmatpush.bf16.msra.mxu0 %v3712
    %5015 = vmatpush.bf16.msra.mxu0 %v3711
    %5016 = vmatpush.bf16.msra.mxu0 %v3710
    %5017 = vmatpush.bf16.msra.mxu0 %v3709
    %5018 = vmatpush.bf16.msra.mxu0 %v3708
    %5019 = vmatpush.bf16.msra.mxu0 %v3707
    %5020 = vmatpush.bf16.msra.mxu0 %v3706
    %5021 = vmatpush.bf16.msra.mxu0 %v3705
    %5022 = vmatmul.bf16.gmra.mxu0 %v1130
    %v5023 = vpop.f32.mrf.mxu0
    %v5024 = vadd.f32 %v5011, %v5023
    %v5025 = vpop.f32.mrf.mxu0
    %5026 = vdwg.mxu0
    %5027 = vmatpush.bf16.msra.mxu0 %v3720
    %5028 = vmatpush.bf16.msra.mxu0 %v3719
    %5029 = vmatpush.bf16.msra.mxu0 %v3718
    %5030 = vmatpush.bf16.msra.mxu0 %v3717
    %5031 = vmatpush.bf16.msra.mxu0 %v3716
    %5032 = vmatpush.bf16.msra.mxu0 %v3715
    %5033 = vmatpush.bf16.msra.mxu0 %v3714
    %5034 = vmatpush.bf16.msra.mxu0 %v3713
    %5035 = vmatmul.bf16.gmra.mxu0 %v1131
    %v5036 = vpop.f32.mrf.mxu0
    %v5037 = vadd.f32 %v5024, %v5036
    %v5038 = vpop.f32.mrf.mxu0
    %5039 = vdwg.mxu0
    %5040 = vmatpush.bf16.msra.mxu0 %v3728
    %5041 = vmatpush.bf16.msra.mxu0 %v3727
    %5042 = vmatpush.bf16.msra.mxu0 %v3726
    %5043 = vmatpush.bf16.msra.mxu0 %v3725
    %5044 = vmatpush.bf16.msra.mxu0 %v3724
    %5045 = vmatpush.bf16.msra.mxu0 %v3723
    %5046 = vmatpush.bf16.msra.mxu0 %v3722
    %5047 = vmatpush.bf16.msra.mxu0 %v3721
    %5048 = vmatmul.bf16.gmra.mxu0 %v1132
    %v5049 = vpop.f32.mrf.mxu0
    %v5050 = vadd.f32 %v5037, %v5049
    %v5051 = vpop.f32.mrf.mxu0
    %5052 = vdwg.mxu0
    %5053 = vmatpush.bf16.msra.mxu0 %v3736
    %5054 = vmatpush.bf16.msra.mxu0 %v3735
    %5055 = vmatpush.bf16.msra.mxu0 %v3734
    %5056 = vmatpush.bf16.msra.mxu0 %v3733
    %5057 = vmatpush.bf16.msra.mxu0 %v3732
    %5058 = vmatpush.bf16.msra.mxu0 %v3731
    %5059 = vmatpush.bf16.msra.mxu0 %v3730
    %5060 = vmatpush.bf16.msra.mxu0 %v3729
    %5061 = vmatmul.bf16.gmra.mxu0 %v1133
    %v5062 = vpop.f32.mrf.mxu0
    %v5063 = vadd.f32 %v5050, %v5062
    %v5064 = vpop.f32.mrf.mxu0
    %5065 = vdwg.mxu0
    %5066 = vmatpush.bf16.msra.mxu0 %v3744
    %5067 = vmatpush.bf16.msra.mxu0 %v3743
    %5068 = vmatpush.bf16.msra.mxu0 %v3742
    %5069 = vmatpush.bf16.msra.mxu0 %v3741
    %5070 = vmatpush.bf16.msra.mxu0 %v3740
    %5071 = vmatpush.bf16.msra.mxu0 %v3739
    %5072 = vmatpush.bf16.msra.mxu0 %v3738
    %5073 = vmatpush.bf16.msra.mxu0 %v3737
    %5074 = vmatmul.bf16.gmra.mxu0 %v1134
    %v5075 = vpop.f32.mrf.mxu0
    %v5076 = vadd.f32 %v5063, %v5075
    %v5077 = vpop.f32.mrf.mxu0
    %5078 = vdwg.mxu0
    %5079 = vmatpush.bf16.msra.mxu0 %v3752
    %5080 = vmatpush.bf16.msra.mxu0 %v3751
    %5081 = vmatpush.bf16.msra.mxu0 %v3750
    %5082 = vmatpush.bf16.msra.mxu0 %v3749
    %5083 = vmatpush.bf16.msra.mxu0 %v3748
    %5084 = vmatpush.bf16.msra.mxu0 %v3747
    %5085 = vmatpush.bf16.msra.mxu0 %v3746
    %5086 = vmatpush.bf16.msra.mxu0 %v3745
    %5087 = vmatmul.bf16.gmra.mxu0 %v1135
    %v5088 = vpop.f32.mrf.mxu0
    %v5089 = vadd.f32 %v5076, %v5088
    %v5090 = vpop.f32.mrf.mxu0
    %5091 = vdwg.mxu0
    %5092 = vmatpush.bf16.msra.mxu0 %v3760
    %5093 = vmatpush.bf16.msra.mxu0 %v3759
    %5094 = vmatpush.bf16.msra.mxu0 %v3758
    %5095 = vmatpush.bf16.msra.mxu0 %v3757
    %5096 = vmatpush.bf16.msra.mxu0 %v3756
    %5097 = vmatpush.bf16.msra.mxu0 %v3755
    %5098 = vmatpush.bf16.msra.mxu0 %v3754
    %5099 = vmatpush.bf16.msra.mxu0 %v3753
    %5100 = vmatmul.bf16.gmra.mxu0 %v1136
    %v5101 = vpop.f32.mrf.mxu0
    %v5102 = vadd.f32 %v5089, %v5101
    %v5103 = vpop.f32.mrf.mxu0
    %5104 = vdwg.mxu0
    %v5105 = vmax.f32 %v5102, 0.0
    %v5106 = vld [vmem:[%s3] sm:$0xff]
    %v5107 = vld [vmem:[%s3 + $0x8] sm:$0xff]
    %v5108 = vld [vmem:[%s3 + $0x10] sm:$0xff]
    %v5109 = vld [vmem:[%s3 + $0x18] sm:$0xff]
    %v5110 = vld [vmem:[%s3 + $0x20] sm:$0xff]
    %v5111 = vld [vmem:[%s3 + $0x28] sm:$0xff]
    %v5112 = vld [vmem:[%s3 + $0x30] sm:$0xff]
    %v5113 = vld [vmem:[%s3 + $0x38] sm:$0xff]
    %v5114 = vld [vmem:[%s3 + $0x40] sm:$0xff]
    %v5115 = vld [vmem:[%s3 + $0x48] sm:$0xff]
    %v5116 = vld [vmem:[%s3 + $0x50] sm:$0xff]
    %v5117 = vld [vmem:[%s3 + $0x58] sm:$0xff]
    %v5118 = vld [vmem:[%s3 + $0x60] sm:$0xff]
    %v5119 = vld [vmem:[%s3 + $0x68] sm:$0xff]
    %v5120 = vld [vmem:[%s3 + $0x70] sm:$0xff]
    %v5121 = vld [vmem:[%s3 + $0x78] sm:$0xff]
    %v5122 = vld [vmem:[%s4] sm:$0x1]
    %v5124 = vperm.slane %v5122, 0
    %5126 = vmatpush.msra.mxu0 %v5121
    %5127 = vmatpush.msra.mxu0 %v5120
    %5128 = vmatpush.msra.mxu0 %v5119
    %5129 = vmatpush.msra.mxu0 %v5118
    %5130 = vmatpush.msra.mxu0 %v5117
    %5131 = vmatpush.msra.mxu0 %v5116
    %5132 = vmatpush.msra.mxu0 %v5115
    %5133 = vmatpush.msra.mxu0 %v5114
    %5134 = vmatpush.msra.mxu0 %v5113
    %5135 = vmatpush.msra.mxu0 %v5112
    %5136 = vmatpush.msra.mxu0 %v5111
    %5137 = vmatpush.msra.mxu0 %v5110
    %5138 = vmatpush.msra.mxu0 %v5109
    %5139 = vmatpush.msra.mxu0 %v5108
    %5140 = vmatpush.msra.mxu0 %v5107
    %5141 = vmatpush.msra.mxu0 %v5106
    %5142 = vmatmul.f32.gmra.mxu0 %v5105
    %v5143 = vpop.f32.mrf.mxu0
    %v5144 = vadd.f32 %v5124, %v5143
    %5145 = vdwg.mxu0
    %vm5146 = vcmask 74752
    %5147 = vst.msk [vmem:[#allocation2] sm:$0x3] %vm5146, %v5144
    // Predicated region
    $region22: #{simple_cnn_forward.9} parent=1 // pred_check
      _
    $region23: #{simple_cnn_forward.9} parent=1 // pred_check_branch
      %5149 = sbr.rel (0) target = $region25
    $region24: #{simple_cnn_forward.9} parent=1 // pred_region
      %5151 = vsyncadd [#allocation3], 0
      %s5153 = sshll.u32 [#allocation2], 4
      %s5154 = int_to_ptr.vmem [resolvable:$true] %s5153
      %s5155 = sshll.u32 %s5, 4
      %s5156 = int_to_ptr.hbm [resolvable:$true] %s5155
      %5158 = dma.vmem_to_hbm [thread:$0]  %s5154, 32, %s5156, [#allocation3]
    $region25: #{simple_cnn_forward.9} parent=1 // pred_fallthru
      _
    // Predicated region
    $region26: #{simple_cnn_forward.9} parent=1 // pred_check
      _
    $region27: #{simple_cnn_forward.9} parent=1 // pred_check_branch
      %5160 = sbr.rel (0) target = $region29
    $region28: #{simple_cnn_forward.9} parent=1 // pred_region
      %5162 = dma.done [#allocation3], 32
    $region29: #{simple_cnn_forward.9} parent=1 // pred_fallthru
      _
    %5163 = vsyncpa [#allocation3], 1

</llo_original>
